<compile_context>
chip_gen: v7x
topology: tpu7x:2x2x1
jax: 0.10.0
libtpu: 0.0.40
codegen_flags: <defaults>
</compile_context>

<pallas_src>
import jax
import jax.numpy as jnp
from jax import lax
from jax.experimental import pallas as pl
from jax.experimental.pallas import tpu as pltpu

LATENT_DIM = 100    # args.latent_dim in the original script
EPS = 1e-5
NEG_SLOPE = 0.2

LATENT_PAD = 128    # 100 -> 128  (aligned K for the first matmul)
OUT_DIM = 784
OUT_PAD = 896       # 784 -> 896 = 7*128 (lane-dense output writeback)

# Packed (1, VEC_TOTAL) vector layout: name -> (offset, size).  All offsets and
# sizes are multiples of 128, so every in-kernel slice is lane-aligned.
_VEC_LAYOUT = {
    "b1":  (0,    128),
    "b2":  (128,  256),
    "g1":  (384,  256),
    "be1": (640,  256),
    "b3":  (896,  512),
    "g2":  (1408, 512),
    "be2": (1920, 512),
    "b4":  (2432, 1024),
    "g3":  (3456, 1024),
    "be3": (4480, 1024),
    "b5":  (5504, OUT_PAD),
}
VEC_TOTAL = 5504 + OUT_PAD  # 6400


def _leaky_relu(x):
    return jnp.where(x > 0, x, NEG_SLOPE * x)


def _batch_stats(x, n_valid):
    """Training-mode BN stats (biased variance) over the batch axis.

    Padded rows (row index >= n_valid) are masked out of the statistics.
    `n_valid` may be a Python int (reference path) or a traced int32 scalar
    (kernel path, read from SMEM).
    """
    b_pad = x.shape[0]
    mask = (lax.broadcasted_iota(jnp.int32, (b_pad, 1), 0) < n_valid).astype(x.dtype)
    inv_n = 1.0 / jnp.asarray(n_valid, x.dtype)
    mean = jnp.sum(x * mask, axis=0, keepdims=True) * inv_n
    d = (x - mean) * mask
    var = jnp.sum(d * d, axis=0, keepdims=True) * inv_n
    return mean, var


def _bn_leaky(x, gamma, beta, n_valid):
    """Folded BatchNorm1d (train mode) + LeakyReLU(0.2)."""
    mean, var = _batch_stats(x, n_valid)
    scale = lax.rsqrt(var + EPS) * gamma
    shift = beta - mean * scale
    return _leaky_relu(x * scale + shift)


def generator_kernel(nvalid_ref, z_ref, w1_ref, w2_ref, w3_ref, w4_ref, w5_ref,
                     vec_ref, out_ref):
    n_valid = nvalid_ref[0]

    def vec(name):
        off, size = _VEC_LAYOUT[name]
        return vec_ref[:, off:off + size]          # static, lane-aligned slice

    x = z_ref[...]                                 # (B_pad, 128) bf16

    # linear1 -> LeakyReLU
    h = jnp.dot(x, w1_ref[...], preferred_element_type=jnp.float32) + vec("b1")
    h = _leaky_relu(h)

    # linear2 -> BN1 -> LeakyReLU
    h = jnp.dot(h.astype(jnp.bfloat16), w2_ref[...],
                preferred_element_type=jnp.float32) + vec("b2")
    h = _bn_leaky(h, vec("g1"), vec("be1"), n_valid)

    # linear3 -> BN2 -> LeakyReLU
    h = jnp.dot(h.astype(jnp.bfloat16), w3_ref[...],
                preferred_element_type=jnp.float32) + vec("b3")
    h = _bn_leaky(h, vec("g2"), vec("be2"), n_valid)

    # linear4 -> BN3 -> LeakyReLU
    h = jnp.dot(h.astype(jnp.bfloat16), w4_ref[...],
                preferred_element_type=jnp.float32) + vec("b4")
    h = _bn_leaky(h, vec("g3"), vec("be3"), n_valid)

    # linear5 -> tanh  (lane-dense 896-wide bf16 store; padded cols sliced off outside)
    h = jnp.dot(h.astype(jnp.bfloat16), w5_ref[...],
                preferred_element_type=jnp.float32) + vec("b5")
    out_ref[...] = jnp.tanh(h).astype(out_ref.dtype)


def make_params(key):
    """Deterministic PyTorch-Linear-style init: U(-1/sqrt(fan_in), 1/sqrt(fan_in))."""
    dims = [(LATENT_DIM, 128), (128, 256), (256, 512), (512, 1024), (1024, OUT_DIM)]
    params = {}
    for idx, (fan_in, fan_out) in enumerate(dims, start=1):
        key, kw, kb = jax.random.split(key, 3)
        bound = 1.0 / jnp.sqrt(jnp.float32(fan_in))
        params[f"w{idx}"] = jax.random.uniform(
            kw, (fan_in, fan_out), jnp.float32, -bound, bound)
        params[f"b{idx}"] = jax.random.uniform(
            kb, (1, fan_out), jnp.float32, -bound, bound)
    # BatchNorm affine params: gamma=1, beta=0 (PyTorch default init).
    for idx, width in enumerate([256, 512, 1024], start=1):
        params[f"g{idx}"] = jnp.ones((1, width), jnp.float32)
        params[f"be{idx}"] = jnp.zeros((1, width), jnp.float32)
    return params


def prepare_params(p):
    """One-time packing for the kernel: padded bf16 weights + packed f32 vector."""
    w1 = jnp.zeros((LATENT_PAD, 128), jnp.float32).at[:LATENT_DIM].set(p["w1"])
    w5 = jnp.zeros((1024, OUT_PAD), jnp.float32).at[:, :OUT_DIM].set(p["w5"])
    weights = (w1.astype(jnp.bfloat16),
               p["w2"].astype(jnp.bfloat16),
               p["w3"].astype(jnp.bfloat16),
               p["w4"].astype(jnp.bfloat16),
               w5.astype(jnp.bfloat16))

    b5 = jnp.zeros((1, OUT_PAD), jnp.float32).at[:, :OUT_DIM].set(p["b5"])
    pieces = {
        "b1": p["b1"], "b2": p["b2"], "g1": p["g1"], "be1": p["be1"],
        "b3": p["b3"], "g2": p["g2"], "be2": p["be2"],
        "b4": p["b4"], "g3": p["g3"], "be3": p["be3"], "b5": b5,
    }
    vec = jnp.zeros((1, VEC_TOTAL), jnp.float32)
    for name, (off, size) in _VEC_LAYOUT.items():
        vec = vec.at[:, off:off + size].set(pieces[name])
    return weights, vec


def generator_forward(z, prepared):
    """z: (G, B, latent) = G independent BatchNorm batches of size B, or (B, latent).

    Returns bf16 images of shape (G, B, 784) (or (B, 784) if z was 2-D).
    BN statistics are computed independently per group, matching G separate
    forward() calls of the PyTorch module.
    """
    weights, vec = prepared
    squeeze = (z.ndim == 2)
    if squeeze:
        z = z[None]
    g, b, _ = z.shape
    b_pad = ((b + 7) // 8) * 8

    # Pad batch rows to a sublane multiple and latent dim to 128 lanes; ship bf16.
    z_pad = jnp.zeros((g, b_pad, LATENT_PAD), jnp.bfloat16)
    z_pad = z_pad.at[:, :b, :LATENT_DIM].set(z.astype(jnp.bfloat16))

    n_valid = jnp.array([b], jnp.int32)            # scalar-prefetch SMEM operand
    const = lambda gi, n: (0, 0)                   # weights resident across grid

    grid_spec = pltpu.PrefetchScalarGridSpec(
        num_scalar_prefetch=1,
        grid=(g,),
        in_specs=[
            pl.BlockSpec((None, b_pad, LATENT_PAD), lambda gi, n: (gi, 0, 0)),
            pl.BlockSpec((LATENT_PAD, 128), const),
            pl.BlockSpec((128, 256), const),
            pl.BlockSpec((256, 512), const),
            pl.BlockSpec((512, 1024), const),
            pl.BlockSpec((1024, OUT_PAD), const),
            pl.BlockSpec((1, VEC_TOTAL), const),
        ],
        out_specs=pl.BlockSpec((None, b_pad, OUT_PAD), lambda gi, n: (gi, 0, 0)),
    )

    out = pl.pallas_call(
        generator_kernel,
        out_shape=jax.ShapeDtypeStruct((g, b_pad, OUT_PAD), jnp.bfloat16),
        grid_spec=grid_spec,
        compiler_params=pltpu.CompilerParams(
            dimension_semantics=("parallel",),     # v7x: groups split across 2 TCs
            vmem_limit_bytes=32 << 20,
        ),
    )(n_valid, z_pad, *weights, vec)

    out = out[:, :b, :OUT_DIM]
    return out[0] if squeeze else out


def generator_reference(z, prepared):
    """Pure-JAX reference mirroring the kernel math (same bf16 casts), per group."""
    (w1, w2, w3, w4, w5), vec = prepared

    def v(name):
        off, size = _VEC_LAYOUT[name]
        return vec[:, off:off + size]

    def one_group(zg):
        b = zg.shape[0]
        x = jnp.zeros((b, LATENT_PAD), jnp.bfloat16).at[:, :LATENT_DIM].set(
            zg.astype(jnp.bfloat16))
        h = _leaky_relu(jnp.dot(x, w1, preferred_element_type=jnp.float32) + v("b1"))
        h = jnp.dot(h.astype(jnp.bfloat16), w2, preferred_element_type=jnp.float32) + v("b2")
        h = _bn_leaky(h, v("g1"), v("be1"), b)
        h = jnp.dot(h.astype(jnp.bfloat16), w3, preferred_element_type=jnp.float32) + v("b3")
        h = _bn_leaky(h, v("g2"), v("be2"), b)
        h = jnp.dot(h.astype(jnp.bfloat16), w4, preferred_element_type=jnp.float32) + v("b4")
        h = _bn_leaky(h, v("g3"), v("be3"), b)
        h = jnp.dot(h.astype(jnp.bfloat16), w5, preferred_element_type=jnp.float32) + v("b5")
        return jnp.tanh(h)[:, :OUT_DIM]

    return jnp.stack([one_group(z[i]) for i in range(z.shape[0])])


if __name__ == "__main__":
    GROUPS = 2        # independent BN batches per kernel call (grid axis)
    BATCH = 32        # samples per BN batch

    key = jax.random.PRNGKey(0)
    kz, kp = jax.random.split(key)
    z = jax.random.normal(kz, (GROUPS, BATCH, LATENT_DIM), jnp.float32)
    params = make_params(kp)
    prepared = prepare_params(params)

    out = jax.block_until_ready(generator_forward(z, prepared))

    ref = generator_reference(z, prepared)
    assert out.shape == (GROUPS, BATCH, OUT_DIM), out.shape
    assert jnp.allclose(out.astype(jnp.float32), ref, atol=1e-2, rtol=1e-2), \
        "mismatch vs JAX reference"
    print("KERNEL_OK")
</pallas_src>

<mosaic_0001>
module attributes {stable_mosaic.version = 11 : i64} {
  func.func @generator_kernel(%arg0: i32, %arg1: memref<1xi32, #tpu.memory_space<smem>>, %arg2: memref<1x32x128xbf16, #tpu.memory_space<vmem>>, %arg3: memref<128x128xbf16, #tpu.memory_space<vmem>>, %arg4: memref<128x256xbf16, #tpu.memory_space<vmem>>, %arg5: memref<256x512xbf16, #tpu.memory_space<vmem>>, %arg6: memref<512x1024xbf16, #tpu.memory_space<vmem>>, %arg7: memref<1024x896xbf16, #tpu.memory_space<vmem>>, %arg8: memref<1x6400xf32, #tpu.memory_space<vmem>>, %arg9: memref<1x32x896xbf16, #tpu.memory_space<vmem>>) attributes {dimension_semantics = [#tpu.dimension_semantics<parallel>], iteration_bounds = array<i64: 2>, scalar_prefetch = 1 : i64, scratch_operands = 0 : i64, tpu.core_type = #tpu.core_type<tc>, window_params = [{transform_indices = @transform_0, window_bounds = array<i64: 1, 32, 128>}, {pipeline_mode = #tpu.pipeline_mode<synchronous>, transform_indices = @transform_1, window_bounds = array<i64: 128, 128>}, {pipeline_mode = #tpu.pipeline_mode<synchronous>, transform_indices = @transform_2, window_bounds = array<i64: 128, 256>}, {pipeline_mode = #tpu.pipeline_mode<synchronous>, transform_indices = @transform_3, window_bounds = array<i64: 256, 512>}, {pipeline_mode = #tpu.pipeline_mode<synchronous>, transform_indices = @transform_4, window_bounds = array<i64: 512, 1024>}, {pipeline_mode = #tpu.pipeline_mode<synchronous>, transform_indices = @transform_5, window_bounds = array<i64: 1024, 896>}, {pipeline_mode = #tpu.pipeline_mode<synchronous>, transform_indices = @transform_6, window_bounds = array<i64: 1, 6400>}, {transform_indices = @transform_7, window_bounds = array<i64: 1, 32, 896>}]} {
    %c0 = arith.constant 0 : index
    %0 = memref.load %arg1[%c0] : memref<1xi32, #tpu.memory_space<smem>>
    %c0_0 = arith.constant 0 : index
    %c0_1 = arith.constant 0 : index
    %c0_2 = arith.constant 0 : index
    %1 = vector.load %arg2[%c0_0, %c0_1, %c0_2] : memref<1x32x128xbf16, #tpu.memory_space<vmem>>, vector<1x32x128xbf16>
    %2 = vector.shape_cast %1 : vector<1x32x128xbf16> to vector<32x128xbf16>
    %c0_3 = arith.constant 0 : index
    %c0_4 = arith.constant 0 : index
    %3 = vector.load %arg3[%c0_3, %c0_4] : memref<128x128xbf16, #tpu.memory_space<vmem>>, vector<128x128xbf16>
    %cst = arith.constant dense<0.000000e+00> : vector<32x128xf32>
    %4 = tpu.matmul %2, %3, %cst {dimension_numbers = #tpu.dot_dimension_numbers<[1], [0], [0], [1], [0, 0, 1, 1], [], []>} : vector<32x128xbf16>, vector<128x128xbf16>, vector<32x128xf32> -> vector<32x128xf32>
    %c0_5 = arith.constant 0 : index
    %c0_6 = arith.constant 0 : index
    %5 = vector.load %arg8[%c0_5, %c0_6] : memref<1x6400xf32, #tpu.memory_space<vmem>>, vector<1x128xf32>
    %6 = vector.broadcast %5 : vector<1x128xf32> to vector<32x128xf32>
    %7 = arith.addf %4, %6 : vector<32x128xf32>
    %cst_7 = arith.constant 0.000000e+00 : f32
    %8 = vector.broadcast %cst_7 : f32 to vector<32x128xf32>
    %9 = arith.cmpf ogt, %7, %8 : vector<32x128xf32>
    %cst_8 = arith.constant 2.000000e-01 : f32
    %10 = vector.broadcast %cst_8 : f32 to vector<32x128xf32>
    %11 = arith.mulf %10, %7 : vector<32x128xf32>
    %12 = arith.select %9, %7, %11 : vector<32x128xi1>, vector<32x128xf32>
    %13 = arith.truncf %12 : vector<32x128xf32> to vector<32x128xbf16>
    %c0_9 = arith.constant 0 : index
    %c0_10 = arith.constant 0 : index
    %14 = vector.load %arg4[%c0_9, %c0_10] : memref<128x256xbf16, #tpu.memory_space<vmem>>, vector<128x256xbf16>
    %cst_11 = arith.constant dense<0.000000e+00> : vector<32x256xf32>
    %15 = tpu.matmul %13, %14, %cst_11 {dimension_numbers = #tpu.dot_dimension_numbers<[1], [0], [0], [1], [0, 0, 1, 1], [], []>} : vector<32x128xbf16>, vector<128x256xbf16>, vector<32x256xf32> -> vector<32x256xf32>
    %c0_12 = arith.constant 0 : index
    %c128 = arith.constant 128 : index
    %16 = vector.load %arg8[%c0_12, %c128] : memref<1x6400xf32, #tpu.memory_space<vmem>>, vector<1x256xf32>
    %17 = vector.broadcast %16 : vector<1x256xf32> to vector<32x256xf32>
    %18 = arith.addf %15, %17 : vector<32x256xf32>
    %c0_13 = arith.constant 0 : index
    %c384 = arith.constant 384 : index
    %19 = vector.load %arg8[%c0_13, %c384] : memref<1x6400xf32, #tpu.memory_space<vmem>>, vector<1x256xf32>
    %c0_14 = arith.constant 0 : index
    %c640 = arith.constant 640 : index
    %20 = vector.load %arg8[%c0_14, %c640] : memref<1x6400xf32, #tpu.memory_space<vmem>>, vector<1x256xf32>
    %21 = tpu.iota {dimensions = array<i32: 0>} : vector<32x1xi32>
    %22 = vector.broadcast %0 : i32 to vector<32x1xi32>
    %23 = arith.cmpi slt, %21, %22 : vector<32x1xi32>
    %24 = arith.extui %23 : vector<32x1xi1> to vector<32x1xi32>
    %25 = arith.sitofp %24 : vector<32x1xi32> to vector<32x1xf32>
    %26 = arith.sitofp %0 : i32 to f32
    %cst_15 = arith.constant 1.000000e+00 : f32
    %27 = arith.divf %cst_15, %26 : f32
    %28 = vector.broadcast %25 : vector<32x1xf32> to vector<32x256xf32>
    %29 = arith.mulf %18, %28 : vector<32x256xf32>
    %cst_16 = arith.constant dense<0.000000e+00> : vector<256xf32>
    %30 = vector.multi_reduction <add>, %29, %cst_16 [0] : vector<32x256xf32> to vector<256xf32>
    %31 = vector.shape_cast %30 : vector<256xf32> to vector<1x256xf32>
    %32 = vector.broadcast %27 : f32 to vector<1x256xf32>
    %33 = arith.mulf %31, %32 : vector<1x256xf32>
    %34 = vector.broadcast %33 : vector<1x256xf32> to vector<32x256xf32>
    %35 = arith.subf %18, %34 : vector<32x256xf32>
    %36 = vector.broadcast %25 : vector<32x1xf32> to vector<32x256xf32>
    %37 = arith.mulf %35, %36 : vector<32x256xf32>
    %38 = arith.mulf %37, %37 : vector<32x256xf32>
    %cst_17 = arith.constant dense<0.000000e+00> : vector<256xf32>
    %39 = vector.multi_reduction <add>, %38, %cst_17 [0] : vector<32x256xf32> to vector<256xf32>
    %40 = vector.shape_cast %39 : vector<256xf32> to vector<1x256xf32>
    %41 = vector.broadcast %27 : f32 to vector<1x256xf32>
    %42 = arith.mulf %40, %41 : vector<1x256xf32>
    %cst_18 = arith.constant 9.99999974E-6 : f32
    %43 = vector.broadcast %cst_18 : f32 to vector<1x256xf32>
    %44 = arith.addf %42, %43 : vector<1x256xf32>
    %45 = math.rsqrt %44 : vector<1x256xf32>
    %46 = arith.mulf %45, %19 : vector<1x256xf32>
    %47 = arith.mulf %33, %46 : vector<1x256xf32>
    %48 = arith.subf %20, %47 : vector<1x256xf32>
    %49 = vector.broadcast %46 : vector<1x256xf32> to vector<32x256xf32>
    %50 = arith.mulf %18, %49 : vector<32x256xf32>
    %51 = vector.broadcast %48 : vector<1x256xf32> to vector<32x256xf32>
    %52 = arith.addf %50, %51 : vector<32x256xf32>
    %cst_19 = arith.constant 0.000000e+00 : f32
    %53 = vector.broadcast %cst_19 : f32 to vector<32x256xf32>
    %54 = arith.cmpf ogt, %52, %53 : vector<32x256xf32>
    %cst_20 = arith.constant 2.000000e-01 : f32
    %55 = vector.broadcast %cst_20 : f32 to vector<32x256xf32>
    %56 = arith.mulf %55, %52 : vector<32x256xf32>
    %57 = arith.select %54, %52, %56 : vector<32x256xi1>, vector<32x256xf32>
    %58 = arith.truncf %57 : vector<32x256xf32> to vector<32x256xbf16>
    %c0_21 = arith.constant 0 : index
    %c0_22 = arith.constant 0 : index
    %59 = vector.load %arg5[%c0_21, %c0_22] : memref<256x512xbf16, #tpu.memory_space<vmem>>, vector<256x512xbf16>
    %cst_23 = arith.constant dense<0.000000e+00> : vector<32x512xf32>
    %60 = tpu.matmul %58, %59, %cst_23 {dimension_numbers = #tpu.dot_dimension_numbers<[1], [0], [0], [1], [0, 0, 1, 1], [], []>} : vector<32x256xbf16>, vector<256x512xbf16>, vector<32x512xf32> -> vector<32x512xf32>
    %c0_24 = arith.constant 0 : index
    %c896 = arith.constant 896 : index
    %61 = vector.load %arg8[%c0_24, %c896] : memref<1x6400xf32, #tpu.memory_space<vmem>>, vector<1x512xf32>
    %62 = vector.broadcast %61 : vector<1x512xf32> to vector<32x512xf32>
    %63 = arith.addf %60, %62 : vector<32x512xf32>
    %c0_25 = arith.constant 0 : index
    %c1408 = arith.constant 1408 : index
    %64 = vector.load %arg8[%c0_25, %c1408] : memref<1x6400xf32, #tpu.memory_space<vmem>>, vector<1x512xf32>
    %c0_26 = arith.constant 0 : index
    %c1920 = arith.constant 1920 : index
    %65 = vector.load %arg8[%c0_26, %c1920] : memref<1x6400xf32, #tpu.memory_space<vmem>>, vector<1x512xf32>
    %66 = tpu.iota {dimensions = array<i32: 0>} : vector<32x1xi32>
    %67 = vector.broadcast %0 : i32 to vector<32x1xi32>
    %68 = arith.cmpi slt, %66, %67 : vector<32x1xi32>
    %69 = arith.extui %68 : vector<32x1xi1> to vector<32x1xi32>
    %70 = arith.sitofp %69 : vector<32x1xi32> to vector<32x1xf32>
    %71 = arith.sitofp %0 : i32 to f32
    %cst_27 = arith.constant 1.000000e+00 : f32
    %72 = arith.divf %cst_27, %71 : f32
    %73 = vector.broadcast %70 : vector<32x1xf32> to vector<32x512xf32>
    %74 = arith.mulf %63, %73 : vector<32x512xf32>
    %cst_28 = arith.constant dense<0.000000e+00> : vector<512xf32>
    %75 = vector.multi_reduction <add>, %74, %cst_28 [0] : vector<32x512xf32> to vector<512xf32>
    %76 = vector.shape_cast %75 : vector<512xf32> to vector<1x512xf32>
    %77 = vector.broadcast %72 : f32 to vector<1x512xf32>
    %78 = arith.mulf %76, %77 : vector<1x512xf32>
    %79 = vector.broadcast %78 : vector<1x512xf32> to vector<32x512xf32>
    %80 = arith.subf %63, %79 : vector<32x512xf32>
    %81 = vector.broadcast %70 : vector<32x1xf32> to vector<32x512xf32>
    %82 = arith.mulf %80, %81 : vector<32x512xf32>
    %83 = arith.mulf %82, %82 : vector<32x512xf32>
    %cst_29 = arith.constant dense<0.000000e+00> : vector<512xf32>
    %84 = vector.multi_reduction <add>, %83, %cst_29 [0] : vector<32x512xf32> to vector<512xf32>
    %85 = vector.shape_cast %84 : vector<512xf32> to vector<1x512xf32>
    %86 = vector.broadcast %72 : f32 to vector<1x512xf32>
    %87 = arith.mulf %85, %86 : vector<1x512xf32>
    %cst_30 = arith.constant 9.99999974E-6 : f32
    %88 = vector.broadcast %cst_30 : f32 to vector<1x512xf32>
    %89 = arith.addf %87, %88 : vector<1x512xf32>
    %90 = math.rsqrt %89 : vector<1x512xf32>
    %91 = arith.mulf %90, %64 : vector<1x512xf32>
    %92 = arith.mulf %78, %91 : vector<1x512xf32>
    %93 = arith.subf %65, %92 : vector<1x512xf32>
    %94 = vector.broadcast %91 : vector<1x512xf32> to vector<32x512xf32>
    %95 = arith.mulf %63, %94 : vector<32x512xf32>
    %96 = vector.broadcast %93 : vector<1x512xf32> to vector<32x512xf32>
    %97 = arith.addf %95, %96 : vector<32x512xf32>
    %cst_31 = arith.constant 0.000000e+00 : f32
    %98 = vector.broadcast %cst_31 : f32 to vector<32x512xf32>
    %99 = arith.cmpf ogt, %97, %98 : vector<32x512xf32>
    %cst_32 = arith.constant 2.000000e-01 : f32
    %100 = vector.broadcast %cst_32 : f32 to vector<32x512xf32>
    %101 = arith.mulf %100, %97 : vector<32x512xf32>
    %102 = arith.select %99, %97, %101 : vector<32x512xi1>, vector<32x512xf32>
    %103 = arith.truncf %102 : vector<32x512xf32> to vector<32x512xbf16>
    %c0_33 = arith.constant 0 : index
    %c0_34 = arith.constant 0 : index
    %104 = vector.load %arg6[%c0_33, %c0_34] : memref<512x1024xbf16, #tpu.memory_space<vmem>>, vector<512x1024xbf16>
    %cst_35 = arith.constant dense<0.000000e+00> : vector<32x1024xf32>
    %105 = tpu.matmul %103, %104, %cst_35 {dimension_numbers = #tpu.dot_dimension_numbers<[1], [0], [0], [1], [0, 0, 1, 1], [], []>} : vector<32x512xbf16>, vector<512x1024xbf16>, vector<32x1024xf32> -> vector<32x1024xf32>
    %c0_36 = arith.constant 0 : index
    %c2432 = arith.constant 2432 : index
    %106 = vector.load %arg8[%c0_36, %c2432] : memref<1x6400xf32, #tpu.memory_space<vmem>>, vector<1x1024xf32>
    %107 = vector.broadcast %106 : vector<1x1024xf32> to vector<32x1024xf32>
    %108 = arith.addf %105, %107 : vector<32x1024xf32>
    %c0_37 = arith.constant 0 : index
    %c3456 = arith.constant 3456 : index
    %109 = vector.load %arg8[%c0_37, %c3456] : memref<1x6400xf32, #tpu.memory_space<vmem>>, vector<1x1024xf32>
    %c0_38 = arith.constant 0 : index
    %c4480 = arith.constant 4480 : index
    %110 = vector.load %arg8[%c0_38, %c4480] : memref<1x6400xf32, #tpu.memory_space<vmem>>, vector<1x1024xf32>
    %111 = tpu.iota {dimensions = array<i32: 0>} : vector<32x1xi32>
    %112 = vector.broadcast %0 : i32 to vector<32x1xi32>
    %113 = arith.cmpi slt, %111, %112 : vector<32x1xi32>
    %114 = arith.extui %113 : vector<32x1xi1> to vector<32x1xi32>
    %115 = arith.sitofp %114 : vector<32x1xi32> to vector<32x1xf32>
    %116 = arith.sitofp %0 : i32 to f32
    %cst_39 = arith.constant 1.000000e+00 : f32
    %117 = arith.divf %cst_39, %116 : f32
    %118 = vector.broadcast %115 : vector<32x1xf32> to vector<32x1024xf32>
    %119 = arith.mulf %108, %118 : vector<32x1024xf32>
    %cst_40 = arith.constant dense<0.000000e+00> : vector<1024xf32>
    %120 = vector.multi_reduction <add>, %119, %cst_40 [0] : vector<32x1024xf32> to vector<1024xf32>
    %121 = vector.shape_cast %120 : vector<1024xf32> to vector<1x1024xf32>
    %122 = vector.broadcast %117 : f32 to vector<1x1024xf32>
    %123 = arith.mulf %121, %122 : vector<1x1024xf32>
    %124 = vector.broadcast %123 : vector<1x1024xf32> to vector<32x1024xf32>
    %125 = arith.subf %108, %124 : vector<32x1024xf32>
    %126 = vector.broadcast %115 : vector<32x1xf32> to vector<32x1024xf32>
    %127 = arith.mulf %125, %126 : vector<32x1024xf32>
    %128 = arith.mulf %127, %127 : vector<32x1024xf32>
    %cst_41 = arith.constant dense<0.000000e+00> : vector<1024xf32>
    %129 = vector.multi_reduction <add>, %128, %cst_41 [0] : vector<32x1024xf32> to vector<1024xf32>
    %130 = vector.shape_cast %129 : vector<1024xf32> to vector<1x1024xf32>
    %131 = vector.broadcast %117 : f32 to vector<1x1024xf32>
    %132 = arith.mulf %130, %131 : vector<1x1024xf32>
    %cst_42 = arith.constant 9.99999974E-6 : f32
    %133 = vector.broadcast %cst_42 : f32 to vector<1x1024xf32>
    %134 = arith.addf %132, %133 : vector<1x1024xf32>
    %135 = math.rsqrt %134 : vector<1x1024xf32>
    %136 = arith.mulf %135, %109 : vector<1x1024xf32>
    %137 = arith.mulf %123, %136 : vector<1x1024xf32>
    %138 = arith.subf %110, %137 : vector<1x1024xf32>
    %139 = vector.broadcast %136 : vector<1x1024xf32> to vector<32x1024xf32>
    %140 = arith.mulf %108, %139 : vector<32x1024xf32>
    %141 = vector.broadcast %138 : vector<1x1024xf32> to vector<32x1024xf32>
    %142 = arith.addf %140, %141 : vector<32x1024xf32>
    %cst_43 = arith.constant 0.000000e+00 : f32
    %143 = vector.broadcast %cst_43 : f32 to vector<32x1024xf32>
    %144 = arith.cmpf ogt, %142, %143 : vector<32x1024xf32>
    %cst_44 = arith.constant 2.000000e-01 : f32
    %145 = vector.broadcast %cst_44 : f32 to vector<32x1024xf32>
    %146 = arith.mulf %145, %142 : vector<32x1024xf32>
    %147 = arith.select %144, %142, %146 : vector<32x1024xi1>, vector<32x1024xf32>
    %148 = arith.truncf %147 : vector<32x1024xf32> to vector<32x1024xbf16>
    %c0_45 = arith.constant 0 : index
    %c0_46 = arith.constant 0 : index
    %149 = vector.load %arg7[%c0_45, %c0_46] : memref<1024x896xbf16, #tpu.memory_space<vmem>>, vector<1024x896xbf16>
    %cst_47 = arith.constant dense<0.000000e+00> : vector<32x896xf32>
    %150 = tpu.matmul %148, %149, %cst_47 {dimension_numbers = #tpu.dot_dimension_numbers<[1], [0], [0], [1], [0, 0, 1, 1], [], []>} : vector<32x1024xbf16>, vector<1024x896xbf16>, vector<32x896xf32> -> vector<32x896xf32>
    %c0_48 = arith.constant 0 : index
    %c5504 = arith.constant 5504 : index
    %151 = vector.load %arg8[%c0_48, %c5504] : memref<1x6400xf32, #tpu.memory_space<vmem>>, vector<1x896xf32>
    %152 = vector.broadcast %151 : vector<1x896xf32> to vector<32x896xf32>
    %153 = arith.addf %150, %152 : vector<32x896xf32>
    %154 = math.tanh %153 : vector<32x896xf32>
    %155 = arith.truncf %154 : vector<32x896xf32> to vector<32x896xbf16>
    %c0_49 = arith.constant 0 : index
    %c0_50 = arith.constant 0 : index
    %c0_51 = arith.constant 0 : index
    %156 = vector.load %arg9[%c0_49, %c0_50, %c0_51] : memref<1x32x896xbf16, #tpu.memory_space<vmem>>, vector<1x32x896xbf16>
    %157 = vector.shape_cast %156 : vector<1x32x896xbf16> to vector<32x896xbf16>
    %158 = vector.shape_cast %155 : vector<32x896xbf16> to vector<1x32x896xbf16>
    tpu.vector_store %arg9[%c0_49, %c0_50, %c0_51], %158 {strides = array<i32>} : memref<1x32x896xbf16, #tpu.memory_space<vmem>>, vector<1x32x896xbf16>,
    return
  }
  func.func @transform_0(%arg0: i32, %arg1: memref<1xi32, #tpu.memory_space<smem>>) -> (i32, i32, i32) {
    %c0_i32 = arith.constant 0 : i32
    %c0_i32_0 = arith.constant 0 : i32
    %c0_i32_1 = arith.constant 0 : i32
    return %arg0, %c0_i32, %c0_i32_0 : i32, i32, i32
  }
  func.func @transform_1(%arg0: i32, %arg1: memref<1xi32, #tpu.memory_space<smem>>) -> (i32, i32) {
    %c0_i32 = arith.constant 0 : i32
    %c0_i32_0 = arith.constant 0 : i32
    %c0_i32_1 = arith.constant 0 : i32
    return %c0_i32, %c0_i32_0 : i32, i32
  }
  func.func @transform_2(%arg0: i32, %arg1: memref<1xi32, #tpu.memory_space<smem>>) -> (i32, i32) {
    %c0_i32 = arith.constant 0 : i32
    %c0_i32_0 = arith.constant 0 : i32
    %c0_i32_1 = arith.constant 0 : i32
    return %c0_i32, %c0_i32_0 : i32, i32
  }
  func.func @transform_3(%arg0: i32, %arg1: memref<1xi32, #tpu.memory_space<smem>>) -> (i32, i32) {
    %c0_i32 = arith.constant 0 : i32
    %c0_i32_0 = arith.constant 0 : i32
    %c0_i32_1 = arith.constant 0 : i32
    return %c0_i32, %c0_i32_0 : i32, i32
  }
  func.func @transform_4(%arg0: i32, %arg1: memref<1xi32, #tpu.memory_space<smem>>) -> (i32, i32) {
    %c0_i32 = arith.constant 0 : i32
    %c0_i32_0 = arith.constant 0 : i32
    %c0_i32_1 = arith.constant 0 : i32
    return %c0_i32, %c0_i32_0 : i32, i32
  }
  func.func @transform_5(%arg0: i32, %arg1: memref<1xi32, #tpu.memory_space<smem>>) -> (i32, i32) {
    %c0_i32 = arith.constant 0 : i32
    %c0_i32_0 = arith.constant 0 : i32
    %c0_i32_1 = arith.constant 0 : i32
    return %c0_i32, %c0_i32_0 : i32, i32
  }
  func.func @transform_6(%arg0: i32, %arg1: memref<1xi32, #tpu.memory_space<smem>>) -> (i32, i32) {
    %c0_i32 = arith.constant 0 : i32
    %c0_i32_0 = arith.constant 0 : i32
    %c0_i32_1 = arith.constant 0 : i32
    return %c0_i32, %c0_i32_0 : i32, i32
  }
  func.func @transform_7(%arg0: i32, %arg1: memref<1xi32, #tpu.memory_space<smem>>) -> (i32, i32, i32) {
    %c0_i32 = arith.constant 0 : i32
    %c0_i32_0 = arith.constant 0 : i32
    %c0_i32_1 = arith.constant 0 : i32
    return %arg0, %c0_i32, %c0_i32_0 : i32, i32, i32
  }
}

</mosaic_0001>

<llo_original>
// kernel: tpu_custom_call.1
$region0: #{tpu_custom_call.1}
  #allocation0 [shape = 'u32[]', space=smem, size = 0x4, offset = 0x4, fixed_abs, tag = 'smem constant byte address 0x4 - core index']
  #allocation1 [shape = 'u32[144,128]{1,0:T(1,128)}', space=vmem, size = 0x12000, scoped, tag = 'internal scratch']
  #allocation2 [shape = 's32[1]{0}', space=sflag, size = 0x4, scoped, tag = 'scoped memory for tpu_custom_call.1']
  #allocation3 [shape = 's32[1]{0:T(128)S(6)}', space=smem, size = 0x200, scoped, tag = 'prefetched SMEM operand 0']
  %s0 = inlined_call_operand.<no memory space> [shape: s32[1], index: 0, kind: input, shape index: {}]
  %s1 = inlined_call_operand.hbm [shape: bf16[2,32,128], index: 1, kind: input, shape index: {}]
  %s2 = inlined_call_operand.hbm [shape: bf16[128,128], index: 2, kind: input, shape index: {}]
  %s3 = inlined_call_operand.hbm [shape: bf16[128,256], index: 3, kind: input, shape index: {}]
  %s4 = inlined_call_operand.hbm [shape: bf16[256,512], index: 4, kind: input, shape index: {}]
  %s5 = inlined_call_operand.hbm [shape: bf16[512,1024], index: 5, kind: input, shape index: {}]
  %s6 = inlined_call_operand.hbm [shape: bf16[1024,896], index: 6, kind: input, shape index: {}]
  %s7 = inlined_call_operand.hbm [shape: f32[1,6400], index: 7, kind: input, shape index: {}]
  %s8 = inlined_call_operand.hbm [shape: bf16[2,32,896], index: 8, kind: output, shape index: {}]
  %s9 = sld [smem:[#allocation0]]
  $region89: #{tpu_custom_call.1} parent=0
    _
  %s11 = ssub.s32 1, %s9
  %s12 = scalar_select 0, %s11, %s9
  %13 = sst [smem:[#allocation3]] %s0
  $region1: #{tpu_custom_call.1} parent=0
    #allocation4 [shape = 'u8[16384]{0}', space=vmem, size = 0x4000, scoped, tag = 'input window, operand 1']
    #allocation5 [shape = 's32[2]{0}', space=sflag, size = 0x8, scoped, tag = 'scoped memory for tpu_custom_call.1']
    #allocation6 [shape = 's32[2]{0}', space=sflag, size = 0x8, scoped, tag = 'scoped memory for tpu_custom_call.1']
    #allocation7 [shape = 'u8[32768]{0}', space=vmem, size = 0x8000, scoped, tag = 'input window, operand 2, single buffered']
    #allocation8 [shape = 's32[1]{0}', space=sflag, size = 0x4, scoped, tag = 'scoped memory for tpu_custom_call.1']
    #allocation9 [shape = 'u8[65536]{0}', space=vmem, size = 0x10000, scoped, tag = 'input window, operand 3, single buffered']
    #allocation10 [shape = 'u8[262144]{0}', space=vmem, size = 0x40000, scoped, tag = 'input window, operand 4, single buffered']
    #allocation11 [shape = 's32[1]{0}', space=sflag, size = 0x4, scoped, tag = 'scoped memory for tpu_custom_call.1']
    #allocation12 [shape = 'u8[1048576]{0}', space=vmem, size = 0x100000, scoped, tag = 'input window, operand 5, single buffered']
    #allocation13 [shape = 'u8[1835008]{0}', space=vmem, size = 0x1c0000, scoped, tag = 'input window, operand 6, single buffered']
    #allocation14 [shape = 's32[1]{0}', space=sflag, size = 0x4, scoped, tag = 'scoped memory for tpu_custom_call.1']
    #allocation15 [shape = 'u8[25600]{0}', space=vmem, size = 0x6400, scoped, tag = 'input window, operand 7, single buffered']
    #allocation16 [shape = 'u8[114688]{0}', space=vmem, size = 0x1c000, scoped, tag = 'output window, operand 0']
    %14 = vsyncpa [#allocation5], 0
    %s15 = scalar_lea.sflag [#allocation5], 1
    %16 = vsyncpa %s15, 0
    %17 = vsyncpa [#allocation8], 0
    %18 = vsyncpa [#allocation11], 0
    %19 = vsyncpa [#allocation14], 0
    %20 = vsyncpa [#allocation6], 0
    %s21 = scalar_lea.sflag [#allocation6], 1
    %22 = vsyncpa %s21, 0
    loop: start=0, step=1, limit=4
    $region2: #{tpu_custom_call.1} parent=1 // loop_pre_header
      _
    $region3: #{tpu_custom_call.1} parent=1 // loop_header
      %s24 = sphi 0, %s28
      %p25 = scmp.ge.s32.totalorder %s24, 4
      %s34 = sphi 0, %s36
      %s37 = sphi 0, %s34
      %s38 = sphi 0, %s37
      %s54 = sphi 0, %s38
      %s58 = sphi 0, %s58
      %s60 = sphi 0, %s58
      %s61 = sphi 0, %s60
      %s75 = sphi 0, %s61
      %s79 = sphi 0, %s79
      %s81 = sphi 0, %s79
      %s82 = sphi 0, %s81
      %s96 = sphi 0, %s82
      %s100 = sphi 0, %s100
      %s102 = sphi 0, %s100
      %s103 = sphi 0, %s102
      %s117 = sphi 0, %s103
      %s121 = sphi 0, %s121
      %s123 = sphi 0, %s121
      %s124 = sphi 0, %s123
      %s138 = sphi 0, %s124
      %s142 = sphi 0, %s142
      %s144 = sphi 0, %s142
      %s145 = sphi 0, %s144
      %s159 = sphi 0, %s145
      %s163 = sphi 0, %s163
      %s165 = sphi 0, %s163
      %s166 = sphi 0, %s165
      %s180 = sphi 0, %s166
      %s186 = sphi 0, %s188
      %s189 = sphi 0, %s186
      %s190 = sphi 0, %s189
      %s206 = sphi 0, %s190
    $region4: #{tpu_custom_call.1} parent=1 // loop_header_branch
      %27 = sbr.rel (%p25) target = $region8
    $region5: #{tpu_custom_call.1} parent=1 // loop_body
      %s29 = ssub.s32 %s24, 1
      %s30 = ssub.s32 %s24, 2
      %s31 = sadd.s32 %s24, 1
      %s32 = ssub.s32 %s24, %s31
      %p33 = scmp.eq.s32.totalorder %s32, 0
      %s35 = sadd.s32 %s34, 1
      %s36 = scalar_select %p33, %s34, %s35
      %p39 = pneg %p33
      %p40 = scmp.eq.s32.totalorder %s24, 1
      %p41 = por %p39, %p40
      %p42 = scmp.ne.s32.totalorder %s34, %s37
      %p43 = scmp.eq.s32.totalorder %s24, 0
      %p44 = por %p42, %p43
      %p45 = scmp.ne.s32.totalorder %s34, %s37
      %p46 = scmp.eq.s32.totalorder %s29, 1
      %p47 = por %p45, %p46
      %p48 = scmp.ne.s32.totalorder %s37, %s38
      %p49 = scmp.eq.s32.totalorder %s29, 0
      %p50 = por %p48, %p49
      %p51 = scmp.ne.s32.totalorder %s37, %s38
      %p52 = scmp.eq.s32.totalorder %s30, 1
      %p53 = por %p51, %p52
      %p55 = scmp.ne.s32.totalorder %s38, %s54
      %p56 = scmp.eq.s32.totalorder %s30, 0
      %p57 = por %p55, %p56
      %s59 = sadd.s32 %s58, 1
      %p62 = scmp.eq.s32.totalorder %s24, 1
      %p63 = scmp.ne.s32.totalorder %s58, %s60
      %p64 = scmp.eq.s32.totalorder %s24, 0
      %p65 = por %p63, %p64
      %p66 = scmp.ne.s32.totalorder %s58, %s60
      %p67 = scmp.eq.s32.totalorder %s29, 1
      %p68 = por %p66, %p67
      %p69 = scmp.ne.s32.totalorder %s60, %s61
      %p70 = scmp.eq.s32.totalorder %s29, 0
      %p71 = por %p69, %p70
      %p72 = scmp.ne.s32.totalorder %s60, %s61
      %p73 = scmp.eq.s32.totalorder %s30, 1
      %p74 = por %p72, %p73
      %p76 = scmp.ne.s32.totalorder %s61, %s75
      %p77 = scmp.eq.s32.totalorder %s30, 0
      %p78 = por %p76, %p77
      %s80 = sadd.s32 %s79, 1
      %p83 = scmp.eq.s32.totalorder %s24, 1
      %p84 = scmp.ne.s32.totalorder %s79, %s81
      %p85 = scmp.eq.s32.totalorder %s24, 0
      %p86 = por %p84, %p85
      %p87 = scmp.ne.s32.totalorder %s79, %s81
      %p88 = scmp.eq.s32.totalorder %s29, 1
      %p89 = por %p87, %p88
      %p90 = scmp.ne.s32.totalorder %s81, %s82
      %p91 = scmp.eq.s32.totalorder %s29, 0
      %p92 = por %p90, %p91
      %p93 = scmp.ne.s32.totalorder %s81, %s82
      %p94 = scmp.eq.s32.totalorder %s30, 1
      %p95 = por %p93, %p94
      %p97 = scmp.ne.s32.totalorder %s82, %s96
      %p98 = scmp.eq.s32.totalorder %s30, 0
      %p99 = por %p97, %p98
      %s101 = sadd.s32 %s100, 1
      %p104 = scmp.eq.s32.totalorder %s24, 1
      %p105 = scmp.ne.s32.totalorder %s100, %s102
      %p106 = scmp.eq.s32.totalorder %s24, 0
      %p107 = por %p105, %p106
      %p108 = scmp.ne.s32.totalorder %s100, %s102
      %p109 = scmp.eq.s32.totalorder %s29, 1
      %p110 = por %p108, %p109
      %p111 = scmp.ne.s32.totalorder %s102, %s103
      %p112 = scmp.eq.s32.totalorder %s29, 0
      %p113 = por %p111, %p112
      %p114 = scmp.ne.s32.totalorder %s102, %s103
      %p115 = scmp.eq.s32.totalorder %s30, 1
      %p116 = por %p114, %p115
      %p118 = scmp.ne.s32.totalorder %s103, %s117
      %p119 = scmp.eq.s32.totalorder %s30, 0
      %p120 = por %p118, %p119
      %s122 = sadd.s32 %s121, 1
      %p125 = scmp.eq.s32.totalorder %s24, 1
      %p126 = scmp.ne.s32.totalorder %s121, %s123
      %p127 = scmp.eq.s32.totalorder %s24, 0
      %p128 = por %p126, %p127
      %p129 = scmp.ne.s32.totalorder %s121, %s123
      %p130 = scmp.eq.s32.totalorder %s29, 1
      %p131 = por %p129, %p130
      %p132 = scmp.ne.s32.totalorder %s123, %s124
      %p133 = scmp.eq.s32.totalorder %s29, 0
      %p134 = por %p132, %p133
      %p135 = scmp.ne.s32.totalorder %s123, %s124
      %p136 = scmp.eq.s32.totalorder %s30, 1
      %p137 = por %p135, %p136
      %p139 = scmp.ne.s32.totalorder %s124, %s138
      %p140 = scmp.eq.s32.totalorder %s30, 0
      %p141 = por %p139, %p140
      %s143 = sadd.s32 %s142, 1
      %p146 = scmp.eq.s32.totalorder %s24, 1
      %p147 = scmp.ne.s32.totalorder %s142, %s144
      %p148 = scmp.eq.s32.totalorder %s24, 0
      %p149 = por %p147, %p148
      %p150 = scmp.ne.s32.totalorder %s142, %s144
      %p151 = scmp.eq.s32.totalorder %s29, 1
      %p152 = por %p150, %p151
      %p153 = scmp.ne.s32.totalorder %s144, %s145
      %p154 = scmp.eq.s32.totalorder %s29, 0
      %p155 = por %p153, %p154
      %p156 = scmp.ne.s32.totalorder %s144, %s145
      %p157 = scmp.eq.s32.totalorder %s30, 1
      %p158 = por %p156, %p157
      %p160 = scmp.ne.s32.totalorder %s145, %s159
      %p161 = scmp.eq.s32.totalorder %s30, 0
      %p162 = por %p160, %p161
      %s164 = sadd.s32 %s163, 1
      %p167 = scmp.eq.s32.totalorder %s24, 1
      %p168 = scmp.ne.s32.totalorder %s163, %s165
      %p169 = scmp.eq.s32.totalorder %s24, 0
      %p170 = por %p168, %p169
      %p171 = scmp.ne.s32.totalorder %s163, %s165
      %p172 = scmp.eq.s32.totalorder %s29, 1
      %p173 = por %p171, %p172
      %p174 = scmp.ne.s32.totalorder %s165, %s166
      %p175 = scmp.eq.s32.totalorder %s29, 0
      %p176 = por %p174, %p175
      %p177 = scmp.ne.s32.totalorder %s165, %s166
      %p178 = scmp.eq.s32.totalorder %s30, 1
      %p179 = por %p177, %p178
      %p181 = scmp.ne.s32.totalorder %s166, %s180
      %p182 = scmp.eq.s32.totalorder %s30, 0
      %p183 = por %p181, %p182
      %s184 = ssub.s32 %s24, %s31
      %p185 = scmp.eq.s32.totalorder %s184, 0
      %s187 = sadd.s32 %s186, 1
      %s188 = scalar_select %p185, %s186, %s187
      %p191 = pneg %p185
      %p192 = scmp.eq.s32.totalorder %s24, 1
      %p193 = por %p191, %p192
      %p194 = scmp.ne.s32.totalorder %s186, %s189
      %p195 = scmp.eq.s32.totalorder %s24, 0
      %p196 = por %p194, %p195
      %p197 = scmp.ne.s32.totalorder %s186, %s189
      %p198 = scmp.eq.s32.totalorder %s29, 1
      %p199 = por %p197, %p198
      %p200 = scmp.ne.s32.totalorder %s189, %s190
      %p201 = scmp.eq.s32.totalorder %s29, 0
      %p202 = por %p200, %p201
      %p203 = scmp.ne.s32.totalorder %s189, %s190
      %p204 = scmp.eq.s32.totalorder %s30, 1
      %p205 = por %p203, %p204
      %p207 = scmp.ne.s32.totalorder %s190, %s206
      %p208 = scmp.eq.s32.totalorder %s30, 0
      %p209 = por %p207, %p208
      %p210 = scmp.le.s32.totalorder 1, %s24
      %p211 = scmp.lt.s32.totalorder %s24, 3
      %p212 = pnand %p210, %p211
      %p213 = pneg %p212
      // Predicated region
      $region9: #{tpu_custom_call.1} parent=5 // pred_check
        _
      $region10: #{tpu_custom_call.1} parent=5 // pred_check_branch
        %215 = sbr.rel (%p212) target = $region12
      $region11: #{tpu_custom_call.1} parent=5 // pred_region
        %s216 = ssub.s32 %s24, 1
        // Predicated region
        $region13: #{tpu_custom_call.1} parent=11 // pred_check
          %p217 = pneg %p71
        $region14: #{tpu_custom_call.1} parent=11 // pred_check_branch
          %219 = sbr.rel (%p217) target = $region16
        $region15: #{tpu_custom_call.1} parent=11 // pred_region
          %s221 = ssub.s32 1024, 1024
          %222 = vsyncadd [#allocation8], %s221
          %s223 = sshll.u32 [#allocation7], 4
          %s224 = int_to_ptr.vmem [resolvable:$true] %s223
          %229 = dma.hbm_to_vmem [thread:$0]  %s2, 1024, %s224, [#allocation8], 64, 64, 4
        $region16: #{tpu_custom_call.1} parent=11 // pred_fallthru
          _
        // Predicated region
        $region17: #{tpu_custom_call.1} parent=11 // pred_check
          %p230 = pneg %p92
        $region18: #{tpu_custom_call.1} parent=11 // pred_check_branch
          %232 = sbr.rel (%p230) target = $region20
        $region19: #{tpu_custom_call.1} parent=11 // pred_region
          %s234 = ssub.s32 2048, 2048
          %235 = vsyncadd [#allocation8], %s234
          %s236 = sshll.u32 [#allocation9], 4
          %s237 = int_to_ptr.vmem [resolvable:$true] %s236
          %242 = dma.hbm_to_vmem [thread:$0]  %s3, 2048, %s237, [#allocation8], 128, 128, 8
        $region20: #{tpu_custom_call.1} parent=11 // pred_fallthru
          _
        // Predicated region
        $region21: #{tpu_custom_call.1} parent=11 // pred_check
          %p243 = pneg %p113
        $region22: #{tpu_custom_call.1} parent=11 // pred_check_branch
          %245 = sbr.rel (%p243) target = $region24
        $region23: #{tpu_custom_call.1} parent=11 // pred_region
          %s247 = ssub.s32 8192, 8192
          %248 = vsyncadd [#allocation11], %s247
          %s249 = sshll.u32 [#allocation10], 4
          %s250 = int_to_ptr.vmem [resolvable:$true] %s249
          %255 = dma.hbm_to_vmem [thread:$0]  %s4, 8192, %s250, [#allocation11], 256, 256, 16
        $region24: #{tpu_custom_call.1} parent=11 // pred_fallthru
          _
        // Predicated region
        $region25: #{tpu_custom_call.1} parent=11 // pred_check
          %p256 = pneg %p134
        $region26: #{tpu_custom_call.1} parent=11 // pred_check_branch
          %258 = sbr.rel (%p256) target = $region28
        $region27: #{tpu_custom_call.1} parent=11 // pred_region
          %s260 = ssub.s32 32768, 32768
          %261 = vsyncadd [#allocation11], %s260
          %s262 = sshll.u32 [#allocation12], 4
          %s263 = int_to_ptr.vmem [resolvable:$true] %s262
          %268 = dma.hbm_to_vmem [thread:$0]  %s5, 32768, %s263, [#allocation11], 512, 512, 32
        $region28: #{tpu_custom_call.1} parent=11 // pred_fallthru
          _
        // Predicated region
        $region29: #{tpu_custom_call.1} parent=11 // pred_check
          %p269 = pneg %p155
        $region30: #{tpu_custom_call.1} parent=11 // pred_check_branch
          %271 = sbr.rel (%p269) target = $region32
        $region31: #{tpu_custom_call.1} parent=11 // pred_region
          %s273 = ssub.s32 57344, 57344
          %274 = vsyncadd [#allocation14], %s273
          %s275 = sshll.u32 [#allocation13], 4
          %s276 = int_to_ptr.vmem [resolvable:$true] %s275
          %281 = dma.hbm_to_vmem [thread:$0]  %s6, 57344, %s276, [#allocation14], 448, 448, 28
        $region32: #{tpu_custom_call.1} parent=11 // pred_fallthru
          _
        // Predicated region
        $region33: #{tpu_custom_call.1} parent=11 // pred_check
          %p282 = pneg %p176
        $region34: #{tpu_custom_call.1} parent=11 // pred_check_branch
          %284 = sbr.rel (%p282) target = $region36
        $region35: #{tpu_custom_call.1} parent=11 // pred_region
          %s286 = ssub.s32 800, 800
          %287 = vsyncadd [#allocation14], %s286
          %s289 = sshll.u32 [#allocation15], 4
          %s290 = int_to_ptr.vmem [resolvable:$true] %s289
          %292 = dma.hbm_to_vmem [thread:$0]  %s7, 800, %s290, [#allocation14]
        $region36: #{tpu_custom_call.1} parent=11 // pred_fallthru
          _
      $region12: #{tpu_custom_call.1} parent=5 // pred_fallthru
        _
      %p293 = scmp.lt.s32.totalorder %s24, 2
      // Predicated region
      $region37: #{tpu_custom_call.1} parent=5 // pred_check
        %p294 = pneg %p293
      $region38: #{tpu_custom_call.1} parent=5 // pred_check_branch
        %296 = sbr.rel (%p294) target = $region40
      $region39: #{tpu_custom_call.1} parent=5 // pred_region
        // Predicated region
        $region41: #{tpu_custom_call.1} parent=39 // pred_check
          %p297 = pneg %p44
        $region42: #{tpu_custom_call.1} parent=39 // pred_check_branch
          %299 = sbr.rel (%p297) target = $region44
        $region43: #{tpu_custom_call.1} parent=39 // pred_region
          %s300 = sand.u32 %s34, 1
          %s301 = scalar_lea.sflag [#allocation5], %s300
          %s302 = sand.u32 %s34, 1
          %s303 = smul.addr %s302, 16
          %s304 = scalar_lea.vmem [#allocation4], %s303
          %s306 = ssub.s32 256, 256
          %307 = vsyncadd %s301, %s306
          %s308 = smul.addr %s24, 4
          %s309 = smul.addr %s308, 64
          %s310 = scalar_lea.hbm %s1, %s309
          %s311 = sshll.u32 %s304, 4
          %s312 = int_to_ptr.vmem [resolvable:$true] %s311
          %317 = dma.hbm_to_vmem [thread:$0]  %s310, 256, %s312, %s301, 64, 64, 4
        $region44: #{tpu_custom_call.1} parent=39 // pred_fallthru
          _
      $region40: #{tpu_custom_call.1} parent=5 // pred_fallthru
        _
      %p318 = scmp.le.s32.totalorder 1, %s24
      %p319 = scmp.lt.s32.totalorder %s24, 3
      %p320 = pnand %p318, %p319
      %p321 = pneg %p320
      // Predicated region
      $region45: #{tpu_custom_call.1} parent=5 // pred_check
        _
      $region46: #{tpu_custom_call.1} parent=5 // pred_check_branch
        %323 = sbr.rel (%p320) target = $region48
      $region47: #{tpu_custom_call.1} parent=5 // pred_region
        %s324 = ssub.s32 %s24, 1
        %s325 = sand.u32 %s37, 1
        %s326 = scalar_lea.sflag [#allocation5], %s325
        %s327 = sand.u32 %s37, 1
        %s328 = smul.addr %s327, 16
        %s329 = scalar_lea.vmem [#allocation4], %s328
        // Predicated region
        $region49: #{tpu_custom_call.1} parent=47 // pred_check
          %p330 = pneg %p50
        $region50: #{tpu_custom_call.1} parent=47 // pred_check_branch
          %332 = sbr.rel (%p330) target = $region52
        $region51: #{tpu_custom_call.1} parent=47 // pred_region
          %333 = dma.done %s326, 256
        $region52: #{tpu_custom_call.1} parent=47 // pred_fallthru
          _
        // Predicated region
        $region53: #{tpu_custom_call.1} parent=47 // pred_check
          %p334 = pneg %p71
        $region54: #{tpu_custom_call.1} parent=47 // pred_check_branch
          %336 = sbr.rel (%p334) target = $region56
        $region55: #{tpu_custom_call.1} parent=47 // pred_region
          %337 = dma.done [#allocation8], 1024
        $region56: #{tpu_custom_call.1} parent=47 // pred_fallthru
          _
        // Predicated region
        $region57: #{tpu_custom_call.1} parent=47 // pred_check
          %p338 = pneg %p92
        $region58: #{tpu_custom_call.1} parent=47 // pred_check_branch
          %340 = sbr.rel (%p338) target = $region60
        $region59: #{tpu_custom_call.1} parent=47 // pred_region
          %341 = dma.done [#allocation8], 2048
        $region60: #{tpu_custom_call.1} parent=47 // pred_fallthru
          _
        // Predicated region
        $region61: #{tpu_custom_call.1} parent=47 // pred_check
          %p342 = pneg %p113
        $region62: #{tpu_custom_call.1} parent=47 // pred_check_branch
          %344 = sbr.rel (%p342) target = $region64
        $region63: #{tpu_custom_call.1} parent=47 // pred_region
          %345 = dma.done [#allocation11], 8192
        $region64: #{tpu_custom_call.1} parent=47 // pred_fallthru
          _
        // Predicated region
        $region65: #{tpu_custom_call.1} parent=47 // pred_check
          %p346 = pneg %p134
        $region66: #{tpu_custom_call.1} parent=47 // pred_check_branch
          %348 = sbr.rel (%p346) target = $region68
        $region67: #{tpu_custom_call.1} parent=47 // pred_region
          %349 = dma.done [#allocation11], 32768
        $region68: #{tpu_custom_call.1} parent=47 // pred_fallthru
          _
        // Predicated region
        $region69: #{tpu_custom_call.1} parent=47 // pred_check
          %p350 = pneg %p155
        $region70: #{tpu_custom_call.1} parent=47 // pred_check_branch
          %352 = sbr.rel (%p350) target = $region72
        $region71: #{tpu_custom_call.1} parent=47 // pred_region
          %353 = dma.done [#allocation14], 57344
        $region72: #{tpu_custom_call.1} parent=47 // pred_fallthru
          _
        // Predicated region
        $region73: #{tpu_custom_call.1} parent=47 // pred_check
          %p354 = pneg %p176
        $region74: #{tpu_custom_call.1} parent=47 // pred_check_branch
          %356 = sbr.rel (%p354) target = $region76
        $region75: #{tpu_custom_call.1} parent=47 // pred_region
          %357 = dma.done [#allocation14], 800
        $region76: #{tpu_custom_call.1} parent=47 // pred_fallthru
          _
        %s358 = sand.u32 %s37, 1
        %s359 = scalar_lea.sflag [#allocation5], %s358
        %s360 = sand.u32 %s37, 1
        %s361 = smul.addr %s360, 16
        %s362 = scalar_lea.vmem [#allocation4], %s361
        %p363 = pneg %p50
        %p364 = pneg %p47
        %p365 = pneg %p71
        %p366 = pneg %p68
        %p367 = pneg %p92
        %p368 = pneg %p89
        %p369 = pneg %p113
        %p370 = pneg %p110
        %p371 = pneg %p134
        %p372 = pneg %p131
        %p373 = pneg %p155
        %p374 = pneg %p152
        %p375 = pneg %p176
        %p376 = pneg %p173
        %p377 = pneg %p202
        %p378 = pneg %p199
        %s379 = sand.u32 %s189, 1
        %s380 = scalar_lea.sflag [#allocation6], %s379
        %s381 = sand.u32 %s189, 1
        %s382 = smul.addr %s381, 112
        %s383 = scalar_lea.vmem [#allocation16], %s382
        %s385 = sld [smem:[#allocation3]]
        %v386 = vld [vmem:[%s329] sm:$0xf]
        %v387 = vld [vmem:[%s329 + $0x4] sm:$0xf]
        %v388 = vld [vmem:[%s329 + $0x8] sm:$0xf]
        %v389 = vld [vmem:[%s329 + $0xc] sm:$0xf]
        %v390 = vld [vmem:[#allocation7] sm:$0xf]
        %v391 = vld [vmem:[#allocation7 + $0x4] sm:$0xf]
        %v392 = vld [vmem:[#allocation7 + $0x8] sm:$0xf]
        %v393 = vld [vmem:[#allocation7 + $0xc] sm:$0xf]
        %v394 = vld [vmem:[#allocation7 + $0x10] sm:$0xf]
        %v395 = vld [vmem:[#allocation7 + $0x14] sm:$0xf]
        %v396 = vld [vmem:[#allocation7 + $0x18] sm:$0xf]
        %v397 = vld [vmem:[#allocation7 + $0x1c] sm:$0xf]
        %v398 = vld [vmem:[#allocation7 + $0x20] sm:$0xf]
        %v399 = vld [vmem:[#allocation7 + $0x24] sm:$0xf]
        %v400 = vld [vmem:[#allocation7 + $0x28] sm:$0xf]
        %v401 = vld [vmem:[#allocation7 + $0x2c] sm:$0xf]
        %v402 = vld [vmem:[#allocation7 + $0x30] sm:$0xf]
        %v403 = vld [vmem:[#allocation7 + $0x34] sm:$0xf]
        %v404 = vld [vmem:[#allocation7 + $0x38] sm:$0xf]
        %v405 = vld [vmem:[#allocation7 + $0x3c] sm:$0xf]
        %v406 = vld [vmem:[#allocation15] sm:$0x1]
        %v408 = vlaneseq
        %v409 = vshrl.u32 %v408, 7
        %v410 = vsub.s32 0, %v409
        %v411 = vrot.slane %v406, %v410
        %v417 = vunpack.c.l.b16 %v386
        %v418 = vunpack.c.l.b16 %v387
        %v419 = vunpack.c.l.b16 %v388
        %v420 = vunpack.c.l.b16 %v389
        %v421 = vpack.c.b16 %v418, %v417
        %v422 = vpack.c.b16 %v420, %v419
        %v441 = vunpack.c.l.b16 %v390
        %v442 = vunpack.c.l.b16 %v391
        %v443 = vunpack.c.l.b16 %v392
        %v444 = vunpack.c.l.b16 %v393
        %v445 = vunpack.c.l.b16 %v394
        %v446 = vunpack.c.l.b16 %v395
        %v447 = vunpack.c.l.b16 %v396
        %v448 = vunpack.c.l.b16 %v397
        %v449 = vunpack.c.l.b16 %v398
        %v450 = vunpack.c.l.b16 %v399
        %v451 = vunpack.c.l.b16 %v400
        %v452 = vunpack.c.l.b16 %v401
        %v453 = vunpack.c.l.b16 %v402
        %v454 = vunpack.c.l.b16 %v403
        %v455 = vunpack.c.l.b16 %v404
        %v456 = vunpack.c.l.b16 %v405
        %v457 = vpack.c.b16 %v442, %v441
        %v458 = vpack.c.b16 %v444, %v443
        %v459 = vpack.c.b16 %v446, %v445
        %v460 = vpack.c.b16 %v448, %v447
        %v461 = vpack.c.b16 %v450, %v449
        %v462 = vpack.c.b16 %v452, %v451
        %v463 = vpack.c.b16 %v454, %v453
        %v464 = vpack.c.b16 %v456, %v455
        %473 = vmatprep.subr.bf16.mxu0 0
        %474 = vmatpush1.bf16.msra.mxu0 %v457
        %475 = vmatprep.subr.bf16.mxu0 0
        %476 = vmatpush1.bf16.msra.mxu0 %v458
        %477 = vmatprep.subr.bf16.mxu0 0
        %478 = vmatpush1.bf16.msra.mxu0 %v459
        %479 = vmatprep.subr.bf16.mxu0 0
        %480 = vmatpush1.bf16.msra.mxu0 %v460
        %481 = vmatprep.subr.bf16.mxu0 0
        %482 = vmatpush1.bf16.msra.mxu0 %v461
        %483 = vmatprep.subr.bf16.mxu0 0
        %484 = vmatpush1.bf16.msra.mxu0 %v462
        %485 = vmatprep.subr.bf16.mxu0 0
        %486 = vmatpush1.bf16.msra.mxu0 %v463
        %487 = vmatprep.subr.bf16.mxu0 0
        %488 = vmatpush1.bf16.msra.mxu0 %v464
        %489 = vmatprep.subr.bf16.mxu0 0
        %490 = vmatpush1.bf16.msra.mxu0 0
        %491 = vmatprep.subr.bf16.mxu0 0
        %492 = vmatpush1.bf16.msra.mxu0 0
        %493 = vmatprep.subr.bf16.mxu0 0
        %494 = vmatpush1.bf16.msra.mxu0 0
        %495 = vmatprep.subr.bf16.mxu0 0
        %496 = vmatpush1.bf16.msra.mxu0 0
        %497 = vmatprep.subr.bf16.mxu0 0
        %498 = vmatpush1.bf16.msra.mxu0 0
        %499 = vmatprep.subr.bf16.mxu0 0
        %500 = vmatpush1.bf16.msra.mxu0 0
        %501 = vmatprep.subr.bf16.mxu0 0
        %502 = vmatpush1.bf16.msra.mxu0 0
        %503 = vmatprep.subr.bf16.mxu0 0
        %504 = vmatpush1.bf16.msra.mxu0 0
        %505 = vmatprep.mubr.bf16.mxu0 0
        %506 = vmatmul.mubr.bf16.gmra.mrb[0].mxu0 %v421
        %v507 = vpop.f32.mrb[0].mxu0
        %v508 = vadd.f32 %v411, %v507
        %v509 = vpop.f32.mrb[0].mxu0
        %v510 = vpop.f32.mrb[0].mxu0
        %v511 = vadd.f32 %v411, %v510
        %v512 = vpop.f32.mrb[0].mxu0
        %513 = vmatprep.mubr.bf16.mxu0 0
        %514 = vmatmul.mubr.bf16.gmra.mrb[0].mxu0 %v422
        %v515 = vpop.f32.mrb[0].mxu0
        %v516 = vadd.f32 %v411, %v515
        %v517 = vpop.f32.mrb[0].mxu0
        %v518 = vpop.f32.mrb[0].mxu0
        %v519 = vadd.f32 %v411, %v518
        %v520 = vpop.f32.mrb[0].mxu0
        %521 = vdwg.mxu0
        %vm522 = vcmp.gt.f32.partialorder %v508, 0.0
        %vm523 = vcmp.gt.f32.partialorder %v511, 0.0
        %vm524 = vcmp.gt.f32.partialorder %v516, 0.0
        %vm525 = vcmp.gt.f32.partialorder %v519, 0.0
        %v526 = vmul.f32 %v508, 0.2
        %v527 = vmul.f32 %v511, 0.2
        %v528 = vmul.f32 %v516, 0.2
        %v529 = vmul.f32 %v519, 0.2
        %v530 = vsel %vm522, %v508, %v526
        %v531 = vsel %vm523, %v511, %v527
        %v532 = vsel %vm524, %v516, %v528
        %v533 = vsel %vm525, %v519, %v529
        %v534 = vpack.c.bf16 %v531, %v530
        %v535 = vpack.c.bf16 %v533, %v532
        %v536 = vld [vmem:[#allocation9] sm:$0xff]
        %v537 = vld [vmem:[#allocation9 + $0x8] sm:$0xff]
        %v538 = vld [vmem:[#allocation9 + $0x10] sm:$0xff]
        %v539 = vld [vmem:[#allocation9 + $0x18] sm:$0xff]
        %v540 = vld [vmem:[#allocation9 + $0x20] sm:$0xff]
        %v541 = vld [vmem:[#allocation9 + $0x28] sm:$0xff]
        %v542 = vld [vmem:[#allocation9 + $0x30] sm:$0xff]
        %v543 = vld [vmem:[#allocation9 + $0x38] sm:$0xff]
        %v544 = vld [vmem:[#allocation9 + $0x40] sm:$0xff]
        %v545 = vld [vmem:[#allocation9 + $0x48] sm:$0xff]
        %v546 = vld [vmem:[#allocation9 + $0x50] sm:$0xff]
        %v547 = vld [vmem:[#allocation9 + $0x58] sm:$0xff]
        %v548 = vld [vmem:[#allocation9 + $0x60] sm:$0xff]
        %v549 = vld [vmem:[#allocation9 + $0x68] sm:$0xff]
        %v550 = vld [vmem:[#allocation9 + $0x70] sm:$0xff]
        %v551 = vld [vmem:[#allocation9 + $0x78] sm:$0xff]
        %v552 = vld [vmem:[#allocation15 + $0x1] sm:$0x3]
        %v554 = vlaneseq
        %v555 = vshrl.u32 %v554, 7
        %v556 = vsub.s32 0, %v555
        %v557 = vrot.slane %v552, %v556
        %v558 = vlaneseq
        %v559 = vshrl.u32 %v558, 7
        %v560 = vsub.s32 1, %v559
        %v561 = vrot.slane %v552, %v560
        %v580 = vunpack.c.l.b16 %v536
        %v581 = vunpack.c.h.b16 %v536
        %v582 = vunpack.c.l.b16 %v537
        %v583 = vunpack.c.h.b16 %v537
        %v584 = vunpack.c.l.b16 %v538
        %v585 = vunpack.c.h.b16 %v538
        %v586 = vunpack.c.l.b16 %v539
        %v587 = vunpack.c.h.b16 %v539
        %v588 = vunpack.c.l.b16 %v540
        %v589 = vunpack.c.h.b16 %v540
        %v590 = vunpack.c.l.b16 %v541
        %v591 = vunpack.c.h.b16 %v541
        %v592 = vunpack.c.l.b16 %v542
        %v593 = vunpack.c.h.b16 %v542
        %v594 = vunpack.c.l.b16 %v543
        %v595 = vunpack.c.h.b16 %v543
        %v596 = vunpack.c.l.b16 %v544
        %v597 = vunpack.c.h.b16 %v544
        %v598 = vunpack.c.l.b16 %v545
        %v599 = vunpack.c.h.b16 %v545
        %v600 = vunpack.c.l.b16 %v546
        %v601 = vunpack.c.h.b16 %v546
        %v602 = vunpack.c.l.b16 %v547
        %v603 = vunpack.c.h.b16 %v547
        %v604 = vunpack.c.l.b16 %v548
        %v605 = vunpack.c.h.b16 %v548
        %v606 = vunpack.c.l.b16 %v549
        %v607 = vunpack.c.h.b16 %v549
        %v608 = vunpack.c.l.b16 %v550
        %v609 = vunpack.c.h.b16 %v550
        %v610 = vunpack.c.l.b16 %v551
        %v611 = vunpack.c.h.b16 %v551
        %v612 = vpack.c.b16 %v582, %v580
        %v613 = vpack.c.b16 %v583, %v581
        %v614 = vpack.c.b16 %v586, %v584
        %v615 = vpack.c.b16 %v587, %v585
        %v616 = vpack.c.b16 %v590, %v588
        %v617 = vpack.c.b16 %v591, %v589
        %v618 = vpack.c.b16 %v594, %v592
        %v619 = vpack.c.b16 %v595, %v593
        %v620 = vpack.c.b16 %v598, %v596
        %v621 = vpack.c.b16 %v599, %v597
        %v622 = vpack.c.b16 %v602, %v600
        %v623 = vpack.c.b16 %v603, %v601
        %v624 = vpack.c.b16 %v606, %v604
        %v625 = vpack.c.b16 %v607, %v605
        %v626 = vpack.c.b16 %v610, %v608
        %v627 = vpack.c.b16 %v611, %v609
        %644 = vmatprep.subr.bf16.mxu0 %v613
        %645 = vmatpush1.bf16.msra.mxu0 %v612
        %646 = vmatprep.subr.bf16.mxu0 %v615
        %647 = vmatpush1.bf16.msra.mxu0 %v614
        %648 = vmatprep.subr.bf16.mxu0 %v617
        %649 = vmatpush1.bf16.msra.mxu0 %v616
        %650 = vmatprep.subr.bf16.mxu0 %v619
        %651 = vmatpush1.bf16.msra.mxu0 %v618
        %652 = vmatprep.subr.bf16.mxu0 %v621
        %653 = vmatpush1.bf16.msra.mxu0 %v620
        %654 = vmatprep.subr.bf16.mxu0 %v623
        %655 = vmatpush1.bf16.msra.mxu0 %v622
        %656 = vmatprep.subr.bf16.mxu0 %v625
        %657 = vmatpush1.bf16.msra.mxu0 %v624
        %658 = vmatprep.subr.bf16.mxu0 %v627
        %659 = vmatpush1.bf16.msra.mxu0 %v626
        %660 = vmatprep.subr.bf16.mxu0 0
        %661 = vmatpush1.bf16.msra.mxu0 0
        %662 = vmatprep.subr.bf16.mxu0 0
        %663 = vmatpush1.bf16.msra.mxu0 0
        %664 = vmatprep.subr.bf16.mxu0 0
        %665 = vmatpush1.bf16.msra.mxu0 0
        %666 = vmatprep.subr.bf16.mxu0 0
        %667 = vmatpush1.bf16.msra.mxu0 0
        %668 = vmatprep.subr.bf16.mxu0 0
        %669 = vmatpush1.bf16.msra.mxu0 0
        %670 = vmatprep.subr.bf16.mxu0 0
        %671 = vmatpush1.bf16.msra.mxu0 0
        %672 = vmatprep.subr.bf16.mxu0 0
        %673 = vmatpush1.bf16.msra.mxu0 0
        %674 = vmatprep.subr.bf16.mxu0 0
        %675 = vmatpush1.bf16.msra.mxu0 0
        %676 = vmatprep.mubr.bf16.mxu0 0
        %677 = vmatmul.mubr.bf16.gmra.mrb[0].mxu0 %v534
        %v678 = vpop.f32.mrb[0].mxu0
        %v679 = vadd.f32 %v557, %v678
        %v680 = vpop.f32.mrb[0].mxu0
        %v681 = vadd.f32 %v561, %v680
        %v682 = vpop.f32.mrb[0].mxu0
        %v683 = vadd.f32 %v557, %v682
        %v684 = vpop.f32.mrb[0].mxu0
        %v685 = vadd.f32 %v561, %v684
        %686 = vmatprep.mubr.bf16.mxu0 0
        %687 = vmatmul.mubr.bf16.gmra.mrb[0].mxu0 %v535
        %v688 = vpop.f32.mrb[0].mxu0
        %v689 = vadd.f32 %v557, %v688
        %v690 = vpop.f32.mrb[0].mxu0
        %v691 = vadd.f32 %v561, %v690
        %v692 = vpop.f32.mrb[0].mxu0
        %v693 = vadd.f32 %v557, %v692
        %v694 = vpop.f32.mrb[0].mxu0
        %v695 = vadd.f32 %v561, %v694
        %696 = vdwg.mxu0
        %v697 = vld [vmem:[#allocation15 + $0x3] sm:$0x3]
        %v698 = vld [vmem:[#allocation15 + $0x5] sm:$0x3]
        %v699 = vlaneseq
        %v700 = vshrl.u32 %v699, 7
        %v701 = vadd.s32 %v700, 8
        %v702 = vadd.s32 %v700, 16
        %v703 = vadd.s32 %v700, 24
        %v704 = vstv %s385
        %vm705 = vcmp.lt.s32.totalorder %v700, %v704
        %vm706 = vcmp.lt.s32.totalorder %v701, %v704
        %vm707 = vcmp.lt.s32.totalorder %v702, %v704
        %vm708 = vcmp.lt.s32.totalorder %v703, %v704
        %v709 = vsel %vm705, 1, 0
        %v710 = vsel %vm706, 1, 0
        %v711 = vsel %vm707, 1, 0
        %v712 = vsel %vm708, 1, 0
        %v713 = vcvt.s32.f32 %v709
        %v714 = vcvt.s32.f32 %v710
        %v715 = vcvt.s32.f32 %v711
        %v716 = vcvt.s32.f32 %v712
        %s717 = scvt.s32.f32 %s385
        %v718 = vstv %s717
        %v719 = vrcp.pop %v718
        %s720 = vtos %v719
        %v721 = vmul.f32 %v679, %v713
        %v722 = vmul.f32 %v681, %v713
        %v723 = vmul.f32 %v683, %v714
        %v724 = vmul.f32 %v685, %v714
        %v725 = vmul.f32 %v689, %v715
        %v726 = vmul.f32 %v691, %v715
        %v727 = vmul.f32 %v693, %v716
        %v728 = vmul.f32 %v695, %v716
        %v729 = vadd.f32 %v721, %v723
        %v730 = vadd.f32 %v729, %v725
        %v731 = vadd.f32 %v730, %v727
        %v732 = vrot.slane %v731, 4
        %v733 = vadd.f32 %v731, %v732
        %v734 = vrot.slane %v733, 2
        %v735 = vadd.f32 %v733, %v734
        %v736 = vrot.slane %v735, 1
        %v737 = vadd.f32 %v735, %v736
        %v738 = vadd.f32 %v722, %v724
        %v739 = vadd.f32 %v738, %v726
        %v740 = vadd.f32 %v739, %v728
        %v741 = vrot.slane %v740, 4
        %v742 = vadd.f32 %v740, %v741
        %v743 = vrot.slane %v742, 2
        %v744 = vadd.f32 %v742, %v743
        %v745 = vrot.slane %v744, 1
        %v746 = vadd.f32 %v744, %v745
        %v747 = vstv %s720
        %v748 = vmul.f32 %v737, %v747
        %v749 = vmul.f32 %v746, %v747
        %v750 = vsub.f32 %v679, %v748
        %v751 = vsub.f32 %v681, %v749
        %v752 = vsub.f32 %v683, %v748
        %v753 = vsub.f32 %v685, %v749
        %v754 = vsub.f32 %v689, %v748
        %v755 = vsub.f32 %v691, %v749
        %v756 = vsub.f32 %v693, %v748
        %v757 = vsub.f32 %v695, %v749
        %v758 = vmul.f32 %v750, %v713
        %v759 = vmul.f32 %v751, %v713
        %v760 = vmul.f32 %v752, %v714
        %v761 = vmul.f32 %v753, %v714
        %v762 = vmul.f32 %v754, %v715
        %v763 = vmul.f32 %v755, %v715
        %v764 = vmul.f32 %v756, %v716
        %v765 = vmul.f32 %v757, %v716
        %v766 = vmul.f32 %v758, %v758
        %v767 = vmul.f32 %v759, %v759
        %v768 = vmul.f32 %v760, %v760
        %v769 = vmul.f32 %v761, %v761
        %v770 = vmul.f32 %v762, %v762
        %v771 = vmul.f32 %v763, %v763
        %v772 = vmul.f32 %v764, %v764
        %v773 = vmul.f32 %v765, %v765
        %v774 = vadd.f32 %v766, %v768
        %v775 = vadd.f32 %v774, %v770
        %v776 = vadd.f32 %v775, %v772
        %v777 = vrot.slane %v776, 4
        %v778 = vadd.f32 %v776, %v777
        %v779 = vrot.slane %v778, 2
        %v780 = vadd.f32 %v778, %v779
        %v781 = vrot.slane %v780, 1
        %v782 = vadd.f32 %v780, %v781
        %v783 = vadd.f32 %v767, %v769
        %v784 = vadd.f32 %v783, %v771
        %v785 = vadd.f32 %v784, %v773
        %v786 = vrot.slane %v785, 4
        %v787 = vadd.f32 %v785, %v786
        %v788 = vrot.slane %v787, 2
        %v789 = vadd.f32 %v787, %v788
        %v790 = vrot.slane %v789, 1
        %v791 = vadd.f32 %v789, %v790
        %v792 = vmul.f32 %v782, %v747
        %v793 = vmul.f32 %v791, %v747
        %v794 = vadd.f32 %v792, 1e-05
        %v795 = vadd.f32 %v793, 1e-05
        %v796 = vrsqrt.pop %v794
        %v797 = vrsqrt.pop %v795
        %v799 = vlaneseq
        %v800 = vshrl.u32 %v799, 7
        %v801 = vsub.s32 0, %v800
        %v802 = vrot.slane %v697, %v801
        %v803 = vlaneseq
        %v804 = vshrl.u32 %v803, 7
        %v805 = vsub.s32 1, %v804
        %v806 = vrot.slane %v697, %v805
        %v809 = vmul.f32 %v796, %v802
        %v810 = vmul.f32 %v797, %v806
        %v811 = vmul.f32 %v748, %v809
        %v812 = vmul.f32 %v749, %v810
        %v815 = vcombine.low %v811, %v812
        %v817 = vunpack.c.l.s4 1966171168
        %v818 = vunpack.c.0.s8 %v817
        %v819 = vlaneseq
        %v820 = vshrl.u32 %v819, 7
        %v821 = vsub.s32 %v818, %v820
        %v822 = vrot.slane %v815, %v821
        %v824 = vunpack.c.l.s4 1966171168
        %v825 = vunpack.c.0.s8 %v824
        %v826 = vlaneseq
        %v827 = vshrl.u32 %v826, 7
        %v828 = vsub.s32 %v825, %v827
        %v829 = vrot.slane %v822, %v828
        %v831 = vsub.f32 %v698, %v829
        %v832 = vlaneseq
        %v833 = vshrl.u32 %v832, 7
        %v834 = vsub.s32 0, %v833
        %v835 = vrot.slane %v809, %v834
        %v836 = vlaneseq
        %v837 = vshrl.u32 %v836, 7
        %v838 = vsub.s32 0, %v837
        %v839 = vrot.slane %v810, %v838
        %v840 = vmul.f32 %v679, %v835
        %v841 = vmul.f32 %v681, %v839
        %v842 = vmul.f32 %v683, %v835
        %v843 = vmul.f32 %v685, %v839
        %v844 = vmul.f32 %v689, %v835
        %v845 = vmul.f32 %v691, %v839
        %v846 = vmul.f32 %v693, %v835
        %v847 = vmul.f32 %v695, %v839
        %v849 = vlaneseq
        %v850 = vshrl.u32 %v849, 7
        %v851 = vsub.s32 0, %v850
        %v852 = vrot.slane %v831, %v851
        %v853 = vlaneseq
        %v854 = vshrl.u32 %v853, 7
        %v855 = vsub.s32 1, %v854
        %v856 = vrot.slane %v831, %v855
        %v859 = vadd.f32 %v840, %v852
        %v860 = vadd.f32 %v841, %v856
        %v861 = vadd.f32 %v842, %v852
        %v862 = vadd.f32 %v843, %v856
        %v863 = vadd.f32 %v844, %v852
        %v864 = vadd.f32 %v845, %v856
        %v865 = vadd.f32 %v846, %v852
        %v866 = vadd.f32 %v847, %v856
        %vm867 = vcmp.gt.f32.partialorder %v859, 0.0
        %vm868 = vcmp.gt.f32.partialorder %v860, 0.0
        %vm869 = vcmp.gt.f32.partialorder %v861, 0.0
        %vm870 = vcmp.gt.f32.partialorder %v862, 0.0
        %vm871 = vcmp.gt.f32.partialorder %v863, 0.0
        %vm872 = vcmp.gt.f32.partialorder %v864, 0.0
        %vm873 = vcmp.gt.f32.partialorder %v865, 0.0
        %vm874 = vcmp.gt.f32.partialorder %v866, 0.0
        %v875 = vmul.f32 %v859, 0.2
        %v876 = vmul.f32 %v860, 0.2
        %v877 = vmul.f32 %v861, 0.2
        %v878 = vmul.f32 %v862, 0.2
        %v879 = vmul.f32 %v863, 0.2
        %v880 = vmul.f32 %v864, 0.2
        %v881 = vmul.f32 %v865, 0.2
        %v882 = vmul.f32 %v866, 0.2
        %v883 = vsel %vm867, %v859, %v875
        %v884 = vsel %vm868, %v860, %v876
        %v885 = vsel %vm869, %v861, %v877
        %v886 = vsel %vm870, %v862, %v878
        %v887 = vsel %vm871, %v863, %v879
        %v888 = vsel %vm872, %v864, %v880
        %v889 = vsel %vm873, %v865, %v881
        %v890 = vsel %vm874, %v866, %v882
        %v891 = vpack.c.bf16 %v885, %v883
        %v892 = vpack.c.bf16 %v886, %v884
        %v893 = vpack.c.bf16 %v889, %v887
        %v894 = vpack.c.bf16 %v890, %v888
        %v895 = vld [vmem:[#allocation10] sm:$0xff]
        %v896 = vld [vmem:[#allocation10 + $0x8] sm:$0xff]
        %v897 = vld [vmem:[#allocation10 + $0x10] sm:$0xff]
        %v898 = vld [vmem:[#allocation10 + $0x18] sm:$0xff]
        %v899 = vld [vmem:[#allocation10 + $0x20] sm:$0xff]
        %v900 = vld [vmem:[#allocation10 + $0x28] sm:$0xff]
        %v901 = vld [vmem:[#allocation10 + $0x30] sm:$0xff]
        %v902 = vld [vmem:[#allocation10 + $0x38] sm:$0xff]
        %v903 = vld [vmem:[#allocation10 + $0x40] sm:$0xff]
        %v904 = vld [vmem:[#allocation10 + $0x48] sm:$0xff]
        %v905 = vld [vmem:[#allocation10 + $0x50] sm:$0xff]
        %v906 = vld [vmem:[#allocation10 + $0x58] sm:$0xff]
        %v907 = vld [vmem:[#allocation10 + $0x60] sm:$0xff]
        %v908 = vld [vmem:[#allocation10 + $0x68] sm:$0xff]
        %v909 = vld [vmem:[#allocation10 + $0x70] sm:$0xff]
        %v910 = vld [vmem:[#allocation10 + $0x78] sm:$0xff]
        %v911 = vld [vmem:[#allocation10 + $0x80] sm:$0xff]
        %v912 = vld [vmem:[#allocation10 + $0x88] sm:$0xff]
        %v913 = vld [vmem:[#allocation10 + $0x90] sm:$0xff]
        %v914 = vld [vmem:[#allocation10 + $0x98] sm:$0xff]
        %v915 = vld [vmem:[#allocation10 + $0xa0] sm:$0xff]
        %v916 = vld [vmem:[#allocation10 + $0xa8] sm:$0xff]
        %v917 = vld [vmem:[#allocation10 + $0xb0] sm:$0xff]
        %v918 = vld [vmem:[#allocation10 + $0xb8] sm:$0xff]
        %v919 = vld [vmem:[#allocation10 + $0xc0] sm:$0xff]
        %v920 = vld [vmem:[#allocation10 + $0xc8] sm:$0xff]
        %v921 = vld [vmem:[#allocation10 + $0xd0] sm:$0xff]
        %v922 = vld [vmem:[#allocation10 + $0xd8] sm:$0xff]
        %v923 = vld [vmem:[#allocation10 + $0xe0] sm:$0xff]
        %v924 = vld [vmem:[#allocation10 + $0xe8] sm:$0xff]
        %v925 = vld [vmem:[#allocation10 + $0xf0] sm:$0xff]
        %v926 = vld [vmem:[#allocation10 + $0xf8] sm:$0xff]
        %v927 = vld [vmem:[#allocation10 + $0x100] sm:$0xff]
        %v928 = vld [vmem:[#allocation10 + $0x108] sm:$0xff]
        %v929 = vld [vmem:[#allocation10 + $0x110] sm:$0xff]
        %v930 = vld [vmem:[#allocation10 + $0x118] sm:$0xff]
        %v931 = vld [vmem:[#allocation10 + $0x120] sm:$0xff]
        %v932 = vld [vmem:[#allocation10 + $0x128] sm:$0xff]
        %v933 = vld [vmem:[#allocation10 + $0x130] sm:$0xff]
        %v934 = vld [vmem:[#allocation10 + $0x138] sm:$0xff]
        %v935 = vld [vmem:[#allocation10 + $0x140] sm:$0xff]
        %v936 = vld [vmem:[#allocation10 + $0x148] sm:$0xff]
        %v937 = vld [vmem:[#allocation10 + $0x150] sm:$0xff]
        %v938 = vld [vmem:[#allocation10 + $0x158] sm:$0xff]
        %v939 = vld [vmem:[#allocation10 + $0x160] sm:$0xff]
        %v940 = vld [vmem:[#allocation10 + $0x168] sm:$0xff]
        %v941 = vld [vmem:[#allocation10 + $0x170] sm:$0xff]
        %v942 = vld [vmem:[#allocation10 + $0x178] sm:$0xff]
        %v943 = vld [vmem:[#allocation10 + $0x180] sm:$0xff]
        %v944 = vld [vmem:[#allocation10 + $0x188] sm:$0xff]
        %v945 = vld [vmem:[#allocation10 + $0x190] sm:$0xff]
        %v946 = vld [vmem:[#allocation10 + $0x198] sm:$0xff]
        %v947 = vld [vmem:[#allocation10 + $0x1a0] sm:$0xff]
        %v948 = vld [vmem:[#allocation10 + $0x1a8] sm:$0xff]
        %v949 = vld [vmem:[#allocation10 + $0x1b0] sm:$0xff]
        %v950 = vld [vmem:[#allocation10 + $0x1b8] sm:$0xff]
        %v951 = vld [vmem:[#allocation10 + $0x1c0] sm:$0xff]
        %v952 = vld [vmem:[#allocation10 + $0x1c8] sm:$0xff]
        %v953 = vld [vmem:[#allocation10 + $0x1d0] sm:$0xff]
        %v954 = vld [vmem:[#allocation10 + $0x1d8] sm:$0xff]
        %v955 = vld [vmem:[#allocation10 + $0x1e0] sm:$0xff]
        %v956 = vld [vmem:[#allocation10 + $0x1e8] sm:$0xff]
        %v957 = vld [vmem:[#allocation10 + $0x1f0] sm:$0xff]
        %v958 = vld [vmem:[#allocation10 + $0x1f8] sm:$0xff]
        %v959 = vld [vmem:[#allocation15 + $0x7] sm:$0xf]
        %v961 = vlaneseq
        %v962 = vshrl.u32 %v961, 7
        %v963 = vsub.s32 0, %v962
        %v964 = vrot.slane %v959, %v963
        %v965 = vlaneseq
        %v966 = vshrl.u32 %v965, 7
        %v967 = vsub.s32 1, %v966
        %v968 = vrot.slane %v959, %v967
        %v969 = vlaneseq
        %v970 = vshrl.u32 %v969, 7
        %v971 = vsub.s32 2, %v970
        %v972 = vrot.slane %v959, %v971
        %v973 = vlaneseq
        %v974 = vshrl.u32 %v973, 7
        %v975 = vsub.s32 3, %v974
        %v976 = vrot.slane %v959, %v975
        %v1045 = vunpack.c.l.b16 %v895
        %v1046 = vunpack.c.h.b16 %v895
        %v1047 = vunpack.c.l.b16 %v896
        %v1048 = vunpack.c.h.b16 %v896
        %v1049 = vunpack.c.l.b16 %v897
        %v1050 = vunpack.c.h.b16 %v897
        %v1051 = vunpack.c.l.b16 %v898
        %v1052 = vunpack.c.h.b16 %v898
        %v1053 = vunpack.c.l.b16 %v899
        %v1054 = vunpack.c.h.b16 %v899
        %v1055 = vunpack.c.l.b16 %v900
        %v1056 = vunpack.c.h.b16 %v900
        %v1057 = vunpack.c.l.b16 %v901
        %v1058 = vunpack.c.h.b16 %v901
        %v1059 = vunpack.c.l.b16 %v902
        %v1060 = vunpack.c.h.b16 %v902
        %v1061 = vunpack.c.l.b16 %v903
        %v1062 = vunpack.c.h.b16 %v903
        %v1063 = vunpack.c.l.b16 %v904
        %v1064 = vunpack.c.h.b16 %v904
        %v1065 = vunpack.c.l.b16 %v905
        %v1066 = vunpack.c.h.b16 %v905
        %v1067 = vunpack.c.l.b16 %v906
        %v1068 = vunpack.c.h.b16 %v906
        %v1069 = vunpack.c.l.b16 %v907
        %v1070 = vunpack.c.h.b16 %v907
        %v1071 = vunpack.c.l.b16 %v908
        %v1072 = vunpack.c.h.b16 %v908
        %v1073 = vunpack.c.l.b16 %v909
        %v1074 = vunpack.c.h.b16 %v909
        %v1075 = vunpack.c.l.b16 %v910
        %v1076 = vunpack.c.h.b16 %v910
        %v1077 = vunpack.c.l.b16 %v911
        %v1078 = vunpack.c.h.b16 %v911
        %v1079 = vunpack.c.l.b16 %v912
        %v1080 = vunpack.c.h.b16 %v912
        %v1081 = vunpack.c.l.b16 %v913
        %v1082 = vunpack.c.h.b16 %v913
        %v1083 = vunpack.c.l.b16 %v914
        %v1084 = vunpack.c.h.b16 %v914
        %v1085 = vunpack.c.l.b16 %v915
        %v1086 = vunpack.c.h.b16 %v915
        %v1087 = vunpack.c.l.b16 %v916
        %v1088 = vunpack.c.h.b16 %v916
        %v1089 = vunpack.c.l.b16 %v917
        %v1090 = vunpack.c.h.b16 %v917
        %v1091 = vunpack.c.l.b16 %v918
        %v1092 = vunpack.c.h.b16 %v918
        %v1093 = vunpack.c.l.b16 %v919
        %v1094 = vunpack.c.h.b16 %v919
        %v1095 = vunpack.c.l.b16 %v920
        %v1096 = vunpack.c.h.b16 %v920
        %v1097 = vunpack.c.l.b16 %v921
        %v1098 = vunpack.c.h.b16 %v921
        %v1099 = vunpack.c.l.b16 %v922
        %v1100 = vunpack.c.h.b16 %v922
        %v1101 = vunpack.c.l.b16 %v923
        %v1102 = vunpack.c.h.b16 %v923
        %v1103 = vunpack.c.l.b16 %v924
        %v1104 = vunpack.c.h.b16 %v924
        %v1105 = vunpack.c.l.b16 %v925
        %v1106 = vunpack.c.h.b16 %v925
        %v1107 = vunpack.c.l.b16 %v926
        %v1108 = vunpack.c.h.b16 %v926
        %v1109 = vunpack.c.l.b16 %v927
        %v1110 = vunpack.c.h.b16 %v927
        %v1111 = vunpack.c.l.b16 %v928
        %v1112 = vunpack.c.h.b16 %v928
        %v1113 = vunpack.c.l.b16 %v929
        %v1114 = vunpack.c.h.b16 %v929
        %v1115 = vunpack.c.l.b16 %v930
        %v1116 = vunpack.c.h.b16 %v930
        %v1117 = vunpack.c.l.b16 %v931
        %v1118 = vunpack.c.h.b16 %v931
        %v1119 = vunpack.c.l.b16 %v932
        %v1120 = vunpack.c.h.b16 %v932
        %v1121 = vunpack.c.l.b16 %v933
        %v1122 = vunpack.c.h.b16 %v933
        %v1123 = vunpack.c.l.b16 %v934
        %v1124 = vunpack.c.h.b16 %v934
        %v1125 = vunpack.c.l.b16 %v935
        %v1126 = vunpack.c.h.b16 %v935
        %v1127 = vunpack.c.l.b16 %v936
        %v1128 = vunpack.c.h.b16 %v936
        %v1129 = vunpack.c.l.b16 %v937
        %v1130 = vunpack.c.h.b16 %v937
        %v1131 = vunpack.c.l.b16 %v938
        %v1132 = vunpack.c.h.b16 %v938
        %v1133 = vunpack.c.l.b16 %v939
        %v1134 = vunpack.c.h.b16 %v939
        %v1135 = vunpack.c.l.b16 %v940
        %v1136 = vunpack.c.h.b16 %v940
        %v1137 = vunpack.c.l.b16 %v941
        %v1138 = vunpack.c.h.b16 %v941
        %v1139 = vunpack.c.l.b16 %v942
        %v1140 = vunpack.c.h.b16 %v942
        %v1141 = vunpack.c.l.b16 %v943
        %v1142 = vunpack.c.h.b16 %v943
        %v1143 = vunpack.c.l.b16 %v944
        %v1144 = vunpack.c.h.b16 %v944
        %v1145 = vunpack.c.l.b16 %v945
        %v1146 = vunpack.c.h.b16 %v945
        %v1147 = vunpack.c.l.b16 %v946
        %v1148 = vunpack.c.h.b16 %v946
        %v1149 = vunpack.c.l.b16 %v947
        %v1150 = vunpack.c.h.b16 %v947
        %v1151 = vunpack.c.l.b16 %v948
        %v1152 = vunpack.c.h.b16 %v948
        %v1153 = vunpack.c.l.b16 %v949
        %v1154 = vunpack.c.h.b16 %v949
        %v1155 = vunpack.c.l.b16 %v950
        %v1156 = vunpack.c.h.b16 %v950
        %v1157 = vunpack.c.l.b16 %v951
        %v1158 = vunpack.c.h.b16 %v951
        %v1159 = vunpack.c.l.b16 %v952
        %v1160 = vunpack.c.h.b16 %v952
        %v1161 = vunpack.c.l.b16 %v953
        %v1162 = vunpack.c.h.b16 %v953
        %v1163 = vunpack.c.l.b16 %v954
        %v1164 = vunpack.c.h.b16 %v954
        %v1165 = vunpack.c.l.b16 %v955
        %v1166 = vunpack.c.h.b16 %v955
        %v1167 = vunpack.c.l.b16 %v956
        %v1168 = vunpack.c.h.b16 %v956
        %v1169 = vunpack.c.l.b16 %v957
        %v1170 = vunpack.c.h.b16 %v957
        %v1171 = vunpack.c.l.b16 %v958
        %v1172 = vunpack.c.h.b16 %v958
        %v1173 = vpack.c.b16 %v1049, %v1045
        %v1174 = vpack.c.b16 %v1050, %v1046
        %v1175 = vpack.c.b16 %v1051, %v1047
        %v1176 = vpack.c.b16 %v1052, %v1048
        %v1177 = vpack.c.b16 %v1057, %v1053
        %v1178 = vpack.c.b16 %v1058, %v1054
        %v1179 = vpack.c.b16 %v1059, %v1055
        %v1180 = vpack.c.b16 %v1060, %v1056
        %v1181 = vpack.c.b16 %v1065, %v1061
        %v1182 = vpack.c.b16 %v1066, %v1062
        %v1183 = vpack.c.b16 %v1067, %v1063
        %v1184 = vpack.c.b16 %v1068, %v1064
        %v1185 = vpack.c.b16 %v1073, %v1069
        %v1186 = vpack.c.b16 %v1074, %v1070
        %v1187 = vpack.c.b16 %v1075, %v1071
        %v1188 = vpack.c.b16 %v1076, %v1072
        %v1189 = vpack.c.b16 %v1081, %v1077
        %v1190 = vpack.c.b16 %v1082, %v1078
        %v1191 = vpack.c.b16 %v1083, %v1079
        %v1192 = vpack.c.b16 %v1084, %v1080
        %v1193 = vpack.c.b16 %v1089, %v1085
        %v1194 = vpack.c.b16 %v1090, %v1086
        %v1195 = vpack.c.b16 %v1091, %v1087
        %v1196 = vpack.c.b16 %v1092, %v1088
        %v1197 = vpack.c.b16 %v1097, %v1093
        %v1198 = vpack.c.b16 %v1098, %v1094
        %v1199 = vpack.c.b16 %v1099, %v1095
        %v1200 = vpack.c.b16 %v1100, %v1096
        %v1201 = vpack.c.b16 %v1105, %v1101
        %v1202 = vpack.c.b16 %v1106, %v1102
        %v1203 = vpack.c.b16 %v1107, %v1103
        %v1204 = vpack.c.b16 %v1108, %v1104
        %v1205 = vpack.c.b16 %v1113, %v1109
        %v1206 = vpack.c.b16 %v1114, %v1110
        %v1207 = vpack.c.b16 %v1115, %v1111
        %v1208 = vpack.c.b16 %v1116, %v1112
        %v1209 = vpack.c.b16 %v1121, %v1117
        %v1210 = vpack.c.b16 %v1122, %v1118
        %v1211 = vpack.c.b16 %v1123, %v1119
        %v1212 = vpack.c.b16 %v1124, %v1120
        %v1213 = vpack.c.b16 %v1129, %v1125
        %v1214 = vpack.c.b16 %v1130, %v1126
        %v1215 = vpack.c.b16 %v1131, %v1127
        %v1216 = vpack.c.b16 %v1132, %v1128
        %v1217 = vpack.c.b16 %v1137, %v1133
        %v1218 = vpack.c.b16 %v1138, %v1134
        %v1219 = vpack.c.b16 %v1139, %v1135
        %v1220 = vpack.c.b16 %v1140, %v1136
        %v1221 = vpack.c.b16 %v1145, %v1141
        %v1222 = vpack.c.b16 %v1146, %v1142
        %v1223 = vpack.c.b16 %v1147, %v1143
        %v1224 = vpack.c.b16 %v1148, %v1144
        %v1225 = vpack.c.b16 %v1153, %v1149
        %v1226 = vpack.c.b16 %v1154, %v1150
        %v1227 = vpack.c.b16 %v1155, %v1151
        %v1228 = vpack.c.b16 %v1156, %v1152
        %v1229 = vpack.c.b16 %v1161, %v1157
        %v1230 = vpack.c.b16 %v1162, %v1158
        %v1231 = vpack.c.b16 %v1163, %v1159
        %v1232 = vpack.c.b16 %v1164, %v1160
        %v1233 = vpack.c.b16 %v1169, %v1165
        %v1234 = vpack.c.b16 %v1170, %v1166
        %v1235 = vpack.c.b16 %v1171, %v1167
        %v1236 = vpack.c.b16 %v1172, %v1168
        %1301 = vmatprep.subr.bf16.mxu0 %v1174
        %1302 = vmatpush1.bf16.msra.mxu0 %v1173
        %1303 = vmatprep.subr.bf16.mxu0 %v1178
        %1304 = vmatpush1.bf16.msra.mxu0 %v1177
        %1305 = vmatprep.subr.bf16.mxu0 %v1182
        %1306 = vmatpush1.bf16.msra.mxu0 %v1181
        %1307 = vmatprep.subr.bf16.mxu0 %v1186
        %1308 = vmatpush1.bf16.msra.mxu0 %v1185
        %1309 = vmatprep.subr.bf16.mxu0 %v1190
        %1310 = vmatpush1.bf16.msra.mxu0 %v1189
        %1311 = vmatprep.subr.bf16.mxu0 %v1194
        %1312 = vmatpush1.bf16.msra.mxu0 %v1193
        %1313 = vmatprep.subr.bf16.mxu0 %v1198
        %1314 = vmatpush1.bf16.msra.mxu0 %v1197
        %1315 = vmatprep.subr.bf16.mxu0 %v1202
        %1316 = vmatpush1.bf16.msra.mxu0 %v1201
        %1317 = vmatprep.subr.bf16.mxu0 %v1206
        %1318 = vmatpush1.bf16.msra.mxu0 %v1205
        %1319 = vmatprep.subr.bf16.mxu0 %v1210
        %1320 = vmatpush1.bf16.msra.mxu0 %v1209
        %1321 = vmatprep.subr.bf16.mxu0 %v1214
        %1322 = vmatpush1.bf16.msra.mxu0 %v1213
        %1323 = vmatprep.subr.bf16.mxu0 %v1218
        %1324 = vmatpush1.bf16.msra.mxu0 %v1217
        %1325 = vmatprep.subr.bf16.mxu0 %v1222
        %1326 = vmatpush1.bf16.msra.mxu0 %v1221
        %1327 = vmatprep.subr.bf16.mxu0 %v1226
        %1328 = vmatpush1.bf16.msra.mxu0 %v1225
        %1329 = vmatprep.subr.bf16.mxu0 %v1230
        %1330 = vmatpush1.bf16.msra.mxu0 %v1229
        %1331 = vmatprep.subr.bf16.mxu0 %v1234
        %1332 = vmatpush1.bf16.msra.mxu0 %v1233
        %1333 = vmatprep.mubr.bf16.mxu0 %v892
        %1334 = vmatmul.mubr.bf16.gmra.mrb[0].mxu0 %v891
        %v1335 = vpop.f32.mrb[0].mxu0
        %v1336 = vadd.f32 %v964, %v1335
        %v1337 = vpop.f32.mrb[0].mxu0
        %v1338 = vadd.f32 %v968, %v1337
        %v1339 = vpop.f32.mrb[0].mxu0
        %v1340 = vadd.f32 %v964, %v1339
        %v1341 = vpop.f32.mrb[0].mxu0
        %v1342 = vadd.f32 %v968, %v1341
        %1343 = vmatprep.mubr.bf16.mxu0 %v894
        %1344 = vmatmul.mubr.bf16.gmra.mrb[0].mxu0 %v893
        %v1345 = vpop.f32.mrb[0].mxu0
        %v1346 = vadd.f32 %v964, %v1345
        %v1347 = vpop.f32.mrb[0].mxu0
        %v1348 = vadd.f32 %v968, %v1347
        %v1349 = vpop.f32.mrb[0].mxu0
        %v1350 = vadd.f32 %v964, %v1349
        %v1351 = vpop.f32.mrb[0].mxu0
        %v1352 = vadd.f32 %v968, %v1351
        %1353 = vdwg.mxu0
        %1354 = vmatprep.subr.bf16.mxu0 %v1176
        %1355 = vmatpush1.bf16.msra.mxu0 %v1175
        %1356 = vmatprep.subr.bf16.mxu0 %v1180
        %1357 = vmatpush1.bf16.msra.mxu0 %v1179
        %1358 = vmatprep.subr.bf16.mxu0 %v1184
        %1359 = vmatpush1.bf16.msra.mxu0 %v1183
        %1360 = vmatprep.subr.bf16.mxu0 %v1188
        %1361 = vmatpush1.bf16.msra.mxu0 %v1187
        %1362 = vmatprep.subr.bf16.mxu0 %v1192
        %1363 = vmatpush1.bf16.msra.mxu0 %v1191
        %1364 = vmatprep.subr.bf16.mxu0 %v1196
        %1365 = vmatpush1.bf16.msra.mxu0 %v1195
        %1366 = vmatprep.subr.bf16.mxu0 %v1200
        %1367 = vmatpush1.bf16.msra.mxu0 %v1199
        %1368 = vmatprep.subr.bf16.mxu0 %v1204
        %1369 = vmatpush1.bf16.msra.mxu0 %v1203
        %1370 = vmatprep.subr.bf16.mxu0 %v1208
        %1371 = vmatpush1.bf16.msra.mxu0 %v1207
        %1372 = vmatprep.subr.bf16.mxu0 %v1212
        %1373 = vmatpush1.bf16.msra.mxu0 %v1211
        %1374 = vmatprep.subr.bf16.mxu0 %v1216
        %1375 = vmatpush1.bf16.msra.mxu0 %v1215
        %1376 = vmatprep.subr.bf16.mxu0 %v1220
        %1377 = vmatpush1.bf16.msra.mxu0 %v1219
        %1378 = vmatprep.subr.bf16.mxu0 %v1224
        %1379 = vmatpush1.bf16.msra.mxu0 %v1223
        %1380 = vmatprep.subr.bf16.mxu0 %v1228
        %1381 = vmatpush1.bf16.msra.mxu0 %v1227
        %1382 = vmatprep.subr.bf16.mxu0 %v1232
        %1383 = vmatpush1.bf16.msra.mxu0 %v1231
        %1384 = vmatprep.subr.bf16.mxu0 %v1236
        %1385 = vmatpush1.bf16.msra.mxu0 %v1235
        %1386 = vmatprep.mubr.bf16.mxu0 %v892
        %1387 = vmatmul.mubr.bf16.gmra.mrb[0].mxu0 %v891
        %v1388 = vpop.f32.mrb[0].mxu0
        %v1389 = vadd.f32 %v972, %v1388
        %v1390 = vpop.f32.mrb[0].mxu0
        %v1391 = vadd.f32 %v976, %v1390
        %v1392 = vpop.f32.mrb[0].mxu0
        %v1393 = vadd.f32 %v972, %v1392
        %v1394 = vpop.f32.mrb[0].mxu0
        %v1395 = vadd.f32 %v976, %v1394
        %1396 = vmatprep.mubr.bf16.mxu0 %v894
        %1397 = vmatmul.mubr.bf16.gmra.mrb[0].mxu0 %v893
        %v1398 = vpop.f32.mrb[0].mxu0
        %v1399 = vadd.f32 %v972, %v1398
        %v1400 = vpop.f32.mrb[0].mxu0
        %v1401 = vadd.f32 %v976, %v1400
        %v1402 = vpop.f32.mrb[0].mxu0
        %v1403 = vadd.f32 %v972, %v1402
        %v1404 = vpop.f32.mrb[0].mxu0
        %v1405 = vadd.f32 %v976, %v1404
        %1406 = vdwg.mxu0
        %v1407 = vld [vmem:[#allocation15 + $0xb] sm:$0xf]
        %v1408 = vld [vmem:[#allocation15 + $0xf] sm:$0xf]
        %v1409 = vmul.f32 %v1336, %v713
        %v1410 = vmul.f32 %v1338, %v713
        %v1411 = vmul.f32 %v1389, %v713
        %v1412 = vmul.f32 %v1391, %v713
        %v1413 = vmul.f32 %v1340, %v714
        %v1414 = vmul.f32 %v1342, %v714
        %v1415 = vmul.f32 %v1393, %v714
        %v1416 = vmul.f32 %v1395, %v714
        %v1417 = vmul.f32 %v1346, %v715
        %v1418 = vmul.f32 %v1348, %v715
        %v1419 = vmul.f32 %v1399, %v715
        %v1420 = vmul.f32 %v1401, %v715
        %v1421 = vmul.f32 %v1350, %v716
        %v1422 = vmul.f32 %v1352, %v716
        %v1423 = vmul.f32 %v1403, %v716
        %v1424 = vmul.f32 %v1405, %v716
        %v1425 = vadd.f32 %v1409, %v1413
        %v1426 = vadd.f32 %v1425, %v1417
        %v1427 = vadd.f32 %v1426, %v1421
        %v1428 = vrot.slane %v1427, 4
        %v1429 = vadd.f32 %v1427, %v1428
        %v1430 = vrot.slane %v1429, 2
        %v1431 = vadd.f32 %v1429, %v1430
        %v1432 = vrot.slane %v1431, 1
        %v1433 = vadd.f32 %v1431, %v1432
        %v1434 = vadd.f32 %v1410, %v1414
        %v1435 = vadd.f32 %v1434, %v1418
        %v1436 = vadd.f32 %v1435, %v1422
        %v1437 = vrot.slane %v1436, 4
        %v1438 = vadd.f32 %v1436, %v1437
        %v1439 = vrot.slane %v1438, 2
        %v1440 = vadd.f32 %v1438, %v1439
        %v1441 = vrot.slane %v1440, 1
        %v1442 = vadd.f32 %v1440, %v1441
        %v1443 = vadd.f32 %v1411, %v1415
        %v1444 = vadd.f32 %v1443, %v1419
        %v1445 = vadd.f32 %v1444, %v1423
        %v1446 = vrot.slane %v1445, 4
        %v1447 = vadd.f32 %v1445, %v1446
        %v1448 = vrot.slane %v1447, 2
        %v1449 = vadd.f32 %v1447, %v1448
        %v1450 = vrot.slane %v1449, 1
        %v1451 = vadd.f32 %v1449, %v1450
        %v1452 = vadd.f32 %v1412, %v1416
        %v1453 = vadd.f32 %v1452, %v1420
        %v1454 = vadd.f32 %v1453, %v1424
        %v1455 = vrot.slane %v1454, 4
        %v1456 = vadd.f32 %v1454, %v1455
        %v1457 = vrot.slane %v1456, 2
        %v1458 = vadd.f32 %v1456, %v1457
        %v1459 = vrot.slane %v1458, 1
        %v1460 = vadd.f32 %v1458, %v1459
        %v1461 = vmul.f32 %v1433, %v747
        %v1462 = vmul.f32 %v1442, %v747
        %v1463 = vmul.f32 %v1451, %v747
        %v1464 = vmul.f32 %v1460, %v747
        %v1465 = vsub.f32 %v1336, %v1461
        %v1466 = vsub.f32 %v1338, %v1462
        %v1467 = vsub.f32 %v1389, %v1463
        %v1468 = vsub.f32 %v1391, %v1464
        %v1469 = vsub.f32 %v1340, %v1461
        %v1470 = vsub.f32 %v1342, %v1462
        %v1471 = vsub.f32 %v1393, %v1463
        %v1472 = vsub.f32 %v1395, %v1464
        %v1473 = vsub.f32 %v1346, %v1461
        %v1474 = vsub.f32 %v1348, %v1462
        %v1475 = vsub.f32 %v1399, %v1463
        %v1476 = vsub.f32 %v1401, %v1464
        %v1477 = vsub.f32 %v1350, %v1461
        %v1478 = vsub.f32 %v1352, %v1462
        %v1479 = vsub.f32 %v1403, %v1463
        %v1480 = vsub.f32 %v1405, %v1464
        %v1481 = vmul.f32 %v1465, %v713
        %v1482 = vmul.f32 %v1466, %v713
        %v1483 = vmul.f32 %v1467, %v713
        %v1484 = vmul.f32 %v1468, %v713
        %v1485 = vmul.f32 %v1469, %v714
        %v1486 = vmul.f32 %v1470, %v714
        %v1487 = vmul.f32 %v1471, %v714
        %v1488 = vmul.f32 %v1472, %v714
        %v1489 = vmul.f32 %v1473, %v715
        %v1490 = vmul.f32 %v1474, %v715
        %v1491 = vmul.f32 %v1475, %v715
        %v1492 = vmul.f32 %v1476, %v715
        %v1493 = vmul.f32 %v1477, %v716
        %v1494 = vmul.f32 %v1478, %v716
        %v1495 = vmul.f32 %v1479, %v716
        %v1496 = vmul.f32 %v1480, %v716
        %v1497 = vmul.f32 %v1481, %v1481
        %v1498 = vmul.f32 %v1482, %v1482
        %v1499 = vmul.f32 %v1483, %v1483
        %v1500 = vmul.f32 %v1484, %v1484
        %v1501 = vmul.f32 %v1485, %v1485
        %v1502 = vmul.f32 %v1486, %v1486
        %v1503 = vmul.f32 %v1487, %v1487
        %v1504 = vmul.f32 %v1488, %v1488
        %v1505 = vmul.f32 %v1489, %v1489
        %v1506 = vmul.f32 %v1490, %v1490
        %v1507 = vmul.f32 %v1491, %v1491
        %v1508 = vmul.f32 %v1492, %v1492
        %v1509 = vmul.f32 %v1493, %v1493
        %v1510 = vmul.f32 %v1494, %v1494
        %v1511 = vmul.f32 %v1495, %v1495
        %v1512 = vmul.f32 %v1496, %v1496
        %v1513 = vadd.f32 %v1497, %v1501
        %v1514 = vadd.f32 %v1513, %v1505
        %v1515 = vadd.f32 %v1514, %v1509
        %v1516 = vrot.slane %v1515, 4
        %v1517 = vadd.f32 %v1515, %v1516
        %v1518 = vrot.slane %v1517, 2
        %v1519 = vadd.f32 %v1517, %v1518
        %v1520 = vrot.slane %v1519, 1
        %v1521 = vadd.f32 %v1519, %v1520
        %v1522 = vadd.f32 %v1498, %v1502
        %v1523 = vadd.f32 %v1522, %v1506
        %v1524 = vadd.f32 %v1523, %v1510
        %v1525 = vrot.slane %v1524, 4
        %v1526 = vadd.f32 %v1524, %v1525
        %v1527 = vrot.slane %v1526, 2
        %v1528 = vadd.f32 %v1526, %v1527
        %v1529 = vrot.slane %v1528, 1
        %v1530 = vadd.f32 %v1528, %v1529
        %v1531 = vadd.f32 %v1499, %v1503
        %v1532 = vadd.f32 %v1531, %v1507
        %v1533 = vadd.f32 %v1532, %v1511
        %v1534 = vrot.slane %v1533, 4
        %v1535 = vadd.f32 %v1533, %v1534
        %v1536 = vrot.slane %v1535, 2
        %v1537 = vadd.f32 %v1535, %v1536
        %v1538 = vrot.slane %v1537, 1
        %v1539 = vadd.f32 %v1537, %v1538
        %v1540 = vadd.f32 %v1500, %v1504
        %v1541 = vadd.f32 %v1540, %v1508
        %v1542 = vadd.f32 %v1541, %v1512
        %v1543 = vrot.slane %v1542, 4
        %v1544 = vadd.f32 %v1542, %v1543
        %v1545 = vrot.slane %v1544, 2
        %v1546 = vadd.f32 %v1544, %v1545
        %v1547 = vrot.slane %v1546, 1
        %v1548 = vadd.f32 %v1546, %v1547
        %v1549 = vmul.f32 %v1521, %v747
        %v1550 = vmul.f32 %v1530, %v747
        %v1551 = vmul.f32 %v1539, %v747
        %v1552 = vmul.f32 %v1548, %v747
        %v1553 = vadd.f32 %v1549, 1e-05
        %v1554 = vadd.f32 %v1550, 1e-05
        %v1555 = vadd.f32 %v1551, 1e-05
        %v1556 = vadd.f32 %v1552, 1e-05
        %v1557 = vrsqrt.pop %v1553
        %v1558 = vrsqrt.pop %v1554
        %v1559 = vrsqrt.pop %v1555
        %v1560 = vrsqrt.pop %v1556
        %v1562 = vlaneseq
        %v1563 = vshrl.u32 %v1562, 7
        %v1564 = vsub.s32 0, %v1563
        %v1565 = vrot.slane %v1407, %v1564
        %v1566 = vlaneseq
        %v1567 = vshrl.u32 %v1566, 7
        %v1568 = vsub.s32 1, %v1567
        %v1569 = vrot.slane %v1407, %v1568
        %v1570 = vlaneseq
        %v1571 = vshrl.u32 %v1570, 7
        %v1572 = vsub.s32 2, %v1571
        %v1573 = vrot.slane %v1407, %v1572
        %v1574 = vlaneseq
        %v1575 = vshrl.u32 %v1574, 7
        %v1576 = vsub.s32 3, %v1575
        %v1577 = vrot.slane %v1407, %v1576
        %v1582 = vmul.f32 %v1557, %v1565
        %v1583 = vmul.f32 %v1558, %v1569
        %v1584 = vmul.f32 %v1559, %v1573
        %v1585 = vmul.f32 %v1560, %v1577
        %v1586 = vmul.f32 %v1461, %v1582
        %v1587 = vmul.f32 %v1462, %v1583
        %v1588 = vmul.f32 %v1463, %v1584
        %v1589 = vmul.f32 %v1464, %v1585
        %v1594 = vcombine.low %v1586, %v1587
        %v1595 = vcombine.low %v1588, %v1589
        %v1597 = vunpack.c.l.s4 1966171168
        %v1598 = vunpack.c.0.s8 %v1597
        %v1599 = vlaneseq
        %v1600 = vshrl.u32 %v1599, 7
        %v1601 = vsub.s32 %v1598, %v1600
        %v1602 = vrot.slane %v1594, %v1601
        %v1604 = vunpack.c.l.s4 1966171168
        %v1605 = vunpack.c.0.s8 %v1604
        %v1606 = vlaneseq
        %v1607 = vshrl.u32 %v1606, 7
        %v1608 = vsub.s32 %v1605, %v1607
        %v1609 = vrot.slane %v1595, %v1608
        %v1610 = vcombine.low %v1602, %v1609
        %v1612 = vunpack.c.l.s4 1966171168
        %v1613 = vunpack.c.0.s8 %v1612
        %v1614 = vlaneseq
        %v1615 = vshrl.u32 %v1614, 7
        %v1616 = vsub.s32 %v1613, %v1615
        %v1617 = vrot.slane %v1610, %v1616
        %v1619 = vsub.f32 %v1408, %v1617
        %v1620 = vlaneseq
        %v1621 = vshrl.u32 %v1620, 7
        %v1622 = vsub.s32 0, %v1621
        %v1623 = vrot.slane %v1582, %v1622
        %v1624 = vlaneseq
        %v1625 = vshrl.u32 %v1624, 7
        %v1626 = vsub.s32 0, %v1625
        %v1627 = vrot.slane %v1583, %v1626
        %v1628 = vlaneseq
        %v1629 = vshrl.u32 %v1628, 7
        %v1630 = vsub.s32 0, %v1629
        %v1631 = vrot.slane %v1584, %v1630
        %v1632 = vlaneseq
        %v1633 = vshrl.u32 %v1632, 7
        %v1634 = vsub.s32 0, %v1633
        %v1635 = vrot.slane %v1585, %v1634
        %v1636 = vmul.f32 %v1336, %v1623
        %v1637 = vmul.f32 %v1338, %v1627
        %v1638 = vmul.f32 %v1389, %v1631
        %v1639 = vmul.f32 %v1391, %v1635
        %v1640 = vmul.f32 %v1340, %v1623
        %v1641 = vmul.f32 %v1342, %v1627
        %v1642 = vmul.f32 %v1393, %v1631
        %v1643 = vmul.f32 %v1395, %v1635
        %v1644 = vmul.f32 %v1346, %v1623
        %v1645 = vmul.f32 %v1348, %v1627
        %v1646 = vmul.f32 %v1399, %v1631
        %v1647 = vmul.f32 %v1401, %v1635
        %v1648 = vmul.f32 %v1350, %v1623
        %v1649 = vmul.f32 %v1352, %v1627
        %v1650 = vmul.f32 %v1403, %v1631
        %v1651 = vmul.f32 %v1405, %v1635
        %v1653 = vlaneseq
        %v1654 = vshrl.u32 %v1653, 7
        %v1655 = vsub.s32 0, %v1654
        %v1656 = vrot.slane %v1619, %v1655
        %v1657 = vlaneseq
        %v1658 = vshrl.u32 %v1657, 7
        %v1659 = vsub.s32 1, %v1658
        %v1660 = vrot.slane %v1619, %v1659
        %v1661 = vlaneseq
        %v1662 = vshrl.u32 %v1661, 7
        %v1663 = vsub.s32 2, %v1662
        %v1664 = vrot.slane %v1619, %v1663
        %v1665 = vlaneseq
        %v1666 = vshrl.u32 %v1665, 7
        %v1667 = vsub.s32 3, %v1666
        %v1668 = vrot.slane %v1619, %v1667
        %v1673 = vadd.f32 %v1636, %v1656
        %v1674 = vadd.f32 %v1637, %v1660
        %v1675 = vadd.f32 %v1638, %v1664
        %v1676 = vadd.f32 %v1639, %v1668
        %v1677 = vadd.f32 %v1640, %v1656
        %v1678 = vadd.f32 %v1641, %v1660
        %v1679 = vadd.f32 %v1642, %v1664
        %v1680 = vadd.f32 %v1643, %v1668
        %v1681 = vadd.f32 %v1644, %v1656
        %v1682 = vadd.f32 %v1645, %v1660
        %v1683 = vadd.f32 %v1646, %v1664
        %v1684 = vadd.f32 %v1647, %v1668
        %v1685 = vadd.f32 %v1648, %v1656
        %v1686 = vadd.f32 %v1649, %v1660
        %v1687 = vadd.f32 %v1650, %v1664
        %v1688 = vadd.f32 %v1651, %v1668
        %vm1689 = vcmp.gt.f32.partialorder %v1673, 0.0
        %vm1690 = vcmp.gt.f32.partialorder %v1674, 0.0
        %vm1691 = vcmp.gt.f32.partialorder %v1675, 0.0
        %vm1692 = vcmp.gt.f32.partialorder %v1676, 0.0
        %vm1693 = vcmp.gt.f32.partialorder %v1677, 0.0
        %vm1694 = vcmp.gt.f32.partialorder %v1678, 0.0
        %vm1695 = vcmp.gt.f32.partialorder %v1679, 0.0
        %vm1696 = vcmp.gt.f32.partialorder %v1680, 0.0
        %vm1697 = vcmp.gt.f32.partialorder %v1681, 0.0
        %vm1698 = vcmp.gt.f32.partialorder %v1682, 0.0
        %vm1699 = vcmp.gt.f32.partialorder %v1683, 0.0
        %vm1700 = vcmp.gt.f32.partialorder %v1684, 0.0
        %vm1701 = vcmp.gt.f32.partialorder %v1685, 0.0
        %vm1702 = vcmp.gt.f32.partialorder %v1686, 0.0
        %vm1703 = vcmp.gt.f32.partialorder %v1687, 0.0
        %vm1704 = vcmp.gt.f32.partialorder %v1688, 0.0
        %v1705 = vmul.f32 %v1673, 0.2
        %v1706 = vmul.f32 %v1674, 0.2
        %v1707 = vmul.f32 %v1675, 0.2
        %v1708 = vmul.f32 %v1676, 0.2
        %v1709 = vmul.f32 %v1677, 0.2
        %v1710 = vmul.f32 %v1678, 0.2
        %v1711 = vmul.f32 %v1679, 0.2
        %v1712 = vmul.f32 %v1680, 0.2
        %v1713 = vmul.f32 %v1681, 0.2
        %v1714 = vmul.f32 %v1682, 0.2
        %v1715 = vmul.f32 %v1683, 0.2
        %v1716 = vmul.f32 %v1684, 0.2
        %v1717 = vmul.f32 %v1685, 0.2
        %v1718 = vmul.f32 %v1686, 0.2
        %v1719 = vmul.f32 %v1687, 0.2
        %v1720 = vmul.f32 %v1688, 0.2
        %v1721 = vsel %vm1689, %v1673, %v1705
        %v1722 = vsel %vm1690, %v1674, %v1706
        %v1723 = vsel %vm1691, %v1675, %v1707
        %v1724 = vsel %vm1692, %v1676, %v1708
        %v1725 = vsel %vm1693, %v1677, %v1709
        %v1726 = vsel %vm1694, %v1678, %v1710
        %v1727 = vsel %vm1695, %v1679, %v1711
        %v1728 = vsel %vm1696, %v1680, %v1712
        %v1729 = vsel %vm1697, %v1681, %v1713
        %v1730 = vsel %vm1698, %v1682, %v1714
        %v1731 = vsel %vm1699, %v1683, %v1715
        %v1732 = vsel %vm1700, %v1684, %v1716
        %v1733 = vsel %vm1701, %v1685, %v1717
        %v1734 = vsel %vm1702, %v1686, %v1718
        %v1735 = vsel %vm1703, %v1687, %v1719
        %v1736 = vsel %vm1704, %v1688, %v1720
        %v1737 = vpack.c.bf16 %v1725, %v1721
        %v1738 = vpack.c.bf16 %v1726, %v1722
        %v1739 = vpack.c.bf16 %v1727, %v1723
        %v1740 = vpack.c.bf16 %v1728, %v1724
        %v1741 = vpack.c.bf16 %v1733, %v1729
        %v1742 = vpack.c.bf16 %v1734, %v1730
        %v1743 = vpack.c.bf16 %v1735, %v1731
        %v1744 = vpack.c.bf16 %v1736, %v1732
        %v1745 = vld [vmem:[#allocation12] sm:$0xff]
        %v1746 = vld [vmem:[#allocation12 + $0x8] sm:$0xff]
        %v1747 = vld [vmem:[#allocation12 + $0x10] sm:$0xff]
        %v1748 = vld [vmem:[#allocation12 + $0x18] sm:$0xff]
        %v1749 = vld [vmem:[#allocation12 + $0x20] sm:$0xff]
        %v1750 = vld [vmem:[#allocation12 + $0x28] sm:$0xff]
        %v1751 = vld [vmem:[#allocation12 + $0x30] sm:$0xff]
        %v1752 = vld [vmem:[#allocation12 + $0x38] sm:$0xff]
        %v1753 = vld [vmem:[#allocation12 + $0x40] sm:$0xff]
        %v1754 = vld [vmem:[#allocation12 + $0x48] sm:$0xff]
        %v1755 = vld [vmem:[#allocation12 + $0x50] sm:$0xff]
        %v1756 = vld [vmem:[#allocation12 + $0x58] sm:$0xff]
        %v1757 = vld [vmem:[#allocation12 + $0x60] sm:$0xff]
        %v1758 = vld [vmem:[#allocation12 + $0x68] sm:$0xff]
        %v1759 = vld [vmem:[#allocation12 + $0x70] sm:$0xff]
        %v1760 = vld [vmem:[#allocation12 + $0x78] sm:$0xff]
        %v1761 = vld [vmem:[#allocation12 + $0x80] sm:$0xff]
        %v1762 = vld [vmem:[#allocation12 + $0x88] sm:$0xff]
        %v1763 = vld [vmem:[#allocation12 + $0x90] sm:$0xff]
        %v1764 = vld [vmem:[#allocation12 + $0x98] sm:$0xff]
        %v1765 = vld [vmem:[#allocation12 + $0xa0] sm:$0xff]
        %v1766 = vld [vmem:[#allocation12 + $0xa8] sm:$0xff]
        %v1767 = vld [vmem:[#allocation12 + $0xb0] sm:$0xff]
        %v1768 = vld [vmem:[#allocation12 + $0xb8] sm:$0xff]
        %v1769 = vld [vmem:[#allocation12 + $0xc0] sm:$0xff]
        %v1770 = vld [vmem:[#allocation12 + $0xc8] sm:$0xff]
        %v1771 = vld [vmem:[#allocation12 + $0xd0] sm:$0xff]
        %v1772 = vld [vmem:[#allocation12 + $0xd8] sm:$0xff]
        %v1773 = vld [vmem:[#allocation12 + $0xe0] sm:$0xff]
        %v1774 = vld [vmem:[#allocation12 + $0xe8] sm:$0xff]
        %v1775 = vld [vmem:[#allocation12 + $0xf0] sm:$0xff]
        %v1776 = vld [vmem:[#allocation12 + $0xf8] sm:$0xff]
        %v1777 = vld [vmem:[#allocation12 + $0x100] sm:$0xff]
        %v1778 = vld [vmem:[#allocation12 + $0x108] sm:$0xff]
        %v1779 = vld [vmem:[#allocation12 + $0x110] sm:$0xff]
        %v1780 = vld [vmem:[#allocation12 + $0x118] sm:$0xff]
        %v1781 = vld [vmem:[#allocation12 + $0x120] sm:$0xff]
        %v1782 = vld [vmem:[#allocation12 + $0x128] sm:$0xff]
        %v1783 = vld [vmem:[#allocation12 + $0x130] sm:$0xff]
        %v1784 = vld [vmem:[#allocation12 + $0x138] sm:$0xff]
        %v1785 = vld [vmem:[#allocation12 + $0x140] sm:$0xff]
        %v1786 = vld [vmem:[#allocation12 + $0x148] sm:$0xff]
        %v1787 = vld [vmem:[#allocation12 + $0x150] sm:$0xff]
        %v1788 = vld [vmem:[#allocation12 + $0x158] sm:$0xff]
        %v1789 = vld [vmem:[#allocation12 + $0x160] sm:$0xff]
        %v1790 = vld [vmem:[#allocation12 + $0x168] sm:$0xff]
        %v1791 = vld [vmem:[#allocation12 + $0x170] sm:$0xff]
        %v1792 = vld [vmem:[#allocation12 + $0x178] sm:$0xff]
        %v1793 = vld [vmem:[#allocation12 + $0x180] sm:$0xff]
        %v1794 = vld [vmem:[#allocation12 + $0x188] sm:$0xff]
        %v1795 = vld [vmem:[#allocation12 + $0x190] sm:$0xff]
        %v1796 = vld [vmem:[#allocation12 + $0x198] sm:$0xff]
        %v1797 = vld [vmem:[#allocation12 + $0x1a0] sm:$0xff]
        %v1798 = vld [vmem:[#allocation12 + $0x1a8] sm:$0xff]
        %v1799 = vld [vmem:[#allocation12 + $0x1b0] sm:$0xff]
        %v1800 = vld [vmem:[#allocation12 + $0x1b8] sm:$0xff]
        %v1801 = vld [vmem:[#allocation12 + $0x1c0] sm:$0xff]
        %v1802 = vld [vmem:[#allocation12 + $0x1c8] sm:$0xff]
        %v1803 = vld [vmem:[#allocation12 + $0x1d0] sm:$0xff]
        %v1804 = vld [vmem:[#allocation12 + $0x1d8] sm:$0xff]
        %v1805 = vld [vmem:[#allocation12 + $0x1e0] sm:$0xff]
        %v1806 = vld [vmem:[#allocation12 + $0x1e8] sm:$0xff]
        %v1807 = vld [vmem:[#allocation12 + $0x1f0] sm:$0xff]
        %v1808 = vld [vmem:[#allocation12 + $0x1f8] sm:$0xff]
        %v1809 = vld [vmem:[#allocation12 + $0x200] sm:$0xff]
        %v1810 = vld [vmem:[#allocation12 + $0x208] sm:$0xff]
        %v1811 = vld [vmem:[#allocation12 + $0x210] sm:$0xff]
        %v1812 = vld [vmem:[#allocation12 + $0x218] sm:$0xff]
        %v1813 = vld [vmem:[#allocation12 + $0x220] sm:$0xff]
        %v1814 = vld [vmem:[#allocation12 + $0x228] sm:$0xff]
        %v1815 = vld [vmem:[#allocation12 + $0x230] sm:$0xff]
        %v1816 = vld [vmem:[#allocation12 + $0x238] sm:$0xff]
        %v1817 = vld [vmem:[#allocation12 + $0x240] sm:$0xff]
        %v1818 = vld [vmem:[#allocation12 + $0x248] sm:$0xff]
        %v1819 = vld [vmem:[#allocation12 + $0x250] sm:$0xff]
        %v1820 = vld [vmem:[#allocation12 + $0x258] sm:$0xff]
        %v1821 = vld [vmem:[#allocation12 + $0x260] sm:$0xff]
        %v1822 = vld [vmem:[#allocation12 + $0x268] sm:$0xff]
        %v1823 = vld [vmem:[#allocation12 + $0x270] sm:$0xff]
        %v1824 = vld [vmem:[#allocation12 + $0x278] sm:$0xff]
        %v1825 = vld [vmem:[#allocation12 + $0x280] sm:$0xff]
        %v1826 = vld [vmem:[#allocation12 + $0x288] sm:$0xff]
        %v1827 = vld [vmem:[#allocation12 + $0x290] sm:$0xff]
        %v1828 = vld [vmem:[#allocation12 + $0x298] sm:$0xff]
        %v1829 = vld [vmem:[#allocation12 + $0x2a0] sm:$0xff]
        %v1830 = vld [vmem:[#allocation12 + $0x2a8] sm:$0xff]
        %v1831 = vld [vmem:[#allocation12 + $0x2b0] sm:$0xff]
        %v1832 = vld [vmem:[#allocation12 + $0x2b8] sm:$0xff]
        %v1833 = vld [vmem:[#allocation12 + $0x2c0] sm:$0xff]
        %v1834 = vld [vmem:[#allocation12 + $0x2c8] sm:$0xff]
        %v1835 = vld [vmem:[#allocation12 + $0x2d0] sm:$0xff]
        %v1836 = vld [vmem:[#allocation12 + $0x2d8] sm:$0xff]
        %v1837 = vld [vmem:[#allocation12 + $0x2e0] sm:$0xff]
        %v1838 = vld [vmem:[#allocation12 + $0x2e8] sm:$0xff]
        %v1839 = vld [vmem:[#allocation12 + $0x2f0] sm:$0xff]
        %v1840 = vld [vmem:[#allocation12 + $0x2f8] sm:$0xff]
        %v1841 = vld [vmem:[#allocation12 + $0x300] sm:$0xff]
        %v1842 = vld [vmem:[#allocation12 + $0x308] sm:$0xff]
        %v1843 = vld [vmem:[#allocation12 + $0x310] sm:$0xff]
        %v1844 = vld [vmem:[#allocation12 + $0x318] sm:$0xff]
        %v1845 = vld [vmem:[#allocation12 + $0x320] sm:$0xff]
        %v1846 = vld [vmem:[#allocation12 + $0x328] sm:$0xff]
        %v1847 = vld [vmem:[#allocation12 + $0x330] sm:$0xff]
        %v1848 = vld [vmem:[#allocation12 + $0x338] sm:$0xff]
        %v1849 = vld [vmem:[#allocation12 + $0x340] sm:$0xff]
        %v1850 = vld [vmem:[#allocation12 + $0x348] sm:$0xff]
        %v1851 = vld [vmem:[#allocation12 + $0x350] sm:$0xff]
        %v1852 = vld [vmem:[#allocation12 + $0x358] sm:$0xff]
        %v1853 = vld [vmem:[#allocation12 + $0x360] sm:$0xff]
        %v1854 = vld [vmem:[#allocation12 + $0x368] sm:$0xff]
        %v1855 = vld [vmem:[#allocation12 + $0x370] sm:$0xff]
        %v1856 = vld [vmem:[#allocation12 + $0x378] sm:$0xff]
        %v1857 = vld [vmem:[#allocation12 + $0x380] sm:$0xff]
        %v1858 = vld [vmem:[#allocation12 + $0x388] sm:$0xff]
        %v1859 = vld [vmem:[#allocation12 + $0x390] sm:$0xff]
        %v1860 = vld [vmem:[#allocation12 + $0x398] sm:$0xff]
        %v1861 = vld [vmem:[#allocation12 + $0x3a0] sm:$0xff]
        %v1862 = vld [vmem:[#allocation12 + $0x3a8] sm:$0xff]
        %v1863 = vld [vmem:[#allocation12 + $0x3b0] sm:$0xff]
        %v1864 = vld [vmem:[#allocation12 + $0x3b8] sm:$0xff]
        %v1865 = vld [vmem:[#allocation12 + $0x3c0] sm:$0xff]
        %v1866 = vld [vmem:[#allocation12 + $0x3c8] sm:$0xff]
        %v1867 = vld [vmem:[#allocation12 + $0x3d0] sm:$0xff]
        %v1868 = vld [vmem:[#allocation12 + $0x3d8] sm:$0xff]
        %v1869 = vld [vmem:[#allocation12 + $0x3e0] sm:$0xff]
        %v1870 = vld [vmem:[#allocation12 + $0x3e8] sm:$0xff]
        %v1871 = vld [vmem:[#allocation12 + $0x3f0] sm:$0xff]
        %v1872 = vld [vmem:[#allocation12 + $0x3f8] sm:$0xff]
        %v1873 = vld [vmem:[#allocation12 + $0x400] sm:$0xff]
        %v1874 = vld [vmem:[#allocation12 + $0x408] sm:$0xff]
        %v1875 = vld [vmem:[#allocation12 + $0x410] sm:$0xff]
        %v1876 = vld [vmem:[#allocation12 + $0x418] sm:$0xff]
        %v1877 = vld [vmem:[#allocation12 + $0x420] sm:$0xff]
        %v1878 = vld [vmem:[#allocation12 + $0x428] sm:$0xff]
        %v1879 = vld [vmem:[#allocation12 + $0x430] sm:$0xff]
        %v1880 = vld [vmem:[#allocation12 + $0x438] sm:$0xff]
        %v1881 = vld [vmem:[#allocation12 + $0x440] sm:$0xff]
        %v1882 = vld [vmem:[#allocation12 + $0x448] sm:$0xff]
        %v1883 = vld [vmem:[#allocation12 + $0x450] sm:$0xff]
        %v1884 = vld [vmem:[#allocation12 + $0x458] sm:$0xff]
        %v1885 = vld [vmem:[#allocation12 + $0x460] sm:$0xff]
        %v1886 = vld [vmem:[#allocation12 + $0x468] sm:$0xff]
        %v1887 = vld [vmem:[#allocation12 + $0x470] sm:$0xff]
        %v1888 = vld [vmem:[#allocation12 + $0x478] sm:$0xff]
        %v1889 = vld [vmem:[#allocation12 + $0x480] sm:$0xff]
        %v1890 = vld [vmem:[#allocation12 + $0x488] sm:$0xff]
        %v1891 = vld [vmem:[#allocation12 + $0x490] sm:$0xff]
        %v1892 = vld [vmem:[#allocation12 + $0x498] sm:$0xff]
        %v1893 = vld [vmem:[#allocation12 + $0x4a0] sm:$0xff]
        %v1894 = vld [vmem:[#allocation12 + $0x4a8] sm:$0xff]
        %v1895 = vld [vmem:[#allocation12 + $0x4b0] sm:$0xff]
        %v1896 = vld [vmem:[#allocation12 + $0x4b8] sm:$0xff]
        %v1897 = vld [vmem:[#allocation12 + $0x4c0] sm:$0xff]
        %v1898 = vld [vmem:[#allocation12 + $0x4c8] sm:$0xff]
        %v1899 = vld [vmem:[#allocation12 + $0x4d0] sm:$0xff]
        %v1900 = vld [vmem:[#allocation12 + $0x4d8] sm:$0xff]
        %v1901 = vld [vmem:[#allocation12 + $0x4e0] sm:$0xff]
        %v1902 = vld [vmem:[#allocation12 + $0x4e8] sm:$0xff]
        %v1903 = vld [vmem:[#allocation12 + $0x4f0] sm:$0xff]
        %v1904 = vld [vmem:[#allocation12 + $0x4f8] sm:$0xff]
        %v1905 = vld [vmem:[#allocation12 + $0x500] sm:$0xff]
        %v1906 = vld [vmem:[#allocation12 + $0x508] sm:$0xff]
        %v1907 = vld [vmem:[#allocation12 + $0x510] sm:$0xff]
        %v1908 = vld [vmem:[#allocation12 + $0x518] sm:$0xff]
        %v1909 = vld [vmem:[#allocation12 + $0x520] sm:$0xff]
        %v1910 = vld [vmem:[#allocation12 + $0x528] sm:$0xff]
        %v1911 = vld [vmem:[#allocation12 + $0x530] sm:$0xff]
        %v1912 = vld [vmem:[#allocation12 + $0x538] sm:$0xff]
        %v1913 = vld [vmem:[#allocation12 + $0x540] sm:$0xff]
        %v1914 = vld [vmem:[#allocation12 + $0x548] sm:$0xff]
        %v1915 = vld [vmem:[#allocation12 + $0x550] sm:$0xff]
        %v1916 = vld [vmem:[#allocation12 + $0x558] sm:$0xff]
        %v1917 = vld [vmem:[#allocation12 + $0x560] sm:$0xff]
        %v1918 = vld [vmem:[#allocation12 + $0x568] sm:$0xff]
        %v1919 = vld [vmem:[#allocation12 + $0x570] sm:$0xff]
        %v1920 = vld [vmem:[#allocation12 + $0x578] sm:$0xff]
        %v1921 = vld [vmem:[#allocation12 + $0x580] sm:$0xff]
        %v1922 = vld [vmem:[#allocation12 + $0x588] sm:$0xff]
        %v1923 = vld [vmem:[#allocation12 + $0x590] sm:$0xff]
        %v1924 = vld [vmem:[#allocation12 + $0x598] sm:$0xff]
        %v1925 = vld [vmem:[#allocation12 + $0x5a0] sm:$0xff]
        %v1926 = vld [vmem:[#allocation12 + $0x5a8] sm:$0xff]
        %v1927 = vld [vmem:[#allocation12 + $0x5b0] sm:$0xff]
        %v1928 = vld [vmem:[#allocation12 + $0x5b8] sm:$0xff]
        %v1929 = vld [vmem:[#allocation12 + $0x5c0] sm:$0xff]
        %v1930 = vld [vmem:[#allocation12 + $0x5c8] sm:$0xff]
        %v1931 = vld [vmem:[#allocation12 + $0x5d0] sm:$0xff]
        %v1932 = vld [vmem:[#allocation12 + $0x5d8] sm:$0xff]
        %v1933 = vld [vmem:[#allocation12 + $0x5e0] sm:$0xff]
        %v1934 = vld [vmem:[#allocation12 + $0x5e8] sm:$0xff]
        %v1935 = vld [vmem:[#allocation12 + $0x5f0] sm:$0xff]
        %v1936 = vld [vmem:[#allocation12 + $0x5f8] sm:$0xff]
        %v1937 = vld [vmem:[#allocation12 + $0x600] sm:$0xff]
        %v1938 = vld [vmem:[#allocation12 + $0x608] sm:$0xff]
        %v1939 = vld [vmem:[#allocation12 + $0x610] sm:$0xff]
        %v1940 = vld [vmem:[#allocation12 + $0x618] sm:$0xff]
        %v1941 = vld [vmem:[#allocation12 + $0x620] sm:$0xff]
        %v1942 = vld [vmem:[#allocation12 + $0x628] sm:$0xff]
        %v1943 = vld [vmem:[#allocation12 + $0x630] sm:$0xff]
        %v1944 = vld [vmem:[#allocation12 + $0x638] sm:$0xff]
        %v1945 = vld [vmem:[#allocation12 + $0x640] sm:$0xff]
        %v1946 = vld [vmem:[#allocation12 + $0x648] sm:$0xff]
        %v1947 = vld [vmem:[#allocation12 + $0x650] sm:$0xff]
        %v1948 = vld [vmem:[#allocation12 + $0x658] sm:$0xff]
        %v1949 = vld [vmem:[#allocation12 + $0x660] sm:$0xff]
        %v1950 = vld [vmem:[#allocation12 + $0x668] sm:$0xff]
        %v1951 = vld [vmem:[#allocation12 + $0x670] sm:$0xff]
        %v1952 = vld [vmem:[#allocation12 + $0x678] sm:$0xff]
        %v1953 = vld [vmem:[#allocation12 + $0x680] sm:$0xff]
        %v1954 = vld [vmem:[#allocation12 + $0x688] sm:$0xff]
        %v1955 = vld [vmem:[#allocation12 + $0x690] sm:$0xff]
        %v1956 = vld [vmem:[#allocation12 + $0x698] sm:$0xff]
        %v1957 = vld [vmem:[#allocation12 + $0x6a0] sm:$0xff]
        %v1958 = vld [vmem:[#allocation12 + $0x6a8] sm:$0xff]
        %v1959 = vld [vmem:[#allocation12 + $0x6b0] sm:$0xff]
        %v1960 = vld [vmem:[#allocation12 + $0x6b8] sm:$0xff]
        %v1961 = vld [vmem:[#allocation12 + $0x6c0] sm:$0xff]
        %v1962 = vld [vmem:[#allocation12 + $0x6c8] sm:$0xff]
        %v1963 = vld [vmem:[#allocation12 + $0x6d0] sm:$0xff]
        %v1964 = vld [vmem:[#allocation12 + $0x6d8] sm:$0xff]
        %v1965 = vld [vmem:[#allocation12 + $0x6e0] sm:$0xff]
        %v1966 = vld [vmem:[#allocation12 + $0x6e8] sm:$0xff]
        %v1967 = vld [vmem:[#allocation12 + $0x6f0] sm:$0xff]
        %v1968 = vld [vmem:[#allocation12 + $0x6f8] sm:$0xff]
        %v1969 = vld [vmem:[#allocation12 + $0x700] sm:$0xff]
        %v1970 = vld [vmem:[#allocation12 + $0x708] sm:$0xff]
        %v1971 = vld [vmem:[#allocation12 + $0x710] sm:$0xff]
        %v1972 = vld [vmem:[#allocation12 + $0x718] sm:$0xff]
        %v1973 = vld [vmem:[#allocation12 + $0x720] sm:$0xff]
        %v1974 = vld [vmem:[#allocation12 + $0x728] sm:$0xff]
        %v1975 = vld [vmem:[#allocation12 + $0x730] sm:$0xff]
        %v1976 = vld [vmem:[#allocation12 + $0x738] sm:$0xff]
        %v1977 = vld [vmem:[#allocation12 + $0x740] sm:$0xff]
        %v1978 = vld [vmem:[#allocation12 + $0x748] sm:$0xff]
        %v1979 = vld [vmem:[#allocation12 + $0x750] sm:$0xff]
        %v1980 = vld [vmem:[#allocation12 + $0x758] sm:$0xff]
        %v1981 = vld [vmem:[#allocation12 + $0x760] sm:$0xff]
        %v1982 = vld [vmem:[#allocation12 + $0x768] sm:$0xff]
        %v1983 = vld [vmem:[#allocation12 + $0x770] sm:$0xff]
        %v1984 = vld [vmem:[#allocation12 + $0x778] sm:$0xff]
        %v1985 = vld [vmem:[#allocation12 + $0x780] sm:$0xff]
        %v1986 = vld [vmem:[#allocation12 + $0x788] sm:$0xff]
        %v1987 = vld [vmem:[#allocation12 + $0x790] sm:$0xff]
        %v1988 = vld [vmem:[#allocation12 + $0x798] sm:$0xff]
        %v1989 = vld [vmem:[#allocation12 + $0x7a0] sm:$0xff]
        %v1990 = vld [vmem:[#allocation12 + $0x7a8] sm:$0xff]
        %v1991 = vld [vmem:[#allocation12 + $0x7b0] sm:$0xff]
        %v1992 = vld [vmem:[#allocation12 + $0x7b8] sm:$0xff]
        %v1993 = vld [vmem:[#allocation12 + $0x7c0] sm:$0xff]
        %v1994 = vld [vmem:[#allocation12 + $0x7c8] sm:$0xff]
        %v1995 = vld [vmem:[#allocation12 + $0x7d0] sm:$0xff]
        %v1996 = vld [vmem:[#allocation12 + $0x7d8] sm:$0xff]
        %v1997 = vld [vmem:[#allocation12 + $0x7e0] sm:$0xff]
        %v1998 = vld [vmem:[#allocation12 + $0x7e8] sm:$0xff]
        %v1999 = vld [vmem:[#allocation12 + $0x7f0] sm:$0xff]
        %v2000 = vld [vmem:[#allocation12 + $0x7f8] sm:$0xff]
        %v2001 = vld [vmem:[#allocation15 + $0x13] sm:$0xff]
        %v2003 = vlaneseq
        %v2004 = vshrl.u32 %v2003, 7
        %v2005 = vsub.s32 0, %v2004
        %v2006 = vrot.slane %v2001, %v2005
        %v2007 = vlaneseq
        %v2008 = vshrl.u32 %v2007, 7
        %v2009 = vsub.s32 1, %v2008
        %v2010 = vrot.slane %v2001, %v2009
        %v2011 = vlaneseq
        %v2012 = vshrl.u32 %v2011, 7
        %v2013 = vsub.s32 2, %v2012
        %v2014 = vrot.slane %v2001, %v2013
        %v2015 = vlaneseq
        %v2016 = vshrl.u32 %v2015, 7
        %v2017 = vsub.s32 3, %v2016
        %v2018 = vrot.slane %v2001, %v2017
        %v2019 = vlaneseq
        %v2020 = vshrl.u32 %v2019, 7
        %v2021 = vsub.s32 4, %v2020
        %v2022 = vrot.slane %v2001, %v2021
        %v2023 = vlaneseq
        %v2024 = vshrl.u32 %v2023, 7
        %v2025 = vsub.s32 5, %v2024
        %v2026 = vrot.slane %v2001, %v2025
        %v2027 = vlaneseq
        %v2028 = vshrl.u32 %v2027, 7
        %v2029 = vsub.s32 6, %v2028
        %v2030 = vrot.slane %v2001, %v2029
        %v2031 = vlaneseq
        %v2032 = vshrl.u32 %v2031, 7
        %v2033 = vsub.s32 7, %v2032
        %v2034 = vrot.slane %v2001, %v2033
        %v2299 = vunpack.c.l.b16 %v1745
        %v2300 = vunpack.c.h.b16 %v1745
        %v2301 = vunpack.c.l.b16 %v1746
        %v2302 = vunpack.c.h.b16 %v1746
        %v2303 = vunpack.c.l.b16 %v1747
        %v2304 = vunpack.c.h.b16 %v1747
        %v2305 = vunpack.c.l.b16 %v1748
        %v2306 = vunpack.c.h.b16 %v1748
        %v2307 = vunpack.c.l.b16 %v1749
        %v2308 = vunpack.c.h.b16 %v1749
        %v2309 = vunpack.c.l.b16 %v1750
        %v2310 = vunpack.c.h.b16 %v1750
        %v2311 = vunpack.c.l.b16 %v1751
        %v2312 = vunpack.c.h.b16 %v1751
        %v2313 = vunpack.c.l.b16 %v1752
        %v2314 = vunpack.c.h.b16 %v1752
        %v2315 = vunpack.c.l.b16 %v1753
        %v2316 = vunpack.c.h.b16 %v1753
        %v2317 = vunpack.c.l.b16 %v1754
        %v2318 = vunpack.c.h.b16 %v1754
        %v2319 = vunpack.c.l.b16 %v1755
        %v2320 = vunpack.c.h.b16 %v1755
        %v2321 = vunpack.c.l.b16 %v1756
        %v2322 = vunpack.c.h.b16 %v1756
        %v2323 = vunpack.c.l.b16 %v1757
        %v2324 = vunpack.c.h.b16 %v1757
        %v2325 = vunpack.c.l.b16 %v1758
        %v2326 = vunpack.c.h.b16 %v1758
        %v2327 = vunpack.c.l.b16 %v1759
        %v2328 = vunpack.c.h.b16 %v1759
        %v2329 = vunpack.c.l.b16 %v1760
        %v2330 = vunpack.c.h.b16 %v1760
        %v2331 = vunpack.c.l.b16 %v1761
        %v2332 = vunpack.c.h.b16 %v1761
        %v2333 = vunpack.c.l.b16 %v1762
        %v2334 = vunpack.c.h.b16 %v1762
        %v2335 = vunpack.c.l.b16 %v1763
        %v2336 = vunpack.c.h.b16 %v1763
        %v2337 = vunpack.c.l.b16 %v1764
        %v2338 = vunpack.c.h.b16 %v1764
        %v2339 = vunpack.c.l.b16 %v1765
        %v2340 = vunpack.c.h.b16 %v1765
        %v2341 = vunpack.c.l.b16 %v1766
        %v2342 = vunpack.c.h.b16 %v1766
        %v2343 = vunpack.c.l.b16 %v1767
        %v2344 = vunpack.c.h.b16 %v1767
        %v2345 = vunpack.c.l.b16 %v1768
        %v2346 = vunpack.c.h.b16 %v1768
        %v2347 = vunpack.c.l.b16 %v1769
        %v2348 = vunpack.c.h.b16 %v1769
        %v2349 = vunpack.c.l.b16 %v1770
        %v2350 = vunpack.c.h.b16 %v1770
        %v2351 = vunpack.c.l.b16 %v1771
        %v2352 = vunpack.c.h.b16 %v1771
        %v2353 = vunpack.c.l.b16 %v1772
        %v2354 = vunpack.c.h.b16 %v1772
        %v2355 = vunpack.c.l.b16 %v1773
        %v2356 = vunpack.c.h.b16 %v1773
        %v2357 = vunpack.c.l.b16 %v1774
        %v2358 = vunpack.c.h.b16 %v1774
        %v2359 = vunpack.c.l.b16 %v1775
        %v2360 = vunpack.c.h.b16 %v1775
        %v2361 = vunpack.c.l.b16 %v1776
        %v2362 = vunpack.c.h.b16 %v1776
        %v2363 = vunpack.c.l.b16 %v1777
        %v2364 = vunpack.c.h.b16 %v1777
        %v2365 = vunpack.c.l.b16 %v1778
        %v2366 = vunpack.c.h.b16 %v1778
        %v2367 = vunpack.c.l.b16 %v1779
        %v2368 = vunpack.c.h.b16 %v1779
        %v2369 = vunpack.c.l.b16 %v1780
        %v2370 = vunpack.c.h.b16 %v1780
        %v2371 = vunpack.c.l.b16 %v1781
        %v2372 = vunpack.c.h.b16 %v1781
        %v2373 = vunpack.c.l.b16 %v1782
        %v2374 = vunpack.c.h.b16 %v1782
        %v2375 = vunpack.c.l.b16 %v1783
        %v2376 = vunpack.c.h.b16 %v1783
        %v2377 = vunpack.c.l.b16 %v1784
        %v2378 = vunpack.c.h.b16 %v1784
        %v2379 = vunpack.c.l.b16 %v1785
        %v2380 = vunpack.c.h.b16 %v1785
        %v2381 = vunpack.c.l.b16 %v1786
        %v2382 = vunpack.c.h.b16 %v1786
        %v2383 = vunpack.c.l.b16 %v1787
        %v2384 = vunpack.c.h.b16 %v1787
        %v2385 = vunpack.c.l.b16 %v1788
        %v2386 = vunpack.c.h.b16 %v1788
        %v2387 = vunpack.c.l.b16 %v1789
        %v2388 = vunpack.c.h.b16 %v1789
        %v2389 = vunpack.c.l.b16 %v1790
        %v2390 = vunpack.c.h.b16 %v1790
        %v2391 = vunpack.c.l.b16 %v1791
        %v2392 = vunpack.c.h.b16 %v1791
        %v2393 = vunpack.c.l.b16 %v1792
        %v2394 = vunpack.c.h.b16 %v1792
        %v2395 = vunpack.c.l.b16 %v1793
        %v2396 = vunpack.c.h.b16 %v1793
        %v2397 = vunpack.c.l.b16 %v1794
        %v2398 = vunpack.c.h.b16 %v1794
        %v2399 = vunpack.c.l.b16 %v1795
        %v2400 = vunpack.c.h.b16 %v1795
        %v2401 = vunpack.c.l.b16 %v1796
        %v2402 = vunpack.c.h.b16 %v1796
        %v2403 = vunpack.c.l.b16 %v1797
        %v2404 = vunpack.c.h.b16 %v1797
        %v2405 = vunpack.c.l.b16 %v1798
        %v2406 = vunpack.c.h.b16 %v1798
        %v2407 = vunpack.c.l.b16 %v1799
        %v2408 = vunpack.c.h.b16 %v1799
        %v2409 = vunpack.c.l.b16 %v1800
        %v2410 = vunpack.c.h.b16 %v1800
        %v2411 = vunpack.c.l.b16 %v1801
        %v2412 = vunpack.c.h.b16 %v1801
        %v2413 = vunpack.c.l.b16 %v1802
        %v2414 = vunpack.c.h.b16 %v1802
        %v2415 = vunpack.c.l.b16 %v1803
        %v2416 = vunpack.c.h.b16 %v1803
        %v2417 = vunpack.c.l.b16 %v1804
        %v2418 = vunpack.c.h.b16 %v1804
        %v2419 = vunpack.c.l.b16 %v1805
        %v2420 = vunpack.c.h.b16 %v1805
        %v2421 = vunpack.c.l.b16 %v1806
        %v2422 = vunpack.c.h.b16 %v1806
        %v2423 = vunpack.c.l.b16 %v1807
        %v2424 = vunpack.c.h.b16 %v1807
        %v2425 = vunpack.c.l.b16 %v1808
        %v2426 = vunpack.c.h.b16 %v1808
        %v2427 = vunpack.c.l.b16 %v1809
        %v2428 = vunpack.c.h.b16 %v1809
        %v2429 = vunpack.c.l.b16 %v1810
        %v2430 = vunpack.c.h.b16 %v1810
        %v2431 = vunpack.c.l.b16 %v1811
        %v2432 = vunpack.c.h.b16 %v1811
        %v2433 = vunpack.c.l.b16 %v1812
        %v2434 = vunpack.c.h.b16 %v1812
        %v2435 = vunpack.c.l.b16 %v1813
        %v2436 = vunpack.c.h.b16 %v1813
        %v2437 = vunpack.c.l.b16 %v1814
        %v2438 = vunpack.c.h.b16 %v1814
        %v2439 = vunpack.c.l.b16 %v1815
        %v2440 = vunpack.c.h.b16 %v1815
        %v2441 = vunpack.c.l.b16 %v1816
        %v2442 = vunpack.c.h.b16 %v1816
        %v2443 = vunpack.c.l.b16 %v1817
        %v2444 = vunpack.c.h.b16 %v1817
        %v2445 = vunpack.c.l.b16 %v1818
        %v2446 = vunpack.c.h.b16 %v1818
        %v2447 = vunpack.c.l.b16 %v1819
        %v2448 = vunpack.c.h.b16 %v1819
        %v2449 = vunpack.c.l.b16 %v1820
        %v2450 = vunpack.c.h.b16 %v1820
        %v2451 = vunpack.c.l.b16 %v1821
        %v2452 = vunpack.c.h.b16 %v1821
        %v2453 = vunpack.c.l.b16 %v1822
        %v2454 = vunpack.c.h.b16 %v1822
        %v2455 = vunpack.c.l.b16 %v1823
        %v2456 = vunpack.c.h.b16 %v1823
        %v2457 = vunpack.c.l.b16 %v1824
        %v2458 = vunpack.c.h.b16 %v1824
        %v2459 = vunpack.c.l.b16 %v1825
        %v2460 = vunpack.c.h.b16 %v1825
        %v2461 = vunpack.c.l.b16 %v1826
        %v2462 = vunpack.c.h.b16 %v1826
        %v2463 = vunpack.c.l.b16 %v1827
        %v2464 = vunpack.c.h.b16 %v1827
        %v2465 = vunpack.c.l.b16 %v1828
        %v2466 = vunpack.c.h.b16 %v1828
        %v2467 = vunpack.c.l.b16 %v1829
        %v2468 = vunpack.c.h.b16 %v1829
        %v2469 = vunpack.c.l.b16 %v1830
        %v2470 = vunpack.c.h.b16 %v1830
        %v2471 = vunpack.c.l.b16 %v1831
        %v2472 = vunpack.c.h.b16 %v1831
        %v2473 = vunpack.c.l.b16 %v1832
        %v2474 = vunpack.c.h.b16 %v1832
        %v2475 = vunpack.c.l.b16 %v1833
        %v2476 = vunpack.c.h.b16 %v1833
        %v2477 = vunpack.c.l.b16 %v1834
        %v2478 = vunpack.c.h.b16 %v1834
        %v2479 = vunpack.c.l.b16 %v1835
        %v2480 = vunpack.c.h.b16 %v1835
        %v2481 = vunpack.c.l.b16 %v1836
        %v2482 = vunpack.c.h.b16 %v1836
        %v2483 = vunpack.c.l.b16 %v1837
        %v2484 = vunpack.c.h.b16 %v1837
        %v2485 = vunpack.c.l.b16 %v1838
        %v2486 = vunpack.c.h.b16 %v1838
        %v2487 = vunpack.c.l.b16 %v1839
        %v2488 = vunpack.c.h.b16 %v1839
        %v2489 = vunpack.c.l.b16 %v1840
        %v2490 = vunpack.c.h.b16 %v1840
        %v2491 = vunpack.c.l.b16 %v1841
        %v2492 = vunpack.c.h.b16 %v1841
        %v2493 = vunpack.c.l.b16 %v1842
        %v2494 = vunpack.c.h.b16 %v1842
        %v2495 = vunpack.c.l.b16 %v1843
        %v2496 = vunpack.c.h.b16 %v1843
        %v2497 = vunpack.c.l.b16 %v1844
        %v2498 = vunpack.c.h.b16 %v1844
        %v2499 = vunpack.c.l.b16 %v1845
        %v2500 = vunpack.c.h.b16 %v1845
        %v2501 = vunpack.c.l.b16 %v1846
        %v2502 = vunpack.c.h.b16 %v1846
        %v2503 = vunpack.c.l.b16 %v1847
        %v2504 = vunpack.c.h.b16 %v1847
        %v2505 = vunpack.c.l.b16 %v1848
        %v2506 = vunpack.c.h.b16 %v1848
        %v2507 = vunpack.c.l.b16 %v1849
        %v2508 = vunpack.c.h.b16 %v1849
        %v2509 = vunpack.c.l.b16 %v1850
        %v2510 = vunpack.c.h.b16 %v1850
        %v2511 = vunpack.c.l.b16 %v1851
        %v2512 = vunpack.c.h.b16 %v1851
        %v2513 = vunpack.c.l.b16 %v1852
        %v2514 = vunpack.c.h.b16 %v1852
        %v2515 = vunpack.c.l.b16 %v1853
        %v2516 = vunpack.c.h.b16 %v1853
        %v2517 = vunpack.c.l.b16 %v1854
        %v2518 = vunpack.c.h.b16 %v1854
        %v2519 = vunpack.c.l.b16 %v1855
        %v2520 = vunpack.c.h.b16 %v1855
        %v2521 = vunpack.c.l.b16 %v1856
        %v2522 = vunpack.c.h.b16 %v1856
        %v2523 = vunpack.c.l.b16 %v1857
        %v2524 = vunpack.c.h.b16 %v1857
        %v2525 = vunpack.c.l.b16 %v1858
        %v2526 = vunpack.c.h.b16 %v1858
        %v2527 = vunpack.c.l.b16 %v1859
        %v2528 = vunpack.c.h.b16 %v1859
        %v2529 = vunpack.c.l.b16 %v1860
        %v2530 = vunpack.c.h.b16 %v1860
        %v2531 = vunpack.c.l.b16 %v1861
        %v2532 = vunpack.c.h.b16 %v1861
        %v2533 = vunpack.c.l.b16 %v1862
        %v2534 = vunpack.c.h.b16 %v1862
        %v2535 = vunpack.c.l.b16 %v1863
        %v2536 = vunpack.c.h.b16 %v1863
        %v2537 = vunpack.c.l.b16 %v1864
        %v2538 = vunpack.c.h.b16 %v1864
        %v2539 = vunpack.c.l.b16 %v1865
        %v2540 = vunpack.c.h.b16 %v1865
        %v2541 = vunpack.c.l.b16 %v1866
        %v2542 = vunpack.c.h.b16 %v1866
        %v2543 = vunpack.c.l.b16 %v1867
        %v2544 = vunpack.c.h.b16 %v1867
        %v2545 = vunpack.c.l.b16 %v1868
        %v2546 = vunpack.c.h.b16 %v1868
        %v2547 = vunpack.c.l.b16 %v1869
        %v2548 = vunpack.c.h.b16 %v1869
        %v2549 = vunpack.c.l.b16 %v1870
        %v2550 = vunpack.c.h.b16 %v1870
        %v2551 = vunpack.c.l.b16 %v1871
        %v2552 = vunpack.c.h.b16 %v1871
        %v2553 = vunpack.c.l.b16 %v1872
        %v2554 = vunpack.c.h.b16 %v1872
        %v2555 = vunpack.c.l.b16 %v1873
        %v2556 = vunpack.c.h.b16 %v1873
        %v2557 = vunpack.c.l.b16 %v1874
        %v2558 = vunpack.c.h.b16 %v1874
        %v2559 = vunpack.c.l.b16 %v1875
        %v2560 = vunpack.c.h.b16 %v1875
        %v2561 = vunpack.c.l.b16 %v1876
        %v2562 = vunpack.c.h.b16 %v1876
        %v2563 = vunpack.c.l.b16 %v1877
        %v2564 = vunpack.c.h.b16 %v1877
        %v2565 = vunpack.c.l.b16 %v1878
        %v2566 = vunpack.c.h.b16 %v1878
        %v2567 = vunpack.c.l.b16 %v1879
        %v2568 = vunpack.c.h.b16 %v1879
        %v2569 = vunpack.c.l.b16 %v1880
        %v2570 = vunpack.c.h.b16 %v1880
        %v2571 = vunpack.c.l.b16 %v1881
        %v2572 = vunpack.c.h.b16 %v1881
        %v2573 = vunpack.c.l.b16 %v1882
        %v2574 = vunpack.c.h.b16 %v1882
        %v2575 = vunpack.c.l.b16 %v1883
        %v2576 = vunpack.c.h.b16 %v1883
        %v2577 = vunpack.c.l.b16 %v1884
        %v2578 = vunpack.c.h.b16 %v1884
        %v2579 = vunpack.c.l.b16 %v1885
        %v2580 = vunpack.c.h.b16 %v1885
        %v2581 = vunpack.c.l.b16 %v1886
        %v2582 = vunpack.c.h.b16 %v1886
        %v2583 = vunpack.c.l.b16 %v1887
        %v2584 = vunpack.c.h.b16 %v1887
        %v2585 = vunpack.c.l.b16 %v1888
        %v2586 = vunpack.c.h.b16 %v1888
        %v2587 = vunpack.c.l.b16 %v1889
        %v2588 = vunpack.c.h.b16 %v1889
        %v2589 = vunpack.c.l.b16 %v1890
        %v2590 = vunpack.c.h.b16 %v1890
        %v2591 = vunpack.c.l.b16 %v1891
        %v2592 = vunpack.c.h.b16 %v1891
        %v2593 = vunpack.c.l.b16 %v1892
        %v2594 = vunpack.c.h.b16 %v1892
        %v2595 = vunpack.c.l.b16 %v1893
        %v2596 = vunpack.c.h.b16 %v1893
        %v2597 = vunpack.c.l.b16 %v1894
        %v2598 = vunpack.c.h.b16 %v1894
        %v2599 = vunpack.c.l.b16 %v1895
        %v2600 = vunpack.c.h.b16 %v1895
        %v2601 = vunpack.c.l.b16 %v1896
        %v2602 = vunpack.c.h.b16 %v1896
        %v2603 = vunpack.c.l.b16 %v1897
        %v2604 = vunpack.c.h.b16 %v1897
        %v2605 = vunpack.c.l.b16 %v1898
        %v2606 = vunpack.c.h.b16 %v1898
        %v2607 = vunpack.c.l.b16 %v1899
        %v2608 = vunpack.c.h.b16 %v1899
        %v2609 = vunpack.c.l.b16 %v1900
        %v2610 = vunpack.c.h.b16 %v1900
        %v2611 = vunpack.c.l.b16 %v1901
        %v2612 = vunpack.c.h.b16 %v1901
        %v2613 = vunpack.c.l.b16 %v1902
        %v2614 = vunpack.c.h.b16 %v1902
        %v2615 = vunpack.c.l.b16 %v1903
        %v2616 = vunpack.c.h.b16 %v1903
        %v2617 = vunpack.c.l.b16 %v1904
        %v2618 = vunpack.c.h.b16 %v1904
        %v2619 = vunpack.c.l.b16 %v1905
        %v2620 = vunpack.c.h.b16 %v1905
        %v2621 = vunpack.c.l.b16 %v1906
        %v2622 = vunpack.c.h.b16 %v1906
        %v2623 = vunpack.c.l.b16 %v1907
        %v2624 = vunpack.c.h.b16 %v1907
        %v2625 = vunpack.c.l.b16 %v1908
        %v2626 = vunpack.c.h.b16 %v1908
        %v2627 = vunpack.c.l.b16 %v1909
        %v2628 = vunpack.c.h.b16 %v1909
        %v2629 = vunpack.c.l.b16 %v1910
        %v2630 = vunpack.c.h.b16 %v1910
        %v2631 = vunpack.c.l.b16 %v1911
        %v2632 = vunpack.c.h.b16 %v1911
        %v2633 = vunpack.c.l.b16 %v1912
        %v2634 = vunpack.c.h.b16 %v1912
        %v2635 = vunpack.c.l.b16 %v1913
        %v2636 = vunpack.c.h.b16 %v1913
        %v2637 = vunpack.c.l.b16 %v1914
        %v2638 = vunpack.c.h.b16 %v1914
        %v2639 = vunpack.c.l.b16 %v1915
        %v2640 = vunpack.c.h.b16 %v1915
        %v2641 = vunpack.c.l.b16 %v1916
        %v2642 = vunpack.c.h.b16 %v1916
        %v2643 = vunpack.c.l.b16 %v1917
        %v2644 = vunpack.c.h.b16 %v1917
        %v2645 = vunpack.c.l.b16 %v1918
        %v2646 = vunpack.c.h.b16 %v1918
        %v2647 = vunpack.c.l.b16 %v1919
        %v2648 = vunpack.c.h.b16 %v1919
        %v2649 = vunpack.c.l.b16 %v1920
        %v2650 = vunpack.c.h.b16 %v1920
        %v2651 = vunpack.c.l.b16 %v1921
        %v2652 = vunpack.c.h.b16 %v1921
        %v2653 = vunpack.c.l.b16 %v1922
        %v2654 = vunpack.c.h.b16 %v1922
        %v2655 = vunpack.c.l.b16 %v1923
        %v2656 = vunpack.c.h.b16 %v1923
        %v2657 = vunpack.c.l.b16 %v1924
        %v2658 = vunpack.c.h.b16 %v1924
        %v2659 = vunpack.c.l.b16 %v1925
        %v2660 = vunpack.c.h.b16 %v1925
        %v2661 = vunpack.c.l.b16 %v1926
        %v2662 = vunpack.c.h.b16 %v1926
        %v2663 = vunpack.c.l.b16 %v1927
        %v2664 = vunpack.c.h.b16 %v1927
        %v2665 = vunpack.c.l.b16 %v1928
        %v2666 = vunpack.c.h.b16 %v1928
        %v2667 = vunpack.c.l.b16 %v1929
        %v2668 = vunpack.c.h.b16 %v1929
        %v2669 = vunpack.c.l.b16 %v1930
        %v2670 = vunpack.c.h.b16 %v1930
        %v2671 = vunpack.c.l.b16 %v1931
        %v2672 = vunpack.c.h.b16 %v1931
        %v2673 = vunpack.c.l.b16 %v1932
        %v2674 = vunpack.c.h.b16 %v1932
        %v2675 = vunpack.c.l.b16 %v1933
        %v2676 = vunpack.c.h.b16 %v1933
        %v2677 = vunpack.c.l.b16 %v1934
        %v2678 = vunpack.c.h.b16 %v1934
        %v2679 = vunpack.c.l.b16 %v1935
        %v2680 = vunpack.c.h.b16 %v1935
        %v2681 = vunpack.c.l.b16 %v1936
        %v2682 = vunpack.c.h.b16 %v1936
        %v2683 = vunpack.c.l.b16 %v1937
        %v2684 = vunpack.c.h.b16 %v1937
        %v2685 = vunpack.c.l.b16 %v1938
        %v2686 = vunpack.c.h.b16 %v1938
        %v2687 = vunpack.c.l.b16 %v1939
        %v2688 = vunpack.c.h.b16 %v1939
        %v2689 = vunpack.c.l.b16 %v1940
        %v2690 = vunpack.c.h.b16 %v1940
        %v2691 = vunpack.c.l.b16 %v1941
        %v2692 = vunpack.c.h.b16 %v1941
        %v2693 = vunpack.c.l.b16 %v1942
        %v2694 = vunpack.c.h.b16 %v1942
        %v2695 = vunpack.c.l.b16 %v1943
        %v2696 = vunpack.c.h.b16 %v1943
        %v2697 = vunpack.c.l.b16 %v1944
        %v2698 = vunpack.c.h.b16 %v1944
        %v2699 = vunpack.c.l.b16 %v1945
        %v2700 = vunpack.c.h.b16 %v1945
        %v2701 = vunpack.c.l.b16 %v1946
        %v2702 = vunpack.c.h.b16 %v1946
        %v2703 = vunpack.c.l.b16 %v1947
        %v2704 = vunpack.c.h.b16 %v1947
        %v2705 = vunpack.c.l.b16 %v1948
        %v2706 = vunpack.c.h.b16 %v1948
        %v2707 = vunpack.c.l.b16 %v1949
        %v2708 = vunpack.c.h.b16 %v1949
        %v2709 = vunpack.c.l.b16 %v1950
        %v2710 = vunpack.c.h.b16 %v1950
        %v2711 = vunpack.c.l.b16 %v1951
        %v2712 = vunpack.c.h.b16 %v1951
        %v2713 = vunpack.c.l.b16 %v1952
        %v2714 = vunpack.c.h.b16 %v1952
        %v2715 = vunpack.c.l.b16 %v1953
        %v2716 = vunpack.c.h.b16 %v1953
        %v2717 = vunpack.c.l.b16 %v1954
        %v2718 = vunpack.c.h.b16 %v1954
        %v2719 = vunpack.c.l.b16 %v1955
        %v2720 = vunpack.c.h.b16 %v1955
        %v2721 = vunpack.c.l.b16 %v1956
        %v2722 = vunpack.c.h.b16 %v1956
        %v2723 = vunpack.c.l.b16 %v1957
        %v2724 = vunpack.c.h.b16 %v1957
        %v2725 = vunpack.c.l.b16 %v1958
        %v2726 = vunpack.c.h.b16 %v1958
        %v2727 = vunpack.c.l.b16 %v1959
        %v2728 = vunpack.c.h.b16 %v1959
        %v2729 = vunpack.c.l.b16 %v1960
        %v2730 = vunpack.c.h.b16 %v1960
        %v2731 = vunpack.c.l.b16 %v1961
        %v2732 = vunpack.c.h.b16 %v1961
        %v2733 = vunpack.c.l.b16 %v1962
        %v2734 = vunpack.c.h.b16 %v1962
        %v2735 = vunpack.c.l.b16 %v1963
        %v2736 = vunpack.c.h.b16 %v1963
        %v2737 = vunpack.c.l.b16 %v1964
        %v2738 = vunpack.c.h.b16 %v1964
        %v2739 = vunpack.c.l.b16 %v1965
        %v2740 = vunpack.c.h.b16 %v1965
        %v2741 = vunpack.c.l.b16 %v1966
        %v2742 = vunpack.c.h.b16 %v1966
        %v2743 = vunpack.c.l.b16 %v1967
        %v2744 = vunpack.c.h.b16 %v1967
        %v2745 = vunpack.c.l.b16 %v1968
        %v2746 = vunpack.c.h.b16 %v1968
        %v2747 = vunpack.c.l.b16 %v1969
        %v2748 = vunpack.c.h.b16 %v1969
        %v2749 = vunpack.c.l.b16 %v1970
        %v2750 = vunpack.c.h.b16 %v1970
        %v2751 = vunpack.c.l.b16 %v1971
        %v2752 = vunpack.c.h.b16 %v1971
        %v2753 = vunpack.c.l.b16 %v1972
        %v2754 = vunpack.c.h.b16 %v1972
        %v2755 = vunpack.c.l.b16 %v1973
        %v2756 = vunpack.c.h.b16 %v1973
        %v2757 = vunpack.c.l.b16 %v1974
        %v2758 = vunpack.c.h.b16 %v1974
        %v2759 = vunpack.c.l.b16 %v1975
        %v2760 = vunpack.c.h.b16 %v1975
        %v2761 = vunpack.c.l.b16 %v1976
        %v2762 = vunpack.c.h.b16 %v1976
        %v2763 = vunpack.c.l.b16 %v1977
        %v2764 = vunpack.c.h.b16 %v1977
        %v2765 = vunpack.c.l.b16 %v1978
        %v2766 = vunpack.c.h.b16 %v1978
        %v2767 = vunpack.c.l.b16 %v1979
        %v2768 = vunpack.c.h.b16 %v1979
        %v2769 = vunpack.c.l.b16 %v1980
        %v2770 = vunpack.c.h.b16 %v1980
        %v2771 = vunpack.c.l.b16 %v1981
        %v2772 = vunpack.c.h.b16 %v1981
        %v2773 = vunpack.c.l.b16 %v1982
        %v2774 = vunpack.c.h.b16 %v1982
        %v2775 = vunpack.c.l.b16 %v1983
        %v2776 = vunpack.c.h.b16 %v1983
        %v2777 = vunpack.c.l.b16 %v1984
        %v2778 = vunpack.c.h.b16 %v1984
        %v2779 = vunpack.c.l.b16 %v1985
        %v2780 = vunpack.c.h.b16 %v1985
        %v2781 = vunpack.c.l.b16 %v1986
        %v2782 = vunpack.c.h.b16 %v1986
        %v2783 = vunpack.c.l.b16 %v1987
        %v2784 = vunpack.c.h.b16 %v1987
        %v2785 = vunpack.c.l.b16 %v1988
        %v2786 = vunpack.c.h.b16 %v1988
        %v2787 = vunpack.c.l.b16 %v1989
        %v2788 = vunpack.c.h.b16 %v1989
        %v2789 = vunpack.c.l.b16 %v1990
        %v2790 = vunpack.c.h.b16 %v1990
        %v2791 = vunpack.c.l.b16 %v1991
        %v2792 = vunpack.c.h.b16 %v1991
        %v2793 = vunpack.c.l.b16 %v1992
        %v2794 = vunpack.c.h.b16 %v1992
        %v2795 = vunpack.c.l.b16 %v1993
        %v2796 = vunpack.c.h.b16 %v1993
        %v2797 = vunpack.c.l.b16 %v1994
        %v2798 = vunpack.c.h.b16 %v1994
        %v2799 = vunpack.c.l.b16 %v1995
        %v2800 = vunpack.c.h.b16 %v1995
        %v2801 = vunpack.c.l.b16 %v1996
        %v2802 = vunpack.c.h.b16 %v1996
        %v2803 = vunpack.c.l.b16 %v1997
        %v2804 = vunpack.c.h.b16 %v1997
        %v2805 = vunpack.c.l.b16 %v1998
        %v2806 = vunpack.c.h.b16 %v1998
        %v2807 = vunpack.c.l.b16 %v1999
        %v2808 = vunpack.c.h.b16 %v1999
        %v2809 = vunpack.c.l.b16 %v2000
        %v2810 = vunpack.c.h.b16 %v2000
        %v2811 = vpack.c.b16 %v2307, %v2299
        %v2812 = vpack.c.b16 %v2308, %v2300
        %v2813 = vpack.c.b16 %v2309, %v2301
        %v2814 = vpack.c.b16 %v2310, %v2302
        %v2815 = vpack.c.b16 %v2311, %v2303
        %v2816 = vpack.c.b16 %v2312, %v2304
        %v2817 = vpack.c.b16 %v2313, %v2305
        %v2818 = vpack.c.b16 %v2314, %v2306
        %v2819 = vpack.c.b16 %v2323, %v2315
        %v2820 = vpack.c.b16 %v2324, %v2316
        %v2821 = vpack.c.b16 %v2325, %v2317
        %v2822 = vpack.c.b16 %v2326, %v2318
        %v2823 = vpack.c.b16 %v2327, %v2319
        %v2824 = vpack.c.b16 %v2328, %v2320
        %v2825 = vpack.c.b16 %v2329, %v2321
        %v2826 = vpack.c.b16 %v2330, %v2322
        %v2827 = vpack.c.b16 %v2339, %v2331
        %v2828 = vpack.c.b16 %v2340, %v2332
        %v2829 = vpack.c.b16 %v2341, %v2333
        %v2830 = vpack.c.b16 %v2342, %v2334
        %v2831 = vpack.c.b16 %v2343, %v2335
        %v2832 = vpack.c.b16 %v2344, %v2336
        %v2833 = vpack.c.b16 %v2345, %v2337
        %v2834 = vpack.c.b16 %v2346, %v2338
        %v2835 = vpack.c.b16 %v2355, %v2347
        %v2836 = vpack.c.b16 %v2356, %v2348
        %v2837 = vpack.c.b16 %v2357, %v2349
        %v2838 = vpack.c.b16 %v2358, %v2350
        %v2839 = vpack.c.b16 %v2359, %v2351
        %v2840 = vpack.c.b16 %v2360, %v2352
        %v2841 = vpack.c.b16 %v2361, %v2353
        %v2842 = vpack.c.b16 %v2362, %v2354
        %v2843 = vpack.c.b16 %v2371, %v2363
        %v2844 = vpack.c.b16 %v2372, %v2364
        %v2845 = vpack.c.b16 %v2373, %v2365
        %v2846 = vpack.c.b16 %v2374, %v2366
        %v2847 = vpack.c.b16 %v2375, %v2367
        %v2848 = vpack.c.b16 %v2376, %v2368
        %v2849 = vpack.c.b16 %v2377, %v2369
        %v2850 = vpack.c.b16 %v2378, %v2370
        %v2851 = vpack.c.b16 %v2387, %v2379
        %v2852 = vpack.c.b16 %v2388, %v2380
        %v2853 = vpack.c.b16 %v2389, %v2381
        %v2854 = vpack.c.b16 %v2390, %v2382
        %v2855 = vpack.c.b16 %v2391, %v2383
        %v2856 = vpack.c.b16 %v2392, %v2384
        %v2857 = vpack.c.b16 %v2393, %v2385
        %v2858 = vpack.c.b16 %v2394, %v2386
        %v2859 = vpack.c.b16 %v2403, %v2395
        %v2860 = vpack.c.b16 %v2404, %v2396
        %v2861 = vpack.c.b16 %v2405, %v2397
        %v2862 = vpack.c.b16 %v2406, %v2398
        %v2863 = vpack.c.b16 %v2407, %v2399
        %v2864 = vpack.c.b16 %v2408, %v2400
        %v2865 = vpack.c.b16 %v2409, %v2401
        %v2866 = vpack.c.b16 %v2410, %v2402
        %v2867 = vpack.c.b16 %v2419, %v2411
        %v2868 = vpack.c.b16 %v2420, %v2412
        %v2869 = vpack.c.b16 %v2421, %v2413
        %v2870 = vpack.c.b16 %v2422, %v2414
        %v2871 = vpack.c.b16 %v2423, %v2415
        %v2872 = vpack.c.b16 %v2424, %v2416
        %v2873 = vpack.c.b16 %v2425, %v2417
        %v2874 = vpack.c.b16 %v2426, %v2418
        %v2875 = vpack.c.b16 %v2435, %v2427
        %v2876 = vpack.c.b16 %v2436, %v2428
        %v2877 = vpack.c.b16 %v2437, %v2429
        %v2878 = vpack.c.b16 %v2438, %v2430
        %v2879 = vpack.c.b16 %v2439, %v2431
        %v2880 = vpack.c.b16 %v2440, %v2432
        %v2881 = vpack.c.b16 %v2441, %v2433
        %v2882 = vpack.c.b16 %v2442, %v2434
        %v2883 = vpack.c.b16 %v2451, %v2443
        %v2884 = vpack.c.b16 %v2452, %v2444
        %v2885 = vpack.c.b16 %v2453, %v2445
        %v2886 = vpack.c.b16 %v2454, %v2446
        %v2887 = vpack.c.b16 %v2455, %v2447
        %v2888 = vpack.c.b16 %v2456, %v2448
        %v2889 = vpack.c.b16 %v2457, %v2449
        %v2890 = vpack.c.b16 %v2458, %v2450
        %v2891 = vpack.c.b16 %v2467, %v2459
        %v2892 = vpack.c.b16 %v2468, %v2460
        %v2893 = vpack.c.b16 %v2469, %v2461
        %v2894 = vpack.c.b16 %v2470, %v2462
        %v2895 = vpack.c.b16 %v2471, %v2463
        %v2896 = vpack.c.b16 %v2472, %v2464
        %v2897 = vpack.c.b16 %v2473, %v2465
        %v2898 = vpack.c.b16 %v2474, %v2466
        %v2899 = vpack.c.b16 %v2483, %v2475
        %v2900 = vpack.c.b16 %v2484, %v2476
        %v2901 = vpack.c.b16 %v2485, %v2477
        %v2902 = vpack.c.b16 %v2486, %v2478
        %v2903 = vpack.c.b16 %v2487, %v2479
        %v2904 = vpack.c.b16 %v2488, %v2480
        %v2905 = vpack.c.b16 %v2489, %v2481
        %v2906 = vpack.c.b16 %v2490, %v2482
        %v2907 = vpack.c.b16 %v2499, %v2491
        %v2908 = vpack.c.b16 %v2500, %v2492
        %v2909 = vpack.c.b16 %v2501, %v2493
        %v2910 = vpack.c.b16 %v2502, %v2494
        %v2911 = vpack.c.b16 %v2503, %v2495
        %v2912 = vpack.c.b16 %v2504, %v2496
        %v2913 = vpack.c.b16 %v2505, %v2497
        %v2914 = vpack.c.b16 %v2506, %v2498
        %v2915 = vpack.c.b16 %v2515, %v2507
        %v2916 = vpack.c.b16 %v2516, %v2508
        %v2917 = vpack.c.b16 %v2517, %v2509
        %v2918 = vpack.c.b16 %v2518, %v2510
        %v2919 = vpack.c.b16 %v2519, %v2511
        %v2920 = vpack.c.b16 %v2520, %v2512
        %v2921 = vpack.c.b16 %v2521, %v2513
        %v2922 = vpack.c.b16 %v2522, %v2514
        %v2923 = vpack.c.b16 %v2531, %v2523
        %v2924 = vpack.c.b16 %v2532, %v2524
        %v2925 = vpack.c.b16 %v2533, %v2525
        %v2926 = vpack.c.b16 %v2534, %v2526
        %v2927 = vpack.c.b16 %v2535, %v2527
        %v2928 = vpack.c.b16 %v2536, %v2528
        %v2929 = vpack.c.b16 %v2537, %v2529
        %v2930 = vpack.c.b16 %v2538, %v2530
        %v2931 = vpack.c.b16 %v2547, %v2539
        %v2932 = vpack.c.b16 %v2548, %v2540
        %v2933 = vpack.c.b16 %v2549, %v2541
        %v2934 = vpack.c.b16 %v2550, %v2542
        %v2935 = vpack.c.b16 %v2551, %v2543
        %v2936 = vpack.c.b16 %v2552, %v2544
        %v2937 = vpack.c.b16 %v2553, %v2545
        %v2938 = vpack.c.b16 %v2554, %v2546
        %v2939 = vpack.c.b16 %v2563, %v2555
        %v2940 = vpack.c.b16 %v2564, %v2556
        %v2941 = vpack.c.b16 %v2565, %v2557
        %v2942 = vpack.c.b16 %v2566, %v2558
        %v2943 = vpack.c.b16 %v2567, %v2559
        %v2944 = vpack.c.b16 %v2568, %v2560
        %v2945 = vpack.c.b16 %v2569, %v2561
        %v2946 = vpack.c.b16 %v2570, %v2562
        %v2947 = vpack.c.b16 %v2579, %v2571
        %v2948 = vpack.c.b16 %v2580, %v2572
        %v2949 = vpack.c.b16 %v2581, %v2573
        %v2950 = vpack.c.b16 %v2582, %v2574
        %v2951 = vpack.c.b16 %v2583, %v2575
        %v2952 = vpack.c.b16 %v2584, %v2576
        %v2953 = vpack.c.b16 %v2585, %v2577
        %v2954 = vpack.c.b16 %v2586, %v2578
        %v2955 = vpack.c.b16 %v2595, %v2587
        %v2956 = vpack.c.b16 %v2596, %v2588
        %v2957 = vpack.c.b16 %v2597, %v2589
        %v2958 = vpack.c.b16 %v2598, %v2590
        %v2959 = vpack.c.b16 %v2599, %v2591
        %v2960 = vpack.c.b16 %v2600, %v2592
        %v2961 = vpack.c.b16 %v2601, %v2593
        %v2962 = vpack.c.b16 %v2602, %v2594
        %v2963 = vpack.c.b16 %v2611, %v2603
        %v2964 = vpack.c.b16 %v2612, %v2604
        %v2965 = vpack.c.b16 %v2613, %v2605
        %v2966 = vpack.c.b16 %v2614, %v2606
        %v2967 = vpack.c.b16 %v2615, %v2607
        %v2968 = vpack.c.b16 %v2616, %v2608
        %v2969 = vpack.c.b16 %v2617, %v2609
        %v2970 = vpack.c.b16 %v2618, %v2610
        %v2971 = vpack.c.b16 %v2627, %v2619
        %v2972 = vpack.c.b16 %v2628, %v2620
        %v2973 = vpack.c.b16 %v2629, %v2621
        %v2974 = vpack.c.b16 %v2630, %v2622
        %v2975 = vpack.c.b16 %v2631, %v2623
        %v2976 = vpack.c.b16 %v2632, %v2624
        %v2977 = vpack.c.b16 %v2633, %v2625
        %v2978 = vpack.c.b16 %v2634, %v2626
        %v2979 = vpack.c.b16 %v2643, %v2635
        %v2980 = vpack.c.b16 %v2644, %v2636
        %v2981 = vpack.c.b16 %v2645, %v2637
        %v2982 = vpack.c.b16 %v2646, %v2638
        %v2983 = vpack.c.b16 %v2647, %v2639
        %v2984 = vpack.c.b16 %v2648, %v2640
        %v2985 = vpack.c.b16 %v2649, %v2641
        %v2986 = vpack.c.b16 %v2650, %v2642
        %v2987 = vpack.c.b16 %v2659, %v2651
        %v2988 = vpack.c.b16 %v2660, %v2652
        %v2989 = vpack.c.b16 %v2661, %v2653
        %v2990 = vpack.c.b16 %v2662, %v2654
        %v2991 = vpack.c.b16 %v2663, %v2655
        %v2992 = vpack.c.b16 %v2664, %v2656
        %v2993 = vpack.c.b16 %v2665, %v2657
        %v2994 = vpack.c.b16 %v2666, %v2658
        %v2995 = vpack.c.b16 %v2675, %v2667
        %v2996 = vpack.c.b16 %v2676, %v2668
        %v2997 = vpack.c.b16 %v2677, %v2669
        %v2998 = vpack.c.b16 %v2678, %v2670
        %v2999 = vpack.c.b16 %v2679, %v2671
        %v3000 = vpack.c.b16 %v2680, %v2672
        %v3001 = vpack.c.b16 %v2681, %v2673
        %v3002 = vpack.c.b16 %v2682, %v2674
        %v3003 = vpack.c.b16 %v2691, %v2683
        %v3004 = vpack.c.b16 %v2692, %v2684
        %v3005 = vpack.c.b16 %v2693, %v2685
        %v3006 = vpack.c.b16 %v2694, %v2686
        %v3007 = vpack.c.b16 %v2695, %v2687
        %v3008 = vpack.c.b16 %v2696, %v2688
        %v3009 = vpack.c.b16 %v2697, %v2689
        %v3010 = vpack.c.b16 %v2698, %v2690
        %v3011 = vpack.c.b16 %v2707, %v2699
        %v3012 = vpack.c.b16 %v2708, %v2700
        %v3013 = vpack.c.b16 %v2709, %v2701
        %v3014 = vpack.c.b16 %v2710, %v2702
        %v3015 = vpack.c.b16 %v2711, %v2703
        %v3016 = vpack.c.b16 %v2712, %v2704
        %v3017 = vpack.c.b16 %v2713, %v2705
        %v3018 = vpack.c.b16 %v2714, %v2706
        %v3019 = vpack.c.b16 %v2723, %v2715
        %v3020 = vpack.c.b16 %v2724, %v2716
        %v3021 = vpack.c.b16 %v2725, %v2717
        %v3022 = vpack.c.b16 %v2726, %v2718
        %v3023 = vpack.c.b16 %v2727, %v2719
        %v3024 = vpack.c.b16 %v2728, %v2720
        %v3025 = vpack.c.b16 %v2729, %v2721
        %v3026 = vpack.c.b16 %v2730, %v2722
        %v3027 = vpack.c.b16 %v2739, %v2731
        %v3028 = vpack.c.b16 %v2740, %v2732
        %v3029 = vpack.c.b16 %v2741, %v2733
        %v3030 = vpack.c.b16 %v2742, %v2734
        %v3031 = vpack.c.b16 %v2743, %v2735
        %v3032 = vpack.c.b16 %v2744, %v2736
        %v3033 = vpack.c.b16 %v2745, %v2737
        %v3034 = vpack.c.b16 %v2746, %v2738
        %v3035 = vpack.c.b16 %v2755, %v2747
        %v3036 = vpack.c.b16 %v2756, %v2748
        %v3037 = vpack.c.b16 %v2757, %v2749
        %v3038 = vpack.c.b16 %v2758, %v2750
        %v3039 = vpack.c.b16 %v2759, %v2751
        %v3040 = vpack.c.b16 %v2760, %v2752
        %v3041 = vpack.c.b16 %v2761, %v2753
        %v3042 = vpack.c.b16 %v2762, %v2754
        %v3043 = vpack.c.b16 %v2771, %v2763
        %v3044 = vpack.c.b16 %v2772, %v2764
        %v3045 = vpack.c.b16 %v2773, %v2765
        %v3046 = vpack.c.b16 %v2774, %v2766
        %v3047 = vpack.c.b16 %v2775, %v2767
        %v3048 = vpack.c.b16 %v2776, %v2768
        %v3049 = vpack.c.b16 %v2777, %v2769
        %v3050 = vpack.c.b16 %v2778, %v2770
        %v3051 = vpack.c.b16 %v2787, %v2779
        %v3052 = vpack.c.b16 %v2788, %v2780
        %v3053 = vpack.c.b16 %v2789, %v2781
        %v3054 = vpack.c.b16 %v2790, %v2782
        %v3055 = vpack.c.b16 %v2791, %v2783
        %v3056 = vpack.c.b16 %v2792, %v2784
        %v3057 = vpack.c.b16 %v2793, %v2785
        %v3058 = vpack.c.b16 %v2794, %v2786
        %v3059 = vpack.c.b16 %v2803, %v2795
        %v3060 = vpack.c.b16 %v2804, %v2796
        %v3061 = vpack.c.b16 %v2805, %v2797
        %v3062 = vpack.c.b16 %v2806, %v2798
        %v3063 = vpack.c.b16 %v2807, %v2799
        %v3064 = vpack.c.b16 %v2808, %v2800
        %v3065 = vpack.c.b16 %v2809, %v2801
        %v3066 = vpack.c.b16 %v2810, %v2802
        %3323 = vmatprep.subr.bf16.mxu0 %v2812
        %3324 = vmatpush1.bf16.msra.mxu0 %v2811
        %3325 = vmatprep.subr.bf16.mxu0 %v2820
        %3326 = vmatpush1.bf16.msra.mxu0 %v2819
        %3327 = vmatprep.subr.bf16.mxu0 %v2828
        %3328 = vmatpush1.bf16.msra.mxu0 %v2827
        %3329 = vmatprep.subr.bf16.mxu0 %v2836
        %3330 = vmatpush1.bf16.msra.mxu0 %v2835
        %3331 = vmatprep.subr.bf16.mxu0 %v2844
        %3332 = vmatpush1.bf16.msra.mxu0 %v2843
        %3333 = vmatprep.subr.bf16.mxu0 %v2852
        %3334 = vmatpush1.bf16.msra.mxu0 %v2851
        %3335 = vmatprep.subr.bf16.mxu0 %v2860
        %3336 = vmatpush1.bf16.msra.mxu0 %v2859
        %3337 = vmatprep.subr.bf16.mxu0 %v2868
        %3338 = vmatpush1.bf16.msra.mxu0 %v2867
        %3339 = vmatprep.subr.bf16.mxu0 %v2876
        %3340 = vmatpush1.bf16.msra.mxu0 %v2875
        %3341 = vmatprep.subr.bf16.mxu0 %v2884
        %3342 = vmatpush1.bf16.msra.mxu0 %v2883
        %3343 = vmatprep.subr.bf16.mxu0 %v2892
        %3344 = vmatpush1.bf16.msra.mxu0 %v2891
        %3345 = vmatprep.subr.bf16.mxu0 %v2900
        %3346 = vmatpush1.bf16.msra.mxu0 %v2899
        %3347 = vmatprep.subr.bf16.mxu0 %v2908
        %3348 = vmatpush1.bf16.msra.mxu0 %v2907
        %3349 = vmatprep.subr.bf16.mxu0 %v2916
        %3350 = vmatpush1.bf16.msra.mxu0 %v2915
        %3351 = vmatprep.subr.bf16.mxu0 %v2924
        %3352 = vmatpush1.bf16.msra.mxu0 %v2923
        %3353 = vmatprep.subr.bf16.mxu0 %v2932
        %3354 = vmatpush1.bf16.msra.mxu0 %v2931
        %3355 = vmatprep.mubr.bf16.mxu0 %v1738
        %3356 = vmatmul.mubr.bf16.gmra.mrb[0].mxu0 %v1737
        %v3357 = vpop.f32.mrb[0].mxu0
        %v3358 = vadd.f32 %v2006, %v3357
        %v3359 = vpop.f32.mrb[0].mxu0
        %v3360 = vadd.f32 %v2010, %v3359
        %v3361 = vpop.f32.mrb[0].mxu0
        %v3362 = vadd.f32 %v2006, %v3361
        %v3363 = vpop.f32.mrb[0].mxu0
        %v3364 = vadd.f32 %v2010, %v3363
        %3365 = vmatprep.mubr.bf16.mxu0 %v1742
        %3366 = vmatmul.mubr.bf16.gmra.mrb[0].mxu0 %v1741
        %v3367 = vpop.f32.mrb[0].mxu0
        %v3368 = vadd.f32 %v2006, %v3367
        %v3369 = vpop.f32.mrb[0].mxu0
        %v3370 = vadd.f32 %v2010, %v3369
        %v3371 = vpop.f32.mrb[0].mxu0
        %v3372 = vadd.f32 %v2006, %v3371
        %v3373 = vpop.f32.mrb[0].mxu0
        %v3374 = vadd.f32 %v2010, %v3373
        %3375 = vdwg.mxu0
        %3376 = vmatprep.subr.bf16.mxu0 %v2940
        %3377 = vmatpush1.bf16.msra.mxu0 %v2939
        %3378 = vmatprep.subr.bf16.mxu0 %v2948
        %3379 = vmatpush1.bf16.msra.mxu0 %v2947
        %3380 = vmatprep.subr.bf16.mxu0 %v2956
        %3381 = vmatpush1.bf16.msra.mxu0 %v2955
        %3382 = vmatprep.subr.bf16.mxu0 %v2964
        %3383 = vmatpush1.bf16.msra.mxu0 %v2963
        %3384 = vmatprep.subr.bf16.mxu0 %v2972
        %3385 = vmatpush1.bf16.msra.mxu0 %v2971
        %3386 = vmatprep.subr.bf16.mxu0 %v2980
        %3387 = vmatpush1.bf16.msra.mxu0 %v2979
        %3388 = vmatprep.subr.bf16.mxu0 %v2988
        %3389 = vmatpush1.bf16.msra.mxu0 %v2987
        %3390 = vmatprep.subr.bf16.mxu0 %v2996
        %3391 = vmatpush1.bf16.msra.mxu0 %v2995
        %3392 = vmatprep.subr.bf16.mxu0 %v3004
        %3393 = vmatpush1.bf16.msra.mxu0 %v3003
        %3394 = vmatprep.subr.bf16.mxu0 %v3012
        %3395 = vmatpush1.bf16.msra.mxu0 %v3011
        %3396 = vmatprep.subr.bf16.mxu0 %v3020
        %3397 = vmatpush1.bf16.msra.mxu0 %v3019
        %3398 = vmatprep.subr.bf16.mxu0 %v3028
        %3399 = vmatpush1.bf16.msra.mxu0 %v3027
        %3400 = vmatprep.subr.bf16.mxu0 %v3036
        %3401 = vmatpush1.bf16.msra.mxu0 %v3035
        %3402 = vmatprep.subr.bf16.mxu0 %v3044
        %3403 = vmatpush1.bf16.msra.mxu0 %v3043
        %3404 = vmatprep.subr.bf16.mxu0 %v3052
        %3405 = vmatpush1.bf16.msra.mxu0 %v3051
        %3406 = vmatprep.subr.bf16.mxu0 %v3060
        %3407 = vmatpush1.bf16.msra.mxu0 %v3059
        %3408 = vmatprep.mubr.bf16.mxu0 %v1740
        %3409 = vmatmul.mubr.bf16.gmra.mrb[0].mxu0 %v1739
        %v3410 = vpop.f32.mrb[0].mxu0
        %v3411 = vadd.f32 %v3358, %v3410
        %v3412 = vpop.f32.mrb[0].mxu0
        %v3413 = vadd.f32 %v3360, %v3412
        %v3414 = vpop.f32.mrb[0].mxu0
        %v3415 = vadd.f32 %v3362, %v3414
        %v3416 = vpop.f32.mrb[0].mxu0
        %v3417 = vadd.f32 %v3364, %v3416
        %3418 = vmatprep.mubr.bf16.mxu0 %v1744
        %3419 = vmatmul.mubr.bf16.gmra.mrb[0].mxu0 %v1743
        %v3420 = vpop.f32.mrb[0].mxu0
        %v3421 = vadd.f32 %v3368, %v3420
        %v3422 = vpop.f32.mrb[0].mxu0
        %v3423 = vadd.f32 %v3370, %v3422
        %v3424 = vpop.f32.mrb[0].mxu0
        %v3425 = vadd.f32 %v3372, %v3424
        %v3426 = vpop.f32.mrb[0].mxu0
        %v3427 = vadd.f32 %v3374, %v3426
        %3428 = vdwg.mxu0
        %3429 = vmatprep.subr.bf16.mxu0 %v2814
        %3430 = vmatpush1.bf16.msra.mxu0 %v2813
        %3431 = vmatprep.subr.bf16.mxu0 %v2822
        %3432 = vmatpush1.bf16.msra.mxu0 %v2821
        %3433 = vmatprep.subr.bf16.mxu0 %v2830
        %3434 = vmatpush1.bf16.msra.mxu0 %v2829
        %3435 = vmatprep.subr.bf16.mxu0 %v2838
        %3436 = vmatpush1.bf16.msra.mxu0 %v2837
        %3437 = vmatprep.subr.bf16.mxu0 %v2846
        %3438 = vmatpush1.bf16.msra.mxu0 %v2845
        %3439 = vmatprep.subr.bf16.mxu0 %v2854
        %3440 = vmatpush1.bf16.msra.mxu0 %v2853
        %3441 = vmatprep.subr.bf16.mxu0 %v2862
        %3442 = vmatpush1.bf16.msra.mxu0 %v2861
        %3443 = vmatprep.subr.bf16.mxu0 %v2870
        %3444 = vmatpush1.bf16.msra.mxu0 %v2869
        %3445 = vmatprep.subr.bf16.mxu0 %v2878
        %3446 = vmatpush1.bf16.msra.mxu0 %v2877
        %3447 = vmatprep.subr.bf16.mxu0 %v2886
        %3448 = vmatpush1.bf16.msra.mxu0 %v2885
        %3449 = vmatprep.subr.bf16.mxu0 %v2894
        %3450 = vmatpush1.bf16.msra.mxu0 %v2893
        %3451 = vmatprep.subr.bf16.mxu0 %v2902
        %3452 = vmatpush1.bf16.msra.mxu0 %v2901
        %3453 = vmatprep.subr.bf16.mxu0 %v2910
        %3454 = vmatpush1.bf16.msra.mxu0 %v2909
        %3455 = vmatprep.subr.bf16.mxu0 %v2918
        %3456 = vmatpush1.bf16.msra.mxu0 %v2917
        %3457 = vmatprep.subr.bf16.mxu0 %v2926
        %3458 = vmatpush1.bf16.msra.mxu0 %v2925
        %3459 = vmatprep.subr.bf16.mxu0 %v2934
        %3460 = vmatpush1.bf16.msra.mxu0 %v2933
        %3461 = vmatprep.mubr.bf16.mxu0 %v1738
        %3462 = vmatmul.mubr.bf16.gmra.mrb[0].mxu0 %v1737
        %v3463 = vpop.f32.mrb[0].mxu0
        %v3464 = vadd.f32 %v2014, %v3463
        %v3465 = vpop.f32.mrb[0].mxu0
        %v3466 = vadd.f32 %v2018, %v3465
        %v3467 = vpop.f32.mrb[0].mxu0
        %v3468 = vadd.f32 %v2014, %v3467
        %v3469 = vpop.f32.mrb[0].mxu0
        %v3470 = vadd.f32 %v2018, %v3469
        %3471 = vmatprep.mubr.bf16.mxu0 %v1742
        %3472 = vmatmul.mubr.bf16.gmra.mrb[0].mxu0 %v1741
        %v3473 = vpop.f32.mrb[0].mxu0
        %v3474 = vadd.f32 %v2014, %v3473
        %v3475 = vpop.f32.mrb[0].mxu0
        %v3476 = vadd.f32 %v2018, %v3475
        %v3477 = vpop.f32.mrb[0].mxu0
        %v3478 = vadd.f32 %v2014, %v3477
        %v3479 = vpop.f32.mrb[0].mxu0
        %v3480 = vadd.f32 %v2018, %v3479
        %3481 = vdwg.mxu0
        %3482 = vmatprep.subr.bf16.mxu0 %v2942
        %3483 = vmatpush1.bf16.msra.mxu0 %v2941
        %3484 = vmatprep.subr.bf16.mxu0 %v2950
        %3485 = vmatpush1.bf16.msra.mxu0 %v2949
        %3486 = vmatprep.subr.bf16.mxu0 %v2958
        %3487 = vmatpush1.bf16.msra.mxu0 %v2957
        %3488 = vmatprep.subr.bf16.mxu0 %v2966
        %3489 = vmatpush1.bf16.msra.mxu0 %v2965
        %3490 = vmatprep.subr.bf16.mxu0 %v2974
        %3491 = vmatpush1.bf16.msra.mxu0 %v2973
        %3492 = vmatprep.subr.bf16.mxu0 %v2982
        %3493 = vmatpush1.bf16.msra.mxu0 %v2981
        %3494 = vmatprep.subr.bf16.mxu0 %v2990
        %3495 = vmatpush1.bf16.msra.mxu0 %v2989
        %3496 = vmatprep.subr.bf16.mxu0 %v2998
        %3497 = vmatpush1.bf16.msra.mxu0 %v2997
        %3498 = vmatprep.subr.bf16.mxu0 %v3006
        %3499 = vmatpush1.bf16.msra.mxu0 %v3005
        %3500 = vmatprep.subr.bf16.mxu0 %v3014
        %3501 = vmatpush1.bf16.msra.mxu0 %v3013
        %3502 = vmatprep.subr.bf16.mxu0 %v3022
        %3503 = vmatpush1.bf16.msra.mxu0 %v3021
        %3504 = vmatprep.subr.bf16.mxu0 %v3030
        %3505 = vmatpush1.bf16.msra.mxu0 %v3029
        %3506 = vmatprep.subr.bf16.mxu0 %v3038
        %3507 = vmatpush1.bf16.msra.mxu0 %v3037
        %3508 = vmatprep.subr.bf16.mxu0 %v3046
        %3509 = vmatpush1.bf16.msra.mxu0 %v3045
        %3510 = vmatprep.subr.bf16.mxu0 %v3054
        %3511 = vmatpush1.bf16.msra.mxu0 %v3053
        %3512 = vmatprep.subr.bf16.mxu0 %v3062
        %3513 = vmatpush1.bf16.msra.mxu0 %v3061
        %3514 = vmatprep.mubr.bf16.mxu0 %v1740
        %3515 = vmatmul.mubr.bf16.gmra.mrb[0].mxu0 %v1739
        %v3516 = vpop.f32.mrb[0].mxu0
        %v3517 = vadd.f32 %v3464, %v3516
        %v3518 = vpop.f32.mrb[0].mxu0
        %v3519 = vadd.f32 %v3466, %v3518
        %v3520 = vpop.f32.mrb[0].mxu0
        %v3521 = vadd.f32 %v3468, %v3520
        %v3522 = vpop.f32.mrb[0].mxu0
        %v3523 = vadd.f32 %v3470, %v3522
        %3524 = vmatprep.mubr.bf16.mxu0 %v1744
        %3525 = vmatmul.mubr.bf16.gmra.mrb[0].mxu0 %v1743
        %v3526 = vpop.f32.mrb[0].mxu0
        %v3527 = vadd.f32 %v3474, %v3526
        %v3528 = vpop.f32.mrb[0].mxu0
        %v3529 = vadd.f32 %v3476, %v3528
        %v3530 = vpop.f32.mrb[0].mxu0
        %v3531 = vadd.f32 %v3478, %v3530
        %v3532 = vpop.f32.mrb[0].mxu0
        %v3533 = vadd.f32 %v3480, %v3532
        %3534 = vdwg.mxu0
        %3535 = vmatprep.subr.bf16.mxu0 %v2816
        %3536 = vmatpush1.bf16.msra.mxu0 %v2815
        %3537 = vmatprep.subr.bf16.mxu0 %v2824
        %3538 = vmatpush1.bf16.msra.mxu0 %v2823
        %3539 = vmatprep.subr.bf16.mxu0 %v2832
        %3540 = vmatpush1.bf16.msra.mxu0 %v2831
        %3541 = vmatprep.subr.bf16.mxu0 %v2840
        %3542 = vmatpush1.bf16.msra.mxu0 %v2839
        %3543 = vmatprep.subr.bf16.mxu0 %v2848
        %3544 = vmatpush1.bf16.msra.mxu0 %v2847
        %3545 = vmatprep.subr.bf16.mxu0 %v2856
        %3546 = vmatpush1.bf16.msra.mxu0 %v2855
        %3547 = vmatprep.subr.bf16.mxu0 %v2864
        %3548 = vmatpush1.bf16.msra.mxu0 %v2863
        %3549 = vmatprep.subr.bf16.mxu0 %v2872
        %3550 = vmatpush1.bf16.msra.mxu0 %v2871
        %3551 = vmatprep.subr.bf16.mxu0 %v2880
        %3552 = vmatpush1.bf16.msra.mxu0 %v2879
        %3553 = vmatprep.subr.bf16.mxu0 %v2888
        %3554 = vmatpush1.bf16.msra.mxu0 %v2887
        %3555 = vmatprep.subr.bf16.mxu0 %v2896
        %3556 = vmatpush1.bf16.msra.mxu0 %v2895
        %3557 = vmatprep.subr.bf16.mxu0 %v2904
        %3558 = vmatpush1.bf16.msra.mxu0 %v2903
        %3559 = vmatprep.subr.bf16.mxu0 %v2912
        %3560 = vmatpush1.bf16.msra.mxu0 %v2911
        %3561 = vmatprep.subr.bf16.mxu0 %v2920
        %3562 = vmatpush1.bf16.msra.mxu0 %v2919
        %3563 = vmatprep.subr.bf16.mxu0 %v2928
        %3564 = vmatpush1.bf16.msra.mxu0 %v2927
        %3565 = vmatprep.subr.bf16.mxu0 %v2936
        %3566 = vmatpush1.bf16.msra.mxu0 %v2935
        %3567 = vmatprep.mubr.bf16.mxu0 %v1738
        %3568 = vmatmul.mubr.bf16.gmra.mrb[0].mxu0 %v1737
        %v3569 = vpop.f32.mrb[0].mxu0
        %v3570 = vadd.f32 %v2022, %v3569
        %v3571 = vpop.f32.mrb[0].mxu0
        %v3572 = vadd.f32 %v2026, %v3571
        %v3573 = vpop.f32.mrb[0].mxu0
        %v3574 = vadd.f32 %v2022, %v3573
        %v3575 = vpop.f32.mrb[0].mxu0
        %v3576 = vadd.f32 %v2026, %v3575
        %3577 = vmatprep.mubr.bf16.mxu0 %v1742
        %3578 = vmatmul.mubr.bf16.gmra.mrb[0].mxu0 %v1741
        %v3579 = vpop.f32.mrb[0].mxu0
        %v3580 = vadd.f32 %v2022, %v3579
        %v3581 = vpop.f32.mrb[0].mxu0
        %v3582 = vadd.f32 %v2026, %v3581
        %v3583 = vpop.f32.mrb[0].mxu0
        %v3584 = vadd.f32 %v2022, %v3583
        %v3585 = vpop.f32.mrb[0].mxu0
        %v3586 = vadd.f32 %v2026, %v3585
        %3587 = vdwg.mxu0
        %3588 = vmatprep.subr.bf16.mxu0 %v2944
        %3589 = vmatpush1.bf16.msra.mxu0 %v2943
        %3590 = vmatprep.subr.bf16.mxu0 %v2952
        %3591 = vmatpush1.bf16.msra.mxu0 %v2951
        %3592 = vmatprep.subr.bf16.mxu0 %v2960
        %3593 = vmatpush1.bf16.msra.mxu0 %v2959
        %3594 = vmatprep.subr.bf16.mxu0 %v2968
        %3595 = vmatpush1.bf16.msra.mxu0 %v2967
        %3596 = vmatprep.subr.bf16.mxu0 %v2976
        %3597 = vmatpush1.bf16.msra.mxu0 %v2975
        %3598 = vmatprep.subr.bf16.mxu0 %v2984
        %3599 = vmatpush1.bf16.msra.mxu0 %v2983
        %3600 = vmatprep.subr.bf16.mxu0 %v2992
        %3601 = vmatpush1.bf16.msra.mxu0 %v2991
        %3602 = vmatprep.subr.bf16.mxu0 %v3000
        %3603 = vmatpush1.bf16.msra.mxu0 %v2999
        %3604 = vmatprep.subr.bf16.mxu0 %v3008
        %3605 = vmatpush1.bf16.msra.mxu0 %v3007
        %3606 = vmatprep.subr.bf16.mxu0 %v3016
        %3607 = vmatpush1.bf16.msra.mxu0 %v3015
        %3608 = vmatprep.subr.bf16.mxu0 %v3024
        %3609 = vmatpush1.bf16.msra.mxu0 %v3023
        %3610 = vmatprep.subr.bf16.mxu0 %v3032
        %3611 = vmatpush1.bf16.msra.mxu0 %v3031
        %3612 = vmatprep.subr.bf16.mxu0 %v3040
        %3613 = vmatpush1.bf16.msra.mxu0 %v3039
        %3614 = vmatprep.subr.bf16.mxu0 %v3048
        %3615 = vmatpush1.bf16.msra.mxu0 %v3047
        %3616 = vmatprep.subr.bf16.mxu0 %v3056
        %3617 = vmatpush1.bf16.msra.mxu0 %v3055
        %3618 = vmatprep.subr.bf16.mxu0 %v3064
        %3619 = vmatpush1.bf16.msra.mxu0 %v3063
        %3620 = vmatprep.mubr.bf16.mxu0 %v1740
        %3621 = vmatmul.mubr.bf16.gmra.mrb[0].mxu0 %v1739
        %v3622 = vpop.f32.mrb[0].mxu0
        %v3623 = vadd.f32 %v3570, %v3622
        %v3624 = vpop.f32.mrb[0].mxu0
        %v3625 = vadd.f32 %v3572, %v3624
        %v3626 = vpop.f32.mrb[0].mxu0
        %v3627 = vadd.f32 %v3574, %v3626
        %v3628 = vpop.f32.mrb[0].mxu0
        %v3629 = vadd.f32 %v3576, %v3628
        %3630 = vmatprep.mubr.bf16.mxu0 %v1744
        %3631 = vmatmul.mubr.bf16.gmra.mrb[0].mxu0 %v1743
        %v3632 = vpop.f32.mrb[0].mxu0
        %v3633 = vadd.f32 %v3580, %v3632
        %v3634 = vpop.f32.mrb[0].mxu0
        %v3635 = vadd.f32 %v3582, %v3634
        %v3636 = vpop.f32.mrb[0].mxu0
        %v3637 = vadd.f32 %v3584, %v3636
        %v3638 = vpop.f32.mrb[0].mxu0
        %v3639 = vadd.f32 %v3586, %v3638
        %3640 = vdwg.mxu0
        %3641 = vmatprep.subr.bf16.mxu0 %v2818
        %3642 = vmatpush1.bf16.msra.mxu0 %v2817
        %3643 = vmatprep.subr.bf16.mxu0 %v2826
        %3644 = vmatpush1.bf16.msra.mxu0 %v2825
        %3645 = vmatprep.subr.bf16.mxu0 %v2834
        %3646 = vmatpush1.bf16.msra.mxu0 %v2833
        %3647 = vmatprep.subr.bf16.mxu0 %v2842
        %3648 = vmatpush1.bf16.msra.mxu0 %v2841
        %3649 = vmatprep.subr.bf16.mxu0 %v2850
        %3650 = vmatpush1.bf16.msra.mxu0 %v2849
        %3651 = vmatprep.subr.bf16.mxu0 %v2858
        %3652 = vmatpush1.bf16.msra.mxu0 %v2857
        %3653 = vmatprep.subr.bf16.mxu0 %v2866
        %3654 = vmatpush1.bf16.msra.mxu0 %v2865
        %3655 = vmatprep.subr.bf16.mxu0 %v2874
        %3656 = vmatpush1.bf16.msra.mxu0 %v2873
        %3657 = vmatprep.subr.bf16.mxu0 %v2882
        %3658 = vmatpush1.bf16.msra.mxu0 %v2881
        %3659 = vmatprep.subr.bf16.mxu0 %v2890
        %3660 = vmatpush1.bf16.msra.mxu0 %v2889
        %3661 = vmatprep.subr.bf16.mxu0 %v2898
        %3662 = vmatpush1.bf16.msra.mxu0 %v2897
        %3663 = vmatprep.subr.bf16.mxu0 %v2906
        %3664 = vmatpush1.bf16.msra.mxu0 %v2905
        %3665 = vmatprep.subr.bf16.mxu0 %v2914
        %3666 = vmatpush1.bf16.msra.mxu0 %v2913
        %3667 = vmatprep.subr.bf16.mxu0 %v2922
        %3668 = vmatpush1.bf16.msra.mxu0 %v2921
        %3669 = vmatprep.subr.bf16.mxu0 %v2930
        %3670 = vmatpush1.bf16.msra.mxu0 %v2929
        %3671 = vmatprep.subr.bf16.mxu0 %v2938
        %3672 = vmatpush1.bf16.msra.mxu0 %v2937
        %3673 = vmatprep.mubr.bf16.mxu0 %v1738
        %3674 = vmatmul.mubr.bf16.gmra.mrb[0].mxu0 %v1737
        %v3675 = vpop.f32.mrb[0].mxu0
        %v3676 = vadd.f32 %v2030, %v3675
        %v3677 = vpop.f32.mrb[0].mxu0
        %v3678 = vadd.f32 %v2034, %v3677
        %v3679 = vpop.f32.mrb[0].mxu0
        %v3680 = vadd.f32 %v2030, %v3679
        %v3681 = vpop.f32.mrb[0].mxu0
        %v3682 = vadd.f32 %v2034, %v3681
        %3683 = vmatprep.mubr.bf16.mxu0 %v1742
        %3684 = vmatmul.mubr.bf16.gmra.mrb[0].mxu0 %v1741
        %v3685 = vpop.f32.mrb[0].mxu0
        %v3686 = vadd.f32 %v2030, %v3685
        %v3687 = vpop.f32.mrb[0].mxu0
        %v3688 = vadd.f32 %v2034, %v3687
        %v3689 = vpop.f32.mrb[0].mxu0
        %v3690 = vadd.f32 %v2030, %v3689
        %v3691 = vpop.f32.mrb[0].mxu0
        %v3692 = vadd.f32 %v2034, %v3691
        %3693 = vdwg.mxu0
        %3694 = vmatprep.subr.bf16.mxu0 %v2946
        %3695 = vmatpush1.bf16.msra.mxu0 %v2945
        %3696 = vmatprep.subr.bf16.mxu0 %v2954
        %3697 = vmatpush1.bf16.msra.mxu0 %v2953
        %3698 = vmatprep.subr.bf16.mxu0 %v2962
        %3699 = vmatpush1.bf16.msra.mxu0 %v2961
        %3700 = vmatprep.subr.bf16.mxu0 %v2970
        %3701 = vmatpush1.bf16.msra.mxu0 %v2969
        %3702 = vmatprep.subr.bf16.mxu0 %v2978
        %3703 = vmatpush1.bf16.msra.mxu0 %v2977
        %3704 = vmatprep.subr.bf16.mxu0 %v2986
        %3705 = vmatpush1.bf16.msra.mxu0 %v2985
        %3706 = vmatprep.subr.bf16.mxu0 %v2994
        %3707 = vmatpush1.bf16.msra.mxu0 %v2993
        %3708 = vmatprep.subr.bf16.mxu0 %v3002
        %3709 = vmatpush1.bf16.msra.mxu0 %v3001
        %3710 = vmatprep.subr.bf16.mxu0 %v3010
        %3711 = vmatpush1.bf16.msra.mxu0 %v3009
        %3712 = vmatprep.subr.bf16.mxu0 %v3018
        %3713 = vmatpush1.bf16.msra.mxu0 %v3017
        %3714 = vmatprep.subr.bf16.mxu0 %v3026
        %3715 = vmatpush1.bf16.msra.mxu0 %v3025
        %3716 = vmatprep.subr.bf16.mxu0 %v3034
        %3717 = vmatpush1.bf16.msra.mxu0 %v3033
        %3718 = vmatprep.subr.bf16.mxu0 %v3042
        %3719 = vmatpush1.bf16.msra.mxu0 %v3041
        %3720 = vmatprep.subr.bf16.mxu0 %v3050
        %3721 = vmatpush1.bf16.msra.mxu0 %v3049
        %3722 = vmatprep.subr.bf16.mxu0 %v3058
        %3723 = vmatpush1.bf16.msra.mxu0 %v3057
        %3724 = vmatprep.subr.bf16.mxu0 %v3066
        %3725 = vmatpush1.bf16.msra.mxu0 %v3065
        %3726 = vmatprep.mubr.bf16.mxu0 %v1740
        %3727 = vmatmul.mubr.bf16.gmra.mrb[0].mxu0 %v1739
        %v3728 = vpop.f32.mrb[0].mxu0
        %v3729 = vadd.f32 %v3676, %v3728
        %v3730 = vpop.f32.mrb[0].mxu0
        %v3731 = vadd.f32 %v3678, %v3730
        %v3732 = vpop.f32.mrb[0].mxu0
        %v3733 = vadd.f32 %v3680, %v3732
        %v3734 = vpop.f32.mrb[0].mxu0
        %v3735 = vadd.f32 %v3682, %v3734
        %3736 = vmatprep.mubr.bf16.mxu0 %v1744
        %3737 = vmatmul.mubr.bf16.gmra.mrb[0].mxu0 %v1743
        %v3738 = vpop.f32.mrb[0].mxu0
        %v3739 = vadd.f32 %v3686, %v3738
        %v3740 = vpop.f32.mrb[0].mxu0
        %v3741 = vadd.f32 %v3688, %v3740
        %v3742 = vpop.f32.mrb[0].mxu0
        %v3743 = vadd.f32 %v3690, %v3742
        %v3744 = vpop.f32.mrb[0].mxu0
        %v3745 = vadd.f32 %v3692, %v3744
        %3746 = vdwg.mxu0
        %v3747 = vld [vmem:[#allocation15 + $0x1b] sm:$0xff]
        %v3748 = vld [vmem:[#allocation15 + $0x23] sm:$0xff]
        %v3749 = vmul.f32 %v3411, %v713
        %v3750 = vmul.f32 %v3413, %v713
        %v3751 = vmul.f32 %v3517, %v713
        %v3752 = vmul.f32 %v3519, %v713
        %v3753 = vmul.f32 %v3623, %v713
        %v3754 = vmul.f32 %v3625, %v713
        %v3755 = vmul.f32 %v3729, %v713
        %v3756 = vmul.f32 %v3731, %v713
        %v3757 = vmul.f32 %v3415, %v714
        %v3758 = vmul.f32 %v3417, %v714
        %v3759 = vmul.f32 %v3521, %v714
        %v3760 = vmul.f32 %v3523, %v714
        %v3761 = vmul.f32 %v3627, %v714
        %v3762 = vmul.f32 %v3629, %v714
        %v3763 = vmul.f32 %v3733, %v714
        %v3764 = vmul.f32 %v3735, %v714
        %v3765 = vmul.f32 %v3421, %v715
        %v3766 = vmul.f32 %v3423, %v715
        %v3767 = vmul.f32 %v3527, %v715
        %v3768 = vmul.f32 %v3529, %v715
        %v3769 = vmul.f32 %v3633, %v715
        %v3770 = vmul.f32 %v3635, %v715
        %v3771 = vmul.f32 %v3739, %v715
        %v3772 = vmul.f32 %v3741, %v715
        %v3773 = vmul.f32 %v3425, %v716
        %v3774 = vmul.f32 %v3427, %v716
        %v3775 = vmul.f32 %v3531, %v716
        %v3776 = vmul.f32 %v3533, %v716
        %v3777 = vmul.f32 %v3637, %v716
        %v3778 = vmul.f32 %v3639, %v716
        %v3779 = vmul.f32 %v3743, %v716
        %v3780 = vmul.f32 %v3745, %v716
        %v3781 = vadd.f32 %v3749, %v3757
        %v3782 = vadd.f32 %v3781, %v3765
        %v3783 = vadd.f32 %v3782, %v3773
        %v3784 = vrot.slane %v3783, 4
        %v3785 = vadd.f32 %v3783, %v3784
        %v3786 = vrot.slane %v3785, 2
        %v3787 = vadd.f32 %v3785, %v3786
        %v3788 = vrot.slane %v3787, 1
        %v3789 = vadd.f32 %v3787, %v3788
        %v3790 = vadd.f32 %v3750, %v3758
        %v3791 = vadd.f32 %v3790, %v3766
        %v3792 = vadd.f32 %v3791, %v3774
        %v3793 = vrot.slane %v3792, 4
        %v3794 = vadd.f32 %v3792, %v3793
        %v3795 = vrot.slane %v3794, 2
        %v3796 = vadd.f32 %v3794, %v3795
        %v3797 = vrot.slane %v3796, 1
        %v3798 = vadd.f32 %v3796, %v3797
        %v3799 = vadd.f32 %v3751, %v3759
        %v3800 = vadd.f32 %v3799, %v3767
        %v3801 = vadd.f32 %v3800, %v3775
        %v3802 = vrot.slane %v3801, 4
        %v3803 = vadd.f32 %v3801, %v3802
        %v3804 = vrot.slane %v3803, 2
        %v3805 = vadd.f32 %v3803, %v3804
        %v3806 = vrot.slane %v3805, 1
        %v3807 = vadd.f32 %v3805, %v3806
        %v3808 = vadd.f32 %v3752, %v3760
        %v3809 = vadd.f32 %v3808, %v3768
        %v3810 = vadd.f32 %v3809, %v3776
        %v3811 = vrot.slane %v3810, 4
        %v3812 = vadd.f32 %v3810, %v3811
        %v3813 = vrot.slane %v3812, 2
        %v3814 = vadd.f32 %v3812, %v3813
        %v3815 = vrot.slane %v3814, 1
        %v3816 = vadd.f32 %v3814, %v3815
        %v3817 = vadd.f32 %v3753, %v3761
        %v3818 = vadd.f32 %v3817, %v3769
        %v3819 = vadd.f32 %v3818, %v3777
        %v3820 = vrot.slane %v3819, 4
        %v3821 = vadd.f32 %v3819, %v3820
        %v3822 = vrot.slane %v3821, 2
        %v3823 = vadd.f32 %v3821, %v3822
        %v3824 = vrot.slane %v3823, 1
        %v3825 = vadd.f32 %v3823, %v3824
        %v3826 = vadd.f32 %v3754, %v3762
        %v3827 = vadd.f32 %v3826, %v3770
        %v3828 = vadd.f32 %v3827, %v3778
        %v3829 = vrot.slane %v3828, 4
        %v3830 = vadd.f32 %v3828, %v3829
        %v3831 = vrot.slane %v3830, 2
        %v3832 = vadd.f32 %v3830, %v3831
        %v3833 = vrot.slane %v3832, 1
        %v3834 = vadd.f32 %v3832, %v3833
        %v3835 = vadd.f32 %v3755, %v3763
        %v3836 = vadd.f32 %v3835, %v3771
        %v3837 = vadd.f32 %v3836, %v3779
        %v3838 = vrot.slane %v3837, 4
        %v3839 = vadd.f32 %v3837, %v3838
        %v3840 = vrot.slane %v3839, 2
        %v3841 = vadd.f32 %v3839, %v3840
        %v3842 = vrot.slane %v3841, 1
        %v3843 = vadd.f32 %v3841, %v3842
        %v3844 = vadd.f32 %v3756, %v3764
        %v3845 = vadd.f32 %v3844, %v3772
        %v3846 = vadd.f32 %v3845, %v3780
        %v3847 = vrot.slane %v3846, 4
        %v3848 = vadd.f32 %v3846, %v3847
        %v3849 = vrot.slane %v3848, 2
        %v3850 = vadd.f32 %v3848, %v3849
        %v3851 = vrot.slane %v3850, 1
        %v3852 = vadd.f32 %v3850, %v3851
        %v3853 = vmul.f32 %v3789, %v747
        %v3854 = vmul.f32 %v3798, %v747
        %v3855 = vmul.f32 %v3807, %v747
        %v3856 = vmul.f32 %v3816, %v747
        %v3857 = vmul.f32 %v3825, %v747
        %v3858 = vmul.f32 %v3834, %v747
        %v3859 = vmul.f32 %v3843, %v747
        %v3860 = vmul.f32 %v3852, %v747
        %v3861 = vsub.f32 %v3411, %v3853
        %v3862 = vsub.f32 %v3413, %v3854
        %v3863 = vsub.f32 %v3517, %v3855
        %v3864 = vsub.f32 %v3519, %v3856
        %v3865 = vsub.f32 %v3623, %v3857
        %v3866 = vsub.f32 %v3625, %v3858
        %v3867 = vsub.f32 %v3729, %v3859
        %v3868 = vsub.f32 %v3731, %v3860
        %v3869 = vsub.f32 %v3415, %v3853
        %v3870 = vsub.f32 %v3417, %v3854
        %v3871 = vsub.f32 %v3521, %v3855
        %v3872 = vsub.f32 %v3523, %v3856
        %v3873 = vsub.f32 %v3627, %v3857
        %v3874 = vsub.f32 %v3629, %v3858
        %v3875 = vsub.f32 %v3733, %v3859
        %v3876 = vsub.f32 %v3735, %v3860
        %v3877 = vsub.f32 %v3421, %v3853
        %v3878 = vsub.f32 %v3423, %v3854
        %v3879 = vsub.f32 %v3527, %v3855
        %v3880 = vsub.f32 %v3529, %v3856
        %v3881 = vsub.f32 %v3633, %v3857
        %v3882 = vsub.f32 %v3635, %v3858
        %v3883 = vsub.f32 %v3739, %v3859
        %v3884 = vsub.f32 %v3741, %v3860
        %v3885 = vsub.f32 %v3425, %v3853
        %v3886 = vsub.f32 %v3427, %v3854
        %v3887 = vsub.f32 %v3531, %v3855
        %v3888 = vsub.f32 %v3533, %v3856
        %v3889 = vsub.f32 %v3637, %v3857
        %v3890 = vsub.f32 %v3639, %v3858
        %v3891 = vsub.f32 %v3743, %v3859
        %v3892 = vsub.f32 %v3745, %v3860
        %v3893 = vmul.f32 %v3861, %v713
        %v3894 = vmul.f32 %v3862, %v713
        %v3895 = vmul.f32 %v3863, %v713
        %v3896 = vmul.f32 %v3864, %v713
        %v3897 = vmul.f32 %v3865, %v713
        %v3898 = vmul.f32 %v3866, %v713
        %v3899 = vmul.f32 %v3867, %v713
        %v3900 = vmul.f32 %v3868, %v713
        %v3901 = vmul.f32 %v3869, %v714
        %v3902 = vmul.f32 %v3870, %v714
        %v3903 = vmul.f32 %v3871, %v714
        %v3904 = vmul.f32 %v3872, %v714
        %v3905 = vmul.f32 %v3873, %v714
        %v3906 = vmul.f32 %v3874, %v714
        %v3907 = vmul.f32 %v3875, %v714
        %v3908 = vmul.f32 %v3876, %v714
        %v3909 = vmul.f32 %v3877, %v715
        %v3910 = vmul.f32 %v3878, %v715
        %v3911 = vmul.f32 %v3879, %v715
        %v3912 = vmul.f32 %v3880, %v715
        %v3913 = vmul.f32 %v3881, %v715
        %v3914 = vmul.f32 %v3882, %v715
        %v3915 = vmul.f32 %v3883, %v715
        %v3916 = vmul.f32 %v3884, %v715
        %v3917 = vmul.f32 %v3885, %v716
        %v3918 = vmul.f32 %v3886, %v716
        %v3919 = vmul.f32 %v3887, %v716
        %v3920 = vmul.f32 %v3888, %v716
        %v3921 = vmul.f32 %v3889, %v716
        %v3922 = vmul.f32 %v3890, %v716
        %v3923 = vmul.f32 %v3891, %v716
        %v3924 = vmul.f32 %v3892, %v716
        %v3925 = vmul.f32 %v3893, %v3893
        %v3926 = vmul.f32 %v3894, %v3894
        %v3927 = vmul.f32 %v3895, %v3895
        %v3928 = vmul.f32 %v3896, %v3896
        %v3929 = vmul.f32 %v3897, %v3897
        %v3930 = vmul.f32 %v3898, %v3898
        %v3931 = vmul.f32 %v3899, %v3899
        %v3932 = vmul.f32 %v3900, %v3900
        %v3933 = vmul.f32 %v3901, %v3901
        %v3934 = vmul.f32 %v3902, %v3902
        %v3935 = vmul.f32 %v3903, %v3903
        %v3936 = vmul.f32 %v3904, %v3904
        %v3937 = vmul.f32 %v3905, %v3905
        %v3938 = vmul.f32 %v3906, %v3906
        %v3939 = vmul.f32 %v3907, %v3907
        %v3940 = vmul.f32 %v3908, %v3908
        %v3941 = vmul.f32 %v3909, %v3909
        %v3942 = vmul.f32 %v3910, %v3910
        %v3943 = vmul.f32 %v3911, %v3911
        %v3944 = vmul.f32 %v3912, %v3912
        %v3945 = vmul.f32 %v3913, %v3913
        %v3946 = vmul.f32 %v3914, %v3914
        %v3947 = vmul.f32 %v3915, %v3915
        %v3948 = vmul.f32 %v3916, %v3916
        %v3949 = vmul.f32 %v3917, %v3917
        %v3950 = vmul.f32 %v3918, %v3918
        %v3951 = vmul.f32 %v3919, %v3919
        %v3952 = vmul.f32 %v3920, %v3920
        %v3953 = vmul.f32 %v3921, %v3921
        %v3954 = vmul.f32 %v3922, %v3922
        %v3955 = vmul.f32 %v3923, %v3923
        %v3956 = vmul.f32 %v3924, %v3924
        %v3957 = vadd.f32 %v3925, %v3933
        %v3958 = vadd.f32 %v3957, %v3941
        %v3959 = vadd.f32 %v3958, %v3949
        %v3960 = vrot.slane %v3959, 4
        %v3961 = vadd.f32 %v3959, %v3960
        %v3962 = vrot.slane %v3961, 2
        %v3963 = vadd.f32 %v3961, %v3962
        %v3964 = vrot.slane %v3963, 1
        %v3965 = vadd.f32 %v3963, %v3964
        %v3966 = vadd.f32 %v3926, %v3934
        %v3967 = vadd.f32 %v3966, %v3942
        %v3968 = vadd.f32 %v3967, %v3950
        %v3969 = vrot.slane %v3968, 4
        %v3970 = vadd.f32 %v3968, %v3969
        %v3971 = vrot.slane %v3970, 2
        %v3972 = vadd.f32 %v3970, %v3971
        %v3973 = vrot.slane %v3972, 1
        %v3974 = vadd.f32 %v3972, %v3973
        %v3975 = vadd.f32 %v3927, %v3935
        %v3976 = vadd.f32 %v3975, %v3943
        %v3977 = vadd.f32 %v3976, %v3951
        %v3978 = vrot.slane %v3977, 4
        %v3979 = vadd.f32 %v3977, %v3978
        %v3980 = vrot.slane %v3979, 2
        %v3981 = vadd.f32 %v3979, %v3980
        %v3982 = vrot.slane %v3981, 1
        %v3983 = vadd.f32 %v3981, %v3982
        %v3984 = vadd.f32 %v3928, %v3936
        %v3985 = vadd.f32 %v3984, %v3944
        %v3986 = vadd.f32 %v3985, %v3952
        %v3987 = vrot.slane %v3986, 4
        %v3988 = vadd.f32 %v3986, %v3987
        %v3989 = vrot.slane %v3988, 2
        %v3990 = vadd.f32 %v3988, %v3989
        %v3991 = vrot.slane %v3990, 1
        %v3992 = vadd.f32 %v3990, %v3991
        %v3993 = vadd.f32 %v3929, %v3937
        %v3994 = vadd.f32 %v3993, %v3945
        %v3995 = vadd.f32 %v3994, %v3953
        %v3996 = vrot.slane %v3995, 4
        %v3997 = vadd.f32 %v3995, %v3996
        %v3998 = vrot.slane %v3997, 2
        %v3999 = vadd.f32 %v3997, %v3998
        %v4000 = vrot.slane %v3999, 1
        %v4001 = vadd.f32 %v3999, %v4000
        %v4002 = vadd.f32 %v3930, %v3938
        %v4003 = vadd.f32 %v4002, %v3946
        %v4004 = vadd.f32 %v4003, %v3954
        %v4005 = vrot.slane %v4004, 4
        %v4006 = vadd.f32 %v4004, %v4005
        %v4007 = vrot.slane %v4006, 2
        %v4008 = vadd.f32 %v4006, %v4007
        %v4009 = vrot.slane %v4008, 1
        %v4010 = vadd.f32 %v4008, %v4009
        %v4011 = vadd.f32 %v3931, %v3939
        %v4012 = vadd.f32 %v4011, %v3947
        %v4013 = vadd.f32 %v4012, %v3955
        %v4014 = vrot.slane %v4013, 4
        %v4015 = vadd.f32 %v4013, %v4014
        %v4016 = vrot.slane %v4015, 2
        %v4017 = vadd.f32 %v4015, %v4016
        %v4018 = vrot.slane %v4017, 1
        %v4019 = vadd.f32 %v4017, %v4018
        %v4020 = vadd.f32 %v3932, %v3940
        %v4021 = vadd.f32 %v4020, %v3948
        %v4022 = vadd.f32 %v4021, %v3956
        %v4023 = vrot.slane %v4022, 4
        %v4024 = vadd.f32 %v4022, %v4023
        %v4025 = vrot.slane %v4024, 2
        %v4026 = vadd.f32 %v4024, %v4025
        %v4027 = vrot.slane %v4026, 1
        %v4028 = vadd.f32 %v4026, %v4027
        %v4029 = vmul.f32 %v3965, %v747
        %v4030 = vmul.f32 %v3974, %v747
        %v4031 = vmul.f32 %v3983, %v747
        %v4032 = vmul.f32 %v3992, %v747
        %v4033 = vmul.f32 %v4001, %v747
        %v4034 = vmul.f32 %v4010, %v747
        %v4035 = vmul.f32 %v4019, %v747
        %v4036 = vmul.f32 %v4028, %v747
        %v4037 = vadd.f32 %v4029, 1e-05
        %v4038 = vadd.f32 %v4030, 1e-05
        %v4039 = vadd.f32 %v4031, 1e-05
        %v4040 = vadd.f32 %v4032, 1e-05
        %v4041 = vadd.f32 %v4033, 1e-05
        %v4042 = vadd.f32 %v4034, 1e-05
        %v4043 = vadd.f32 %v4035, 1e-05
        %v4044 = vadd.f32 %v4036, 1e-05
        %v4045 = vrsqrt.pop %v4037
        %v4046 = vrsqrt.pop %v4038
        %v4047 = vrsqrt.pop %v4039
        %v4048 = vrsqrt.pop %v4040
        %v4049 = vrsqrt.pop %v4041
        %v4050 = vrsqrt.pop %v4042
        %v4051 = vrsqrt.pop %v4043
        %v4052 = vrsqrt.pop %v4044
        %v4054 = vlaneseq
        %v4055 = vshrl.u32 %v4054, 7
        %v4056 = vsub.s32 0, %v4055
        %v4057 = vrot.slane %v3747, %v4056
        %v4058 = vlaneseq
        %v4059 = vshrl.u32 %v4058, 7
        %v4060 = vsub.s32 1, %v4059
        %v4061 = vrot.slane %v3747, %v4060
        %v4062 = vlaneseq
        %v4063 = vshrl.u32 %v4062, 7
        %v4064 = vsub.s32 2, %v4063
        %v4065 = vrot.slane %v3747, %v4064
        %v4066 = vlaneseq
        %v4067 = vshrl.u32 %v4066, 7
        %v4068 = vsub.s32 3, %v4067
        %v4069 = vrot.slane %v3747, %v4068
        %v4070 = vlaneseq
        %v4071 = vshrl.u32 %v4070, 7
        %v4072 = vsub.s32 4, %v4071
        %v4073 = vrot.slane %v3747, %v4072
        %v4074 = vlaneseq
        %v4075 = vshrl.u32 %v4074, 7
        %v4076 = vsub.s32 5, %v4075
        %v4077 = vrot.slane %v3747, %v4076
        %v4078 = vlaneseq
        %v4079 = vshrl.u32 %v4078, 7
        %v4080 = vsub.s32 6, %v4079
        %v4081 = vrot.slane %v3747, %v4080
        %v4082 = vlaneseq
        %v4083 = vshrl.u32 %v4082, 7
        %v4084 = vsub.s32 7, %v4083
        %v4085 = vrot.slane %v3747, %v4084
        %v4094 = vmul.f32 %v4045, %v4057
        %v4095 = vmul.f32 %v4046, %v4061
        %v4096 = vmul.f32 %v4047, %v4065
        %v4097 = vmul.f32 %v4048, %v4069
        %v4098 = vmul.f32 %v4049, %v4073
        %v4099 = vmul.f32 %v4050, %v4077
        %v4100 = vmul.f32 %v4051, %v4081
        %v4101 = vmul.f32 %v4052, %v4085
        %v4102 = vmul.f32 %v3853, %v4094
        %v4103 = vmul.f32 %v3854, %v4095
        %v4104 = vmul.f32 %v3855, %v4096
        %v4105 = vmul.f32 %v3856, %v4097
        %v4106 = vmul.f32 %v3857, %v4098
        %v4107 = vmul.f32 %v3858, %v4099
        %v4108 = vmul.f32 %v3859, %v4100
        %v4109 = vmul.f32 %v3860, %v4101
        %v4118 = vcombine.low %v4102, %v4103
        %v4119 = vcombine.low %v4104, %v4105
        %v4120 = vcombine.low %v4106, %v4107
        %v4121 = vcombine.low %v4108, %v4109
        %v4123 = vunpack.c.l.s4 1966171168
        %v4124 = vunpack.c.0.s8 %v4123
        %v4125 = vlaneseq
        %v4126 = vshrl.u32 %v4125, 7
        %v4127 = vsub.s32 %v4124, %v4126
        %v4128 = vrot.slane %v4118, %v4127
        %v4130 = vunpack.c.l.s4 1966171168
        %v4131 = vunpack.c.0.s8 %v4130
        %v4132 = vlaneseq
        %v4133 = vshrl.u32 %v4132, 7
        %v4134 = vsub.s32 %v4131, %v4133
        %v4135 = vrot.slane %v4119, %v4134
        %v4137 = vunpack.c.l.s4 1966171168
        %v4138 = vunpack.c.0.s8 %v4137
        %v4139 = vlaneseq
        %v4140 = vshrl.u32 %v4139, 7
        %v4141 = vsub.s32 %v4138, %v4140
        %v4142 = vrot.slane %v4120, %v4141
        %v4144 = vunpack.c.l.s4 1966171168
        %v4145 = vunpack.c.0.s8 %v4144
        %v4146 = vlaneseq
        %v4147 = vshrl.u32 %v4146, 7
        %v4148 = vsub.s32 %v4145, %v4147
        %v4149 = vrot.slane %v4121, %v4148
        %v4150 = vcombine.low %v4128, %v4135
        %v4151 = vcombine.low %v4142, %v4149
        %v4153 = vunpack.c.l.s4 1966171168
        %v4154 = vunpack.c.0.s8 %v4153
        %v4155 = vlaneseq
        %v4156 = vshrl.u32 %v4155, 7
        %v4157 = vsub.s32 %v4154, %v4156
        %v4158 = vrot.slane %v4150, %v4157
        %v4160 = vunpack.c.l.s4 1966171168
        %v4161 = vunpack.c.0.s8 %v4160
        %v4162 = vlaneseq
        %v4163 = vshrl.u32 %v4162, 7
        %v4164 = vsub.s32 %v4161, %v4163
        %v4165 = vrot.slane %v4151, %v4164
        %v4166 = vcombine.low %v4158, %v4165
        %v4168 = vsub.f32 %v3748, %v4166
        %v4169 = vlaneseq
        %v4170 = vshrl.u32 %v4169, 7
        %v4171 = vsub.s32 0, %v4170
        %v4172 = vrot.slane %v4094, %v4171
        %v4173 = vlaneseq
        %v4174 = vshrl.u32 %v4173, 7
        %v4175 = vsub.s32 0, %v4174
        %v4176 = vrot.slane %v4095, %v4175
        %v4177 = vlaneseq
        %v4178 = vshrl.u32 %v4177, 7
        %v4179 = vsub.s32 0, %v4178
        %v4180 = vrot.slane %v4096, %v4179
        %v4181 = vlaneseq
        %v4182 = vshrl.u32 %v4181, 7
        %v4183 = vsub.s32 0, %v4182
        %v4184 = vrot.slane %v4097, %v4183
        %v4185 = vlaneseq
        %v4186 = vshrl.u32 %v4185, 7
        %v4187 = vsub.s32 0, %v4186
        %v4188 = vrot.slane %v4098, %v4187
        %v4189 = vlaneseq
        %v4190 = vshrl.u32 %v4189, 7
        %v4191 = vsub.s32 0, %v4190
        %v4192 = vrot.slane %v4099, %v4191
        %v4193 = vlaneseq
        %v4194 = vshrl.u32 %v4193, 7
        %v4195 = vsub.s32 0, %v4194
        %v4196 = vrot.slane %v4100, %v4195
        %v4197 = vlaneseq
        %v4198 = vshrl.u32 %v4197, 7
        %v4199 = vsub.s32 0, %v4198
        %v4200 = vrot.slane %v4101, %v4199
        %v4201 = vmul.f32 %v3411, %v4172
        %v4202 = vmul.f32 %v3413, %v4176
        %v4203 = vmul.f32 %v3517, %v4180
        %v4204 = vmul.f32 %v3519, %v4184
        %v4205 = vmul.f32 %v3623, %v4188
        %v4206 = vmul.f32 %v3625, %v4192
        %v4207 = vmul.f32 %v3729, %v4196
        %v4208 = vmul.f32 %v3731, %v4200
        %v4209 = vmul.f32 %v3415, %v4172
        %v4210 = vmul.f32 %v3417, %v4176
        %v4211 = vmul.f32 %v3521, %v4180
        %v4212 = vmul.f32 %v3523, %v4184
        %v4213 = vmul.f32 %v3627, %v4188
        %v4214 = vmul.f32 %v3629, %v4192
        %v4215 = vmul.f32 %v3733, %v4196
        %v4216 = vmul.f32 %v3735, %v4200
        %v4217 = vmul.f32 %v3421, %v4172
        %v4218 = vmul.f32 %v3423, %v4176
        %v4219 = vmul.f32 %v3527, %v4180
        %v4220 = vmul.f32 %v3529, %v4184
        %v4221 = vmul.f32 %v3633, %v4188
        %v4222 = vmul.f32 %v3635, %v4192
        %v4223 = vmul.f32 %v3739, %v4196
        %v4224 = vmul.f32 %v3741, %v4200
        %v4225 = vmul.f32 %v3425, %v4172
        %v4226 = vmul.f32 %v3427, %v4176
        %v4227 = vmul.f32 %v3531, %v4180
        %v4228 = vmul.f32 %v3533, %v4184
        %v4229 = vmul.f32 %v3637, %v4188
        %v4230 = vmul.f32 %v3639, %v4192
        %v4231 = vmul.f32 %v3743, %v4196
        %v4232 = vmul.f32 %v3745, %v4200
        %v4234 = vlaneseq
        %v4235 = vshrl.u32 %v4234, 7
        %v4236 = vsub.s32 0, %v4235
        %v4237 = vrot.slane %v4168, %v4236
        %v4238 = vlaneseq
        %v4239 = vshrl.u32 %v4238, 7
        %v4240 = vsub.s32 1, %v4239
        %v4241 = vrot.slane %v4168, %v4240
        %v4242 = vlaneseq
        %v4243 = vshrl.u32 %v4242, 7
        %v4244 = vsub.s32 2, %v4243
        %v4245 = vrot.slane %v4168, %v4244
        %v4246 = vlaneseq
        %v4247 = vshrl.u32 %v4246, 7
        %v4248 = vsub.s32 3, %v4247
        %v4249 = vrot.slane %v4168, %v4248
        %v4250 = vlaneseq
        %v4251 = vshrl.u32 %v4250, 7
        %v4252 = vsub.s32 4, %v4251
        %v4253 = vrot.slane %v4168, %v4252
        %v4254 = vlaneseq
        %v4255 = vshrl.u32 %v4254, 7
        %v4256 = vsub.s32 5, %v4255
        %v4257 = vrot.slane %v4168, %v4256
        %v4258 = vlaneseq
        %v4259 = vshrl.u32 %v4258, 7
        %v4260 = vsub.s32 6, %v4259
        %v4261 = vrot.slane %v4168, %v4260
        %v4262 = vlaneseq
        %v4263 = vshrl.u32 %v4262, 7
        %v4264 = vsub.s32 7, %v4263
        %v4265 = vrot.slane %v4168, %v4264
        %v4274 = vadd.f32 %v4201, %v4237
        %v4275 = vadd.f32 %v4202, %v4241
        %v4276 = vadd.f32 %v4203, %v4245
        %v4277 = vadd.f32 %v4204, %v4249
        %v4278 = vadd.f32 %v4205, %v4253
        %v4279 = vadd.f32 %v4206, %v4257
        %v4280 = vadd.f32 %v4207, %v4261
        %v4281 = vadd.f32 %v4208, %v4265
        %v4282 = vadd.f32 %v4209, %v4237
        %v4283 = vadd.f32 %v4210, %v4241
        %v4284 = vadd.f32 %v4211, %v4245
        %v4285 = vadd.f32 %v4212, %v4249
        %v4286 = vadd.f32 %v4213, %v4253
        %v4287 = vadd.f32 %v4214, %v4257
        %v4288 = vadd.f32 %v4215, %v4261
        %v4289 = vadd.f32 %v4216, %v4265
        %v4290 = vadd.f32 %v4217, %v4237
        %v4291 = vadd.f32 %v4218, %v4241
        %v4292 = vadd.f32 %v4219, %v4245
        %v4293 = vadd.f32 %v4220, %v4249
        %v4294 = vadd.f32 %v4221, %v4253
        %v4295 = vadd.f32 %v4222, %v4257
        %v4296 = vadd.f32 %v4223, %v4261
        %v4297 = vadd.f32 %v4224, %v4265
        %v4298 = vadd.f32 %v4225, %v4237
        %v4299 = vadd.f32 %v4226, %v4241
        %v4300 = vadd.f32 %v4227, %v4245
        %v4301 = vadd.f32 %v4228, %v4249
        %v4302 = vadd.f32 %v4229, %v4253
        %v4303 = vadd.f32 %v4230, %v4257
        %v4304 = vadd.f32 %v4231, %v4261
        %v4305 = vadd.f32 %v4232, %v4265
        %vm4306 = vcmp.gt.f32.partialorder %v4274, 0.0
        %vm4307 = vcmp.gt.f32.partialorder %v4275, 0.0
        %vm4308 = vcmp.gt.f32.partialorder %v4276, 0.0
        %vm4309 = vcmp.gt.f32.partialorder %v4277, 0.0
        %vm4310 = vcmp.gt.f32.partialorder %v4278, 0.0
        %vm4311 = vcmp.gt.f32.partialorder %v4279, 0.0
        %vm4312 = vcmp.gt.f32.partialorder %v4280, 0.0
        %vm4313 = vcmp.gt.f32.partialorder %v4281, 0.0
        %vm4314 = vcmp.gt.f32.partialorder %v4282, 0.0
        %vm4315 = vcmp.gt.f32.partialorder %v4283, 0.0
        %vm4316 = vcmp.gt.f32.partialorder %v4284, 0.0
        %vm4317 = vcmp.gt.f32.partialorder %v4285, 0.0
        %vm4318 = vcmp.gt.f32.partialorder %v4286, 0.0
        %vm4319 = vcmp.gt.f32.partialorder %v4287, 0.0
        %vm4320 = vcmp.gt.f32.partialorder %v4288, 0.0
        %vm4321 = vcmp.gt.f32.partialorder %v4289, 0.0
        %vm4322 = vcmp.gt.f32.partialorder %v4290, 0.0
        %vm4323 = vcmp.gt.f32.partialorder %v4291, 0.0
        %vm4324 = vcmp.gt.f32.partialorder %v4292, 0.0
        %vm4325 = vcmp.gt.f32.partialorder %v4293, 0.0
        %vm4326 = vcmp.gt.f32.partialorder %v4294, 0.0
        %vm4327 = vcmp.gt.f32.partialorder %v4295, 0.0
        %vm4328 = vcmp.gt.f32.partialorder %v4296, 0.0
        %vm4329 = vcmp.gt.f32.partialorder %v4297, 0.0
        %vm4330 = vcmp.gt.f32.partialorder %v4298, 0.0
        %vm4331 = vcmp.gt.f32.partialorder %v4299, 0.0
        %vm4332 = vcmp.gt.f32.partialorder %v4300, 0.0
        %vm4333 = vcmp.gt.f32.partialorder %v4301, 0.0
        %vm4334 = vcmp.gt.f32.partialorder %v4302, 0.0
        %vm4335 = vcmp.gt.f32.partialorder %v4303, 0.0
        %vm4336 = vcmp.gt.f32.partialorder %v4304, 0.0
        %vm4337 = vcmp.gt.f32.partialorder %v4305, 0.0
        %v4338 = vmul.f32 %v4274, 0.2
        %v4339 = vmul.f32 %v4275, 0.2
        %v4340 = vmul.f32 %v4276, 0.2
        %v4341 = vmul.f32 %v4277, 0.2
        %v4342 = vmul.f32 %v4278, 0.2
        %v4343 = vmul.f32 %v4279, 0.2
        %v4344 = vmul.f32 %v4280, 0.2
        %v4345 = vmul.f32 %v4281, 0.2
        %v4346 = vmul.f32 %v4282, 0.2
        %v4347 = vmul.f32 %v4283, 0.2
        %v4348 = vmul.f32 %v4284, 0.2
        %v4349 = vmul.f32 %v4285, 0.2
        %v4350 = vmul.f32 %v4286, 0.2
        %v4351 = vmul.f32 %v4287, 0.2
        %v4352 = vmul.f32 %v4288, 0.2
        %v4353 = vmul.f32 %v4289, 0.2
        %v4354 = vmul.f32 %v4290, 0.2
        %v4355 = vmul.f32 %v4291, 0.2
        %v4356 = vmul.f32 %v4292, 0.2
        %v4357 = vmul.f32 %v4293, 0.2
        %v4358 = vmul.f32 %v4294, 0.2
        %v4359 = vmul.f32 %v4295, 0.2
        %v4360 = vmul.f32 %v4296, 0.2
        %v4361 = vmul.f32 %v4297, 0.2
        %v4362 = vmul.f32 %v4298, 0.2
        %v4363 = vmul.f32 %v4299, 0.2
        %v4364 = vmul.f32 %v4300, 0.2
        %v4365 = vmul.f32 %v4301, 0.2
        %v4366 = vmul.f32 %v4302, 0.2
        %v4367 = vmul.f32 %v4303, 0.2
        %v4368 = vmul.f32 %v4304, 0.2
        %v4369 = vmul.f32 %v4305, 0.2
        %v4370 = vsel %vm4306, %v4274, %v4338
        %v4371 = vsel %vm4307, %v4275, %v4339
        %v4372 = vsel %vm4308, %v4276, %v4340
        %v4373 = vsel %vm4309, %v4277, %v4341
        %v4374 = vsel %vm4310, %v4278, %v4342
        %v4375 = vsel %vm4311, %v4279, %v4343
        %v4376 = vsel %vm4312, %v4280, %v4344
        %v4377 = vsel %vm4313, %v4281, %v4345
        %v4378 = vsel %vm4314, %v4282, %v4346
        %v4379 = vsel %vm4315, %v4283, %v4347
        %v4380 = vsel %vm4316, %v4284, %v4348
        %v4381 = vsel %vm4317, %v4285, %v4349
        %v4382 = vsel %vm4318, %v4286, %v4350
        %v4383 = vsel %vm4319, %v4287, %v4351
        %v4384 = vsel %vm4320, %v4288, %v4352
        %v4385 = vsel %vm4321, %v4289, %v4353
        %v4386 = vsel %vm4322, %v4290, %v4354
        %v4387 = vsel %vm4323, %v4291, %v4355
        %v4388 = vsel %vm4324, %v4292, %v4356
        %v4389 = vsel %vm4325, %v4293, %v4357
        %v4390 = vsel %vm4326, %v4294, %v4358
        %v4391 = vsel %vm4327, %v4295, %v4359
        %v4392 = vsel %vm4328, %v4296, %v4360
        %v4393 = vsel %vm4329, %v4297, %v4361
        %v4394 = vsel %vm4330, %v4298, %v4362
        %v4395 = vsel %vm4331, %v4299, %v4363
        %v4396 = vsel %vm4332, %v4300, %v4364
        %v4397 = vsel %vm4333, %v4301, %v4365
        %v4398 = vsel %vm4334, %v4302, %v4366
        %v4399 = vsel %vm4335, %v4303, %v4367
        %v4400 = vsel %vm4336, %v4304, %v4368
        %v4401 = vsel %vm4337, %v4305, %v4369
        %v4402 = vpack.c.bf16 %v4378, %v4370
        %v4403 = vpack.c.bf16 %v4379, %v4371
        %v4404 = vpack.c.bf16 %v4380, %v4372
        %v4405 = vpack.c.bf16 %v4381, %v4373
        %v4406 = vpack.c.bf16 %v4382, %v4374
        %v4407 = vpack.c.bf16 %v4383, %v4375
        %v4408 = vpack.c.bf16 %v4384, %v4376
        %v4409 = vpack.c.bf16 %v4385, %v4377
        %v4410 = vpack.c.bf16 %v4394, %v4386
        %v4411 = vpack.c.bf16 %v4395, %v4387
        %v4412 = vpack.c.bf16 %v4396, %v4388
        %v4413 = vpack.c.bf16 %v4397, %v4389
        %v4414 = vpack.c.bf16 %v4398, %v4390
        %v4415 = vpack.c.bf16 %v4399, %v4391
        %v4416 = vpack.c.bf16 %v4400, %v4392
        %v4417 = vpack.c.bf16 %v4401, %v4393
        %v4418 = vld [vmem:[#allocation13] sm:$0xff]
        %v4419 = vld [vmem:[#allocation13 + $0x8] sm:$0xff]
        %v4420 = vld [vmem:[#allocation13 + $0x10] sm:$0xff]
        %v4421 = vld [vmem:[#allocation13 + $0x18] sm:$0xf]
        %v4422 = vld [vmem:[#allocation13 + $0x1c] sm:$0xff]
        %v4423 = vld [vmem:[#allocation13 + $0x24] sm:$0xff]
        %v4424 = vld [vmem:[#allocation13 + $0x2c] sm:$0xff]
        %v4425 = vld [vmem:[#allocation13 + $0x34] sm:$0xf]
        %v4426 = vld [vmem:[#allocation13 + $0x38] sm:$0xff]
        %v4427 = vld [vmem:[#allocation13 + $0x40] sm:$0xff]
        %v4428 = vld [vmem:[#allocation13 + $0x48] sm:$0xff]
        %v4429 = vld [vmem:[#allocation13 + $0x50] sm:$0xf]
        %v4430 = vld [vmem:[#allocation13 + $0x54] sm:$0xff]
        %v4431 = vld [vmem:[#allocation13 + $0x5c] sm:$0xff]
        %v4432 = vld [vmem:[#allocation13 + $0x64] sm:$0xff]
        %v4433 = vld [vmem:[#allocation13 + $0x6c] sm:$0xf]
        %v4434 = vld [vmem:[#allocation13 + $0x70] sm:$0xff]
        %v4435 = vld [vmem:[#allocation13 + $0x78] sm:$0xff]
        %v4436 = vld [vmem:[#allocation13 + $0x80] sm:$0xff]
        %v4437 = vld [vmem:[#allocation13 + $0x88] sm:$0xf]
        %v4438 = vld [vmem:[#allocation13 + $0x8c] sm:$0xff]
        %v4439 = vld [vmem:[#allocation13 + $0x94] sm:$0xff]
        %v4440 = vld [vmem:[#allocation13 + $0x9c] sm:$0xff]
        %v4441 = vld [vmem:[#allocation13 + $0xa4] sm:$0xf]
        %v4442 = vld [vmem:[#allocation13 + $0xa8] sm:$0xff]
        %v4443 = vld [vmem:[#allocation13 + $0xb0] sm:$0xff]
        %v4444 = vld [vmem:[#allocation13 + $0xb8] sm:$0xff]
        %v4445 = vld [vmem:[#allocation13 + $0xc0] sm:$0xf]
        %v4446 = vld [vmem:[#allocation13 + $0xc4] sm:$0xff]
        %v4447 = vld [vmem:[#allocation13 + $0xcc] sm:$0xff]
        %v4448 = vld [vmem:[#allocation13 + $0xd4] sm:$0xff]
        %v4449 = vld [vmem:[#allocation13 + $0xdc] sm:$0xf]
        %v4450 = vld [vmem:[#allocation13 + $0xe0] sm:$0xff]
        %v4451 = vld [vmem:[#allocation13 + $0xe8] sm:$0xff]
        %v4452 = vld [vmem:[#allocation13 + $0xf0] sm:$0xff]
        %v4453 = vld [vmem:[#allocation13 + $0xf8] sm:$0xf]
        %v4454 = vld [vmem:[#allocation13 + $0xfc] sm:$0xff]
        %v4455 = vld [vmem:[#allocation13 + $0x104] sm:$0xff]
        %v4456 = vld [vmem:[#allocation13 + $0x10c] sm:$0xff]
        %v4457 = vld [vmem:[#allocation13 + $0x114] sm:$0xf]
        %v4458 = vld [vmem:[#allocation13 + $0x118] sm:$0xff]
        %v4459 = vld [vmem:[#allocation13 + $0x120] sm:$0xff]
        %v4460 = vld [vmem:[#allocation13 + $0x128] sm:$0xff]
        %v4461 = vld [vmem:[#allocation13 + $0x130] sm:$0xf]
        %v4462 = vld [vmem:[#allocation13 + $0x134] sm:$0xff]
        %v4463 = vld [vmem:[#allocation13 + $0x13c] sm:$0xff]
        %v4464 = vld [vmem:[#allocation13 + $0x144] sm:$0xff]
        %v4465 = vld [vmem:[#allocation13 + $0x14c] sm:$0xf]
        %v4466 = vld [vmem:[#allocation13 + $0x150] sm:$0xff]
        %v4467 = vld [vmem:[#allocation13 + $0x158] sm:$0xff]
        %v4468 = vld [vmem:[#allocation13 + $0x160] sm:$0xff]
        %v4469 = vld [vmem:[#allocation13 + $0x168] sm:$0xf]
        %v4470 = vld [vmem:[#allocation13 + $0x16c] sm:$0xff]
        %v4471 = vld [vmem:[#allocation13 + $0x174] sm:$0xff]
        %v4472 = vld [vmem:[#allocation13 + $0x17c] sm:$0xff]
        %v4473 = vld [vmem:[#allocation13 + $0x184] sm:$0xf]
        %v4474 = vld [vmem:[#allocation13 + $0x188] sm:$0xff]
        %v4475 = vld [vmem:[#allocation13 + $0x190] sm:$0xff]
        %v4476 = vld [vmem:[#allocation13 + $0x198] sm:$0xff]
        %v4477 = vld [vmem:[#allocation13 + $0x1a0] sm:$0xf]
        %v4478 = vld [vmem:[#allocation13 + $0x1a4] sm:$0xff]
        %v4479 = vld [vmem:[#allocation13 + $0x1ac] sm:$0xff]
        %v4480 = vld [vmem:[#allocation13 + $0x1b4] sm:$0xff]
        %v4481 = vld [vmem:[#allocation13 + $0x1bc] sm:$0xf]
        %v4482 = vld [vmem:[#allocation13 + $0x1c0] sm:$0xff]
        %v4483 = vld [vmem:[#allocation13 + $0x1c8] sm:$0xff]
        %v4484 = vld [vmem:[#allocation13 + $0x1d0] sm:$0xff]
        %v4485 = vld [vmem:[#allocation13 + $0x1d8] sm:$0xf]
        %v4486 = vld [vmem:[#allocation13 + $0x1dc] sm:$0xff]
        %v4487 = vld [vmem:[#allocation13 + $0x1e4] sm:$0xff]
        %v4488 = vld [vmem:[#allocation13 + $0x1ec] sm:$0xff]
        %v4489 = vld [vmem:[#allocation13 + $0x1f4] sm:$0xf]
        %v4490 = vld [vmem:[#allocation13 + $0x1f8] sm:$0xff]
        %v4491 = vld [vmem:[#allocation13 + $0x200] sm:$0xff]
        %v4492 = vld [vmem:[#allocation13 + $0x208] sm:$0xff]
        %v4493 = vld [vmem:[#allocation13 + $0x210] sm:$0xf]
        %v4494 = vld [vmem:[#allocation13 + $0x214] sm:$0xff]
        %v4495 = vld [vmem:[#allocation13 + $0x21c] sm:$0xff]
        %v4496 = vld [vmem:[#allocation13 + $0x224] sm:$0xff]
        %v4497 = vld [vmem:[#allocation13 + $0x22c] sm:$0xf]
        %v4498 = vld [vmem:[#allocation13 + $0x230] sm:$0xff]
        %v4499 = vld [vmem:[#allocation13 + $0x238] sm:$0xff]
        %v4500 = vld [vmem:[#allocation13 + $0x240] sm:$0xff]
        %v4501 = vld [vmem:[#allocation13 + $0x248] sm:$0xf]
        %v4502 = vld [vmem:[#allocation13 + $0x24c] sm:$0xff]
        %v4503 = vld [vmem:[#allocation13 + $0x254] sm:$0xff]
        %v4504 = vld [vmem:[#allocation13 + $0x25c] sm:$0xff]
        %v4505 = vld [vmem:[#allocation13 + $0x264] sm:$0xf]
        %v4506 = vld [vmem:[#allocation13 + $0x268] sm:$0xff]
        %v4507 = vld [vmem:[#allocation13 + $0x270] sm:$0xff]
        %v4508 = vld [vmem:[#allocation13 + $0x278] sm:$0xff]
        %v4509 = vld [vmem:[#allocation13 + $0x280] sm:$0xf]
        %v4510 = vld [vmem:[#allocation13 + $0x284] sm:$0xff]
        %v4511 = vld [vmem:[#allocation13 + $0x28c] sm:$0xff]
        %v4512 = vld [vmem:[#allocation13 + $0x294] sm:$0xff]
        %v4513 = vld [vmem:[#allocation13 + $0x29c] sm:$0xf]
        %v4514 = vld [vmem:[#allocation13 + $0x2a0] sm:$0xff]
        %v4515 = vld [vmem:[#allocation13 + $0x2a8] sm:$0xff]
        %v4516 = vld [vmem:[#allocation13 + $0x2b0] sm:$0xff]
        %v4517 = vld [vmem:[#allocation13 + $0x2b8] sm:$0xf]
        %v4518 = vld [vmem:[#allocation13 + $0x2bc] sm:$0xff]
        %v4519 = vld [vmem:[#allocation13 + $0x2c4] sm:$0xff]
        %v4520 = vld [vmem:[#allocation13 + $0x2cc] sm:$0xff]
        %v4521 = vld [vmem:[#allocation13 + $0x2d4] sm:$0xf]
        %v4522 = vld [vmem:[#allocation13 + $0x2d8] sm:$0xff]
        %v4523 = vld [vmem:[#allocation13 + $0x2e0] sm:$0xff]
        %v4524 = vld [vmem:[#allocation13 + $0x2e8] sm:$0xff]
        %v4525 = vld [vmem:[#allocation13 + $0x2f0] sm:$0xf]
        %v4526 = vld [vmem:[#allocation13 + $0x2f4] sm:$0xff]
        %v4527 = vld [vmem:[#allocation13 + $0x2fc] sm:$0xff]
        %v4528 = vld [vmem:[#allocation13 + $0x304] sm:$0xff]
        %v4529 = vld [vmem:[#allocation13 + $0x30c] sm:$0xf]
        %v4530 = vld [vmem:[#allocation13 + $0x310] sm:$0xff]
        %v4531 = vld [vmem:[#allocation13 + $0x318] sm:$0xff]
        %v4532 = vld [vmem:[#allocation13 + $0x320] sm:$0xff]
        %v4533 = vld [vmem:[#allocation13 + $0x328] sm:$0xf]
        %v4534 = vld [vmem:[#allocation13 + $0x32c] sm:$0xff]
        %v4535 = vld [vmem:[#allocation13 + $0x334] sm:$0xff]
        %v4536 = vld [vmem:[#allocation13 + $0x33c] sm:$0xff]
        %v4537 = vld [vmem:[#allocation13 + $0x344] sm:$0xf]
        %v4538 = vld [vmem:[#allocation13 + $0x348] sm:$0xff]
        %v4539 = vld [vmem:[#allocation13 + $0x350] sm:$0xff]
        %v4540 = vld [vmem:[#allocation13 + $0x358] sm:$0xff]
        %v4541 = vld [vmem:[#allocation13 + $0x360] sm:$0xf]
        %v4542 = vld [vmem:[#allocation13 + $0x364] sm:$0xff]
        %v4543 = vld [vmem:[#allocation13 + $0x36c] sm:$0xff]
        %v4544 = vld [vmem:[#allocation13 + $0x374] sm:$0xff]
        %v4545 = vld [vmem:[#allocation13 + $0x37c] sm:$0xf]
        %v4546 = vld [vmem:[#allocation13 + $0x380] sm:$0xff]
        %v4547 = vld [vmem:[#allocation13 + $0x388] sm:$0xff]
        %v4548 = vld [vmem:[#allocation13 + $0x390] sm:$0xff]
        %v4549 = vld [vmem:[#allocation13 + $0x398] sm:$0xf]
        %v4550 = vld [vmem:[#allocation13 + $0x39c] sm:$0xff]
        %v4551 = vld [vmem:[#allocation13 + $0x3a4] sm:$0xff]
        %v4552 = vld [vmem:[#allocation13 + $0x3ac] sm:$0xff]
        %v4553 = vld [vmem:[#allocation13 + $0x3b4] sm:$0xf]
        %v4554 = vld [vmem:[#allocation13 + $0x3b8] sm:$0xff]
        %v4555 = vld [vmem:[#allocation13 + $0x3c0] sm:$0xff]
        %v4556 = vld [vmem:[#allocation13 + $0x3c8] sm:$0xff]
        %v4557 = vld [vmem:[#allocation13 + $0x3d0] sm:$0xf]
        %v4558 = vld [vmem:[#allocation13 + $0x3d4] sm:$0xff]
        %v4559 = vld [vmem:[#allocation13 + $0x3dc] sm:$0xff]
        %v4560 = vld [vmem:[#allocation13 + $0x3e4] sm:$0xff]
        %v4561 = vld [vmem:[#allocation13 + $0x3ec] sm:$0xf]
        %v4562 = vld [vmem:[#allocation13 + $0x3f0] sm:$0xff]
        %v4563 = vld [vmem:[#allocation13 + $0x3f8] sm:$0xff]
        %v4564 = vld [vmem:[#allocation13 + $0x400] sm:$0xff]
        %v4565 = vld [vmem:[#allocation13 + $0x408] sm:$0xf]
        %v4566 = vld [vmem:[#allocation13 + $0x40c] sm:$0xff]
        %v4567 = vld [vmem:[#allocation13 + $0x414] sm:$0xff]
        %v4568 = vld [vmem:[#allocation13 + $0x41c] sm:$0xff]
        %v4569 = vld [vmem:[#allocation13 + $0x424] sm:$0xf]
        %v4570 = vld [vmem:[#allocation13 + $0x428] sm:$0xff]
        %v4571 = vld [vmem:[#allocation13 + $0x430] sm:$0xff]
        %v4572 = vld [vmem:[#allocation13 + $0x438] sm:$0xff]
        %v4573 = vld [vmem:[#allocation13 + $0x440] sm:$0xf]
        %v4574 = vld [vmem:[#allocation13 + $0x444] sm:$0xff]
        %v4575 = vld [vmem:[#allocation13 + $0x44c] sm:$0xff]
        %v4576 = vld [vmem:[#allocation13 + $0x454] sm:$0xff]
        %v4577 = vld [vmem:[#allocation13 + $0x45c] sm:$0xf]
        %v4578 = vld [vmem:[#allocation13 + $0x460] sm:$0xff]
        %v4579 = vld [vmem:[#allocation13 + $0x468] sm:$0xff]
        %v4580 = vld [vmem:[#allocation13 + $0x470] sm:$0xff]
        %v4581 = vld [vmem:[#allocation13 + $0x478] sm:$0xf]
        %v4582 = vld [vmem:[#allocation13 + $0x47c] sm:$0xff]
        %v4583 = vld [vmem:[#allocation13 + $0x484] sm:$0xff]
        %v4584 = vld [vmem:[#allocation13 + $0x48c] sm:$0xff]
        %v4585 = vld [vmem:[#allocation13 + $0x494] sm:$0xf]
        %v4586 = vld [vmem:[#allocation13 + $0x498] sm:$0xff]
        %v4587 = vld [vmem:[#allocation13 + $0x4a0] sm:$0xff]
        %v4588 = vld [vmem:[#allocation13 + $0x4a8] sm:$0xff]
        %v4589 = vld [vmem:[#allocation13 + $0x4b0] sm:$0xf]
        %v4590 = vld [vmem:[#allocation13 + $0x4b4] sm:$0xff]
        %v4591 = vld [vmem:[#allocation13 + $0x4bc] sm:$0xff]
        %v4592 = vld [vmem:[#allocation13 + $0x4c4] sm:$0xff]
        %v4593 = vld [vmem:[#allocation13 + $0x4cc] sm:$0xf]
        %v4594 = vld [vmem:[#allocation13 + $0x4d0] sm:$0xff]
        %v4595 = vld [vmem:[#allocation13 + $0x4d8] sm:$0xff]
        %v4596 = vld [vmem:[#allocation13 + $0x4e0] sm:$0xff]
        %v4597 = vld [vmem:[#allocation13 + $0x4e8] sm:$0xf]
        %v4598 = vld [vmem:[#allocation13 + $0x4ec] sm:$0xff]
        %v4599 = vld [vmem:[#allocation13 + $0x4f4] sm:$0xff]
        %v4600 = vld [vmem:[#allocation13 + $0x4fc] sm:$0xff]
        %v4601 = vld [vmem:[#allocation13 + $0x504] sm:$0xf]
        %v4602 = vld [vmem:[#allocation13 + $0x508] sm:$0xff]
        %v4603 = vld [vmem:[#allocation13 + $0x510] sm:$0xff]
        %v4604 = vld [vmem:[#allocation13 + $0x518] sm:$0xff]
        %v4605 = vld [vmem:[#allocation13 + $0x520] sm:$0xf]
        %v4606 = vld [vmem:[#allocation13 + $0x524] sm:$0xff]
        %v4607 = vld [vmem:[#allocation13 + $0x52c] sm:$0xff]
        %v4608 = vld [vmem:[#allocation13 + $0x534] sm:$0xff]
        %v4609 = vld [vmem:[#allocation13 + $0x53c] sm:$0xf]
        %v4610 = vld [vmem:[#allocation13 + $0x540] sm:$0xff]
        %v4611 = vld [vmem:[#allocation13 + $0x548] sm:$0xff]
        %v4612 = vld [vmem:[#allocation13 + $0x550] sm:$0xff]
        %v4613 = vld [vmem:[#allocation13 + $0x558] sm:$0xf]
        %v4614 = vld [vmem:[#allocation13 + $0x55c] sm:$0xff]
        %v4615 = vld [vmem:[#allocation13 + $0x564] sm:$0xff]
        %v4616 = vld [vmem:[#allocation13 + $0x56c] sm:$0xff]
        %v4617 = vld [vmem:[#allocation13 + $0x574] sm:$0xf]
        %v4618 = vld [vmem:[#allocation13 + $0x578] sm:$0xff]
        %v4619 = vld [vmem:[#allocation13 + $0x580] sm:$0xff]
        %v4620 = vld [vmem:[#allocation13 + $0x588] sm:$0xff]
        %v4621 = vld [vmem:[#allocation13 + $0x590] sm:$0xf]
        %v4622 = vld [vmem:[#allocation13 + $0x594] sm:$0xff]
        %v4623 = vld [vmem:[#allocation13 + $0x59c] sm:$0xff]
        %v4624 = vld [vmem:[#allocation13 + $0x5a4] sm:$0xff]
        %v4625 = vld [vmem:[#allocation13 + $0x5ac] sm:$0xf]
        %v4626 = vld [vmem:[#allocation13 + $0x5b0] sm:$0xff]
        %v4627 = vld [vmem:[#allocation13 + $0x5b8] sm:$0xff]
        %v4628 = vld [vmem:[#allocation13 + $0x5c0] sm:$0xff]
        %v4629 = vld [vmem:[#allocation13 + $0x5c8] sm:$0xf]
        %v4630 = vld [vmem:[#allocation13 + $0x5cc] sm:$0xff]
        %v4631 = vld [vmem:[#allocation13 + $0x5d4] sm:$0xff]
        %v4632 = vld [vmem:[#allocation13 + $0x5dc] sm:$0xff]
        %v4633 = vld [vmem:[#allocation13 + $0x5e4] sm:$0xf]
        %v4634 = vld [vmem:[#allocation13 + $0x5e8] sm:$0xff]
        %v4635 = vld [vmem:[#allocation13 + $0x5f0] sm:$0xff]
        %v4636 = vld [vmem:[#allocation13 + $0x5f8] sm:$0xff]
        %v4637 = vld [vmem:[#allocation13 + $0x600] sm:$0xf]
        %v4638 = vld [vmem:[#allocation13 + $0x604] sm:$0xff]
        %v4639 = vld [vmem:[#allocation13 + $0x60c] sm:$0xff]
        %v4640 = vld [vmem:[#allocation13 + $0x614] sm:$0xff]
        %v4641 = vld [vmem:[#allocation13 + $0x61c] sm:$0xf]
        %v4642 = vld [vmem:[#allocation13 + $0x620] sm:$0xff]
        %v4643 = vld [vmem:[#allocation13 + $0x628] sm:$0xff]
        %v4644 = vld [vmem:[#allocation13 + $0x630] sm:$0xff]
        %v4645 = vld [vmem:[#allocation13 + $0x638] sm:$0xf]
        %v4646 = vld [vmem:[#allocation13 + $0x63c] sm:$0xff]
        %v4647 = vld [vmem:[#allocation13 + $0x644] sm:$0xff]
        %v4648 = vld [vmem:[#allocation13 + $0x64c] sm:$0xff]
        %v4649 = vld [vmem:[#allocation13 + $0x654] sm:$0xf]
        %v4650 = vld [vmem:[#allocation13 + $0x658] sm:$0xff]
        %v4651 = vld [vmem:[#allocation13 + $0x660] sm:$0xff]
        %v4652 = vld [vmem:[#allocation13 + $0x668] sm:$0xff]
        %v4653 = vld [vmem:[#allocation13 + $0x670] sm:$0xf]
        %v4654 = vld [vmem:[#allocation13 + $0x674] sm:$0xff]
        %v4655 = vld [vmem:[#allocation13 + $0x67c] sm:$0xff]
        %v4656 = vld [vmem:[#allocation13 + $0x684] sm:$0xff]
        %v4657 = vld [vmem:[#allocation13 + $0x68c] sm:$0xf]
        %v4658 = vld [vmem:[#allocation13 + $0x690] sm:$0xff]
        %v4659 = vld [vmem:[#allocation13 + $0x698] sm:$0xff]
        %v4660 = vld [vmem:[#allocation13 + $0x6a0] sm:$0xff]
        %v4661 = vld [vmem:[#allocation13 + $0x6a8] sm:$0xf]
        %v4662 = vld [vmem:[#allocation13 + $0x6ac] sm:$0xff]
        %v4663 = vld [vmem:[#allocation13 + $0x6b4] sm:$0xff]
        %v4664 = vld [vmem:[#allocation13 + $0x6bc] sm:$0xff]
        %v4665 = vld [vmem:[#allocation13 + $0x6c4] sm:$0xf]
        %v4666 = vld [vmem:[#allocation13 + $0x6c8] sm:$0xff]
        %v4667 = vld [vmem:[#allocation13 + $0x6d0] sm:$0xff]
        %v4668 = vld [vmem:[#allocation13 + $0x6d8] sm:$0xff]
        %v4669 = vld [vmem:[#allocation13 + $0x6e0] sm:$0xf]
        %v4670 = vld [vmem:[#allocation13 + $0x6e4] sm:$0xff]
        %v4671 = vld [vmem:[#allocation13 + $0x6ec] sm:$0xff]
        %v4672 = vld [vmem:[#allocation13 + $0x6f4] sm:$0xff]
        %v4673 = vld [vmem:[#allocation13 + $0x6fc] sm:$0xf]
        %v4674 = vld [vmem:[#allocation13 + $0x700] sm:$0xff]
        %v4675 = vld [vmem:[#allocation13 + $0x708] sm:$0xff]
        %v4676 = vld [vmem:[#allocation13 + $0x710] sm:$0xff]
        %v4677 = vld [vmem:[#allocation13 + $0x718] sm:$0xf]
        %v4678 = vld [vmem:[#allocation13 + $0x71c] sm:$0xff]
        %v4679 = vld [vmem:[#allocation13 + $0x724] sm:$0xff]
        %v4680 = vld [vmem:[#allocation13 + $0x72c] sm:$0xff]
        %v4681 = vld [vmem:[#allocation13 + $0x734] sm:$0xf]
        %v4682 = vld [vmem:[#allocation13 + $0x738] sm:$0xff]
        %v4683 = vld [vmem:[#allocation13 + $0x740] sm:$0xff]
        %v4684 = vld [vmem:[#allocation13 + $0x748] sm:$0xff]
        %v4685 = vld [vmem:[#allocation13 + $0x750] sm:$0xf]
        %v4686 = vld [vmem:[#allocation13 + $0x754] sm:$0xff]
        %v4687 = vld [vmem:[#allocation13 + $0x75c] sm:$0xff]
        %v4688 = vld [vmem:[#allocation13 + $0x764] sm:$0xff]
        %v4689 = vld [vmem:[#allocation13 + $0x76c] sm:$0xf]
        %v4690 = vld [vmem:[#allocation13 + $0x770] sm:$0xff]
        %v4691 = vld [vmem:[#allocation13 + $0x778] sm:$0xff]
        %v4692 = vld [vmem:[#allocation13 + $0x780] sm:$0xff]
        %v4693 = vld [vmem:[#allocation13 + $0x788] sm:$0xf]
        %v4694 = vld [vmem:[#allocation13 + $0x78c] sm:$0xff]
        %v4695 = vld [vmem:[#allocation13 + $0x794] sm:$0xff]
        %v4696 = vld [vmem:[#allocation13 + $0x79c] sm:$0xff]
        %v4697 = vld [vmem:[#allocation13 + $0x7a4] sm:$0xf]
        %v4698 = vld [vmem:[#allocation13 + $0x7a8] sm:$0xff]
        %v4699 = vld [vmem:[#allocation13 + $0x7b0] sm:$0xff]
        %v4700 = vld [vmem:[#allocation13 + $0x7b8] sm:$0xff]
        %v4701 = vld [vmem:[#allocation13 + $0x7c0] sm:$0xf]
        %v4702 = vld [vmem:[#allocation13 + $0x7c4] sm:$0xff]
        %v4703 = vld [vmem:[#allocation13 + $0x7cc] sm:$0xff]
        %v4704 = vld [vmem:[#allocation13 + $0x7d4] sm:$0xff]
        %v4705 = vld [vmem:[#allocation13 + $0x7dc] sm:$0xf]
        %v4706 = vld [vmem:[#allocation13 + $0x7e0] sm:$0xff]
        %v4707 = vld [vmem:[#allocation13 + $0x7e8] sm:$0xff]
        %v4708 = vld [vmem:[#allocation13 + $0x7f0] sm:$0xff]
        %v4709 = vld [vmem:[#allocation13 + $0x7f8] sm:$0xf]
        %v4710 = vld [vmem:[#allocation13 + $0x7fc] sm:$0xff]
        %v4711 = vld [vmem:[#allocation13 + $0x804] sm:$0xff]
        %v4712 = vld [vmem:[#allocation13 + $0x80c] sm:$0xff]
        %v4713 = vld [vmem:[#allocation13 + $0x814] sm:$0xf]
        %v4714 = vld [vmem:[#allocation13 + $0x818] sm:$0xff]
        %v4715 = vld [vmem:[#allocation13 + $0x820] sm:$0xff]
        %v4716 = vld [vmem:[#allocation13 + $0x828] sm:$0xff]
        %v4717 = vld [vmem:[#allocation13 + $0x830] sm:$0xf]
        %v4718 = vld [vmem:[#allocation13 + $0x834] sm:$0xff]
        %v4719 = vld [vmem:[#allocation13 + $0x83c] sm:$0xff]
        %v4720 = vld [vmem:[#allocation13 + $0x844] sm:$0xff]
        %v4721 = vld [vmem:[#allocation13 + $0x84c] sm:$0xf]
        %v4722 = vld [vmem:[#allocation13 + $0x850] sm:$0xff]
        %v4723 = vld [vmem:[#allocation13 + $0x858] sm:$0xff]
        %v4724 = vld [vmem:[#allocation13 + $0x860] sm:$0xff]
        %v4725 = vld [vmem:[#allocation13 + $0x868] sm:$0xf]
        %v4726 = vld [vmem:[#allocation13 + $0x86c] sm:$0xff]
        %v4727 = vld [vmem:[#allocation13 + $0x874] sm:$0xff]
        %v4728 = vld [vmem:[#allocation13 + $0x87c] sm:$0xff]
        %v4729 = vld [vmem:[#allocation13 + $0x884] sm:$0xf]
        %v4730 = vld [vmem:[#allocation13 + $0x888] sm:$0xff]
        %v4731 = vld [vmem:[#allocation13 + $0x890] sm:$0xff]
        %v4732 = vld [vmem:[#allocation13 + $0x898] sm:$0xff]
        %v4733 = vld [vmem:[#allocation13 + $0x8a0] sm:$0xf]
        %v4734 = vld [vmem:[#allocation13 + $0x8a4] sm:$0xff]
        %v4735 = vld [vmem:[#allocation13 + $0x8ac] sm:$0xff]
        %v4736 = vld [vmem:[#allocation13 + $0x8b4] sm:$0xff]
        %v4737 = vld [vmem:[#allocation13 + $0x8bc] sm:$0xf]
        %v4738 = vld [vmem:[#allocation13 + $0x8c0] sm:$0xff]
        %v4739 = vld [vmem:[#allocation13 + $0x8c8] sm:$0xff]
        %v4740 = vld [vmem:[#allocation13 + $0x8d0] sm:$0xff]
        %v4741 = vld [vmem:[#allocation13 + $0x8d8] sm:$0xf]
        %v4742 = vld [vmem:[#allocation13 + $0x8dc] sm:$0xff]
        %v4743 = vld [vmem:[#allocation13 + $0x8e4] sm:$0xff]
        %v4744 = vld [vmem:[#allocation13 + $0x8ec] sm:$0xff]
        %v4745 = vld [vmem:[#allocation13 + $0x8f4] sm:$0xf]
        %v4746 = vld [vmem:[#allocation13 + $0x8f8] sm:$0xff]
        %v4747 = vld [vmem:[#allocation13 + $0x900] sm:$0xff]
        %v4748 = vld [vmem:[#allocation13 + $0x908] sm:$0xff]
        %v4749 = vld [vmem:[#allocation13 + $0x910] sm:$0xf]
        %v4750 = vld [vmem:[#allocation13 + $0x914] sm:$0xff]
        %v4751 = vld [vmem:[#allocation13 + $0x91c] sm:$0xff]
        %v4752 = vld [vmem:[#allocation13 + $0x924] sm:$0xff]
        %v4753 = vld [vmem:[#allocation13 + $0x92c] sm:$0xf]
        %v4754 = vld [vmem:[#allocation13 + $0x930] sm:$0xff]
        %v4755 = vld [vmem:[#allocation13 + $0x938] sm:$0xff]
        %v4756 = vld [vmem:[#allocation13 + $0x940] sm:$0xff]
        %v4757 = vld [vmem:[#allocation13 + $0x948] sm:$0xf]
        %v4758 = vld [vmem:[#allocation13 + $0x94c] sm:$0xff]
        %v4759 = vld [vmem:[#allocation13 + $0x954] sm:$0xff]
        %v4760 = vld [vmem:[#allocation13 + $0x95c] sm:$0xff]
        %v4761 = vld [vmem:[#allocation13 + $0x964] sm:$0xf]
        %v4762 = vld [vmem:[#allocation13 + $0x968] sm:$0xff]
        %v4763 = vld [vmem:[#allocation13 + $0x970] sm:$0xff]
        %v4764 = vld [vmem:[#allocation13 + $0x978] sm:$0xff]
        %v4765 = vld [vmem:[#allocation13 + $0x980] sm:$0xf]
        %v4766 = vld [vmem:[#allocation13 + $0x984] sm:$0xff]
        %v4767 = vld [vmem:[#allocation13 + $0x98c] sm:$0xff]
        %v4768 = vld [vmem:[#allocation13 + $0x994] sm:$0xff]
        %v4769 = vld [vmem:[#allocation13 + $0x99c] sm:$0xf]
        %v4770 = vld [vmem:[#allocation13 + $0x9a0] sm:$0xff]
        %v4771 = vld [vmem:[#allocation13 + $0x9a8] sm:$0xff]
        %v4772 = vld [vmem:[#allocation13 + $0x9b0] sm:$0xff]
        %v4773 = vld [vmem:[#allocation13 + $0x9b8] sm:$0xf]
        %v4774 = vld [vmem:[#allocation13 + $0x9bc] sm:$0xff]
        %v4775 = vld [vmem:[#allocation13 + $0x9c4] sm:$0xff]
        %v4776 = vld [vmem:[#allocation13 + $0x9cc] sm:$0xff]
        %v4777 = vld [vmem:[#allocation13 + $0x9d4] sm:$0xf]
        %v4778 = vld [vmem:[#allocation13 + $0x9d8] sm:$0xff]
        %v4779 = vld [vmem:[#allocation13 + $0x9e0] sm:$0xff]
        %v4780 = vld [vmem:[#allocation13 + $0x9e8] sm:$0xff]
        %v4781 = vld [vmem:[#allocation13 + $0x9f0] sm:$0xf]
        %v4782 = vld [vmem:[#allocation13 + $0x9f4] sm:$0xff]
        %v4783 = vld [vmem:[#allocation13 + $0x9fc] sm:$0xff]
        %v4784 = vld [vmem:[#allocation13 + $0xa04] sm:$0xff]
        %v4785 = vld [vmem:[#allocation13 + $0xa0c] sm:$0xf]
        %v4786 = vld [vmem:[#allocation13 + $0xa10] sm:$0xff]
        %v4787 = vld [vmem:[#allocation13 + $0xa18] sm:$0xff]
        %v4788 = vld [vmem:[#allocation13 + $0xa20] sm:$0xff]
        %v4789 = vld [vmem:[#allocation13 + $0xa28] sm:$0xf]
        %v4790 = vld [vmem:[#allocation13 + $0xa2c] sm:$0xff]
        %v4791 = vld [vmem:[#allocation13 + $0xa34] sm:$0xff]
        %v4792 = vld [vmem:[#allocation13 + $0xa3c] sm:$0xff]
        %v4793 = vld [vmem:[#allocation13 + $0xa44] sm:$0xf]
        %v4794 = vld [vmem:[#allocation13 + $0xa48] sm:$0xff]
        %v4795 = vld [vmem:[#allocation13 + $0xa50] sm:$0xff]
        %v4796 = vld [vmem:[#allocation13 + $0xa58] sm:$0xff]
        %v4797 = vld [vmem:[#allocation13 + $0xa60] sm:$0xf]
        %v4798 = vld [vmem:[#allocation13 + $0xa64] sm:$0xff]
        %v4799 = vld [vmem:[#allocation13 + $0xa6c] sm:$0xff]
        %v4800 = vld [vmem:[#allocation13 + $0xa74] sm:$0xff]
        %v4801 = vld [vmem:[#allocation13 + $0xa7c] sm:$0xf]
        %v4802 = vld [vmem:[#allocation13 + $0xa80] sm:$0xff]
        %v4803 = vld [vmem:[#allocation13 + $0xa88] sm:$0xff]
        %v4804 = vld [vmem:[#allocation13 + $0xa90] sm:$0xff]
        %v4805 = vld [vmem:[#allocation13 + $0xa98] sm:$0xf]
        %v4806 = vld [vmem:[#allocation13 + $0xa9c] sm:$0xff]
        %v4807 = vld [vmem:[#allocation13 + $0xaa4] sm:$0xff]
        %v4808 = vld [vmem:[#allocation13 + $0xaac] sm:$0xff]
        %v4809 = vld [vmem:[#allocation13 + $0xab4] sm:$0xf]
        %v4810 = vld [vmem:[#allocation13 + $0xab8] sm:$0xff]
        %v4811 = vld [vmem:[#allocation13 + $0xac0] sm:$0xff]
        %v4812 = vld [vmem:[#allocation13 + $0xac8] sm:$0xff]
        %v4813 = vld [vmem:[#allocation13 + $0xad0] sm:$0xf]
        %v4814 = vld [vmem:[#allocation13 + $0xad4] sm:$0xff]
        %v4815 = vld [vmem:[#allocation13 + $0xadc] sm:$0xff]
        %v4816 = vld [vmem:[#allocation13 + $0xae4] sm:$0xff]
        %v4817 = vld [vmem:[#allocation13 + $0xaec] sm:$0xf]
        %v4818 = vld [vmem:[#allocation13 + $0xaf0] sm:$0xff]
        %v4819 = vld [vmem:[#allocation13 + $0xaf8] sm:$0xff]
        %v4820 = vld [vmem:[#allocation13 + $0xb00] sm:$0xff]
        %v4821 = vld [vmem:[#allocation13 + $0xb08] sm:$0xf]
        %v4822 = vld [vmem:[#allocation13 + $0xb0c] sm:$0xff]
        %v4823 = vld [vmem:[#allocation13 + $0xb14] sm:$0xff]
        %v4824 = vld [vmem:[#allocation13 + $0xb1c] sm:$0xff]
        %v4825 = vld [vmem:[#allocation13 + $0xb24] sm:$0xf]
        %v4826 = vld [vmem:[#allocation13 + $0xb28] sm:$0xff]
        %v4827 = vld [vmem:[#allocation13 + $0xb30] sm:$0xff]
        %v4828 = vld [vmem:[#allocation13 + $0xb38] sm:$0xff]
        %v4829 = vld [vmem:[#allocation13 + $0xb40] sm:$0xf]
        %v4830 = vld [vmem:[#allocation13 + $0xb44] sm:$0xff]
        %v4831 = vld [vmem:[#allocation13 + $0xb4c] sm:$0xff]
        %v4832 = vld [vmem:[#allocation13 + $0xb54] sm:$0xff]
        %v4833 = vld [vmem:[#allocation13 + $0xb5c] sm:$0xf]
        %v4834 = vld [vmem:[#allocation13 + $0xb60] sm:$0xff]
        %v4835 = vld [vmem:[#allocation13 + $0xb68] sm:$0xff]
        %v4836 = vld [vmem:[#allocation13 + $0xb70] sm:$0xff]
        %v4837 = vld [vmem:[#allocation13 + $0xb78] sm:$0xf]
        %v4838 = vld [vmem:[#allocation13 + $0xb7c] sm:$0xff]
        %v4839 = vld [vmem:[#allocation13 + $0xb84] sm:$0xff]
        %v4840 = vld [vmem:[#allocation13 + $0xb8c] sm:$0xff]
        %v4841 = vld [vmem:[#allocation13 + $0xb94] sm:$0xf]
        %v4842 = vld [vmem:[#allocation13 + $0xb98] sm:$0xff]
        %v4843 = vld [vmem:[#allocation13 + $0xba0] sm:$0xff]
        %v4844 = vld [vmem:[#allocation13 + $0xba8] sm:$0xff]
        %v4845 = vld [vmem:[#allocation13 + $0xbb0] sm:$0xf]
        %v4846 = vld [vmem:[#allocation13 + $0xbb4] sm:$0xff]
        %v4847 = vld [vmem:[#allocation13 + $0xbbc] sm:$0xff]
        %v4848 = vld [vmem:[#allocation13 + $0xbc4] sm:$0xff]
        %v4849 = vld [vmem:[#allocation13 + $0xbcc] sm:$0xf]
        %v4850 = vld [vmem:[#allocation13 + $0xbd0] sm:$0xff]
        %v4851 = vld [vmem:[#allocation13 + $0xbd8] sm:$0xff]
        %v4852 = vld [vmem:[#allocation13 + $0xbe0] sm:$0xff]
        %v4853 = vld [vmem:[#allocation13 + $0xbe8] sm:$0xf]
        %v4854 = vld [vmem:[#allocation13 + $0xbec] sm:$0xff]
        %v4855 = vld [vmem:[#allocation13 + $0xbf4] sm:$0xff]
        %v4856 = vld [vmem:[#allocation13 + $0xbfc] sm:$0xff]
        %v4857 = vld [vmem:[#allocation13 + $0xc04] sm:$0xf]
        %v4858 = vld [vmem:[#allocation13 + $0xc08] sm:$0xff]
        %v4859 = vld [vmem:[#allocation13 + $0xc10] sm:$0xff]
        %v4860 = vld [vmem:[#allocation13 + $0xc18] sm:$0xff]
        %v4861 = vld [vmem:[#allocation13 + $0xc20] sm:$0xf]
        %v4862 = vld [vmem:[#allocation13 + $0xc24] sm:$0xff]
        %v4863 = vld [vmem:[#allocation13 + $0xc2c] sm:$0xff]
        %v4864 = vld [vmem:[#allocation13 + $0xc34] sm:$0xff]
        %v4865 = vld [vmem:[#allocation13 + $0xc3c] sm:$0xf]
        %v4866 = vld [vmem:[#allocation13 + $0xc40] sm:$0xff]
        %v4867 = vld [vmem:[#allocation13 + $0xc48] sm:$0xff]
        %v4868 = vld [vmem:[#allocation13 + $0xc50] sm:$0xff]
        %v4869 = vld [vmem:[#allocation13 + $0xc58] sm:$0xf]
        %v4870 = vld [vmem:[#allocation13 + $0xc5c] sm:$0xff]
        %v4871 = vld [vmem:[#allocation13 + $0xc64] sm:$0xff]
        %v4872 = vld [vmem:[#allocation13 + $0xc6c] sm:$0xff]
        %v4873 = vld [vmem:[#allocation13 + $0xc74] sm:$0xf]
        %v4874 = vld [vmem:[#allocation13 + $0xc78] sm:$0xff]
        %v4875 = vld [vmem:[#allocation13 + $0xc80] sm:$0xff]
        %v4876 = vld [vmem:[#allocation13 + $0xc88] sm:$0xff]
        %v4877 = vld [vmem:[#allocation13 + $0xc90] sm:$0xf]
        %v4878 = vld [vmem:[#allocation13 + $0xc94] sm:$0xff]
        %v4879 = vld [vmem:[#allocation13 + $0xc9c] sm:$0xff]
        %v4880 = vld [vmem:[#allocation13 + $0xca4] sm:$0xff]
        %v4881 = vld [vmem:[#allocation13 + $0xcac] sm:$0xf]
        %v4882 = vld [vmem:[#allocation13 + $0xcb0] sm:$0xff]
        %v4883 = vld [vmem:[#allocation13 + $0xcb8] sm:$0xff]
        %v4884 = vld [vmem:[#allocation13 + $0xcc0] sm:$0xff]
        %v4885 = vld [vmem:[#allocation13 + $0xcc8] sm:$0xf]
        %v4886 = vld [vmem:[#allocation13 + $0xccc] sm:$0xff]
        %v4887 = vld [vmem:[#allocation13 + $0xcd4] sm:$0xff]
        %v4888 = vld [vmem:[#allocation13 + $0xcdc] sm:$0xff]
        %v4889 = vld [vmem:[#allocation13 + $0xce4] sm:$0xf]
        %v4890 = vld [vmem:[#allocation13 + $0xce8] sm:$0xff]
        %v4891 = vld [vmem:[#allocation13 + $0xcf0] sm:$0xff]
        %v4892 = vld [vmem:[#allocation13 + $0xcf8] sm:$0xff]
        %v4893 = vld [vmem:[#allocation13 + $0xd00] sm:$0xf]
        %v4894 = vld [vmem:[#allocation13 + $0xd04] sm:$0xff]
        %v4895 = vld [vmem:[#allocation13 + $0xd0c] sm:$0xff]
        %v4896 = vld [vmem:[#allocation13 + $0xd14] sm:$0xff]
        %v4897 = vld [vmem:[#allocation13 + $0xd1c] sm:$0xf]
        %v4898 = vld [vmem:[#allocation13 + $0xd20] sm:$0xff]
        %v4899 = vld [vmem:[#allocation13 + $0xd28] sm:$0xff]
        %v4900 = vld [vmem:[#allocation13 + $0xd30] sm:$0xff]
        %v4901 = vld [vmem:[#allocation13 + $0xd38] sm:$0xf]
        %v4902 = vld [vmem:[#allocation13 + $0xd3c] sm:$0xff]
        %v4903 = vld [vmem:[#allocation13 + $0xd44] sm:$0xff]
        %v4904 = vld [vmem:[#allocation13 + $0xd4c] sm:$0xff]
        %v4905 = vld [vmem:[#allocation13 + $0xd54] sm:$0xf]
        %v4906 = vld [vmem:[#allocation13 + $0xd58] sm:$0xff]
        %v4907 = vld [vmem:[#allocation13 + $0xd60] sm:$0xff]
        %v4908 = vld [vmem:[#allocation13 + $0xd68] sm:$0xff]
        %v4909 = vld [vmem:[#allocation13 + $0xd70] sm:$0xf]
        %v4910 = vld [vmem:[#allocation13 + $0xd74] sm:$0xff]
        %v4911 = vld [vmem:[#allocation13 + $0xd7c] sm:$0xff]
        %v4912 = vld [vmem:[#allocation13 + $0xd84] sm:$0xff]
        %v4913 = vld [vmem:[#allocation13 + $0xd8c] sm:$0xf]
        %v4914 = vld [vmem:[#allocation13 + $0xd90] sm:$0xff]
        %v4915 = vld [vmem:[#allocation13 + $0xd98] sm:$0xff]
        %v4916 = vld [vmem:[#allocation13 + $0xda0] sm:$0xff]
        %v4917 = vld [vmem:[#allocation13 + $0xda8] sm:$0xf]
        %v4918 = vld [vmem:[#allocation13 + $0xdac] sm:$0xff]
        %v4919 = vld [vmem:[#allocation13 + $0xdb4] sm:$0xff]
        %v4920 = vld [vmem:[#allocation13 + $0xdbc] sm:$0xff]
        %v4921 = vld [vmem:[#allocation13 + $0xdc4] sm:$0xf]
        %v4922 = vld [vmem:[#allocation13 + $0xdc8] sm:$0xff]
        %v4923 = vld [vmem:[#allocation13 + $0xdd0] sm:$0xff]
        %v4924 = vld [vmem:[#allocation13 + $0xdd8] sm:$0xff]
        %v4925 = vld [vmem:[#allocation13 + $0xde0] sm:$0xf]
        %v4926 = vld [vmem:[#allocation13 + $0xde4] sm:$0xff]
        %v4927 = vld [vmem:[#allocation13 + $0xdec] sm:$0xff]
        %v4928 = vld [vmem:[#allocation13 + $0xdf4] sm:$0xff]
        %v4929 = vld [vmem:[#allocation13 + $0xdfc] sm:$0xf]
        %v4930 = vld [vmem:[#allocation15 + $0x2b] sm:$0xff]
        %v4932 = vlaneseq
        %v4933 = vshrl.u32 %v4932, 7
        %v4934 = vsub.s32 0, %v4933
        %v4935 = vrot.slane %v4930, %v4934
        %v4936 = vlaneseq
        %v4937 = vshrl.u32 %v4936, 7
        %v4938 = vsub.s32 1, %v4937
        %v4939 = vrot.slane %v4930, %v4938
        %v4940 = vlaneseq
        %v4941 = vshrl.u32 %v4940, 7
        %v4942 = vsub.s32 2, %v4941
        %v4943 = vrot.slane %v4930, %v4942
        %v4944 = vlaneseq
        %v4945 = vshrl.u32 %v4944, 7
        %v4946 = vsub.s32 3, %v4945
        %v4947 = vrot.slane %v4930, %v4946
        %v4948 = vlaneseq
        %v4949 = vshrl.u32 %v4948, 7
        %v4950 = vsub.s32 4, %v4949
        %v4951 = vrot.slane %v4930, %v4950
        %v4952 = vlaneseq
        %v4953 = vshrl.u32 %v4952, 7
        %v4954 = vsub.s32 5, %v4953
        %v4955 = vrot.slane %v4930, %v4954
        %v4956 = vlaneseq
        %v4957 = vshrl.u32 %v4956, 7
        %v4958 = vsub.s32 6, %v4957
        %v4959 = vrot.slane %v4930, %v4958
        %v5479 = vunpack.c.l.b16 %v4418
        %v5480 = vunpack.c.h.b16 %v4418
        %v5481 = vunpack.c.l.b16 %v4419
        %v5482 = vunpack.c.h.b16 %v4419
        %v5483 = vunpack.c.l.b16 %v4420
        %v5484 = vunpack.c.h.b16 %v4420
        %v5485 = vunpack.c.l.b16 %v4421
        %v5486 = vunpack.c.l.b16 %v4422
        %v5487 = vunpack.c.h.b16 %v4422
        %v5488 = vunpack.c.l.b16 %v4423
        %v5489 = vunpack.c.h.b16 %v4423
        %v5490 = vunpack.c.l.b16 %v4424
        %v5491 = vunpack.c.h.b16 %v4424
        %v5492 = vunpack.c.l.b16 %v4425
        %v5493 = vunpack.c.l.b16 %v4426
        %v5494 = vunpack.c.h.b16 %v4426
        %v5495 = vunpack.c.l.b16 %v4427
        %v5496 = vunpack.c.h.b16 %v4427
        %v5497 = vunpack.c.l.b16 %v4428
        %v5498 = vunpack.c.h.b16 %v4428
        %v5499 = vunpack.c.l.b16 %v4429
        %v5500 = vunpack.c.l.b16 %v4430
        %v5501 = vunpack.c.h.b16 %v4430
        %v5502 = vunpack.c.l.b16 %v4431
        %v5503 = vunpack.c.h.b16 %v4431
        %v5504 = vunpack.c.l.b16 %v4432
        %v5505 = vunpack.c.h.b16 %v4432
        %v5506 = vunpack.c.l.b16 %v4433
        %v5507 = vunpack.c.l.b16 %v4434
        %v5508 = vunpack.c.h.b16 %v4434
        %v5509 = vunpack.c.l.b16 %v4435
        %v5510 = vunpack.c.h.b16 %v4435
        %v5511 = vunpack.c.l.b16 %v4436
        %v5512 = vunpack.c.h.b16 %v4436
        %v5513 = vunpack.c.l.b16 %v4437
        %v5514 = vunpack.c.l.b16 %v4438
        %v5515 = vunpack.c.h.b16 %v4438
        %v5516 = vunpack.c.l.b16 %v4439
        %v5517 = vunpack.c.h.b16 %v4439
        %v5518 = vunpack.c.l.b16 %v4440
        %v5519 = vunpack.c.h.b16 %v4440
        %v5520 = vunpack.c.l.b16 %v4441
        %v5521 = vunpack.c.l.b16 %v4442
        %v5522 = vunpack.c.h.b16 %v4442
        %v5523 = vunpack.c.l.b16 %v4443
        %v5524 = vunpack.c.h.b16 %v4443
        %v5525 = vunpack.c.l.b16 %v4444
        %v5526 = vunpack.c.h.b16 %v4444
        %v5527 = vunpack.c.l.b16 %v4445
        %v5528 = vunpack.c.l.b16 %v4446
        %v5529 = vunpack.c.h.b16 %v4446
        %v5530 = vunpack.c.l.b16 %v4447
        %v5531 = vunpack.c.h.b16 %v4447
        %v5532 = vunpack.c.l.b16 %v4448
        %v5533 = vunpack.c.h.b16 %v4448
        %v5534 = vunpack.c.l.b16 %v4449
        %v5535 = vunpack.c.l.b16 %v4450
        %v5536 = vunpack.c.h.b16 %v4450
        %v5537 = vunpack.c.l.b16 %v4451
        %v5538 = vunpack.c.h.b16 %v4451
        %v5539 = vunpack.c.l.b16 %v4452
        %v5540 = vunpack.c.h.b16 %v4452
        %v5541 = vunpack.c.l.b16 %v4453
        %v5542 = vunpack.c.l.b16 %v4454
        %v5543 = vunpack.c.h.b16 %v4454
        %v5544 = vunpack.c.l.b16 %v4455
        %v5545 = vunpack.c.h.b16 %v4455
        %v5546 = vunpack.c.l.b16 %v4456
        %v5547 = vunpack.c.h.b16 %v4456
        %v5548 = vunpack.c.l.b16 %v4457
        %v5549 = vunpack.c.l.b16 %v4458
        %v5550 = vunpack.c.h.b16 %v4458
        %v5551 = vunpack.c.l.b16 %v4459
        %v5552 = vunpack.c.h.b16 %v4459
        %v5553 = vunpack.c.l.b16 %v4460
        %v5554 = vunpack.c.h.b16 %v4460
        %v5555 = vunpack.c.l.b16 %v4461
        %v5556 = vunpack.c.l.b16 %v4462
        %v5557 = vunpack.c.h.b16 %v4462
        %v5558 = vunpack.c.l.b16 %v4463
        %v5559 = vunpack.c.h.b16 %v4463
        %v5560 = vunpack.c.l.b16 %v4464
        %v5561 = vunpack.c.h.b16 %v4464
        %v5562 = vunpack.c.l.b16 %v4465
        %v5563 = vunpack.c.l.b16 %v4466
        %v5564 = vunpack.c.h.b16 %v4466
        %v5565 = vunpack.c.l.b16 %v4467
        %v5566 = vunpack.c.h.b16 %v4467
        %v5567 = vunpack.c.l.b16 %v4468
        %v5568 = vunpack.c.h.b16 %v4468
        %v5569 = vunpack.c.l.b16 %v4469
        %v5570 = vunpack.c.l.b16 %v4470
        %v5571 = vunpack.c.h.b16 %v4470
        %v5572 = vunpack.c.l.b16 %v4471
        %v5573 = vunpack.c.h.b16 %v4471
        %v5574 = vunpack.c.l.b16 %v4472
        %v5575 = vunpack.c.h.b16 %v4472
        %v5576 = vunpack.c.l.b16 %v4473
        %v5577 = vunpack.c.l.b16 %v4474
        %v5578 = vunpack.c.h.b16 %v4474
        %v5579 = vunpack.c.l.b16 %v4475
        %v5580 = vunpack.c.h.b16 %v4475
        %v5581 = vunpack.c.l.b16 %v4476
        %v5582 = vunpack.c.h.b16 %v4476
        %v5583 = vunpack.c.l.b16 %v4477
        %v5584 = vunpack.c.l.b16 %v4478
        %v5585 = vunpack.c.h.b16 %v4478
        %v5586 = vunpack.c.l.b16 %v4479
        %v5587 = vunpack.c.h.b16 %v4479
        %v5588 = vunpack.c.l.b16 %v4480
        %v5589 = vunpack.c.h.b16 %v4480
        %v5590 = vunpack.c.l.b16 %v4481
        %v5591 = vunpack.c.l.b16 %v4482
        %v5592 = vunpack.c.h.b16 %v4482
        %v5593 = vunpack.c.l.b16 %v4483
        %v5594 = vunpack.c.h.b16 %v4483
        %v5595 = vunpack.c.l.b16 %v4484
        %v5596 = vunpack.c.h.b16 %v4484
        %v5597 = vunpack.c.l.b16 %v4485
        %v5598 = vunpack.c.l.b16 %v4486
        %v5599 = vunpack.c.h.b16 %v4486
        %v5600 = vunpack.c.l.b16 %v4487
        %v5601 = vunpack.c.h.b16 %v4487
        %v5602 = vunpack.c.l.b16 %v4488
        %v5603 = vunpack.c.h.b16 %v4488
        %v5604 = vunpack.c.l.b16 %v4489
        %v5605 = vunpack.c.l.b16 %v4490
        %v5606 = vunpack.c.h.b16 %v4490
        %v5607 = vunpack.c.l.b16 %v4491
        %v5608 = vunpack.c.h.b16 %v4491
        %v5609 = vunpack.c.l.b16 %v4492
        %v5610 = vunpack.c.h.b16 %v4492
        %v5611 = vunpack.c.l.b16 %v4493
        %v5612 = vunpack.c.l.b16 %v4494
        %v5613 = vunpack.c.h.b16 %v4494
        %v5614 = vunpack.c.l.b16 %v4495
        %v5615 = vunpack.c.h.b16 %v4495
        %v5616 = vunpack.c.l.b16 %v4496
        %v5617 = vunpack.c.h.b16 %v4496
        %v5618 = vunpack.c.l.b16 %v4497
        %v5619 = vunpack.c.l.b16 %v4498
        %v5620 = vunpack.c.h.b16 %v4498
        %v5621 = vunpack.c.l.b16 %v4499
        %v5622 = vunpack.c.h.b16 %v4499
        %v5623 = vunpack.c.l.b16 %v4500
        %v5624 = vunpack.c.h.b16 %v4500
        %v5625 = vunpack.c.l.b16 %v4501
        %v5626 = vunpack.c.l.b16 %v4502
        %v5627 = vunpack.c.h.b16 %v4502
        %v5628 = vunpack.c.l.b16 %v4503
        %v5629 = vunpack.c.h.b16 %v4503
        %v5630 = vunpack.c.l.b16 %v4504
        %v5631 = vunpack.c.h.b16 %v4504
        %v5632 = vunpack.c.l.b16 %v4505
        %v5633 = vunpack.c.l.b16 %v4506
        %v5634 = vunpack.c.h.b16 %v4506
        %v5635 = vunpack.c.l.b16 %v4507
        %v5636 = vunpack.c.h.b16 %v4507
        %v5637 = vunpack.c.l.b16 %v4508
        %v5638 = vunpack.c.h.b16 %v4508
        %v5639 = vunpack.c.l.b16 %v4509
        %v5640 = vunpack.c.l.b16 %v4510
        %v5641 = vunpack.c.h.b16 %v4510
        %v5642 = vunpack.c.l.b16 %v4511
        %v5643 = vunpack.c.h.b16 %v4511
        %v5644 = vunpack.c.l.b16 %v4512
        %v5645 = vunpack.c.h.b16 %v4512
        %v5646 = vunpack.c.l.b16 %v4513
        %v5647 = vunpack.c.l.b16 %v4514
        %v5648 = vunpack.c.h.b16 %v4514
        %v5649 = vunpack.c.l.b16 %v4515
        %v5650 = vunpack.c.h.b16 %v4515
        %v5651 = vunpack.c.l.b16 %v4516
        %v5652 = vunpack.c.h.b16 %v4516
        %v5653 = vunpack.c.l.b16 %v4517
        %v5654 = vunpack.c.l.b16 %v4518
        %v5655 = vunpack.c.h.b16 %v4518
        %v5656 = vunpack.c.l.b16 %v4519
        %v5657 = vunpack.c.h.b16 %v4519
        %v5658 = vunpack.c.l.b16 %v4520
        %v5659 = vunpack.c.h.b16 %v4520
        %v5660 = vunpack.c.l.b16 %v4521
        %v5661 = vunpack.c.l.b16 %v4522
        %v5662 = vunpack.c.h.b16 %v4522
        %v5663 = vunpack.c.l.b16 %v4523
        %v5664 = vunpack.c.h.b16 %v4523
        %v5665 = vunpack.c.l.b16 %v4524
        %v5666 = vunpack.c.h.b16 %v4524
        %v5667 = vunpack.c.l.b16 %v4525
        %v5668 = vunpack.c.l.b16 %v4526
        %v5669 = vunpack.c.h.b16 %v4526
        %v5670 = vunpack.c.l.b16 %v4527
        %v5671 = vunpack.c.h.b16 %v4527
        %v5672 = vunpack.c.l.b16 %v4528
        %v5673 = vunpack.c.h.b16 %v4528
        %v5674 = vunpack.c.l.b16 %v4529
        %v5675 = vunpack.c.l.b16 %v4530
        %v5676 = vunpack.c.h.b16 %v4530
        %v5677 = vunpack.c.l.b16 %v4531
        %v5678 = vunpack.c.h.b16 %v4531
        %v5679 = vunpack.c.l.b16 %v4532
        %v5680 = vunpack.c.h.b16 %v4532
        %v5681 = vunpack.c.l.b16 %v4533
        %v5682 = vunpack.c.l.b16 %v4534
        %v5683 = vunpack.c.h.b16 %v4534
        %v5684 = vunpack.c.l.b16 %v4535
        %v5685 = vunpack.c.h.b16 %v4535
        %v5686 = vunpack.c.l.b16 %v4536
        %v5687 = vunpack.c.h.b16 %v4536
        %v5688 = vunpack.c.l.b16 %v4537
        %v5689 = vunpack.c.l.b16 %v4538
        %v5690 = vunpack.c.h.b16 %v4538
        %v5691 = vunpack.c.l.b16 %v4539
        %v5692 = vunpack.c.h.b16 %v4539
        %v5693 = vunpack.c.l.b16 %v4540
        %v5694 = vunpack.c.h.b16 %v4540
        %v5695 = vunpack.c.l.b16 %v4541
        %v5696 = vunpack.c.l.b16 %v4542
        %v5697 = vunpack.c.h.b16 %v4542
        %v5698 = vunpack.c.l.b16 %v4543
        %v5699 = vunpack.c.h.b16 %v4543
        %v5700 = vunpack.c.l.b16 %v4544
        %v5701 = vunpack.c.h.b16 %v4544
        %v5702 = vunpack.c.l.b16 %v4545
        %v5703 = vunpack.c.l.b16 %v4546
        %v5704 = vunpack.c.h.b16 %v4546
        %v5705 = vunpack.c.l.b16 %v4547
        %v5706 = vunpack.c.h.b16 %v4547
        %v5707 = vunpack.c.l.b16 %v4548
        %v5708 = vunpack.c.h.b16 %v4548
        %v5709 = vunpack.c.l.b16 %v4549
        %v5710 = vunpack.c.l.b16 %v4550
        %v5711 = vunpack.c.h.b16 %v4550
        %v5712 = vunpack.c.l.b16 %v4551
        %v5713 = vunpack.c.h.b16 %v4551
        %v5714 = vunpack.c.l.b16 %v4552
        %v5715 = vunpack.c.h.b16 %v4552
        %v5716 = vunpack.c.l.b16 %v4553
        %v5717 = vunpack.c.l.b16 %v4554
        %v5718 = vunpack.c.h.b16 %v4554
        %v5719 = vunpack.c.l.b16 %v4555
        %v5720 = vunpack.c.h.b16 %v4555
        %v5721 = vunpack.c.l.b16 %v4556
        %v5722 = vunpack.c.h.b16 %v4556
        %v5723 = vunpack.c.l.b16 %v4557
        %v5724 = vunpack.c.l.b16 %v4558
        %v5725 = vunpack.c.h.b16 %v4558
        %v5726 = vunpack.c.l.b16 %v4559
        %v5727 = vunpack.c.h.b16 %v4559
        %v5728 = vunpack.c.l.b16 %v4560
        %v5729 = vunpack.c.h.b16 %v4560
        %v5730 = vunpack.c.l.b16 %v4561
        %v5731 = vunpack.c.l.b16 %v4562
        %v5732 = vunpack.c.h.b16 %v4562
        %v5733 = vunpack.c.l.b16 %v4563
        %v5734 = vunpack.c.h.b16 %v4563
        %v5735 = vunpack.c.l.b16 %v4564
        %v5736 = vunpack.c.h.b16 %v4564
        %v5737 = vunpack.c.l.b16 %v4565
        %v5738 = vunpack.c.l.b16 %v4566
        %v5739 = vunpack.c.h.b16 %v4566
        %v5740 = vunpack.c.l.b16 %v4567
        %v5741 = vunpack.c.h.b16 %v4567
        %v5742 = vunpack.c.l.b16 %v4568
        %v5743 = vunpack.c.h.b16 %v4568
        %v5744 = vunpack.c.l.b16 %v4569
        %v5745 = vunpack.c.l.b16 %v4570
        %v5746 = vunpack.c.h.b16 %v4570
        %v5747 = vunpack.c.l.b16 %v4571
        %v5748 = vunpack.c.h.b16 %v4571
        %v5749 = vunpack.c.l.b16 %v4572
        %v5750 = vunpack.c.h.b16 %v4572
        %v5751 = vunpack.c.l.b16 %v4573
        %v5752 = vunpack.c.l.b16 %v4574
        %v5753 = vunpack.c.h.b16 %v4574
        %v5754 = vunpack.c.l.b16 %v4575
        %v5755 = vunpack.c.h.b16 %v4575
        %v5756 = vunpack.c.l.b16 %v4576
        %v5757 = vunpack.c.h.b16 %v4576
        %v5758 = vunpack.c.l.b16 %v4577
        %v5759 = vunpack.c.l.b16 %v4578
        %v5760 = vunpack.c.h.b16 %v4578
        %v5761 = vunpack.c.l.b16 %v4579
        %v5762 = vunpack.c.h.b16 %v4579
        %v5763 = vunpack.c.l.b16 %v4580
        %v5764 = vunpack.c.h.b16 %v4580
        %v5765 = vunpack.c.l.b16 %v4581
        %v5766 = vunpack.c.l.b16 %v4582
        %v5767 = vunpack.c.h.b16 %v4582
        %v5768 = vunpack.c.l.b16 %v4583
        %v5769 = vunpack.c.h.b16 %v4583
        %v5770 = vunpack.c.l.b16 %v4584
        %v5771 = vunpack.c.h.b16 %v4584
        %v5772 = vunpack.c.l.b16 %v4585
        %v5773 = vunpack.c.l.b16 %v4586
        %v5774 = vunpack.c.h.b16 %v4586
        %v5775 = vunpack.c.l.b16 %v4587
        %v5776 = vunpack.c.h.b16 %v4587
        %v5777 = vunpack.c.l.b16 %v4588
        %v5778 = vunpack.c.h.b16 %v4588
        %v5779 = vunpack.c.l.b16 %v4589
        %v5780 = vunpack.c.l.b16 %v4590
        %v5781 = vunpack.c.h.b16 %v4590
        %v5782 = vunpack.c.l.b16 %v4591
        %v5783 = vunpack.c.h.b16 %v4591
        %v5784 = vunpack.c.l.b16 %v4592
        %v5785 = vunpack.c.h.b16 %v4592
        %v5786 = vunpack.c.l.b16 %v4593
        %v5787 = vunpack.c.l.b16 %v4594
        %v5788 = vunpack.c.h.b16 %v4594
        %v5789 = vunpack.c.l.b16 %v4595
        %v5790 = vunpack.c.h.b16 %v4595
        %v5791 = vunpack.c.l.b16 %v4596
        %v5792 = vunpack.c.h.b16 %v4596
        %v5793 = vunpack.c.l.b16 %v4597
        %v5794 = vunpack.c.l.b16 %v4598
        %v5795 = vunpack.c.h.b16 %v4598
        %v5796 = vunpack.c.l.b16 %v4599
        %v5797 = vunpack.c.h.b16 %v4599
        %v5798 = vunpack.c.l.b16 %v4600
        %v5799 = vunpack.c.h.b16 %v4600
        %v5800 = vunpack.c.l.b16 %v4601
        %v5801 = vunpack.c.l.b16 %v4602
        %v5802 = vunpack.c.h.b16 %v4602
        %v5803 = vunpack.c.l.b16 %v4603
        %v5804 = vunpack.c.h.b16 %v4603
        %v5805 = vunpack.c.l.b16 %v4604
        %v5806 = vunpack.c.h.b16 %v4604
        %v5807 = vunpack.c.l.b16 %v4605
        %v5808 = vunpack.c.l.b16 %v4606
        %v5809 = vunpack.c.h.b16 %v4606
        %v5810 = vunpack.c.l.b16 %v4607
        %v5811 = vunpack.c.h.b16 %v4607
        %v5812 = vunpack.c.l.b16 %v4608
        %v5813 = vunpack.c.h.b16 %v4608
        %v5814 = vunpack.c.l.b16 %v4609
        %v5815 = vunpack.c.l.b16 %v4610
        %v5816 = vunpack.c.h.b16 %v4610
        %v5817 = vunpack.c.l.b16 %v4611
        %v5818 = vunpack.c.h.b16 %v4611
        %v5819 = vunpack.c.l.b16 %v4612
        %v5820 = vunpack.c.h.b16 %v4612
        %v5821 = vunpack.c.l.b16 %v4613
        %v5822 = vunpack.c.l.b16 %v4614
        %v5823 = vunpack.c.h.b16 %v4614
        %v5824 = vunpack.c.l.b16 %v4615
        %v5825 = vunpack.c.h.b16 %v4615
        %v5826 = vunpack.c.l.b16 %v4616
        %v5827 = vunpack.c.h.b16 %v4616
        %v5828 = vunpack.c.l.b16 %v4617
        %v5829 = vunpack.c.l.b16 %v4618
        %v5830 = vunpack.c.h.b16 %v4618
        %v5831 = vunpack.c.l.b16 %v4619
        %v5832 = vunpack.c.h.b16 %v4619
        %v5833 = vunpack.c.l.b16 %v4620
        %v5834 = vunpack.c.h.b16 %v4620
        %v5835 = vunpack.c.l.b16 %v4621
        %v5836 = vunpack.c.l.b16 %v4622
        %v5837 = vunpack.c.h.b16 %v4622
        %v5838 = vunpack.c.l.b16 %v4623
        %v5839 = vunpack.c.h.b16 %v4623
        %v5840 = vunpack.c.l.b16 %v4624
        %v5841 = vunpack.c.h.b16 %v4624
        %v5842 = vunpack.c.l.b16 %v4625
        %v5843 = vunpack.c.l.b16 %v4626
        %v5844 = vunpack.c.h.b16 %v4626
        %v5845 = vunpack.c.l.b16 %v4627
        %v5846 = vunpack.c.h.b16 %v4627
        %v5847 = vunpack.c.l.b16 %v4628
        %v5848 = vunpack.c.h.b16 %v4628
        %v5849 = vunpack.c.l.b16 %v4629
        %v5850 = vunpack.c.l.b16 %v4630
        %v5851 = vunpack.c.h.b16 %v4630
        %v5852 = vunpack.c.l.b16 %v4631
        %v5853 = vunpack.c.h.b16 %v4631
        %v5854 = vunpack.c.l.b16 %v4632
        %v5855 = vunpack.c.h.b16 %v4632
        %v5856 = vunpack.c.l.b16 %v4633
        %v5857 = vunpack.c.l.b16 %v4634
        %v5858 = vunpack.c.h.b16 %v4634
        %v5859 = vunpack.c.l.b16 %v4635
        %v5860 = vunpack.c.h.b16 %v4635
        %v5861 = vunpack.c.l.b16 %v4636
        %v5862 = vunpack.c.h.b16 %v4636
        %v5863 = vunpack.c.l.b16 %v4637
        %v5864 = vunpack.c.l.b16 %v4638
        %v5865 = vunpack.c.h.b16 %v4638
        %v5866 = vunpack.c.l.b16 %v4639
        %v5867 = vunpack.c.h.b16 %v4639
        %v5868 = vunpack.c.l.b16 %v4640
        %v5869 = vunpack.c.h.b16 %v4640
        %v5870 = vunpack.c.l.b16 %v4641
        %v5871 = vunpack.c.l.b16 %v4642
        %v5872 = vunpack.c.h.b16 %v4642
        %v5873 = vunpack.c.l.b16 %v4643
        %v5874 = vunpack.c.h.b16 %v4643
        %v5875 = vunpack.c.l.b16 %v4644
        %v5876 = vunpack.c.h.b16 %v4644
        %v5877 = vunpack.c.l.b16 %v4645
        %v5878 = vunpack.c.l.b16 %v4646
        %v5879 = vunpack.c.h.b16 %v4646
        %v5880 = vunpack.c.l.b16 %v4647
        %v5881 = vunpack.c.h.b16 %v4647
        %v5882 = vunpack.c.l.b16 %v4648
        %v5883 = vunpack.c.h.b16 %v4648
        %v5884 = vunpack.c.l.b16 %v4649
        %v5885 = vunpack.c.l.b16 %v4650
        %v5886 = vunpack.c.h.b16 %v4650
        %v5887 = vunpack.c.l.b16 %v4651
        %v5888 = vunpack.c.h.b16 %v4651
        %v5889 = vunpack.c.l.b16 %v4652
        %v5890 = vunpack.c.h.b16 %v4652
        %v5891 = vunpack.c.l.b16 %v4653
        %v5892 = vunpack.c.l.b16 %v4654
        %v5893 = vunpack.c.h.b16 %v4654
        %v5894 = vunpack.c.l.b16 %v4655
        %v5895 = vunpack.c.h.b16 %v4655
        %v5896 = vunpack.c.l.b16 %v4656
        %v5897 = vunpack.c.h.b16 %v4656
        %v5898 = vunpack.c.l.b16 %v4657
        %v5899 = vunpack.c.l.b16 %v4658
        %v5900 = vunpack.c.h.b16 %v4658
        %v5901 = vunpack.c.l.b16 %v4659
        %v5902 = vunpack.c.h.b16 %v4659
        %v5903 = vunpack.c.l.b16 %v4660
        %v5904 = vunpack.c.h.b16 %v4660
        %v5905 = vunpack.c.l.b16 %v4661
        %v5906 = vunpack.c.l.b16 %v4662
        %v5907 = vunpack.c.h.b16 %v4662
        %v5908 = vunpack.c.l.b16 %v4663
        %v5909 = vunpack.c.h.b16 %v4663
        %v5910 = vunpack.c.l.b16 %v4664
        %v5911 = vunpack.c.h.b16 %v4664
        %v5912 = vunpack.c.l.b16 %v4665
        %v5913 = vunpack.c.l.b16 %v4666
        %v5914 = vunpack.c.h.b16 %v4666
        %v5915 = vunpack.c.l.b16 %v4667
        %v5916 = vunpack.c.h.b16 %v4667
        %v5917 = vunpack.c.l.b16 %v4668
        %v5918 = vunpack.c.h.b16 %v4668
        %v5919 = vunpack.c.l.b16 %v4669
        %v5920 = vunpack.c.l.b16 %v4670
        %v5921 = vunpack.c.h.b16 %v4670
        %v5922 = vunpack.c.l.b16 %v4671
        %v5923 = vunpack.c.h.b16 %v4671
        %v5924 = vunpack.c.l.b16 %v4672
        %v5925 = vunpack.c.h.b16 %v4672
        %v5926 = vunpack.c.l.b16 %v4673
        %v5927 = vunpack.c.l.b16 %v4674
        %v5928 = vunpack.c.h.b16 %v4674
        %v5929 = vunpack.c.l.b16 %v4675
        %v5930 = vunpack.c.h.b16 %v4675
        %v5931 = vunpack.c.l.b16 %v4676
        %v5932 = vunpack.c.h.b16 %v4676
        %v5933 = vunpack.c.l.b16 %v4677
        %v5934 = vunpack.c.l.b16 %v4678
        %v5935 = vunpack.c.h.b16 %v4678
        %v5936 = vunpack.c.l.b16 %v4679
        %v5937 = vunpack.c.h.b16 %v4679
        %v5938 = vunpack.c.l.b16 %v4680
        %v5939 = vunpack.c.h.b16 %v4680
        %v5940 = vunpack.c.l.b16 %v4681
        %v5941 = vunpack.c.l.b16 %v4682
        %v5942 = vunpack.c.h.b16 %v4682
        %v5943 = vunpack.c.l.b16 %v4683
        %v5944 = vunpack.c.h.b16 %v4683
        %v5945 = vunpack.c.l.b16 %v4684
        %v5946 = vunpack.c.h.b16 %v4684
        %v5947 = vunpack.c.l.b16 %v4685
        %v5948 = vunpack.c.l.b16 %v4686
        %v5949 = vunpack.c.h.b16 %v4686
        %v5950 = vunpack.c.l.b16 %v4687
        %v5951 = vunpack.c.h.b16 %v4687
        %v5952 = vunpack.c.l.b16 %v4688
        %v5953 = vunpack.c.h.b16 %v4688
        %v5954 = vunpack.c.l.b16 %v4689
        %v5955 = vunpack.c.l.b16 %v4690
        %v5956 = vunpack.c.h.b16 %v4690
        %v5957 = vunpack.c.l.b16 %v4691
        %v5958 = vunpack.c.h.b16 %v4691
        %v5959 = vunpack.c.l.b16 %v4692
        %v5960 = vunpack.c.h.b16 %v4692
        %v5961 = vunpack.c.l.b16 %v4693
        %v5962 = vunpack.c.l.b16 %v4694
        %v5963 = vunpack.c.h.b16 %v4694
        %v5964 = vunpack.c.l.b16 %v4695
        %v5965 = vunpack.c.h.b16 %v4695
        %v5966 = vunpack.c.l.b16 %v4696
        %v5967 = vunpack.c.h.b16 %v4696
        %v5968 = vunpack.c.l.b16 %v4697
        %v5969 = vunpack.c.l.b16 %v4698
        %v5970 = vunpack.c.h.b16 %v4698
        %v5971 = vunpack.c.l.b16 %v4699
        %v5972 = vunpack.c.h.b16 %v4699
        %v5973 = vunpack.c.l.b16 %v4700
        %v5974 = vunpack.c.h.b16 %v4700
        %v5975 = vunpack.c.l.b16 %v4701
        %v5976 = vunpack.c.l.b16 %v4702
        %v5977 = vunpack.c.h.b16 %v4702
        %v5978 = vunpack.c.l.b16 %v4703
        %v5979 = vunpack.c.h.b16 %v4703
        %v5980 = vunpack.c.l.b16 %v4704
        %v5981 = vunpack.c.h.b16 %v4704
        %v5982 = vunpack.c.l.b16 %v4705
        %v5983 = vunpack.c.l.b16 %v4706
        %v5984 = vunpack.c.h.b16 %v4706
        %v5985 = vunpack.c.l.b16 %v4707
        %v5986 = vunpack.c.h.b16 %v4707
        %v5987 = vunpack.c.l.b16 %v4708
        %v5988 = vunpack.c.h.b16 %v4708
        %v5989 = vunpack.c.l.b16 %v4709
        %v5990 = vunpack.c.l.b16 %v4710
        %v5991 = vunpack.c.h.b16 %v4710
        %v5992 = vunpack.c.l.b16 %v4711
        %v5993 = vunpack.c.h.b16 %v4711
        %v5994 = vunpack.c.l.b16 %v4712
        %v5995 = vunpack.c.h.b16 %v4712
        %v5996 = vunpack.c.l.b16 %v4713
        %v5997 = vunpack.c.l.b16 %v4714
        %v5998 = vunpack.c.h.b16 %v4714
        %v5999 = vunpack.c.l.b16 %v4715
        %v6000 = vunpack.c.h.b16 %v4715
        %v6001 = vunpack.c.l.b16 %v4716
        %v6002 = vunpack.c.h.b16 %v4716
        %v6003 = vunpack.c.l.b16 %v4717
        %v6004 = vunpack.c.l.b16 %v4718
        %v6005 = vunpack.c.h.b16 %v4718
        %v6006 = vunpack.c.l.b16 %v4719
        %v6007 = vunpack.c.h.b16 %v4719
        %v6008 = vunpack.c.l.b16 %v4720
        %v6009 = vunpack.c.h.b16 %v4720
        %v6010 = vunpack.c.l.b16 %v4721
        %v6011 = vunpack.c.l.b16 %v4722
        %v6012 = vunpack.c.h.b16 %v4722
        %v6013 = vunpack.c.l.b16 %v4723
        %v6014 = vunpack.c.h.b16 %v4723
        %v6015 = vunpack.c.l.b16 %v4724
        %v6016 = vunpack.c.h.b16 %v4724
        %v6017 = vunpack.c.l.b16 %v4725
        %v6018 = vunpack.c.l.b16 %v4726
        %v6019 = vunpack.c.h.b16 %v4726
        %v6020 = vunpack.c.l.b16 %v4727
        %v6021 = vunpack.c.h.b16 %v4727
        %v6022 = vunpack.c.l.b16 %v4728
        %v6023 = vunpack.c.h.b16 %v4728
        %v6024 = vunpack.c.l.b16 %v4729
        %v6025 = vunpack.c.l.b16 %v4730
        %v6026 = vunpack.c.h.b16 %v4730
        %v6027 = vunpack.c.l.b16 %v4731
        %v6028 = vunpack.c.h.b16 %v4731
        %v6029 = vunpack.c.l.b16 %v4732
        %v6030 = vunpack.c.h.b16 %v4732
        %v6031 = vunpack.c.l.b16 %v4733
        %v6032 = vunpack.c.l.b16 %v4734
        %v6033 = vunpack.c.h.b16 %v4734
        %v6034 = vunpack.c.l.b16 %v4735
        %v6035 = vunpack.c.h.b16 %v4735
        %v6036 = vunpack.c.l.b16 %v4736
        %v6037 = vunpack.c.h.b16 %v4736
        %v6038 = vunpack.c.l.b16 %v4737
        %v6039 = vunpack.c.l.b16 %v4738
        %v6040 = vunpack.c.h.b16 %v4738
        %v6041 = vunpack.c.l.b16 %v4739
        %v6042 = vunpack.c.h.b16 %v4739
        %v6043 = vunpack.c.l.b16 %v4740
        %v6044 = vunpack.c.h.b16 %v4740
        %v6045 = vunpack.c.l.b16 %v4741
        %v6046 = vunpack.c.l.b16 %v4742
        %v6047 = vunpack.c.h.b16 %v4742
        %v6048 = vunpack.c.l.b16 %v4743
        %v6049 = vunpack.c.h.b16 %v4743
        %v6050 = vunpack.c.l.b16 %v4744
        %v6051 = vunpack.c.h.b16 %v4744
        %v6052 = vunpack.c.l.b16 %v4745
        %v6053 = vunpack.c.l.b16 %v4746
        %v6054 = vunpack.c.h.b16 %v4746
        %v6055 = vunpack.c.l.b16 %v4747
        %v6056 = vunpack.c.h.b16 %v4747
        %v6057 = vunpack.c.l.b16 %v4748
        %v6058 = vunpack.c.h.b16 %v4748
        %v6059 = vunpack.c.l.b16 %v4749
        %v6060 = vunpack.c.l.b16 %v4750
        %v6061 = vunpack.c.h.b16 %v4750
        %v6062 = vunpack.c.l.b16 %v4751
        %v6063 = vunpack.c.h.b16 %v4751
        %v6064 = vunpack.c.l.b16 %v4752
        %v6065 = vunpack.c.h.b16 %v4752
        %v6066 = vunpack.c.l.b16 %v4753
        %v6067 = vunpack.c.l.b16 %v4754
        %v6068 = vunpack.c.h.b16 %v4754
        %v6069 = vunpack.c.l.b16 %v4755
        %v6070 = vunpack.c.h.b16 %v4755
        %v6071 = vunpack.c.l.b16 %v4756
        %v6072 = vunpack.c.h.b16 %v4756
        %v6073 = vunpack.c.l.b16 %v4757
        %v6074 = vunpack.c.l.b16 %v4758
        %v6075 = vunpack.c.h.b16 %v4758
        %v6076 = vunpack.c.l.b16 %v4759
        %v6077 = vunpack.c.h.b16 %v4759
        %v6078 = vunpack.c.l.b16 %v4760
        %v6079 = vunpack.c.h.b16 %v4760
        %v6080 = vunpack.c.l.b16 %v4761
        %v6081 = vunpack.c.l.b16 %v4762
        %v6082 = vunpack.c.h.b16 %v4762
        %v6083 = vunpack.c.l.b16 %v4763
        %v6084 = vunpack.c.h.b16 %v4763
        %v6085 = vunpack.c.l.b16 %v4764
        %v6086 = vunpack.c.h.b16 %v4764
        %v6087 = vunpack.c.l.b16 %v4765
        %v6088 = vunpack.c.l.b16 %v4766
        %v6089 = vunpack.c.h.b16 %v4766
        %v6090 = vunpack.c.l.b16 %v4767
        %v6091 = vunpack.c.h.b16 %v4767
        %v6092 = vunpack.c.l.b16 %v4768
        %v6093 = vunpack.c.h.b16 %v4768
        %v6094 = vunpack.c.l.b16 %v4769
        %v6095 = vunpack.c.l.b16 %v4770
        %v6096 = vunpack.c.h.b16 %v4770
        %v6097 = vunpack.c.l.b16 %v4771
        %v6098 = vunpack.c.h.b16 %v4771
        %v6099 = vunpack.c.l.b16 %v4772
        %v6100 = vunpack.c.h.b16 %v4772
        %v6101 = vunpack.c.l.b16 %v4773
        %v6102 = vunpack.c.l.b16 %v4774
        %v6103 = vunpack.c.h.b16 %v4774
        %v6104 = vunpack.c.l.b16 %v4775
        %v6105 = vunpack.c.h.b16 %v4775
        %v6106 = vunpack.c.l.b16 %v4776
        %v6107 = vunpack.c.h.b16 %v4776
        %v6108 = vunpack.c.l.b16 %v4777
        %v6109 = vunpack.c.l.b16 %v4778
        %v6110 = vunpack.c.h.b16 %v4778
        %v6111 = vunpack.c.l.b16 %v4779
        %v6112 = vunpack.c.h.b16 %v4779
        %v6113 = vunpack.c.l.b16 %v4780
        %v6114 = vunpack.c.h.b16 %v4780
        %v6115 = vunpack.c.l.b16 %v4781
        %v6116 = vunpack.c.l.b16 %v4782
        %v6117 = vunpack.c.h.b16 %v4782
        %v6118 = vunpack.c.l.b16 %v4783
        %v6119 = vunpack.c.h.b16 %v4783
        %v6120 = vunpack.c.l.b16 %v4784
        %v6121 = vunpack.c.h.b16 %v4784
        %v6122 = vunpack.c.l.b16 %v4785
        %v6123 = vunpack.c.l.b16 %v4786
        %v6124 = vunpack.c.h.b16 %v4786
        %v6125 = vunpack.c.l.b16 %v4787
        %v6126 = vunpack.c.h.b16 %v4787
        %v6127 = vunpack.c.l.b16 %v4788
        %v6128 = vunpack.c.h.b16 %v4788
        %v6129 = vunpack.c.l.b16 %v4789
        %v6130 = vunpack.c.l.b16 %v4790
        %v6131 = vunpack.c.h.b16 %v4790
        %v6132 = vunpack.c.l.b16 %v4791
        %v6133 = vunpack.c.h.b16 %v4791
        %v6134 = vunpack.c.l.b16 %v4792
        %v6135 = vunpack.c.h.b16 %v4792
        %v6136 = vunpack.c.l.b16 %v4793
        %v6137 = vunpack.c.l.b16 %v4794
        %v6138 = vunpack.c.h.b16 %v4794
        %v6139 = vunpack.c.l.b16 %v4795
        %v6140 = vunpack.c.h.b16 %v4795
        %v6141 = vunpack.c.l.b16 %v4796
        %v6142 = vunpack.c.h.b16 %v4796
        %v6143 = vunpack.c.l.b16 %v4797
        %v6144 = vunpack.c.l.b16 %v4798
        %v6145 = vunpack.c.h.b16 %v4798
        %v6146 = vunpack.c.l.b16 %v4799
        %v6147 = vunpack.c.h.b16 %v4799
        %v6148 = vunpack.c.l.b16 %v4800
        %v6149 = vunpack.c.h.b16 %v4800
        %v6150 = vunpack.c.l.b16 %v4801
        %v6151 = vunpack.c.l.b16 %v4802
        %v6152 = vunpack.c.h.b16 %v4802
        %v6153 = vunpack.c.l.b16 %v4803
        %v6154 = vunpack.c.h.b16 %v4803
        %v6155 = vunpack.c.l.b16 %v4804
        %v6156 = vunpack.c.h.b16 %v4804
        %v6157 = vunpack.c.l.b16 %v4805
        %v6158 = vunpack.c.l.b16 %v4806
        %v6159 = vunpack.c.h.b16 %v4806
        %v6160 = vunpack.c.l.b16 %v4807
        %v6161 = vunpack.c.h.b16 %v4807
        %v6162 = vunpack.c.l.b16 %v4808
        %v6163 = vunpack.c.h.b16 %v4808
        %v6164 = vunpack.c.l.b16 %v4809
        %v6165 = vunpack.c.l.b16 %v4810
        %v6166 = vunpack.c.h.b16 %v4810
        %v6167 = vunpack.c.l.b16 %v4811
        %v6168 = vunpack.c.h.b16 %v4811
        %v6169 = vunpack.c.l.b16 %v4812
        %v6170 = vunpack.c.h.b16 %v4812
        %v6171 = vunpack.c.l.b16 %v4813
        %v6172 = vunpack.c.l.b16 %v4814
        %v6173 = vunpack.c.h.b16 %v4814
        %v6174 = vunpack.c.l.b16 %v4815
        %v6175 = vunpack.c.h.b16 %v4815
        %v6176 = vunpack.c.l.b16 %v4816
        %v6177 = vunpack.c.h.b16 %v4816
        %v6178 = vunpack.c.l.b16 %v4817
        %v6179 = vunpack.c.l.b16 %v4818
        %v6180 = vunpack.c.h.b16 %v4818
        %v6181 = vunpack.c.l.b16 %v4819
        %v6182 = vunpack.c.h.b16 %v4819
        %v6183 = vunpack.c.l.b16 %v4820
        %v6184 = vunpack.c.h.b16 %v4820
        %v6185 = vunpack.c.l.b16 %v4821
        %v6186 = vunpack.c.l.b16 %v4822
        %v6187 = vunpack.c.h.b16 %v4822
        %v6188 = vunpack.c.l.b16 %v4823
        %v6189 = vunpack.c.h.b16 %v4823
        %v6190 = vunpack.c.l.b16 %v4824
        %v6191 = vunpack.c.h.b16 %v4824
        %v6192 = vunpack.c.l.b16 %v4825
        %v6193 = vunpack.c.l.b16 %v4826
        %v6194 = vunpack.c.h.b16 %v4826
        %v6195 = vunpack.c.l.b16 %v4827
        %v6196 = vunpack.c.h.b16 %v4827
        %v6197 = vunpack.c.l.b16 %v4828
        %v6198 = vunpack.c.h.b16 %v4828
        %v6199 = vunpack.c.l.b16 %v4829
        %v6200 = vunpack.c.l.b16 %v4830
        %v6201 = vunpack.c.h.b16 %v4830
        %v6202 = vunpack.c.l.b16 %v4831
        %v6203 = vunpack.c.h.b16 %v4831
        %v6204 = vunpack.c.l.b16 %v4832
        %v6205 = vunpack.c.h.b16 %v4832
        %v6206 = vunpack.c.l.b16 %v4833
        %v6207 = vunpack.c.l.b16 %v4834
        %v6208 = vunpack.c.h.b16 %v4834
        %v6209 = vunpack.c.l.b16 %v4835
        %v6210 = vunpack.c.h.b16 %v4835
        %v6211 = vunpack.c.l.b16 %v4836
        %v6212 = vunpack.c.h.b16 %v4836
        %v6213 = vunpack.c.l.b16 %v4837
        %v6214 = vunpack.c.l.b16 %v4838
        %v6215 = vunpack.c.h.b16 %v4838
        %v6216 = vunpack.c.l.b16 %v4839
        %v6217 = vunpack.c.h.b16 %v4839
        %v6218 = vunpack.c.l.b16 %v4840
        %v6219 = vunpack.c.h.b16 %v4840
        %v6220 = vunpack.c.l.b16 %v4841
        %v6221 = vunpack.c.l.b16 %v4842
        %v6222 = vunpack.c.h.b16 %v4842
        %v6223 = vunpack.c.l.b16 %v4843
        %v6224 = vunpack.c.h.b16 %v4843
        %v6225 = vunpack.c.l.b16 %v4844
        %v6226 = vunpack.c.h.b16 %v4844
        %v6227 = vunpack.c.l.b16 %v4845
        %v6228 = vunpack.c.l.b16 %v4846
        %v6229 = vunpack.c.h.b16 %v4846
        %v6230 = vunpack.c.l.b16 %v4847
        %v6231 = vunpack.c.h.b16 %v4847
        %v6232 = vunpack.c.l.b16 %v4848
        %v6233 = vunpack.c.h.b16 %v4848
        %v6234 = vunpack.c.l.b16 %v4849
        %v6235 = vunpack.c.l.b16 %v4850
        %v6236 = vunpack.c.h.b16 %v4850
        %v6237 = vunpack.c.l.b16 %v4851
        %v6238 = vunpack.c.h.b16 %v4851
        %v6239 = vunpack.c.l.b16 %v4852
        %v6240 = vunpack.c.h.b16 %v4852
        %v6241 = vunpack.c.l.b16 %v4853
        %v6242 = vunpack.c.l.b16 %v4854
        %v6243 = vunpack.c.h.b16 %v4854
        %v6244 = vunpack.c.l.b16 %v4855
        %v6245 = vunpack.c.h.b16 %v4855
        %v6246 = vunpack.c.l.b16 %v4856
        %v6247 = vunpack.c.h.b16 %v4856
        %v6248 = vunpack.c.l.b16 %v4857
        %v6249 = vunpack.c.l.b16 %v4858
        %v6250 = vunpack.c.h.b16 %v4858
        %v6251 = vunpack.c.l.b16 %v4859
        %v6252 = vunpack.c.h.b16 %v4859
        %v6253 = vunpack.c.l.b16 %v4860
        %v6254 = vunpack.c.h.b16 %v4860
        %v6255 = vunpack.c.l.b16 %v4861
        %v6256 = vunpack.c.l.b16 %v4862
        %v6257 = vunpack.c.h.b16 %v4862
        %v6258 = vunpack.c.l.b16 %v4863
        %v6259 = vunpack.c.h.b16 %v4863
        %v6260 = vunpack.c.l.b16 %v4864
        %v6261 = vunpack.c.h.b16 %v4864
        %v6262 = vunpack.c.l.b16 %v4865
        %v6263 = vunpack.c.l.b16 %v4866
        %v6264 = vunpack.c.h.b16 %v4866
        %v6265 = vunpack.c.l.b16 %v4867
        %v6266 = vunpack.c.h.b16 %v4867
        %v6267 = vunpack.c.l.b16 %v4868
        %v6268 = vunpack.c.h.b16 %v4868
        %v6269 = vunpack.c.l.b16 %v4869
        %v6270 = vunpack.c.l.b16 %v4870
        %v6271 = vunpack.c.h.b16 %v4870
        %v6272 = vunpack.c.l.b16 %v4871
        %v6273 = vunpack.c.h.b16 %v4871
        %v6274 = vunpack.c.l.b16 %v4872
        %v6275 = vunpack.c.h.b16 %v4872
        %v6276 = vunpack.c.l.b16 %v4873
        %v6277 = vunpack.c.l.b16 %v4874
        %v6278 = vunpack.c.h.b16 %v4874
        %v6279 = vunpack.c.l.b16 %v4875
        %v6280 = vunpack.c.h.b16 %v4875
        %v6281 = vunpack.c.l.b16 %v4876
        %v6282 = vunpack.c.h.b16 %v4876
        %v6283 = vunpack.c.l.b16 %v4877
        %v6284 = vunpack.c.l.b16 %v4878
        %v6285 = vunpack.c.h.b16 %v4878
        %v6286 = vunpack.c.l.b16 %v4879
        %v6287 = vunpack.c.h.b16 %v4879
        %v6288 = vunpack.c.l.b16 %v4880
        %v6289 = vunpack.c.h.b16 %v4880
        %v6290 = vunpack.c.l.b16 %v4881
        %v6291 = vunpack.c.l.b16 %v4882
        %v6292 = vunpack.c.h.b16 %v4882
        %v6293 = vunpack.c.l.b16 %v4883
        %v6294 = vunpack.c.h.b16 %v4883
        %v6295 = vunpack.c.l.b16 %v4884
        %v6296 = vunpack.c.h.b16 %v4884
        %v6297 = vunpack.c.l.b16 %v4885
        %v6298 = vunpack.c.l.b16 %v4886
        %v6299 = vunpack.c.h.b16 %v4886
        %v6300 = vunpack.c.l.b16 %v4887
        %v6301 = vunpack.c.h.b16 %v4887
        %v6302 = vunpack.c.l.b16 %v4888
        %v6303 = vunpack.c.h.b16 %v4888
        %v6304 = vunpack.c.l.b16 %v4889
        %v6305 = vunpack.c.l.b16 %v4890
        %v6306 = vunpack.c.h.b16 %v4890
        %v6307 = vunpack.c.l.b16 %v4891
        %v6308 = vunpack.c.h.b16 %v4891
        %v6309 = vunpack.c.l.b16 %v4892
        %v6310 = vunpack.c.h.b16 %v4892
        %v6311 = vunpack.c.l.b16 %v4893
        %v6312 = vunpack.c.l.b16 %v4894
        %v6313 = vunpack.c.h.b16 %v4894
        %v6314 = vunpack.c.l.b16 %v4895
        %v6315 = vunpack.c.h.b16 %v4895
        %v6316 = vunpack.c.l.b16 %v4896
        %v6317 = vunpack.c.h.b16 %v4896
        %v6318 = vunpack.c.l.b16 %v4897
        %v6319 = vunpack.c.l.b16 %v4898
        %v6320 = vunpack.c.h.b16 %v4898
        %v6321 = vunpack.c.l.b16 %v4899
        %v6322 = vunpack.c.h.b16 %v4899
        %v6323 = vunpack.c.l.b16 %v4900
        %v6324 = vunpack.c.h.b16 %v4900
        %v6325 = vunpack.c.l.b16 %v4901
        %v6326 = vunpack.c.l.b16 %v4902
        %v6327 = vunpack.c.h.b16 %v4902
        %v6328 = vunpack.c.l.b16 %v4903
        %v6329 = vunpack.c.h.b16 %v4903
        %v6330 = vunpack.c.l.b16 %v4904
        %v6331 = vunpack.c.h.b16 %v4904
        %v6332 = vunpack.c.l.b16 %v4905
        %v6333 = vunpack.c.l.b16 %v4906
        %v6334 = vunpack.c.h.b16 %v4906
        %v6335 = vunpack.c.l.b16 %v4907
        %v6336 = vunpack.c.h.b16 %v4907
        %v6337 = vunpack.c.l.b16 %v4908
        %v6338 = vunpack.c.h.b16 %v4908
        %v6339 = vunpack.c.l.b16 %v4909
        %v6340 = vunpack.c.l.b16 %v4910
        %v6341 = vunpack.c.h.b16 %v4910
        %v6342 = vunpack.c.l.b16 %v4911
        %v6343 = vunpack.c.h.b16 %v4911
        %v6344 = vunpack.c.l.b16 %v4912
        %v6345 = vunpack.c.h.b16 %v4912
        %v6346 = vunpack.c.l.b16 %v4913
        %v6347 = vunpack.c.l.b16 %v4914
        %v6348 = vunpack.c.h.b16 %v4914
        %v6349 = vunpack.c.l.b16 %v4915
        %v6350 = vunpack.c.h.b16 %v4915
        %v6351 = vunpack.c.l.b16 %v4916
        %v6352 = vunpack.c.h.b16 %v4916
        %v6353 = vunpack.c.l.b16 %v4917
        %v6354 = vunpack.c.l.b16 %v4918
        %v6355 = vunpack.c.h.b16 %v4918
        %v6356 = vunpack.c.l.b16 %v4919
        %v6357 = vunpack.c.h.b16 %v4919
        %v6358 = vunpack.c.l.b16 %v4920
        %v6359 = vunpack.c.h.b16 %v4920
        %v6360 = vunpack.c.l.b16 %v4921
        %v6361 = vunpack.c.l.b16 %v4922
        %v6362 = vunpack.c.h.b16 %v4922
        %v6363 = vunpack.c.l.b16 %v4923
        %v6364 = vunpack.c.h.b16 %v4923
        %v6365 = vunpack.c.l.b16 %v4924
        %v6366 = vunpack.c.h.b16 %v4924
        %v6367 = vunpack.c.l.b16 %v4925
        %v6368 = vunpack.c.l.b16 %v4926
        %v6369 = vunpack.c.h.b16 %v4926
        %v6370 = vunpack.c.l.b16 %v4927
        %v6371 = vunpack.c.h.b16 %v4927
        %v6372 = vunpack.c.l.b16 %v4928
        %v6373 = vunpack.c.h.b16 %v4928
        %v6374 = vunpack.c.l.b16 %v4929
        %v6375 = vpack.c.b16 %v5486, %v5479
        %v6376 = vpack.c.b16 %v5487, %v5480
        %v6377 = vpack.c.b16 %v5488, %v5481
        %v6378 = vpack.c.b16 %v5489, %v5482
        %v6379 = vpack.c.b16 %v5490, %v5483
        %v6380 = vpack.c.b16 %v5491, %v5484
        %v6381 = vpack.c.b16 %v5492, %v5485
        %v6382 = vpack.c.b16 %v5500, %v5493
        %v6383 = vpack.c.b16 %v5501, %v5494
        %v6384 = vpack.c.b16 %v5502, %v5495
        %v6385 = vpack.c.b16 %v5503, %v5496
        %v6386 = vpack.c.b16 %v5504, %v5497
        %v6387 = vpack.c.b16 %v5505, %v5498
        %v6388 = vpack.c.b16 %v5506, %v5499
        %v6389 = vpack.c.b16 %v5514, %v5507
        %v6390 = vpack.c.b16 %v5515, %v5508
        %v6391 = vpack.c.b16 %v5516, %v5509
        %v6392 = vpack.c.b16 %v5517, %v5510
        %v6393 = vpack.c.b16 %v5518, %v5511
        %v6394 = vpack.c.b16 %v5519, %v5512
        %v6395 = vpack.c.b16 %v5520, %v5513
        %v6396 = vpack.c.b16 %v5528, %v5521
        %v6397 = vpack.c.b16 %v5529, %v5522
        %v6398 = vpack.c.b16 %v5530, %v5523
        %v6399 = vpack.c.b16 %v5531, %v5524
        %v6400 = vpack.c.b16 %v5532, %v5525
        %v6401 = vpack.c.b16 %v5533, %v5526
        %v6402 = vpack.c.b16 %v5534, %v5527
        %v6403 = vpack.c.b16 %v5542, %v5535
        %v6404 = vpack.c.b16 %v5543, %v5536
        %v6405 = vpack.c.b16 %v5544, %v5537
        %v6406 = vpack.c.b16 %v5545, %v5538
        %v6407 = vpack.c.b16 %v5546, %v5539
        %v6408 = vpack.c.b16 %v5547, %v5540
        %v6409 = vpack.c.b16 %v5548, %v5541
        %v6410 = vpack.c.b16 %v5556, %v5549
        %v6411 = vpack.c.b16 %v5557, %v5550
        %v6412 = vpack.c.b16 %v5558, %v5551
        %v6413 = vpack.c.b16 %v5559, %v5552
        %v6414 = vpack.c.b16 %v5560, %v5553
        %v6415 = vpack.c.b16 %v5561, %v5554
        %v6416 = vpack.c.b16 %v5562, %v5555
        %v6417 = vpack.c.b16 %v5570, %v5563
        %v6418 = vpack.c.b16 %v5571, %v5564
        %v6419 = vpack.c.b16 %v5572, %v5565
        %v6420 = vpack.c.b16 %v5573, %v5566
        %v6421 = vpack.c.b16 %v5574, %v5567
        %v6422 = vpack.c.b16 %v5575, %v5568
        %v6423 = vpack.c.b16 %v5576, %v5569
        %v6424 = vpack.c.b16 %v5584, %v5577
        %v6425 = vpack.c.b16 %v5585, %v5578
        %v6426 = vpack.c.b16 %v5586, %v5579
        %v6427 = vpack.c.b16 %v5587, %v5580
        %v6428 = vpack.c.b16 %v5588, %v5581
        %v6429 = vpack.c.b16 %v5589, %v5582
        %v6430 = vpack.c.b16 %v5590, %v5583
        %v6431 = vpack.c.b16 %v5598, %v5591
        %v6432 = vpack.c.b16 %v5599, %v5592
        %v6433 = vpack.c.b16 %v5600, %v5593
        %v6434 = vpack.c.b16 %v5601, %v5594
        %v6435 = vpack.c.b16 %v5602, %v5595
        %v6436 = vpack.c.b16 %v5603, %v5596
        %v6437 = vpack.c.b16 %v5604, %v5597
        %v6438 = vpack.c.b16 %v5612, %v5605
        %v6439 = vpack.c.b16 %v5613, %v5606
        %v6440 = vpack.c.b16 %v5614, %v5607
        %v6441 = vpack.c.b16 %v5615, %v5608
        %v6442 = vpack.c.b16 %v5616, %v5609
        %v6443 = vpack.c.b16 %v5617, %v5610
        %v6444 = vpack.c.b16 %v5618, %v5611
        %v6445 = vpack.c.b16 %v5626, %v5619
        %v6446 = vpack.c.b16 %v5627, %v5620
        %v6447 = vpack.c.b16 %v5628, %v5621
        %v6448 = vpack.c.b16 %v5629, %v5622
        %v6449 = vpack.c.b16 %v5630, %v5623
        %v6450 = vpack.c.b16 %v5631, %v5624
        %v6451 = vpack.c.b16 %v5632, %v5625
        %v6452 = vpack.c.b16 %v5640, %v5633
        %v6453 = vpack.c.b16 %v5641, %v5634
        %v6454 = vpack.c.b16 %v5642, %v5635
        %v6455 = vpack.c.b16 %v5643, %v5636
        %v6456 = vpack.c.b16 %v5644, %v5637
        %v6457 = vpack.c.b16 %v5645, %v5638
        %v6458 = vpack.c.b16 %v5646, %v5639
        %v6459 = vpack.c.b16 %v5654, %v5647
        %v6460 = vpack.c.b16 %v5655, %v5648
        %v6461 = vpack.c.b16 %v5656, %v5649
        %v6462 = vpack.c.b16 %v5657, %v5650
        %v6463 = vpack.c.b16 %v5658, %v5651
        %v6464 = vpack.c.b16 %v5659, %v5652
        %v6465 = vpack.c.b16 %v5660, %v5653
        %v6466 = vpack.c.b16 %v5668, %v5661
        %v6467 = vpack.c.b16 %v5669, %v5662
        %v6468 = vpack.c.b16 %v5670, %v5663
        %v6469 = vpack.c.b16 %v5671, %v5664
        %v6470 = vpack.c.b16 %v5672, %v5665
        %v6471 = vpack.c.b16 %v5673, %v5666
        %v6472 = vpack.c.b16 %v5674, %v5667
        %v6473 = vpack.c.b16 %v5682, %v5675
        %v6474 = vpack.c.b16 %v5683, %v5676
        %v6475 = vpack.c.b16 %v5684, %v5677
        %v6476 = vpack.c.b16 %v5685, %v5678
        %v6477 = vpack.c.b16 %v5686, %v5679
        %v6478 = vpack.c.b16 %v5687, %v5680
        %v6479 = vpack.c.b16 %v5688, %v5681
        %v6480 = vpack.c.b16 %v5696, %v5689
        %v6481 = vpack.c.b16 %v5697, %v5690
        %v6482 = vpack.c.b16 %v5698, %v5691
        %v6483 = vpack.c.b16 %v5699, %v5692
        %v6484 = vpack.c.b16 %v5700, %v5693
        %v6485 = vpack.c.b16 %v5701, %v5694
        %v6486 = vpack.c.b16 %v5702, %v5695
        %v6487 = vpack.c.b16 %v5710, %v5703
        %v6488 = vpack.c.b16 %v5711, %v5704
        %v6489 = vpack.c.b16 %v5712, %v5705
        %v6490 = vpack.c.b16 %v5713, %v5706
        %v6491 = vpack.c.b16 %v5714, %v5707
        %v6492 = vpack.c.b16 %v5715, %v5708
        %v6493 = vpack.c.b16 %v5716, %v5709
        %v6494 = vpack.c.b16 %v5724, %v5717
        %v6495 = vpack.c.b16 %v5725, %v5718
        %v6496 = vpack.c.b16 %v5726, %v5719
        %v6497 = vpack.c.b16 %v5727, %v5720
        %v6498 = vpack.c.b16 %v5728, %v5721
        %v6499 = vpack.c.b16 %v5729, %v5722
        %v6500 = vpack.c.b16 %v5730, %v5723
        %v6501 = vpack.c.b16 %v5738, %v5731
        %v6502 = vpack.c.b16 %v5739, %v5732
        %v6503 = vpack.c.b16 %v5740, %v5733
        %v6504 = vpack.c.b16 %v5741, %v5734
        %v6505 = vpack.c.b16 %v5742, %v5735
        %v6506 = vpack.c.b16 %v5743, %v5736
        %v6507 = vpack.c.b16 %v5744, %v5737
        %v6508 = vpack.c.b16 %v5752, %v5745
        %v6509 = vpack.c.b16 %v5753, %v5746
        %v6510 = vpack.c.b16 %v5754, %v5747
        %v6511 = vpack.c.b16 %v5755, %v5748
        %v6512 = vpack.c.b16 %v5756, %v5749
        %v6513 = vpack.c.b16 %v5757, %v5750
        %v6514 = vpack.c.b16 %v5758, %v5751
        %v6515 = vpack.c.b16 %v5766, %v5759
        %v6516 = vpack.c.b16 %v5767, %v5760
        %v6517 = vpack.c.b16 %v5768, %v5761
        %v6518 = vpack.c.b16 %v5769, %v5762
        %v6519 = vpack.c.b16 %v5770, %v5763
        %v6520 = vpack.c.b16 %v5771, %v5764
        %v6521 = vpack.c.b16 %v5772, %v5765
        %v6522 = vpack.c.b16 %v5780, %v5773
        %v6523 = vpack.c.b16 %v5781, %v5774
        %v6524 = vpack.c.b16 %v5782, %v5775
        %v6525 = vpack.c.b16 %v5783, %v5776
        %v6526 = vpack.c.b16 %v5784, %v5777
        %v6527 = vpack.c.b16 %v5785, %v5778
        %v6528 = vpack.c.b16 %v5786, %v5779
        %v6529 = vpack.c.b16 %v5794, %v5787
        %v6530 = vpack.c.b16 %v5795, %v5788
        %v6531 = vpack.c.b16 %v5796, %v5789
        %v6532 = vpack.c.b16 %v5797, %v5790
        %v6533 = vpack.c.b16 %v5798, %v5791
        %v6534 = vpack.c.b16 %v5799, %v5792
        %v6535 = vpack.c.b16 %v5800, %v5793
        %v6536 = vpack.c.b16 %v5808, %v5801
        %v6537 = vpack.c.b16 %v5809, %v5802
        %v6538 = vpack.c.b16 %v5810, %v5803
        %v6539 = vpack.c.b16 %v5811, %v5804
        %v6540 = vpack.c.b16 %v5812, %v5805
        %v6541 = vpack.c.b16 %v5813, %v5806
        %v6542 = vpack.c.b16 %v5814, %v5807
        %v6543 = vpack.c.b16 %v5822, %v5815
        %v6544 = vpack.c.b16 %v5823, %v5816
        %v6545 = vpack.c.b16 %v5824, %v5817
        %v6546 = vpack.c.b16 %v5825, %v5818
        %v6547 = vpack.c.b16 %v5826, %v5819
        %v6548 = vpack.c.b16 %v5827, %v5820
        %v6549 = vpack.c.b16 %v5828, %v5821
        %v6550 = vpack.c.b16 %v5836, %v5829
        %v6551 = vpack.c.b16 %v5837, %v5830
        %v6552 = vpack.c.b16 %v5838, %v5831
        %v6553 = vpack.c.b16 %v5839, %v5832
        %v6554 = vpack.c.b16 %v5840, %v5833
        %v6555 = vpack.c.b16 %v5841, %v5834
        %v6556 = vpack.c.b16 %v5842, %v5835
        %v6557 = vpack.c.b16 %v5850, %v5843
        %v6558 = vpack.c.b16 %v5851, %v5844
        %v6559 = vpack.c.b16 %v5852, %v5845
        %v6560 = vpack.c.b16 %v5853, %v5846
        %v6561 = vpack.c.b16 %v5854, %v5847
        %v6562 = vpack.c.b16 %v5855, %v5848
        %v6563 = vpack.c.b16 %v5856, %v5849
        %v6564 = vpack.c.b16 %v5864, %v5857
        %v6565 = vpack.c.b16 %v5865, %v5858
        %v6566 = vpack.c.b16 %v5866, %v5859
        %v6567 = vpack.c.b16 %v5867, %v5860
        %v6568 = vpack.c.b16 %v5868, %v5861
        %v6569 = vpack.c.b16 %v5869, %v5862
        %v6570 = vpack.c.b16 %v5870, %v5863
        %v6571 = vpack.c.b16 %v5878, %v5871
        %v6572 = vpack.c.b16 %v5879, %v5872
        %v6573 = vpack.c.b16 %v5880, %v5873
        %v6574 = vpack.c.b16 %v5881, %v5874
        %v6575 = vpack.c.b16 %v5882, %v5875
        %v6576 = vpack.c.b16 %v5883, %v5876
        %v6577 = vpack.c.b16 %v5884, %v5877
        %v6578 = vpack.c.b16 %v5892, %v5885
        %v6579 = vpack.c.b16 %v5893, %v5886
        %v6580 = vpack.c.b16 %v5894, %v5887
        %v6581 = vpack.c.b16 %v5895, %v5888
        %v6582 = vpack.c.b16 %v5896, %v5889
        %v6583 = vpack.c.b16 %v5897, %v5890
        %v6584 = vpack.c.b16 %v5898, %v5891
        %v6585 = vpack.c.b16 %v5906, %v5899
        %v6586 = vpack.c.b16 %v5907, %v5900
        %v6587 = vpack.c.b16 %v5908, %v5901
        %v6588 = vpack.c.b16 %v5909, %v5902
        %v6589 = vpack.c.b16 %v5910, %v5903
        %v6590 = vpack.c.b16 %v5911, %v5904
        %v6591 = vpack.c.b16 %v5912, %v5905
        %v6592 = vpack.c.b16 %v5920, %v5913
        %v6593 = vpack.c.b16 %v5921, %v5914
        %v6594 = vpack.c.b16 %v5922, %v5915
        %v6595 = vpack.c.b16 %v5923, %v5916
        %v6596 = vpack.c.b16 %v5924, %v5917
        %v6597 = vpack.c.b16 %v5925, %v5918
        %v6598 = vpack.c.b16 %v5926, %v5919
        %v6599 = vpack.c.b16 %v5934, %v5927
        %v6600 = vpack.c.b16 %v5935, %v5928
        %v6601 = vpack.c.b16 %v5936, %v5929
        %v6602 = vpack.c.b16 %v5937, %v5930
        %v6603 = vpack.c.b16 %v5938, %v5931
        %v6604 = vpack.c.b16 %v5939, %v5932
        %v6605 = vpack.c.b16 %v5940, %v5933
        %v6606 = vpack.c.b16 %v5948, %v5941
        %v6607 = vpack.c.b16 %v5949, %v5942
        %v6608 = vpack.c.b16 %v5950, %v5943
        %v6609 = vpack.c.b16 %v5951, %v5944
        %v6610 = vpack.c.b16 %v5952, %v5945
        %v6611 = vpack.c.b16 %v5953, %v5946
        %v6612 = vpack.c.b16 %v5954, %v5947
        %v6613 = vpack.c.b16 %v5962, %v5955
        %v6614 = vpack.c.b16 %v5963, %v5956
        %v6615 = vpack.c.b16 %v5964, %v5957
        %v6616 = vpack.c.b16 %v5965, %v5958
        %v6617 = vpack.c.b16 %v5966, %v5959
        %v6618 = vpack.c.b16 %v5967, %v5960
        %v6619 = vpack.c.b16 %v5968, %v5961
        %v6620 = vpack.c.b16 %v5976, %v5969
        %v6621 = vpack.c.b16 %v5977, %v5970
        %v6622 = vpack.c.b16 %v5978, %v5971
        %v6623 = vpack.c.b16 %v5979, %v5972
        %v6624 = vpack.c.b16 %v5980, %v5973
        %v6625 = vpack.c.b16 %v5981, %v5974
        %v6626 = vpack.c.b16 %v5982, %v5975
        %v6627 = vpack.c.b16 %v5990, %v5983
        %v6628 = vpack.c.b16 %v5991, %v5984
        %v6629 = vpack.c.b16 %v5992, %v5985
        %v6630 = vpack.c.b16 %v5993, %v5986
        %v6631 = vpack.c.b16 %v5994, %v5987
        %v6632 = vpack.c.b16 %v5995, %v5988
        %v6633 = vpack.c.b16 %v5996, %v5989
        %v6634 = vpack.c.b16 %v6004, %v5997
        %v6635 = vpack.c.b16 %v6005, %v5998
        %v6636 = vpack.c.b16 %v6006, %v5999
        %v6637 = vpack.c.b16 %v6007, %v6000
        %v6638 = vpack.c.b16 %v6008, %v6001
        %v6639 = vpack.c.b16 %v6009, %v6002
        %v6640 = vpack.c.b16 %v6010, %v6003
        %v6641 = vpack.c.b16 %v6018, %v6011
        %v6642 = vpack.c.b16 %v6019, %v6012
        %v6643 = vpack.c.b16 %v6020, %v6013
        %v6644 = vpack.c.b16 %v6021, %v6014
        %v6645 = vpack.c.b16 %v6022, %v6015
        %v6646 = vpack.c.b16 %v6023, %v6016
        %v6647 = vpack.c.b16 %v6024, %v6017
        %v6648 = vpack.c.b16 %v6032, %v6025
        %v6649 = vpack.c.b16 %v6033, %v6026
        %v6650 = vpack.c.b16 %v6034, %v6027
        %v6651 = vpack.c.b16 %v6035, %v6028
        %v6652 = vpack.c.b16 %v6036, %v6029
        %v6653 = vpack.c.b16 %v6037, %v6030
        %v6654 = vpack.c.b16 %v6038, %v6031
        %v6655 = vpack.c.b16 %v6046, %v6039
        %v6656 = vpack.c.b16 %v6047, %v6040
        %v6657 = vpack.c.b16 %v6048, %v6041
        %v6658 = vpack.c.b16 %v6049, %v6042
        %v6659 = vpack.c.b16 %v6050, %v6043
        %v6660 = vpack.c.b16 %v6051, %v6044
        %v6661 = vpack.c.b16 %v6052, %v6045
        %v6662 = vpack.c.b16 %v6060, %v6053
        %v6663 = vpack.c.b16 %v6061, %v6054
        %v6664 = vpack.c.b16 %v6062, %v6055
        %v6665 = vpack.c.b16 %v6063, %v6056
        %v6666 = vpack.c.b16 %v6064, %v6057
        %v6667 = vpack.c.b16 %v6065, %v6058
        %v6668 = vpack.c.b16 %v6066, %v6059
        %v6669 = vpack.c.b16 %v6074, %v6067
        %v6670 = vpack.c.b16 %v6075, %v6068
        %v6671 = vpack.c.b16 %v6076, %v6069
        %v6672 = vpack.c.b16 %v6077, %v6070
        %v6673 = vpack.c.b16 %v6078, %v6071
        %v6674 = vpack.c.b16 %v6079, %v6072
        %v6675 = vpack.c.b16 %v6080, %v6073
        %v6676 = vpack.c.b16 %v6088, %v6081
        %v6677 = vpack.c.b16 %v6089, %v6082
        %v6678 = vpack.c.b16 %v6090, %v6083
        %v6679 = vpack.c.b16 %v6091, %v6084
        %v6680 = vpack.c.b16 %v6092, %v6085
        %v6681 = vpack.c.b16 %v6093, %v6086
        %v6682 = vpack.c.b16 %v6094, %v6087
        %v6683 = vpack.c.b16 %v6102, %v6095
        %v6684 = vpack.c.b16 %v6103, %v6096
        %v6685 = vpack.c.b16 %v6104, %v6097
        %v6686 = vpack.c.b16 %v6105, %v6098
        %v6687 = vpack.c.b16 %v6106, %v6099
        %v6688 = vpack.c.b16 %v6107, %v6100
        %v6689 = vpack.c.b16 %v6108, %v6101
        %v6690 = vpack.c.b16 %v6116, %v6109
        %v6691 = vpack.c.b16 %v6117, %v6110
        %v6692 = vpack.c.b16 %v6118, %v6111
        %v6693 = vpack.c.b16 %v6119, %v6112
        %v6694 = vpack.c.b16 %v6120, %v6113
        %v6695 = vpack.c.b16 %v6121, %v6114
        %v6696 = vpack.c.b16 %v6122, %v6115
        %v6697 = vpack.c.b16 %v6130, %v6123
        %v6698 = vpack.c.b16 %v6131, %v6124
        %v6699 = vpack.c.b16 %v6132, %v6125
        %v6700 = vpack.c.b16 %v6133, %v6126
        %v6701 = vpack.c.b16 %v6134, %v6127
        %v6702 = vpack.c.b16 %v6135, %v6128
        %v6703 = vpack.c.b16 %v6136, %v6129
        %v6704 = vpack.c.b16 %v6144, %v6137
        %v6705 = vpack.c.b16 %v6145, %v6138
        %v6706 = vpack.c.b16 %v6146, %v6139
        %v6707 = vpack.c.b16 %v6147, %v6140
        %v6708 = vpack.c.b16 %v6148, %v6141
        %v6709 = vpack.c.b16 %v6149, %v6142
        %v6710 = vpack.c.b16 %v6150, %v6143
        %v6711 = vpack.c.b16 %v6158, %v6151
        %v6712 = vpack.c.b16 %v6159, %v6152
        %v6713 = vpack.c.b16 %v6160, %v6153
        %v6714 = vpack.c.b16 %v6161, %v6154
        %v6715 = vpack.c.b16 %v6162, %v6155
        %v6716 = vpack.c.b16 %v6163, %v6156
        %v6717 = vpack.c.b16 %v6164, %v6157
        %v6718 = vpack.c.b16 %v6172, %v6165
        %v6719 = vpack.c.b16 %v6173, %v6166
        %v6720 = vpack.c.b16 %v6174, %v6167
        %v6721 = vpack.c.b16 %v6175, %v6168
        %v6722 = vpack.c.b16 %v6176, %v6169
        %v6723 = vpack.c.b16 %v6177, %v6170
        %v6724 = vpack.c.b16 %v6178, %v6171
        %v6725 = vpack.c.b16 %v6186, %v6179
        %v6726 = vpack.c.b16 %v6187, %v6180
        %v6727 = vpack.c.b16 %v6188, %v6181
        %v6728 = vpack.c.b16 %v6189, %v6182
        %v6729 = vpack.c.b16 %v6190, %v6183
        %v6730 = vpack.c.b16 %v6191, %v6184
        %v6731 = vpack.c.b16 %v6192, %v6185
        %v6732 = vpack.c.b16 %v6200, %v6193
        %v6733 = vpack.c.b16 %v6201, %v6194
        %v6734 = vpack.c.b16 %v6202, %v6195
        %v6735 = vpack.c.b16 %v6203, %v6196
        %v6736 = vpack.c.b16 %v6204, %v6197
        %v6737 = vpack.c.b16 %v6205, %v6198
        %v6738 = vpack.c.b16 %v6206, %v6199
        %v6739 = vpack.c.b16 %v6214, %v6207
        %v6740 = vpack.c.b16 %v6215, %v6208
        %v6741 = vpack.c.b16 %v6216, %v6209
        %v6742 = vpack.c.b16 %v6217, %v6210
        %v6743 = vpack.c.b16 %v6218, %v6211
        %v6744 = vpack.c.b16 %v6219, %v6212
        %v6745 = vpack.c.b16 %v6220, %v6213
        %v6746 = vpack.c.b16 %v6228, %v6221
        %v6747 = vpack.c.b16 %v6229, %v6222
        %v6748 = vpack.c.b16 %v6230, %v6223
        %v6749 = vpack.c.b16 %v6231, %v6224
        %v6750 = vpack.c.b16 %v6232, %v6225
        %v6751 = vpack.c.b16 %v6233, %v6226
        %v6752 = vpack.c.b16 %v6234, %v6227
        %v6753 = vpack.c.b16 %v6242, %v6235
        %v6754 = vpack.c.b16 %v6243, %v6236
        %v6755 = vpack.c.b16 %v6244, %v6237
        %v6756 = vpack.c.b16 %v6245, %v6238
        %v6757 = vpack.c.b16 %v6246, %v6239
        %v6758 = vpack.c.b16 %v6247, %v6240
        %v6759 = vpack.c.b16 %v6248, %v6241
        %v6760 = vpack.c.b16 %v6256, %v6249
        %v6761 = vpack.c.b16 %v6257, %v6250
        %v6762 = vpack.c.b16 %v6258, %v6251
        %v6763 = vpack.c.b16 %v6259, %v6252
        %v6764 = vpack.c.b16 %v6260, %v6253
        %v6765 = vpack.c.b16 %v6261, %v6254
        %v6766 = vpack.c.b16 %v6262, %v6255
        %v6767 = vpack.c.b16 %v6270, %v6263
        %v6768 = vpack.c.b16 %v6271, %v6264
        %v6769 = vpack.c.b16 %v6272, %v6265
        %v6770 = vpack.c.b16 %v6273, %v6266
        %v6771 = vpack.c.b16 %v6274, %v6267
        %v6772 = vpack.c.b16 %v6275, %v6268
        %v6773 = vpack.c.b16 %v6276, %v6269
        %v6774 = vpack.c.b16 %v6284, %v6277
        %v6775 = vpack.c.b16 %v6285, %v6278
        %v6776 = vpack.c.b16 %v6286, %v6279
        %v6777 = vpack.c.b16 %v6287, %v6280
        %v6778 = vpack.c.b16 %v6288, %v6281
        %v6779 = vpack.c.b16 %v6289, %v6282
        %v6780 = vpack.c.b16 %v6290, %v6283
        %v6781 = vpack.c.b16 %v6298, %v6291
        %v6782 = vpack.c.b16 %v6299, %v6292
        %v6783 = vpack.c.b16 %v6300, %v6293
        %v6784 = vpack.c.b16 %v6301, %v6294
        %v6785 = vpack.c.b16 %v6302, %v6295
        %v6786 = vpack.c.b16 %v6303, %v6296
        %v6787 = vpack.c.b16 %v6304, %v6297
        %v6788 = vpack.c.b16 %v6312, %v6305
        %v6789 = vpack.c.b16 %v6313, %v6306
        %v6790 = vpack.c.b16 %v6314, %v6307
        %v6791 = vpack.c.b16 %v6315, %v6308
        %v6792 = vpack.c.b16 %v6316, %v6309
        %v6793 = vpack.c.b16 %v6317, %v6310
        %v6794 = vpack.c.b16 %v6318, %v6311
        %v6795 = vpack.c.b16 %v6326, %v6319
        %v6796 = vpack.c.b16 %v6327, %v6320
        %v6797 = vpack.c.b16 %v6328, %v6321
        %v6798 = vpack.c.b16 %v6329, %v6322
        %v6799 = vpack.c.b16 %v6330, %v6323
        %v6800 = vpack.c.b16 %v6331, %v6324
        %v6801 = vpack.c.b16 %v6332, %v6325
        %v6802 = vpack.c.b16 %v6340, %v6333
        %v6803 = vpack.c.b16 %v6341, %v6334
        %v6804 = vpack.c.b16 %v6342, %v6335
        %v6805 = vpack.c.b16 %v6343, %v6336
        %v6806 = vpack.c.b16 %v6344, %v6337
        %v6807 = vpack.c.b16 %v6345, %v6338
        %v6808 = vpack.c.b16 %v6346, %v6339
        %v6809 = vpack.c.b16 %v6354, %v6347
        %v6810 = vpack.c.b16 %v6355, %v6348
        %v6811 = vpack.c.b16 %v6356, %v6349
        %v6812 = vpack.c.b16 %v6357, %v6350
        %v6813 = vpack.c.b16 %v6358, %v6351
        %v6814 = vpack.c.b16 %v6359, %v6352
        %v6815 = vpack.c.b16 %v6360, %v6353
        %v6816 = vpack.c.b16 %v6368, %v6361
        %v6817 = vpack.c.b16 %v6369, %v6362
        %v6818 = vpack.c.b16 %v6370, %v6363
        %v6819 = vpack.c.b16 %v6371, %v6364
        %v6820 = vpack.c.b16 %v6372, %v6365
        %v6821 = vpack.c.b16 %v6373, %v6366
        %v6822 = vpack.c.b16 %v6374, %v6367
        %7271 = vmatprep.subr.bf16.mxu0 %v6376
        %7272 = vmatpush1.bf16.msra.mxu0 %v6375
        %7273 = vmatprep.subr.bf16.mxu0 %v6383
        %7274 = vmatpush1.bf16.msra.mxu0 %v6382
        %7275 = vmatprep.subr.bf16.mxu0 %v6390
        %7276 = vmatpush1.bf16.msra.mxu0 %v6389
        %7277 = vmatprep.subr.bf16.mxu0 %v6397
        %7278 = vmatpush1.bf16.msra.mxu0 %v6396
        %7279 = vmatprep.subr.bf16.mxu0 %v6404
        %7280 = vmatpush1.bf16.msra.mxu0 %v6403
        %7281 = vmatprep.subr.bf16.mxu0 %v6411
        %7282 = vmatpush1.bf16.msra.mxu0 %v6410
        %7283 = vmatprep.subr.bf16.mxu0 %v6418
        %7284 = vmatpush1.bf16.msra.mxu0 %v6417
        %7285 = vmatprep.subr.bf16.mxu0 %v6425
        %7286 = vmatpush1.bf16.msra.mxu0 %v6424
        %7287 = vmatprep.subr.bf16.mxu0 %v6432
        %7288 = vmatpush1.bf16.msra.mxu0 %v6431
        %7289 = vmatprep.subr.bf16.mxu0 %v6439
        %7290 = vmatpush1.bf16.msra.mxu0 %v6438
        %7291 = vmatprep.subr.bf16.mxu0 %v6446
        %7292 = vmatpush1.bf16.msra.mxu0 %v6445
        %7293 = vmatprep.subr.bf16.mxu0 %v6453
        %7294 = vmatpush1.bf16.msra.mxu0 %v6452
        %7295 = vmatprep.subr.bf16.mxu0 %v6460
        %7296 = vmatpush1.bf16.msra.mxu0 %v6459
        %7297 = vmatprep.subr.bf16.mxu0 %v6467
        %7298 = vmatpush1.bf16.msra.mxu0 %v6466
        %7299 = vmatprep.subr.bf16.mxu0 %v6474
        %7300 = vmatpush1.bf16.msra.mxu0 %v6473
        %7301 = vmatprep.subr.bf16.mxu0 %v6481
        %7302 = vmatpush1.bf16.msra.mxu0 %v6480
        %7303 = vmatprep.mubr.bf16.mxu0 %v4403
        %7304 = vmatmul.mubr.bf16.gmra.mrb[0].mxu0 %v4402
        %v7305 = vpop.f32.mrb[0].mxu0
        %v7306 = vadd.f32 %v4935, %v7305
        %v7307 = vpop.f32.mrb[0].mxu0
        %v7308 = vadd.f32 %v4939, %v7307
        %v7309 = vpop.f32.mrb[0].mxu0
        %v7310 = vadd.f32 %v4935, %v7309
        %v7311 = vpop.f32.mrb[0].mxu0
        %v7312 = vadd.f32 %v4939, %v7311
        %7313 = vmatprep.mubr.bf16.mxu0 %v4411
        %7314 = vmatmul.mubr.bf16.gmra.mrb[0].mxu0 %v4410
        %v7315 = vpop.f32.mrb[0].mxu0
        %v7316 = vadd.f32 %v4935, %v7315
        %v7317 = vpop.f32.mrb[0].mxu0
        %v7318 = vadd.f32 %v4939, %v7317
        %v7319 = vpop.f32.mrb[0].mxu0
        %v7320 = vadd.f32 %v4935, %v7319
        %v7321 = vpop.f32.mrb[0].mxu0
        %v7322 = vadd.f32 %v4939, %v7321
        %7323 = vdwg.mxu0
        %7324 = vmatprep.subr.bf16.mxu0 %v6488
        %7325 = vmatpush1.bf16.msra.mxu0 %v6487
        %7326 = vmatprep.subr.bf16.mxu0 %v6495
        %7327 = vmatpush1.bf16.msra.mxu0 %v6494
        %7328 = vmatprep.subr.bf16.mxu0 %v6502
        %7329 = vmatpush1.bf16.msra.mxu0 %v6501
        %7330 = vmatprep.subr.bf16.mxu0 %v6509
        %7331 = vmatpush1.bf16.msra.mxu0 %v6508
        %7332 = vmatprep.subr.bf16.mxu0 %v6516
        %7333 = vmatpush1.bf16.msra.mxu0 %v6515
        %7334 = vmatprep.subr.bf16.mxu0 %v6523
        %7335 = vmatpush1.bf16.msra.mxu0 %v6522
        %7336 = vmatprep.subr.bf16.mxu0 %v6530
        %7337 = vmatpush1.bf16.msra.mxu0 %v6529
        %7338 = vmatprep.subr.bf16.mxu0 %v6537
        %7339 = vmatpush1.bf16.msra.mxu0 %v6536
        %7340 = vmatprep.subr.bf16.mxu0 %v6544
        %7341 = vmatpush1.bf16.msra.mxu0 %v6543
        %7342 = vmatprep.subr.bf16.mxu0 %v6551
        %7343 = vmatpush1.bf16.msra.mxu0 %v6550
        %7344 = vmatprep.subr.bf16.mxu0 %v6558
        %7345 = vmatpush1.bf16.msra.mxu0 %v6557
        %7346 = vmatprep.subr.bf16.mxu0 %v6565
        %7347 = vmatpush1.bf16.msra.mxu0 %v6564
        %7348 = vmatprep.subr.bf16.mxu0 %v6572
        %7349 = vmatpush1.bf16.msra.mxu0 %v6571
        %7350 = vmatprep.subr.bf16.mxu0 %v6579
        %7351 = vmatpush1.bf16.msra.mxu0 %v6578
        %7352 = vmatprep.subr.bf16.mxu0 %v6586
        %7353 = vmatpush1.bf16.msra.mxu0 %v6585
        %7354 = vmatprep.subr.bf16.mxu0 %v6593
        %7355 = vmatpush1.bf16.msra.mxu0 %v6592
        %7356 = vmatprep.mubr.bf16.mxu0 %v4405
        %7357 = vmatmul.mubr.bf16.gmra.mrb[0].mxu0 %v4404
        %v7358 = vpop.f32.mrb[0].mxu0
        %v7359 = vadd.f32 %v7306, %v7358
        %v7360 = vpop.f32.mrb[0].mxu0
        %v7361 = vadd.f32 %v7308, %v7360
        %v7362 = vpop.f32.mrb[0].mxu0
        %v7363 = vadd.f32 %v7310, %v7362
        %v7364 = vpop.f32.mrb[0].mxu0
        %v7365 = vadd.f32 %v7312, %v7364
        %7366 = vmatprep.mubr.bf16.mxu0 %v4413
        %7367 = vmatmul.mubr.bf16.gmra.mrb[0].mxu0 %v4412
        %v7368 = vpop.f32.mrb[0].mxu0
        %v7369 = vadd.f32 %v7316, %v7368
        %v7370 = vpop.f32.mrb[0].mxu0
        %v7371 = vadd.f32 %v7318, %v7370
        %v7372 = vpop.f32.mrb[0].mxu0
        %v7373 = vadd.f32 %v7320, %v7372
        %v7374 = vpop.f32.mrb[0].mxu0
        %v7375 = vadd.f32 %v7322, %v7374
        %7376 = vdwg.mxu0
        %7377 = vmatprep.subr.bf16.mxu0 %v6600
        %7378 = vmatpush1.bf16.msra.mxu0 %v6599
        %7379 = vmatprep.subr.bf16.mxu0 %v6607
        %7380 = vmatpush1.bf16.msra.mxu0 %v6606
        %7381 = vmatprep.subr.bf16.mxu0 %v6614
        %7382 = vmatpush1.bf16.msra.mxu0 %v6613
        %7383 = vmatprep.subr.bf16.mxu0 %v6621
        %7384 = vmatpush1.bf16.msra.mxu0 %v6620
        %7385 = vmatprep.subr.bf16.mxu0 %v6628
        %7386 = vmatpush1.bf16.msra.mxu0 %v6627
        %7387 = vmatprep.subr.bf16.mxu0 %v6635
        %7388 = vmatpush1.bf16.msra.mxu0 %v6634
        %7389 = vmatprep.subr.bf16.mxu0 %v6642
        %7390 = vmatpush1.bf16.msra.mxu0 %v6641
        %7391 = vmatprep.subr.bf16.mxu0 %v6649
        %7392 = vmatpush1.bf16.msra.mxu0 %v6648
        %7393 = vmatprep.subr.bf16.mxu0 %v6656
        %7394 = vmatpush1.bf16.msra.mxu0 %v6655
        %7395 = vmatprep.subr.bf16.mxu0 %v6663
        %7396 = vmatpush1.bf16.msra.mxu0 %v6662
        %7397 = vmatprep.subr.bf16.mxu0 %v6670
        %7398 = vmatpush1.bf16.msra.mxu0 %v6669
        %7399 = vmatprep.subr.bf16.mxu0 %v6677
        %7400 = vmatpush1.bf16.msra.mxu0 %v6676
        %7401 = vmatprep.subr.bf16.mxu0 %v6684
        %7402 = vmatpush1.bf16.msra.mxu0 %v6683
        %7403 = vmatprep.subr.bf16.mxu0 %v6691
        %7404 = vmatpush1.bf16.msra.mxu0 %v6690
        %7405 = vmatprep.subr.bf16.mxu0 %v6698
        %7406 = vmatpush1.bf16.msra.mxu0 %v6697
        %7407 = vmatprep.subr.bf16.mxu0 %v6705
        %7408 = vmatpush1.bf16.msra.mxu0 %v6704
        %7409 = vmatprep.mubr.bf16.mxu0 %v4407
        %7410 = vmatmul.mubr.bf16.gmra.mrb[0].mxu0 %v4406
        %v7411 = vpop.f32.mrb[0].mxu0
        %v7412 = vadd.f32 %v7359, %v7411
        %v7413 = vpop.f32.mrb[0].mxu0
        %v7414 = vadd.f32 %v7361, %v7413
        %v7415 = vpop.f32.mrb[0].mxu0
        %v7416 = vadd.f32 %v7363, %v7415
        %v7417 = vpop.f32.mrb[0].mxu0
        %v7418 = vadd.f32 %v7365, %v7417
        %7419 = vmatprep.mubr.bf16.mxu0 %v4415
        %7420 = vmatmul.mubr.bf16.gmra.mrb[0].mxu0 %v4414
        %v7421 = vpop.f32.mrb[0].mxu0
        %v7422 = vadd.f32 %v7369, %v7421
        %v7423 = vpop.f32.mrb[0].mxu0
        %v7424 = vadd.f32 %v7371, %v7423
        %v7425 = vpop.f32.mrb[0].mxu0
        %v7426 = vadd.f32 %v7373, %v7425
        %v7427 = vpop.f32.mrb[0].mxu0
        %v7428 = vadd.f32 %v7375, %v7427
        %7429 = vdwg.mxu0
        %7430 = vmatprep.subr.bf16.mxu0 %v6712
        %7431 = vmatpush1.bf16.msra.mxu0 %v6711
        %7432 = vmatprep.subr.bf16.mxu0 %v6719
        %7433 = vmatpush1.bf16.msra.mxu0 %v6718
        %7434 = vmatprep.subr.bf16.mxu0 %v6726
        %7435 = vmatpush1.bf16.msra.mxu0 %v6725
        %7436 = vmatprep.subr.bf16.mxu0 %v6733
        %7437 = vmatpush1.bf16.msra.mxu0 %v6732
        %7438 = vmatprep.subr.bf16.mxu0 %v6740
        %7439 = vmatpush1.bf16.msra.mxu0 %v6739
        %7440 = vmatprep.subr.bf16.mxu0 %v6747
        %7441 = vmatpush1.bf16.msra.mxu0 %v6746
        %7442 = vmatprep.subr.bf16.mxu0 %v6754
        %7443 = vmatpush1.bf16.msra.mxu0 %v6753
        %7444 = vmatprep.subr.bf16.mxu0 %v6761
        %7445 = vmatpush1.bf16.msra.mxu0 %v6760
        %7446 = vmatprep.subr.bf16.mxu0 %v6768
        %7447 = vmatpush1.bf16.msra.mxu0 %v6767
        %7448 = vmatprep.subr.bf16.mxu0 %v6775
        %7449 = vmatpush1.bf16.msra.mxu0 %v6774
        %7450 = vmatprep.subr.bf16.mxu0 %v6782
        %7451 = vmatpush1.bf16.msra.mxu0 %v6781
        %7452 = vmatprep.subr.bf16.mxu0 %v6789
        %7453 = vmatpush1.bf16.msra.mxu0 %v6788
        %7454 = vmatprep.subr.bf16.mxu0 %v6796
        %7455 = vmatpush1.bf16.msra.mxu0 %v6795
        %7456 = vmatprep.subr.bf16.mxu0 %v6803
        %7457 = vmatpush1.bf16.msra.mxu0 %v6802
        %7458 = vmatprep.subr.bf16.mxu0 %v6810
        %7459 = vmatpush1.bf16.msra.mxu0 %v6809
        %7460 = vmatprep.subr.bf16.mxu0 %v6817
        %7461 = vmatpush1.bf16.msra.mxu0 %v6816
        %7462 = vmatprep.mubr.bf16.mxu0 %v4409
        %7463 = vmatmul.mubr.bf16.gmra.mrb[0].mxu0 %v4408
        %v7464 = vpop.f32.mrb[0].mxu0
        %v7465 = vadd.f32 %v7412, %v7464
        %v7466 = vpop.f32.mrb[0].mxu0
        %v7467 = vadd.f32 %v7414, %v7466
        %v7468 = vpop.f32.mrb[0].mxu0
        %v7469 = vadd.f32 %v7416, %v7468
        %v7470 = vpop.f32.mrb[0].mxu0
        %v7471 = vadd.f32 %v7418, %v7470
        %7472 = vmatprep.mubr.bf16.mxu0 %v4417
        %7473 = vmatmul.mubr.bf16.gmra.mrb[0].mxu0 %v4416
        %v7474 = vpop.f32.mrb[0].mxu0
        %v7475 = vadd.f32 %v7422, %v7474
        %v7476 = vpop.f32.mrb[0].mxu0
        %v7477 = vadd.f32 %v7424, %v7476
        %v7478 = vpop.f32.mrb[0].mxu0
        %v7479 = vadd.f32 %v7426, %v7478
        %v7480 = vpop.f32.mrb[0].mxu0
        %v7481 = vadd.f32 %v7428, %v7480
        %7482 = vdwg.mxu0
        %7483 = vmatprep.subr.bf16.mxu0 %v6378
        %7484 = vmatpush1.bf16.msra.mxu0 %v6377
        %7485 = vmatprep.subr.bf16.mxu0 %v6385
        %7486 = vmatpush1.bf16.msra.mxu0 %v6384
        %7487 = vmatprep.subr.bf16.mxu0 %v6392
        %7488 = vmatpush1.bf16.msra.mxu0 %v6391
        %7489 = vmatprep.subr.bf16.mxu0 %v6399
        %7490 = vmatpush1.bf16.msra.mxu0 %v6398
        %7491 = vmatprep.subr.bf16.mxu0 %v6406
        %7492 = vmatpush1.bf16.msra.mxu0 %v6405
        %7493 = vmatprep.subr.bf16.mxu0 %v6413
        %7494 = vmatpush1.bf16.msra.mxu0 %v6412
        %7495 = vmatprep.subr.bf16.mxu0 %v6420
        %7496 = vmatpush1.bf16.msra.mxu0 %v6419
        %7497 = vmatprep.subr.bf16.mxu0 %v6427
        %7498 = vmatpush1.bf16.msra.mxu0 %v6426
        %7499 = vmatprep.subr.bf16.mxu0 %v6434
        %7500 = vmatpush1.bf16.msra.mxu0 %v6433
        %7501 = vmatprep.subr.bf16.mxu0 %v6441
        %7502 = vmatpush1.bf16.msra.mxu0 %v6440
        %7503 = vmatprep.subr.bf16.mxu0 %v6448
        %7504 = vmatpush1.bf16.msra.mxu0 %v6447
        %7505 = vmatprep.subr.bf16.mxu0 %v6455
        %7506 = vmatpush1.bf16.msra.mxu0 %v6454
        %7507 = vmatprep.subr.bf16.mxu0 %v6462
        %7508 = vmatpush1.bf16.msra.mxu0 %v6461
        %7509 = vmatprep.subr.bf16.mxu0 %v6469
        %7510 = vmatpush1.bf16.msra.mxu0 %v6468
        %7511 = vmatprep.subr.bf16.mxu0 %v6476
        %7512 = vmatpush1.bf16.msra.mxu0 %v6475
        %7513 = vmatprep.subr.bf16.mxu0 %v6483
        %7514 = vmatpush1.bf16.msra.mxu0 %v6482
        %7515 = vmatprep.mubr.bf16.mxu0 %v4403
        %7516 = vmatmul.mubr.bf16.gmra.mrb[0].mxu0 %v4402
        %v7517 = vpop.f32.mrb[0].mxu0
        %v7518 = vadd.f32 %v4943, %v7517
        %v7519 = vpop.f32.mrb[0].mxu0
        %v7520 = vadd.f32 %v4947, %v7519
        %v7521 = vpop.f32.mrb[0].mxu0
        %v7522 = vadd.f32 %v4943, %v7521
        %v7523 = vpop.f32.mrb[0].mxu0
        %v7524 = vadd.f32 %v4947, %v7523
        %7525 = vmatprep.mubr.bf16.mxu0 %v4411
        %7526 = vmatmul.mubr.bf16.gmra.mrb[0].mxu0 %v4410
        %v7527 = vpop.f32.mrb[0].mxu0
        %v7528 = vadd.f32 %v4943, %v7527
        %v7529 = vpop.f32.mrb[0].mxu0
        %v7530 = vadd.f32 %v4947, %v7529
        %v7531 = vpop.f32.mrb[0].mxu0
        %v7532 = vadd.f32 %v4943, %v7531
        %v7533 = vpop.f32.mrb[0].mxu0
        %v7534 = vadd.f32 %v4947, %v7533
        %7535 = vdwg.mxu0
        %7536 = vmatprep.subr.bf16.mxu0 %v6490
        %7537 = vmatpush1.bf16.msra.mxu0 %v6489
        %7538 = vmatprep.subr.bf16.mxu0 %v6497
        %7539 = vmatpush1.bf16.msra.mxu0 %v6496
        %7540 = vmatprep.subr.bf16.mxu0 %v6504
        %7541 = vmatpush1.bf16.msra.mxu0 %v6503
        %7542 = vmatprep.subr.bf16.mxu0 %v6511
        %7543 = vmatpush1.bf16.msra.mxu0 %v6510
        %7544 = vmatprep.subr.bf16.mxu0 %v6518
        %7545 = vmatpush1.bf16.msra.mxu0 %v6517
        %7546 = vmatprep.subr.bf16.mxu0 %v6525
        %7547 = vmatpush1.bf16.msra.mxu0 %v6524
        %7548 = vmatprep.subr.bf16.mxu0 %v6532
        %7549 = vmatpush1.bf16.msra.mxu0 %v6531
        %7550 = vmatprep.subr.bf16.mxu0 %v6539
        %7551 = vmatpush1.bf16.msra.mxu0 %v6538
        %7552 = vmatprep.subr.bf16.mxu0 %v6546
        %7553 = vmatpush1.bf16.msra.mxu0 %v6545
        %7554 = vmatprep.subr.bf16.mxu0 %v6553
        %7555 = vmatpush1.bf16.msra.mxu0 %v6552
        %7556 = vmatprep.subr.bf16.mxu0 %v6560
        %7557 = vmatpush1.bf16.msra.mxu0 %v6559
        %7558 = vmatprep.subr.bf16.mxu0 %v6567
        %7559 = vmatpush1.bf16.msra.mxu0 %v6566
        %7560 = vmatprep.subr.bf16.mxu0 %v6574
        %7561 = vmatpush1.bf16.msra.mxu0 %v6573
        %7562 = vmatprep.subr.bf16.mxu0 %v6581
        %7563 = vmatpush1.bf16.msra.mxu0 %v6580
        %7564 = vmatprep.subr.bf16.mxu0 %v6588
        %7565 = vmatpush1.bf16.msra.mxu0 %v6587
        %7566 = vmatprep.subr.bf16.mxu0 %v6595
        %7567 = vmatpush1.bf16.msra.mxu0 %v6594
        %7568 = vmatprep.mubr.bf16.mxu0 %v4405
        %7569 = vmatmul.mubr.bf16.gmra.mrb[0].mxu0 %v4404
        %v7570 = vpop.f32.mrb[0].mxu0
        %v7571 = vadd.f32 %v7518, %v7570
        %v7572 = vpop.f32.mrb[0].mxu0
        %v7573 = vadd.f32 %v7520, %v7572
        %v7574 = vpop.f32.mrb[0].mxu0
        %v7575 = vadd.f32 %v7522, %v7574
        %v7576 = vpop.f32.mrb[0].mxu0
        %v7577 = vadd.f32 %v7524, %v7576
        %7578 = vmatprep.mubr.bf16.mxu0 %v4413
        %7579 = vmatmul.mubr.bf16.gmra.mrb[0].mxu0 %v4412
        %v7580 = vpop.f32.mrb[0].mxu0
        %v7581 = vadd.f32 %v7528, %v7580
        %v7582 = vpop.f32.mrb[0].mxu0
        %v7583 = vadd.f32 %v7530, %v7582
        %v7584 = vpop.f32.mrb[0].mxu0
        %v7585 = vadd.f32 %v7532, %v7584
        %v7586 = vpop.f32.mrb[0].mxu0
        %v7587 = vadd.f32 %v7534, %v7586
        %7588 = vdwg.mxu0
        %7589 = vmatprep.subr.bf16.mxu0 %v6602
        %7590 = vmatpush1.bf16.msra.mxu0 %v6601
        %7591 = vmatprep.subr.bf16.mxu0 %v6609
        %7592 = vmatpush1.bf16.msra.mxu0 %v6608
        %7593 = vmatprep.subr.bf16.mxu0 %v6616
        %7594 = vmatpush1.bf16.msra.mxu0 %v6615
        %7595 = vmatprep.subr.bf16.mxu0 %v6623
        %7596 = vmatpush1.bf16.msra.mxu0 %v6622
        %7597 = vmatprep.subr.bf16.mxu0 %v6630
        %7598 = vmatpush1.bf16.msra.mxu0 %v6629
        %7599 = vmatprep.subr.bf16.mxu0 %v6637
        %7600 = vmatpush1.bf16.msra.mxu0 %v6636
        %7601 = vmatprep.subr.bf16.mxu0 %v6644
        %7602 = vmatpush1.bf16.msra.mxu0 %v6643
        %7603 = vmatprep.subr.bf16.mxu0 %v6651
        %7604 = vmatpush1.bf16.msra.mxu0 %v6650
        %7605 = vmatprep.subr.bf16.mxu0 %v6658
        %7606 = vmatpush1.bf16.msra.mxu0 %v6657
        %7607 = vmatprep.subr.bf16.mxu0 %v6665
        %7608 = vmatpush1.bf16.msra.mxu0 %v6664
        %7609 = vmatprep.subr.bf16.mxu0 %v6672
        %7610 = vmatpush1.bf16.msra.mxu0 %v6671
        %7611 = vmatprep.subr.bf16.mxu0 %v6679
        %7612 = vmatpush1.bf16.msra.mxu0 %v6678
        %7613 = vmatprep.subr.bf16.mxu0 %v6686
        %7614 = vmatpush1.bf16.msra.mxu0 %v6685
        %7615 = vmatprep.subr.bf16.mxu0 %v6693
        %7616 = vmatpush1.bf16.msra.mxu0 %v6692
        %7617 = vmatprep.subr.bf16.mxu0 %v6700
        %7618 = vmatpush1.bf16.msra.mxu0 %v6699
        %7619 = vmatprep.subr.bf16.mxu0 %v6707
        %7620 = vmatpush1.bf16.msra.mxu0 %v6706
        %7621 = vmatprep.mubr.bf16.mxu0 %v4407
        %7622 = vmatmul.mubr.bf16.gmra.mrb[0].mxu0 %v4406
        %v7623 = vpop.f32.mrb[0].mxu0
        %v7624 = vadd.f32 %v7571, %v7623
        %v7625 = vpop.f32.mrb[0].mxu0
        %v7626 = vadd.f32 %v7573, %v7625
        %v7627 = vpop.f32.mrb[0].mxu0
        %v7628 = vadd.f32 %v7575, %v7627
        %v7629 = vpop.f32.mrb[0].mxu0
        %v7630 = vadd.f32 %v7577, %v7629
        %7631 = vmatprep.mubr.bf16.mxu0 %v4415
        %7632 = vmatmul.mubr.bf16.gmra.mrb[0].mxu0 %v4414
        %v7633 = vpop.f32.mrb[0].mxu0
        %v7634 = vadd.f32 %v7581, %v7633
        %v7635 = vpop.f32.mrb[0].mxu0
        %v7636 = vadd.f32 %v7583, %v7635
        %v7637 = vpop.f32.mrb[0].mxu0
        %v7638 = vadd.f32 %v7585, %v7637
        %v7639 = vpop.f32.mrb[0].mxu0
        %v7640 = vadd.f32 %v7587, %v7639
        %7641 = vdwg.mxu0
        %7642 = vmatprep.subr.bf16.mxu0 %v6714
        %7643 = vmatpush1.bf16.msra.mxu0 %v6713
        %7644 = vmatprep.subr.bf16.mxu0 %v6721
        %7645 = vmatpush1.bf16.msra.mxu0 %v6720
        %7646 = vmatprep.subr.bf16.mxu0 %v6728
        %7647 = vmatpush1.bf16.msra.mxu0 %v6727
        %7648 = vmatprep.subr.bf16.mxu0 %v6735
        %7649 = vmatpush1.bf16.msra.mxu0 %v6734
        %7650 = vmatprep.subr.bf16.mxu0 %v6742
        %7651 = vmatpush1.bf16.msra.mxu0 %v6741
        %7652 = vmatprep.subr.bf16.mxu0 %v6749
        %7653 = vmatpush1.bf16.msra.mxu0 %v6748
        %7654 = vmatprep.subr.bf16.mxu0 %v6756
        %7655 = vmatpush1.bf16.msra.mxu0 %v6755
        %7656 = vmatprep.subr.bf16.mxu0 %v6763
        %7657 = vmatpush1.bf16.msra.mxu0 %v6762
        %7658 = vmatprep.subr.bf16.mxu0 %v6770
        %7659 = vmatpush1.bf16.msra.mxu0 %v6769
        %7660 = vmatprep.subr.bf16.mxu0 %v6777
        %7661 = vmatpush1.bf16.msra.mxu0 %v6776
        %7662 = vmatprep.subr.bf16.mxu0 %v6784
        %7663 = vmatpush1.bf16.msra.mxu0 %v6783
        %7664 = vmatprep.subr.bf16.mxu0 %v6791
        %7665 = vmatpush1.bf16.msra.mxu0 %v6790
        %7666 = vmatprep.subr.bf16.mxu0 %v6798
        %7667 = vmatpush1.bf16.msra.mxu0 %v6797
        %7668 = vmatprep.subr.bf16.mxu0 %v6805
        %7669 = vmatpush1.bf16.msra.mxu0 %v6804
        %7670 = vmatprep.subr.bf16.mxu0 %v6812
        %7671 = vmatpush1.bf16.msra.mxu0 %v6811
        %7672 = vmatprep.subr.bf16.mxu0 %v6819
        %7673 = vmatpush1.bf16.msra.mxu0 %v6818
        %7674 = vmatprep.mubr.bf16.mxu0 %v4409
        %7675 = vmatmul.mubr.bf16.gmra.mrb[0].mxu0 %v4408
        %v7676 = vpop.f32.mrb[0].mxu0
        %v7677 = vadd.f32 %v7624, %v7676
        %v7678 = vpop.f32.mrb[0].mxu0
        %v7679 = vadd.f32 %v7626, %v7678
        %v7680 = vpop.f32.mrb[0].mxu0
        %v7681 = vadd.f32 %v7628, %v7680
        %v7682 = vpop.f32.mrb[0].mxu0
        %v7683 = vadd.f32 %v7630, %v7682
        %7684 = vmatprep.mubr.bf16.mxu0 %v4417
        %7685 = vmatmul.mubr.bf16.gmra.mrb[0].mxu0 %v4416
        %v7686 = vpop.f32.mrb[0].mxu0
        %v7687 = vadd.f32 %v7634, %v7686
        %v7688 = vpop.f32.mrb[0].mxu0
        %v7689 = vadd.f32 %v7636, %v7688
        %v7690 = vpop.f32.mrb[0].mxu0
        %v7691 = vadd.f32 %v7638, %v7690
        %v7692 = vpop.f32.mrb[0].mxu0
        %v7693 = vadd.f32 %v7640, %v7692
        %7694 = vdwg.mxu0
        %7695 = vmatprep.subr.bf16.mxu0 %v6380
        %7696 = vmatpush1.bf16.msra.mxu0 %v6379
        %7697 = vmatprep.subr.bf16.mxu0 %v6387
        %7698 = vmatpush1.bf16.msra.mxu0 %v6386
        %7699 = vmatprep.subr.bf16.mxu0 %v6394
        %7700 = vmatpush1.bf16.msra.mxu0 %v6393
        %7701 = vmatprep.subr.bf16.mxu0 %v6401
        %7702 = vmatpush1.bf16.msra.mxu0 %v6400
        %7703 = vmatprep.subr.bf16.mxu0 %v6408
        %7704 = vmatpush1.bf16.msra.mxu0 %v6407
        %7705 = vmatprep.subr.bf16.mxu0 %v6415
        %7706 = vmatpush1.bf16.msra.mxu0 %v6414
        %7707 = vmatprep.subr.bf16.mxu0 %v6422
        %7708 = vmatpush1.bf16.msra.mxu0 %v6421
        %7709 = vmatprep.subr.bf16.mxu0 %v6429
        %7710 = vmatpush1.bf16.msra.mxu0 %v6428
        %7711 = vmatprep.subr.bf16.mxu0 %v6436
        %7712 = vmatpush1.bf16.msra.mxu0 %v6435
        %7713 = vmatprep.subr.bf16.mxu0 %v6443
        %7714 = vmatpush1.bf16.msra.mxu0 %v6442
        %7715 = vmatprep.subr.bf16.mxu0 %v6450
        %7716 = vmatpush1.bf16.msra.mxu0 %v6449
        %7717 = vmatprep.subr.bf16.mxu0 %v6457
        %7718 = vmatpush1.bf16.msra.mxu0 %v6456
        %7719 = vmatprep.subr.bf16.mxu0 %v6464
        %7720 = vmatpush1.bf16.msra.mxu0 %v6463
        %7721 = vmatprep.subr.bf16.mxu0 %v6471
        %7722 = vmatpush1.bf16.msra.mxu0 %v6470
        %7723 = vmatprep.subr.bf16.mxu0 %v6478
        %7724 = vmatpush1.bf16.msra.mxu0 %v6477
        %7725 = vmatprep.subr.bf16.mxu0 %v6485
        %7726 = vmatpush1.bf16.msra.mxu0 %v6484
        %7727 = vmatprep.mubr.bf16.mxu0 %v4403
        %7728 = vmatmul.mubr.bf16.gmra.mrb[0].mxu0 %v4402
        %v7729 = vpop.f32.mrb[0].mxu0
        %v7730 = vadd.f32 %v4951, %v7729
        %v7731 = vpop.f32.mrb[0].mxu0
        %v7732 = vadd.f32 %v4955, %v7731
        %v7733 = vpop.f32.mrb[0].mxu0
        %v7734 = vadd.f32 %v4951, %v7733
        %v7735 = vpop.f32.mrb[0].mxu0
        %v7736 = vadd.f32 %v4955, %v7735
        %7737 = vmatprep.mubr.bf16.mxu0 %v4411
        %7738 = vmatmul.mubr.bf16.gmra.mrb[0].mxu0 %v4410
        %v7739 = vpop.f32.mrb[0].mxu0
        %v7740 = vadd.f32 %v4951, %v7739
        %v7741 = vpop.f32.mrb[0].mxu0
        %v7742 = vadd.f32 %v4955, %v7741
        %v7743 = vpop.f32.mrb[0].mxu0
        %v7744 = vadd.f32 %v4951, %v7743
        %v7745 = vpop.f32.mrb[0].mxu0
        %v7746 = vadd.f32 %v4955, %v7745
        %7747 = vdwg.mxu0
        %7748 = vmatprep.subr.bf16.mxu0 %v6492
        %7749 = vmatpush1.bf16.msra.mxu0 %v6491
        %7750 = vmatprep.subr.bf16.mxu0 %v6499
        %7751 = vmatpush1.bf16.msra.mxu0 %v6498
        %7752 = vmatprep.subr.bf16.mxu0 %v6506
        %7753 = vmatpush1.bf16.msra.mxu0 %v6505
        %7754 = vmatprep.subr.bf16.mxu0 %v6513
        %7755 = vmatpush1.bf16.msra.mxu0 %v6512
        %7756 = vmatprep.subr.bf16.mxu0 %v6520
        %7757 = vmatpush1.bf16.msra.mxu0 %v6519
        %7758 = vmatprep.subr.bf16.mxu0 %v6527
        %7759 = vmatpush1.bf16.msra.mxu0 %v6526
        %7760 = vmatprep.subr.bf16.mxu0 %v6534
        %7761 = vmatpush1.bf16.msra.mxu0 %v6533
        %7762 = vmatprep.subr.bf16.mxu0 %v6541
        %7763 = vmatpush1.bf16.msra.mxu0 %v6540
        %7764 = vmatprep.subr.bf16.mxu0 %v6548
        %7765 = vmatpush1.bf16.msra.mxu0 %v6547
        %7766 = vmatprep.subr.bf16.mxu0 %v6555
        %7767 = vmatpush1.bf16.msra.mxu0 %v6554
        %7768 = vmatprep.subr.bf16.mxu0 %v6562
        %7769 = vmatpush1.bf16.msra.mxu0 %v6561
        %7770 = vmatprep.subr.bf16.mxu0 %v6569
        %7771 = vmatpush1.bf16.msra.mxu0 %v6568
        %7772 = vmatprep.subr.bf16.mxu0 %v6576
        %7773 = vmatpush1.bf16.msra.mxu0 %v6575
        %7774 = vmatprep.subr.bf16.mxu0 %v6583
        %7775 = vmatpush1.bf16.msra.mxu0 %v6582
        %7776 = vmatprep.subr.bf16.mxu0 %v6590
        %7777 = vmatpush1.bf16.msra.mxu0 %v6589
        %7778 = vmatprep.subr.bf16.mxu0 %v6597
        %7779 = vmatpush1.bf16.msra.mxu0 %v6596
        %7780 = vmatprep.mubr.bf16.mxu0 %v4405
        %7781 = vmatmul.mubr.bf16.gmra.mrb[0].mxu0 %v4404
        %v7782 = vpop.f32.mrb[0].mxu0
        %v7783 = vadd.f32 %v7730, %v7782
        %v7784 = vpop.f32.mrb[0].mxu0
        %v7785 = vadd.f32 %v7732, %v7784
        %v7786 = vpop.f32.mrb[0].mxu0
        %v7787 = vadd.f32 %v7734, %v7786
        %v7788 = vpop.f32.mrb[0].mxu0
        %v7789 = vadd.f32 %v7736, %v7788
        %7790 = vmatprep.mubr.bf16.mxu0 %v4413
        %7791 = vmatmul.mubr.bf16.gmra.mrb[0].mxu0 %v4412
        %v7792 = vpop.f32.mrb[0].mxu0
        %v7793 = vadd.f32 %v7740, %v7792
        %v7794 = vpop.f32.mrb[0].mxu0
        %v7795 = vadd.f32 %v7742, %v7794
        %v7796 = vpop.f32.mrb[0].mxu0
        %v7797 = vadd.f32 %v7744, %v7796
        %v7798 = vpop.f32.mrb[0].mxu0
        %v7799 = vadd.f32 %v7746, %v7798
        %7800 = vdwg.mxu0
        %7801 = vmatprep.subr.bf16.mxu0 %v6604
        %7802 = vmatpush1.bf16.msra.mxu0 %v6603
        %7803 = vmatprep.subr.bf16.mxu0 %v6611
        %7804 = vmatpush1.bf16.msra.mxu0 %v6610
        %7805 = vmatprep.subr.bf16.mxu0 %v6618
        %7806 = vmatpush1.bf16.msra.mxu0 %v6617
        %7807 = vmatprep.subr.bf16.mxu0 %v6625
        %7808 = vmatpush1.bf16.msra.mxu0 %v6624
        %7809 = vmatprep.subr.bf16.mxu0 %v6632
        %7810 = vmatpush1.bf16.msra.mxu0 %v6631
        %7811 = vmatprep.subr.bf16.mxu0 %v6639
        %7812 = vmatpush1.bf16.msra.mxu0 %v6638
        %7813 = vmatprep.subr.bf16.mxu0 %v6646
        %7814 = vmatpush1.bf16.msra.mxu0 %v6645
        %7815 = vmatprep.subr.bf16.mxu0 %v6653
        %7816 = vmatpush1.bf16.msra.mxu0 %v6652
        %7817 = vmatprep.subr.bf16.mxu0 %v6660
        %7818 = vmatpush1.bf16.msra.mxu0 %v6659
        %7819 = vmatprep.subr.bf16.mxu0 %v6667
        %7820 = vmatpush1.bf16.msra.mxu0 %v6666
        %7821 = vmatprep.subr.bf16.mxu0 %v6674
        %7822 = vmatpush1.bf16.msra.mxu0 %v6673
        %7823 = vmatprep.subr.bf16.mxu0 %v6681
        %7824 = vmatpush1.bf16.msra.mxu0 %v6680
        %7825 = vmatprep.subr.bf16.mxu0 %v6688
        %7826 = vmatpush1.bf16.msra.mxu0 %v6687
        %7827 = vmatprep.subr.bf16.mxu0 %v6695
        %7828 = vmatpush1.bf16.msra.mxu0 %v6694
        %7829 = vmatprep.subr.bf16.mxu0 %v6702
        %7830 = vmatpush1.bf16.msra.mxu0 %v6701
        %7831 = vmatprep.subr.bf16.mxu0 %v6709
        %7832 = vmatpush1.bf16.msra.mxu0 %v6708
        %7833 = vmatprep.mubr.bf16.mxu0 %v4407
        %7834 = vmatmul.mubr.bf16.gmra.mrb[0].mxu0 %v4406
        %v7835 = vpop.f32.mrb[0].mxu0
        %v7836 = vadd.f32 %v7783, %v7835
        %v7837 = vpop.f32.mrb[0].mxu0
        %v7838 = vadd.f32 %v7785, %v7837
        %v7839 = vpop.f32.mrb[0].mxu0
        %v7840 = vadd.f32 %v7787, %v7839
        %v7841 = vpop.f32.mrb[0].mxu0
        %v7842 = vadd.f32 %v7789, %v7841
        %7843 = vmatprep.mubr.bf16.mxu0 %v4415
        %7844 = vmatmul.mubr.bf16.gmra.mrb[0].mxu0 %v4414
        %v7845 = vpop.f32.mrb[0].mxu0
        %v7846 = vadd.f32 %v7793, %v7845
        %v7847 = vpop.f32.mrb[0].mxu0
        %v7848 = vadd.f32 %v7795, %v7847
        %v7849 = vpop.f32.mrb[0].mxu0
        %v7850 = vadd.f32 %v7797, %v7849
        %v7851 = vpop.f32.mrb[0].mxu0
        %v7852 = vadd.f32 %v7799, %v7851
        %7853 = vdwg.mxu0
        %7854 = vmatprep.subr.bf16.mxu0 %v6716
        %7855 = vmatpush1.bf16.msra.mxu0 %v6715
        %7856 = vmatprep.subr.bf16.mxu0 %v6723
        %7857 = vmatpush1.bf16.msra.mxu0 %v6722
        %7858 = vmatprep.subr.bf16.mxu0 %v6730
        %7859 = vmatpush1.bf16.msra.mxu0 %v6729
        %7860 = vmatprep.subr.bf16.mxu0 %v6737
        %7861 = vmatpush1.bf16.msra.mxu0 %v6736
        %7862 = vmatprep.subr.bf16.mxu0 %v6744
        %7863 = vmatpush1.bf16.msra.mxu0 %v6743
        %7864 = vmatprep.subr.bf16.mxu0 %v6751
        %7865 = vmatpush1.bf16.msra.mxu0 %v6750
        %7866 = vmatprep.subr.bf16.mxu0 %v6758
        %7867 = vmatpush1.bf16.msra.mxu0 %v6757
        %7868 = vmatprep.subr.bf16.mxu0 %v6765
        %7869 = vmatpush1.bf16.msra.mxu0 %v6764
        %7870 = vmatprep.subr.bf16.mxu0 %v6772
        %7871 = vmatpush1.bf16.msra.mxu0 %v6771
        %7872 = vmatprep.subr.bf16.mxu0 %v6779
        %7873 = vmatpush1.bf16.msra.mxu0 %v6778
        %7874 = vmatprep.subr.bf16.mxu0 %v6786
        %7875 = vmatpush1.bf16.msra.mxu0 %v6785
        %7876 = vmatprep.subr.bf16.mxu0 %v6793
        %7877 = vmatpush1.bf16.msra.mxu0 %v6792
        %7878 = vmatprep.subr.bf16.mxu0 %v6800
        %7879 = vmatpush1.bf16.msra.mxu0 %v6799
        %7880 = vmatprep.subr.bf16.mxu0 %v6807
        %7881 = vmatpush1.bf16.msra.mxu0 %v6806
        %7882 = vmatprep.subr.bf16.mxu0 %v6814
        %7883 = vmatpush1.bf16.msra.mxu0 %v6813
        %7884 = vmatprep.subr.bf16.mxu0 %v6821
        %7885 = vmatpush1.bf16.msra.mxu0 %v6820
        %7886 = vmatprep.mubr.bf16.mxu0 %v4409
        %7887 = vmatmul.mubr.bf16.gmra.mrb[0].mxu0 %v4408
        %v7888 = vpop.f32.mrb[0].mxu0
        %v7889 = vadd.f32 %v7836, %v7888
        %v7890 = vpop.f32.mrb[0].mxu0
        %v7891 = vadd.f32 %v7838, %v7890
        %v7892 = vpop.f32.mrb[0].mxu0
        %v7893 = vadd.f32 %v7840, %v7892
        %v7894 = vpop.f32.mrb[0].mxu0
        %v7895 = vadd.f32 %v7842, %v7894
        %7896 = vmatprep.mubr.bf16.mxu0 %v4417
        %7897 = vmatmul.mubr.bf16.gmra.mrb[0].mxu0 %v4416
        %v7898 = vpop.f32.mrb[0].mxu0
        %v7899 = vadd.f32 %v7846, %v7898
        %v7900 = vpop.f32.mrb[0].mxu0
        %v7901 = vadd.f32 %v7848, %v7900
        %v7902 = vpop.f32.mrb[0].mxu0
        %v7903 = vadd.f32 %v7850, %v7902
        %v7904 = vpop.f32.mrb[0].mxu0
        %v7905 = vadd.f32 %v7852, %v7904
        %7906 = vdwg.mxu0
        %7907 = vmatprep.subr.bf16.mxu0 0
        %7908 = vmatpush1.bf16.msra.mxu0 %v6381
        %7909 = vmatprep.subr.bf16.mxu0 0
        %7910 = vmatpush1.bf16.msra.mxu0 %v6388
        %7911 = vmatprep.subr.bf16.mxu0 0
        %7912 = vmatpush1.bf16.msra.mxu0 %v6395
        %7913 = vmatprep.subr.bf16.mxu0 0
        %7914 = vmatpush1.bf16.msra.mxu0 %v6402
        %7915 = vmatprep.subr.bf16.mxu0 0
        %7916 = vmatpush1.bf16.msra.mxu0 %v6409
        %7917 = vmatprep.subr.bf16.mxu0 0
        %7918 = vmatpush1.bf16.msra.mxu0 %v6416
        %7919 = vmatprep.subr.bf16.mxu0 0
        %7920 = vmatpush1.bf16.msra.mxu0 %v6423
        %7921 = vmatprep.subr.bf16.mxu0 0
        %7922 = vmatpush1.bf16.msra.mxu0 %v6430
        %7923 = vmatprep.subr.bf16.mxu0 0
        %7924 = vmatpush1.bf16.msra.mxu0 %v6437
        %7925 = vmatprep.subr.bf16.mxu0 0
        %7926 = vmatpush1.bf16.msra.mxu0 %v6444
        %7927 = vmatprep.subr.bf16.mxu0 0
        %7928 = vmatpush1.bf16.msra.mxu0 %v6451
        %7929 = vmatprep.subr.bf16.mxu0 0
        %7930 = vmatpush1.bf16.msra.mxu0 %v6458
        %7931 = vmatprep.subr.bf16.mxu0 0
        %7932 = vmatpush1.bf16.msra.mxu0 %v6465
        %7933 = vmatprep.subr.bf16.mxu0 0
        %7934 = vmatpush1.bf16.msra.mxu0 %v6472
        %7935 = vmatprep.subr.bf16.mxu0 0
        %7936 = vmatpush1.bf16.msra.mxu0 %v6479
        %7937 = vmatprep.subr.bf16.mxu0 0
        %7938 = vmatpush1.bf16.msra.mxu0 %v6486
        %7939 = vmatprep.mubr.bf16.mxu0 %v4403
        %7940 = vmatmul.mubr.bf16.gmra.mrb[0].mxu0 %v4402
        %v7941 = vpop.f32.mrb[0].mxu0
        %v7942 = vadd.f32 %v4959, %v7941
        %v7943 = vpop.f32.mrb[0].mxu0
        %v7944 = vpop.f32.mrb[0].mxu0
        %v7945 = vadd.f32 %v4959, %v7944
        %v7946 = vpop.f32.mrb[0].mxu0
        %7947 = vmatprep.mubr.bf16.mxu0 %v4411
        %7948 = vmatmul.mubr.bf16.gmra.mrb[0].mxu0 %v4410
        %v7949 = vpop.f32.mrb[0].mxu0
        %v7950 = vadd.f32 %v4959, %v7949
        %v7951 = vpop.f32.mrb[0].mxu0
        %v7952 = vpop.f32.mrb[0].mxu0
        %v7953 = vadd.f32 %v4959, %v7952
        %v7954 = vpop.f32.mrb[0].mxu0
        %7955 = vdwg.mxu0
        %7956 = vmatprep.subr.bf16.mxu0 0
        %7957 = vmatpush1.bf16.msra.mxu0 %v6493
        %7958 = vmatprep.subr.bf16.mxu0 0
        %7959 = vmatpush1.bf16.msra.mxu0 %v6500
        %7960 = vmatprep.subr.bf16.mxu0 0
        %7961 = vmatpush1.bf16.msra.mxu0 %v6507
        %7962 = vmatprep.subr.bf16.mxu0 0
        %7963 = vmatpush1.bf16.msra.mxu0 %v6514
        %7964 = vmatprep.subr.bf16.mxu0 0
        %7965 = vmatpush1.bf16.msra.mxu0 %v6521
        %7966 = vmatprep.subr.bf16.mxu0 0
        %7967 = vmatpush1.bf16.msra.mxu0 %v6528
        %7968 = vmatprep.subr.bf16.mxu0 0
        %7969 = vmatpush1.bf16.msra.mxu0 %v6535
        %7970 = vmatprep.subr.bf16.mxu0 0
        %7971 = vmatpush1.bf16.msra.mxu0 %v6542
        %7972 = vmatprep.subr.bf16.mxu0 0
        %7973 = vmatpush1.bf16.msra.mxu0 %v6549
        %7974 = vmatprep.subr.bf16.mxu0 0
        %7975 = vmatpush1.bf16.msra.mxu0 %v6556
        %7976 = vmatprep.subr.bf16.mxu0 0
        %7977 = vmatpush1.bf16.msra.mxu0 %v6563
        %7978 = vmatprep.subr.bf16.mxu0 0
        %7979 = vmatpush1.bf16.msra.mxu0 %v6570
        %7980 = vmatprep.subr.bf16.mxu0 0
        %7981 = vmatpush1.bf16.msra.mxu0 %v6577
        %7982 = vmatprep.subr.bf16.mxu0 0
        %7983 = vmatpush1.bf16.msra.mxu0 %v6584
        %7984 = vmatprep.subr.bf16.mxu0 0
        %7985 = vmatpush1.bf16.msra.mxu0 %v6591
        %7986 = vmatprep.subr.bf16.mxu0 0
        %7987 = vmatpush1.bf16.msra.mxu0 %v6598
        %7988 = vmatprep.mubr.bf16.mxu0 %v4405
        %7989 = vmatmul.mubr.bf16.gmra.mrb[0].mxu0 %v4404
        %v7990 = vpop.f32.mrb[0].mxu0
        %v7991 = vadd.f32 %v7942, %v7990
        %v7992 = vpop.f32.mrb[0].mxu0
        %v7993 = vpop.f32.mrb[0].mxu0
        %v7994 = vadd.f32 %v7945, %v7993
        %v7995 = vpop.f32.mrb[0].mxu0
        %7996 = vmatprep.mubr.bf16.mxu0 %v4413
        %7997 = vmatmul.mubr.bf16.gmra.mrb[0].mxu0 %v4412
        %v7998 = vpop.f32.mrb[0].mxu0
        %v7999 = vadd.f32 %v7950, %v7998
        %v8000 = vpop.f32.mrb[0].mxu0
        %v8001 = vpop.f32.mrb[0].mxu0
        %v8002 = vadd.f32 %v7953, %v8001
        %v8003 = vpop.f32.mrb[0].mxu0
        %8004 = vdwg.mxu0
        %8005 = vmatprep.subr.bf16.mxu0 0
        %8006 = vmatpush1.bf16.msra.mxu0 %v6605
        %8007 = vmatprep.subr.bf16.mxu0 0
        %8008 = vmatpush1.bf16.msra.mxu0 %v6612
        %8009 = vmatprep.subr.bf16.mxu0 0
        %8010 = vmatpush1.bf16.msra.mxu0 %v6619
        %8011 = vmatprep.subr.bf16.mxu0 0
        %8012 = vmatpush1.bf16.msra.mxu0 %v6626
        %8013 = vmatprep.subr.bf16.mxu0 0
        %8014 = vmatpush1.bf16.msra.mxu0 %v6633
        %8015 = vmatprep.subr.bf16.mxu0 0
        %8016 = vmatpush1.bf16.msra.mxu0 %v6640
        %8017 = vmatprep.subr.bf16.mxu0 0
        %8018 = vmatpush1.bf16.msra.mxu0 %v6647
        %8019 = vmatprep.subr.bf16.mxu0 0
        %8020 = vmatpush1.bf16.msra.mxu0 %v6654
        %8021 = vmatprep.subr.bf16.mxu0 0
        %8022 = vmatpush1.bf16.msra.mxu0 %v6661
        %8023 = vmatprep.subr.bf16.mxu0 0
        %8024 = vmatpush1.bf16.msra.mxu0 %v6668
        %8025 = vmatprep.subr.bf16.mxu0 0
        %8026 = vmatpush1.bf16.msra.mxu0 %v6675
        %8027 = vmatprep.subr.bf16.mxu0 0
        %8028 = vmatpush1.bf16.msra.mxu0 %v6682
        %8029 = vmatprep.subr.bf16.mxu0 0
        %8030 = vmatpush1.bf16.msra.mxu0 %v6689
        %8031 = vmatprep.subr.bf16.mxu0 0
        %8032 = vmatpush1.bf16.msra.mxu0 %v6696
        %8033 = vmatprep.subr.bf16.mxu0 0
        %8034 = vmatpush1.bf16.msra.mxu0 %v6703
        %8035 = vmatprep.subr.bf16.mxu0 0
        %8036 = vmatpush1.bf16.msra.mxu0 %v6710
        %8037 = vmatprep.mubr.bf16.mxu0 %v4407
        %8038 = vmatmul.mubr.bf16.gmra.mrb[0].mxu0 %v4406
        %v8039 = vpop.f32.mrb[0].mxu0
        %v8040 = vadd.f32 %v7991, %v8039
        %v8041 = vpop.f32.mrb[0].mxu0
        %v8042 = vpop.f32.mrb[0].mxu0
        %v8043 = vadd.f32 %v7994, %v8042
        %v8044 = vpop.f32.mrb[0].mxu0
        %8045 = vmatprep.mubr.bf16.mxu0 %v4415
        %8046 = vmatmul.mubr.bf16.gmra.mrb[0].mxu0 %v4414
        %v8047 = vpop.f32.mrb[0].mxu0
        %v8048 = vadd.f32 %v7999, %v8047
        %v8049 = vpop.f32.mrb[0].mxu0
        %v8050 = vpop.f32.mrb[0].mxu0
        %v8051 = vadd.f32 %v8002, %v8050
        %v8052 = vpop.f32.mrb[0].mxu0
        %8053 = vdwg.mxu0
        %8054 = vmatprep.subr.bf16.mxu0 0
        %8055 = vmatpush1.bf16.msra.mxu0 %v6717
        %8056 = vmatprep.subr.bf16.mxu0 0
        %8057 = vmatpush1.bf16.msra.mxu0 %v6724
        %8058 = vmatprep.subr.bf16.mxu0 0
        %8059 = vmatpush1.bf16.msra.mxu0 %v6731
        %8060 = vmatprep.subr.bf16.mxu0 0
        %8061 = vmatpush1.bf16.msra.mxu0 %v6738
        %8062 = vmatprep.subr.bf16.mxu0 0
        %8063 = vmatpush1.bf16.msra.mxu0 %v6745
        %8064 = vmatprep.subr.bf16.mxu0 0
        %8065 = vmatpush1.bf16.msra.mxu0 %v6752
        %8066 = vmatprep.subr.bf16.mxu0 0
        %8067 = vmatpush1.bf16.msra.mxu0 %v6759
        %8068 = vmatprep.subr.bf16.mxu0 0
        %8069 = vmatpush1.bf16.msra.mxu0 %v6766
        %8070 = vmatprep.subr.bf16.mxu0 0
        %8071 = vmatpush1.bf16.msra.mxu0 %v6773
        %8072 = vmatprep.subr.bf16.mxu0 0
        %8073 = vmatpush1.bf16.msra.mxu0 %v6780
        %8074 = vmatprep.subr.bf16.mxu0 0
        %8075 = vmatpush1.bf16.msra.mxu0 %v6787
        %8076 = vmatprep.subr.bf16.mxu0 0
        %8077 = vmatpush1.bf16.msra.mxu0 %v6794
        %8078 = vmatprep.subr.bf16.mxu0 0
        %8079 = vmatpush1.bf16.msra.mxu0 %v6801
        %8080 = vmatprep.subr.bf16.mxu0 0
        %8081 = vmatpush1.bf16.msra.mxu0 %v6808
        %8082 = vmatprep.subr.bf16.mxu0 0
        %8083 = vmatpush1.bf16.msra.mxu0 %v6815
        %8084 = vmatprep.subr.bf16.mxu0 0
        %8085 = vmatpush1.bf16.msra.mxu0 %v6822
        %8086 = vmatprep.mubr.bf16.mxu0 %v4409
        %8087 = vmatmul.mubr.bf16.gmra.mrb[0].mxu0 %v4408
        %v8088 = vpop.f32.mrb[0].mxu0
        %v8089 = vadd.f32 %v8040, %v8088
        %v8090 = vpop.f32.mrb[0].mxu0
        %v8091 = vpop.f32.mrb[0].mxu0
        %v8092 = vadd.f32 %v8043, %v8091
        %v8093 = vpop.f32.mrb[0].mxu0
        %8094 = vmatprep.mubr.bf16.mxu0 %v4417
        %8095 = vmatmul.mubr.bf16.gmra.mrb[0].mxu0 %v4416
        %v8096 = vpop.f32.mrb[0].mxu0
        %v8097 = vadd.f32 %v8048, %v8096
        %v8098 = vpop.f32.mrb[0].mxu0
        %v8099 = vpop.f32.mrb[0].mxu0
        %v8100 = vadd.f32 %v8051, %v8099
        %v8101 = vpop.f32.mrb[0].mxu0
        %8102 = vdwg.mxu0
        %v8103 = vtanh.pop %v7465
        %v8104 = vtanh.pop %v7467
        %v8105 = vtanh.pop %v7677
        %v8106 = vtanh.pop %v7679
        %v8107 = vtanh.pop %v7889
        %v8108 = vtanh.pop %v7891
        %v8109 = vtanh.pop %v8089
        %v8110 = vtanh.pop %v7469
        %v8111 = vtanh.pop %v7471
        %v8112 = vtanh.pop %v7681
        %v8113 = vtanh.pop %v7683
        %v8114 = vtanh.pop %v7893
        %v8115 = vtanh.pop %v7895
        %v8116 = vtanh.pop %v8092
        %v8117 = vtanh.pop %v7475
        %v8118 = vtanh.pop %v7477
        %v8119 = vtanh.pop %v7687
        %v8120 = vtanh.pop %v7689
        %v8121 = vtanh.pop %v7899
        %v8122 = vtanh.pop %v7901
        %v8123 = vtanh.pop %v8097
        %v8124 = vtanh.pop %v7479
        %v8125 = vtanh.pop %v7481
        %v8126 = vtanh.pop %v7691
        %v8127 = vtanh.pop %v7693
        %v8128 = vtanh.pop %v7903
        %v8129 = vtanh.pop %v7905
        %v8130 = vtanh.pop %v8100
        %v8131 = vpack.c.bf16 %v8110, %v8103
        %v8132 = vpack.c.bf16 %v8111, %v8104
        %v8133 = vpack.c.bf16 %v8112, %v8105
        %v8134 = vpack.c.bf16 %v8113, %v8106
        %v8135 = vpack.c.bf16 %v8114, %v8107
        %v8136 = vpack.c.bf16 %v8115, %v8108
        %v8137 = vpack.c.bf16 %v8116, %v8109
        %v8138 = vpack.c.bf16 %v8124, %v8117
        %v8139 = vpack.c.bf16 %v8125, %v8118
        %v8140 = vpack.c.bf16 %v8126, %v8119
        %v8141 = vpack.c.bf16 %v8127, %v8120
        %v8142 = vpack.c.bf16 %v8128, %v8121
        %v8143 = vpack.c.bf16 %v8129, %v8122
        %v8144 = vpack.c.bf16 %v8130, %v8123
        %v8159 = vunpack.c.l.b16 %v8131
        %v8160 = vunpack.c.l.b16 %v8132
        %v8161 = vunpack.c.l.b16 %v8133
        %v8162 = vunpack.c.l.b16 %v8134
        %v8163 = vunpack.c.l.b16 %v8135
        %v8164 = vunpack.c.l.b16 %v8136
        %v8165 = vunpack.c.l.b16 %v8137
        %v8166 = vunpack.c.h.b16 %v8131
        %v8167 = vunpack.c.h.b16 %v8132
        %v8168 = vunpack.c.h.b16 %v8133
        %v8169 = vunpack.c.h.b16 %v8134
        %v8170 = vunpack.c.h.b16 %v8135
        %v8171 = vunpack.c.h.b16 %v8136
        %v8172 = vunpack.c.h.b16 %v8137
        %v8173 = vunpack.c.l.b16 %v8138
        %v8174 = vunpack.c.l.b16 %v8139
        %v8175 = vunpack.c.l.b16 %v8140
        %v8176 = vunpack.c.l.b16 %v8141
        %v8177 = vunpack.c.l.b16 %v8142
        %v8178 = vunpack.c.l.b16 %v8143
        %v8179 = vunpack.c.l.b16 %v8144
        %v8180 = vunpack.c.h.b16 %v8138
        %v8181 = vunpack.c.h.b16 %v8139
        %v8182 = vunpack.c.h.b16 %v8140
        %v8183 = vunpack.c.h.b16 %v8141
        %v8184 = vunpack.c.h.b16 %v8142
        %v8185 = vunpack.c.h.b16 %v8143
        %v8186 = vunpack.c.h.b16 %v8144
        %v8187 = vpack.c.b16 %v8160, %v8159
        %v8188 = vpack.c.b16 %v8162, %v8161
        %v8189 = vpack.c.b16 %v8164, %v8163
        %v8190 = vpack.c.b16 %v8165, %v8165
        %v8191 = vpack.c.b16 %v8167, %v8166
        %v8192 = vpack.c.b16 %v8169, %v8168
        %v8193 = vpack.c.b16 %v8171, %v8170
        %v8194 = vpack.c.b16 %v8172, %v8172
        %v8195 = vpack.c.b16 %v8174, %v8173
        %v8196 = vpack.c.b16 %v8176, %v8175
        %v8197 = vpack.c.b16 %v8178, %v8177
        %v8198 = vpack.c.b16 %v8179, %v8179
        %v8199 = vpack.c.b16 %v8181, %v8180
        %v8200 = vpack.c.b16 %v8183, %v8182
        %v8201 = vpack.c.b16 %v8185, %v8184
        %v8202 = vpack.c.b16 %v8186, %v8186
        %8219 = vst [vmem:[%s383] sm:$0xff] %v8187
        %8220 = vst [vmem:[%s383 + $0x8] sm:$0xff] %v8188
        %8221 = vst [vmem:[%s383 + $0x10] sm:$0xff] %v8189
        %8222 = vst [vmem:[%s383 + $0x18] sm:$0xf] %v8190
        %8223 = vst [vmem:[%s383 + $0x1c] sm:$0xff] %v8191
        %8224 = vst [vmem:[%s383 + $0x24] sm:$0xff] %v8192
        %8225 = vst [vmem:[%s383 + $0x2c] sm:$0xff] %v8193
        %8226 = vst [vmem:[%s383 + $0x34] sm:$0xf] %v8194
        %8227 = vst [vmem:[%s383 + $0x38] sm:$0xff] %v8195
        %8228 = vst [vmem:[%s383 + $0x40] sm:$0xff] %v8196
        %8229 = vst [vmem:[%s383 + $0x48] sm:$0xff] %v8197
        %8230 = vst [vmem:[%s383 + $0x50] sm:$0xf] %v8198
        %8231 = vst [vmem:[%s383 + $0x54] sm:$0xff] %v8199
        %8232 = vst [vmem:[%s383 + $0x5c] sm:$0xff] %v8200
        %8233 = vst [vmem:[%s383 + $0x64] sm:$0xff] %v8201
        %8234 = vst [vmem:[%s383 + $0x6c] sm:$0xf] %v8202
        %s8235 = sand.u32 %s189, 1
        %s8236 = scalar_lea.sflag [#allocation6], %s8235
        %s8237 = sand.u32 %s189, 1
        %s8238 = smul.addr %s8237, 112
        %s8239 = scalar_lea.vmem [#allocation16], %s8238
        // Predicated region
        $region77: #{tpu_custom_call.1} parent=47 // pred_check
          %p8240 = pneg %p199
        $region78: #{tpu_custom_call.1} parent=47 // pred_check_branch
          %8242 = sbr.rel (%p8240) target = $region80
        $region79: #{tpu_custom_call.1} parent=47 // pred_region
          %s8244 = ssub.s32 1792, 1792
          %8245 = vsyncadd %s8236, %s8244
          %s8246 = smul.addr %s29, 28
          %s8247 = smul.addr %s8246, 64
          %s8248 = scalar_lea.hbm %s8, %s8247
          %s8249 = sshll.u32 %s8239, 4
          %s8250 = int_to_ptr.vmem [resolvable:$true] %s8249
          %8255 = dma.vmem_to_hbm [thread:$0]  %s8250, 1792, %s8248, %s8236, 448, 448, 28
        $region80: #{tpu_custom_call.1} parent=47 // pred_fallthru
          _
      $region48: #{tpu_custom_call.1} parent=5 // pred_fallthru
        _
      %p8256 = scmp.le.s32.totalorder 2, %s24
      // Predicated region
      $region81: #{tpu_custom_call.1} parent=5 // pred_check
        %p8257 = pneg %p8256
      $region82: #{tpu_custom_call.1} parent=5 // pred_check_branch
        %8259 = sbr.rel (%p8257) target = $region84
      $region83: #{tpu_custom_call.1} parent=5 // pred_region
        %s8260 = ssub.s32 %s24, 2
        // Predicated region
        $region85: #{tpu_custom_call.1} parent=83 // pred_check
          %p8261 = pneg %p205
        $region86: #{tpu_custom_call.1} parent=83 // pred_check_branch
          %8263 = sbr.rel (%p8261) target = $region88
        $region87: #{tpu_custom_call.1} parent=83 // pred_region
          %s8264 = sand.u32 %s190, 1
          %s8265 = scalar_lea.sflag [#allocation6], %s8264
          %s8266 = sand.u32 %s190, 1
          %s8267 = smul.addr %s8266, 112
          %s8268 = scalar_lea.vmem [#allocation16], %s8267
          %8269 = dma.done %s8265, 1792
        $region88: #{tpu_custom_call.1} parent=83 // pred_fallthru
          _
      $region84: #{tpu_custom_call.1} parent=5 // pred_fallthru
        _
    $region6: #{tpu_custom_call.1} parent=1 // loop_footer
      %s28 = sadd.s32 1, %s24
    $region7: #{tpu_custom_call.1} parent=1 // loop_footer_branch
      %23 = sbr.rel target = $region3
    $region8: #{tpu_custom_call.1} parent=1 // loop_exit
      _
    %8270 = vsyncpa [#allocation5], 1
    %s8271 = scalar_lea.sflag [#allocation5], 1
    %8272 = vsyncpa %s8271, 1
    %8273 = vsyncpa [#allocation8], 1
    %8274 = vsyncpa [#allocation11], 1
    %8275 = vsyncpa [#allocation14], 1
    %8276 = vsyncpa [#allocation6], 1
    %s8277 = scalar_lea.sflag [#allocation6], 1
    %8278 = vsyncpa %s8277, 1

</llo_original>
